<compile_context>
chip_gen: v6e
topology: v6e:2x2x1
jax: 0.10.0
libtpu: 0.0.40
codegen_flags: <defaults>
</compile_context>

<pallas_src>
import jax
import jax.numpy as jnp
import numpy as np
from jax.experimental import pallas as pl
from jax.experimental.pallas import tpu as pltpu

EPS = 1e-5


def basic_block_kernel(xpad_ref, w1_ref, b1_ref, w2_ref, b2_ref, out_ref, mid_ref):
    # xpad_ref : (1, H+2, W+2, C)  bf16, spatially zero-padded, channel-padded input
    # w1_ref   : (9*C, C)          bf16, tap-major rows [(kh*3+kw)*C + ci], BN1 scale folded
    # b1_ref   : (1, C)            f32, BN1 bias
    # w2_ref   : (9*C, C)          bf16, BN2 scale folded
    # b2_ref   : (1, C)            f32, BN2 bias
    # out_ref  : (1, H, W, C)      f32
    # mid_ref  : (1, H+2, W+2, C)  bf16 VMEM scratch (padded conv1 output)
    _, Hp, Wp, C = xpad_ref.shape
    H, W = Hp - 2, Wp - 2
    M = H * W

    # ---- conv1 (3x3, stride 1, pad 1) as 9 MXU matmuls + BN1 bias + ReLU ----
    acc1 = jnp.zeros((M, C), jnp.float32)
    for kh in range(3):
        for kw in range(3):
            t = kh * 3 + kw
            patch = xpad_ref[:, kh:kh + H, kw:kw + W, :].reshape(M, C)
            acc1 = acc1 + jnp.dot(patch, w1_ref[t * C:(t + 1) * C, :],
                                  preferred_element_type=jnp.float32)
    out1 = jnp.maximum(acc1 + b1_ref[...], 0.0)                    # (M, C) f32

    # ---- stage conv1 output into the padded scratch (zero only the 1-px border) ----
    mid_ref[:, 0:1, :, :] = jnp.zeros((1, 1, Wp, C), mid_ref.dtype)
    mid_ref[:, Hp - 1:Hp, :, :] = jnp.zeros((1, 1, Wp, C), mid_ref.dtype)
    mid_ref[:, :, 0:1, :] = jnp.zeros((1, Hp, 1, C), mid_ref.dtype)
    mid_ref[:, :, Wp - 1:Wp, :] = jnp.zeros((1, Hp, 1, C), mid_ref.dtype)
    mid_ref[:, 1:H + 1, 1:W + 1, :] = out1.reshape(1, H, W, C).astype(mid_ref.dtype)

    # ---- conv2 (3x3, stride 1, pad 1) as 9 MXU matmuls + BN2 bias ----
    acc2 = jnp.zeros((M, C), jnp.float32)
    for kh in range(3):
        for kw in range(3):
            t = kh * 3 + kw
            patch = mid_ref[:, kh:kh + H, kw:kw + W, :].reshape(M, C)
            acc2 = acc2 + jnp.dot(patch, w2_ref[t * C:(t + 1) * C, :],
                                  preferred_element_type=jnp.float32)
    out2 = acc2 + b2_ref[...]

    # ---- residual add (downsample is None, stride == 1) + ReLU ----
    residual = xpad_ref[:, 1:H + 1, 1:W + 1, :].reshape(M, C).astype(jnp.float32)
    out_ref[...] = jnp.maximum(out2 + residual, 0.0).reshape(1, H, W, C)


def _round_up(x, m):
    return ((x + m - 1) // m) * m


def _fold_bn(gamma, beta, mean, var, eps=EPS):
    # Eval-mode BN: y = x * scale + bias, scale/bias per channel.
    scale = gamma / jnp.sqrt(var + eps)
    bias = beta - mean * scale
    return scale.astype(jnp.float32), bias.astype(jnp.float32)


def _prep_conv_weight(w, scale, cp):
    # (Cout, Cin, 3, 3) -> (3, 3, Cin, Cout); fold BN scale into output columns,
    # zero-pad channels to cp, flatten tap-major to (9*cp, cp), cast to bf16.
    cout, cin = w.shape[0], w.shape[1]
    wt = jnp.transpose(w, (2, 3, 1, 0)).astype(jnp.float32) * scale[None, None, None, :]
    wt = jnp.pad(wt, ((0, 0), (0, 0), (0, cp - cin), (0, cp - cout)))
    return wt.reshape(9 * cp, cp).astype(jnp.bfloat16)


def basic_block_forward(x_nchw, w1, w2, bn1, bn2):
    """x_nchw: (N, C, H, W) f32; w: (Cout, Cin, 3, 3); bn: (gamma, beta, mean, var)."""
    N, Cin, H, W = x_nchw.shape
    Cout = w1.shape[0]
    # Module defaults: stride=1, downsample=None => residual is the raw input.
    assert Cin == Cout and w2.shape == (Cout, Cout, 3, 3), \
        "BasicBlock with stride=1 / downsample=None requires Cin == Cout"
    Cp = _round_up(max(Cin, Cout), 128)        # lane-dense padded channel count
    Hp, Wp = H + 2, W + 2

    scale1, bias1 = _fold_bn(*bn1)
    scale2, bias2 = _fold_bn(*bn2)
    w1f = _prep_conv_weight(w1, scale1, Cp)
    w2f = _prep_conv_weight(w2, scale2, Cp)
    b1 = jnp.pad(bias1, (0, Cp - Cout)).reshape(1, Cp)
    b2 = jnp.pad(bias2, (0, Cp - Cout)).reshape(1, Cp)

    x_nhwc = jnp.transpose(x_nchw, (0, 2, 3, 1)).astype(jnp.float32)
    xpad = jnp.pad(x_nhwc, ((0, 0), (1, 1), (1, 1), (0, Cp - Cin))).astype(jnp.bfloat16)

    out_padded = pl.pallas_call(
        basic_block_kernel,
        out_shape=jax.ShapeDtypeStruct((N, H, W, Cp), jnp.float32),
        grid=(N,),
        in_specs=[
            pl.BlockSpec((1, Hp, Wp, Cp), lambda n: (n, 0, 0, 0)),   # padded input
            pl.BlockSpec((9 * Cp, Cp), lambda n: (0, 0)),            # conv1 weights
            pl.BlockSpec((1, Cp), lambda n: (0, 0)),                 # BN1 bias
            pl.BlockSpec((9 * Cp, Cp), lambda n: (0, 0)),            # conv2 weights
            pl.BlockSpec((1, Cp), lambda n: (0, 0)),                 # BN2 bias
        ],
        out_specs=pl.BlockSpec((1, H, W, Cp), lambda n: (n, 0, 0, 0)),
        scratch_shapes=[pltpu.VMEM((1, Hp, Wp, Cp), jnp.bfloat16)],
        compiler_params=pltpu.CompilerParams(
            dimension_semantics=("parallel",),      # batch axis -> v7x megacore
            vmem_limit_bytes=32 * 1024 * 1024,
        ),
    )(xpad, w1f, b1, w2f, b2)

    out_nhwc = out_padded[:, :, :, :Cout]
    return jnp.transpose(out_nhwc, (0, 3, 1, 2))                     # back to NCHW


def reference_forward(x_nchw, w1, w2, bn1, bn2):
    """Pure-JAX f32 reference matching the PyTorch forward (eval-mode BN)."""
    def conv(x, w):
        return jax.lax.conv_general_dilated(
            x, w, window_strides=(1, 1), padding=((1, 1), (1, 1)),
            dimension_numbers=("NCHW", "OIHW", "NCHW"))

    def bn(x, p):
        gamma, beta, mean, var = p
        g = gamma[None, :, None, None]
        b = beta[None, :, None, None]
        m = mean[None, :, None, None]
        v = var[None, :, None, None]
        return (x - m) / jnp.sqrt(v + EPS) * g + b

    out = jnp.maximum(bn(conv(x_nchw, w1), bn1), 0.0)
    out = bn(conv(out, w2), bn2)
    return jnp.maximum(out + x_nchw, 0.0)


if __name__ == "__main__":
    N, C, H, W = 2, 4, 16, 16          # inplanes = planes = 4, stride = 1
    key = jax.random.PRNGKey(0)
    keys = jax.random.split(key, 9)

    x = jax.random.normal(keys[0], (N, C, H, W), dtype=jnp.float32)

    w1 = jax.random.normal(keys[1], (C, C, 3, 3), dtype=jnp.float32) * 0.2
    w2 = jax.random.normal(keys[2], (C, C, 3, 3), dtype=jnp.float32) * 0.2

    bn1 = (1.0 + 0.1 * jax.random.normal(keys[3], (C,), dtype=jnp.float32),   # gamma
           0.1 * jax.random.normal(keys[4], (C,), dtype=jnp.float32),         # beta
           0.1 * jax.random.normal(keys[5], (C,), dtype=jnp.float32),         # running_mean
           jnp.abs(1.0 + 0.1 * jax.random.normal(keys[6], (C,), dtype=jnp.float32)))  # running_var
    bn2 = (1.0 + 0.1 * jax.random.normal(keys[7], (C,), dtype=jnp.float32),
           0.1 * jax.random.normal(keys[8], (C,), dtype=jnp.float32),
           jnp.zeros((C,), jnp.float32),
           jnp.ones((C,), jnp.float32))

    out = basic_block_forward(x, w1, w2, bn1, bn2)
    out = jax.block_until_ready(out)

    ref = jax.block_until_ready(reference_forward(x, w1, w2, bn1, bn2))
    assert out.shape == (N, C, H, W)
    # Kernel uses bf16 MXU inputs with f32 accumulation -> compare at bf16-level tolerance.
    np.testing.assert_allclose(np.asarray(out), np.asarray(ref), rtol=5e-2, atol=5e-2)

    print("KERNEL_OK")
</pallas_src>

<mosaic_0001>
module attributes {stable_mosaic.version = 11 : i64} {
  func.func @basic_block_kernel(%arg0: i32, %arg1: memref<1x18x18x128xbf16, #tpu.memory_space<vmem>>, %arg2: memref<1152x128xbf16, #tpu.memory_space<vmem>>, %arg3: memref<1x128xf32, #tpu.memory_space<vmem>>, %arg4: memref<1152x128xbf16, #tpu.memory_space<vmem>>, %arg5: memref<1x128xf32, #tpu.memory_space<vmem>>, %arg6: memref<1x16x16x128xf32, #tpu.memory_space<vmem>>, %arg7: memref<1x18x18x128xbf16, #tpu.memory_space<vmem>>) attributes {dimension_semantics = [#tpu.dimension_semantics<parallel>], iteration_bounds = array<i64: 2>, scalar_prefetch = 0 : i64, scratch_operands = 1 : i64, tpu.core_type = #tpu.core_type<tc>, window_params = [{transform_indices = @transform_0, window_bounds = array<i64: 1, 18, 18, 128>}, {pipeline_mode = #tpu.pipeline_mode<synchronous>, transform_indices = @transform_1, window_bounds = array<i64: 1152, 128>}, {pipeline_mode = #tpu.pipeline_mode<synchronous>, transform_indices = @transform_2, window_bounds = array<i64: 1, 128>}, {pipeline_mode = #tpu.pipeline_mode<synchronous>, transform_indices = @transform_3, window_bounds = array<i64: 1152, 128>}, {pipeline_mode = #tpu.pipeline_mode<synchronous>, transform_indices = @transform_4, window_bounds = array<i64: 1, 128>}, {transform_indices = @transform_5, window_bounds = array<i64: 1, 16, 16, 128>}]} {
    %cst = arith.constant 0.000000e+00 : f32
    %0 = vector.broadcast %cst : f32 to vector<256x128xf32>
    %c0 = arith.constant 0 : index
    %c0_0 = arith.constant 0 : index
    %c0_1 = arith.constant 0 : index
    %c0_2 = arith.constant 0 : index
    %1 = vector.load %arg1[%c0, %c0_0, %c0_1, %c0_2] : memref<1x18x18x128xbf16, #tpu.memory_space<vmem>>, vector<1x16x16x128xbf16>
    %2 = vector.shape_cast %1 : vector<1x16x16x128xbf16> to vector<256x128xbf16>
    %c0_3 = arith.constant 0 : index
    %c0_4 = arith.constant 0 : index
    %3 = vector.load %arg2[%c0_3, %c0_4] : memref<1152x128xbf16, #tpu.memory_space<vmem>>, vector<128x128xbf16>
    %cst_5 = arith.constant dense<0.000000e+00> : vector<256x128xf32>
    %4 = tpu.matmul %2, %3, %cst_5 {dimension_numbers = #tpu.dot_dimension_numbers<[1], [0], [0], [1], [0, 0, 1, 1], [], []>} : vector<256x128xbf16>, vector<128x128xbf16>, vector<256x128xf32> -> vector<256x128xf32>
    %5 = arith.addf %0, %4 : vector<256x128xf32>
    %c0_6 = arith.constant 0 : index
    %c0_7 = arith.constant 0 : index
    %c1 = arith.constant 1 : index
    %c0_8 = arith.constant 0 : index
    %6 = vector.load %arg1[%c0_6, %c0_7, %c1, %c0_8] : memref<1x18x18x128xbf16, #tpu.memory_space<vmem>>, vector<1x16x16x128xbf16>
    %7 = vector.shape_cast %6 : vector<1x16x16x128xbf16> to vector<256x128xbf16>
    %c128 = arith.constant 128 : index
    %c0_9 = arith.constant 0 : index
    %8 = vector.load %arg2[%c128, %c0_9] : memref<1152x128xbf16, #tpu.memory_space<vmem>>, vector<128x128xbf16>
    %cst_10 = arith.constant dense<0.000000e+00> : vector<256x128xf32>
    %9 = tpu.matmul %7, %8, %cst_10 {dimension_numbers = #tpu.dot_dimension_numbers<[1], [0], [0], [1], [0, 0, 1, 1], [], []>} : vector<256x128xbf16>, vector<128x128xbf16>, vector<256x128xf32> -> vector<256x128xf32>
    %10 = arith.addf %5, %9 : vector<256x128xf32>
    %c0_11 = arith.constant 0 : index
    %c0_12 = arith.constant 0 : index
    %c2 = arith.constant 2 : index
    %c0_13 = arith.constant 0 : index
    %11 = vector.load %arg1[%c0_11, %c0_12, %c2, %c0_13] : memref<1x18x18x128xbf16, #tpu.memory_space<vmem>>, vector<1x16x16x128xbf16>
    %12 = vector.shape_cast %11 : vector<1x16x16x128xbf16> to vector<256x128xbf16>
    %c256 = arith.constant 256 : index
    %c0_14 = arith.constant 0 : index
    %13 = vector.load %arg2[%c256, %c0_14] : memref<1152x128xbf16, #tpu.memory_space<vmem>>, vector<128x128xbf16>
    %cst_15 = arith.constant dense<0.000000e+00> : vector<256x128xf32>
    %14 = tpu.matmul %12, %13, %cst_15 {dimension_numbers = #tpu.dot_dimension_numbers<[1], [0], [0], [1], [0, 0, 1, 1], [], []>} : vector<256x128xbf16>, vector<128x128xbf16>, vector<256x128xf32> -> vector<256x128xf32>
    %15 = arith.addf %10, %14 : vector<256x128xf32>
    %c0_16 = arith.constant 0 : index
    %c1_17 = arith.constant 1 : index
    %c0_18 = arith.constant 0 : index
    %c0_19 = arith.constant 0 : index
    %16 = vector.load %arg1[%c0_16, %c1_17, %c0_18, %c0_19] : memref<1x18x18x128xbf16, #tpu.memory_space<vmem>>, vector<1x16x16x128xbf16>
    %17 = vector.shape_cast %16 : vector<1x16x16x128xbf16> to vector<256x128xbf16>
    %c384 = arith.constant 384 : index
    %c0_20 = arith.constant 0 : index
    %18 = vector.load %arg2[%c384, %c0_20] : memref<1152x128xbf16, #tpu.memory_space<vmem>>, vector<128x128xbf16>
    %cst_21 = arith.constant dense<0.000000e+00> : vector<256x128xf32>
    %19 = tpu.matmul %17, %18, %cst_21 {dimension_numbers = #tpu.dot_dimension_numbers<[1], [0], [0], [1], [0, 0, 1, 1], [], []>} : vector<256x128xbf16>, vector<128x128xbf16>, vector<256x128xf32> -> vector<256x128xf32>
    %20 = arith.addf %15, %19 : vector<256x128xf32>
    %c0_22 = arith.constant 0 : index
    %c1_23 = arith.constant 1 : index
    %c1_24 = arith.constant 1 : index
    %c0_25 = arith.constant 0 : index
    %21 = vector.load %arg1[%c0_22, %c1_23, %c1_24, %c0_25] : memref<1x18x18x128xbf16, #tpu.memory_space<vmem>>, vector<1x16x16x128xbf16>
    %22 = vector.shape_cast %21 : vector<1x16x16x128xbf16> to vector<256x128xbf16>
    %c512 = arith.constant 512 : index
    %c0_26 = arith.constant 0 : index
    %23 = vector.load %arg2[%c512, %c0_26] : memref<1152x128xbf16, #tpu.memory_space<vmem>>, vector<128x128xbf16>
    %cst_27 = arith.constant dense<0.000000e+00> : vector<256x128xf32>
    %24 = tpu.matmul %22, %23, %cst_27 {dimension_numbers = #tpu.dot_dimension_numbers<[1], [0], [0], [1], [0, 0, 1, 1], [], []>} : vector<256x128xbf16>, vector<128x128xbf16>, vector<256x128xf32> -> vector<256x128xf32>
    %25 = arith.addf %20, %24 : vector<256x128xf32>
    %c0_28 = arith.constant 0 : index
    %c1_29 = arith.constant 1 : index
    %c2_30 = arith.constant 2 : index
    %c0_31 = arith.constant 0 : index
    %26 = vector.load %arg1[%c0_28, %c1_29, %c2_30, %c0_31] : memref<1x18x18x128xbf16, #tpu.memory_space<vmem>>, vector<1x16x16x128xbf16>
    %27 = vector.shape_cast %26 : vector<1x16x16x128xbf16> to vector<256x128xbf16>
    %c640 = arith.constant 640 : index
    %c0_32 = arith.constant 0 : index
    %28 = vector.load %arg2[%c640, %c0_32] : memref<1152x128xbf16, #tpu.memory_space<vmem>>, vector<128x128xbf16>
    %cst_33 = arith.constant dense<0.000000e+00> : vector<256x128xf32>
    %29 = tpu.matmul %27, %28, %cst_33 {dimension_numbers = #tpu.dot_dimension_numbers<[1], [0], [0], [1], [0, 0, 1, 1], [], []>} : vector<256x128xbf16>, vector<128x128xbf16>, vector<256x128xf32> -> vector<256x128xf32>
    %30 = arith.addf %25, %29 : vector<256x128xf32>
    %c0_34 = arith.constant 0 : index
    %c2_35 = arith.constant 2 : index
    %c0_36 = arith.constant 0 : index
    %c0_37 = arith.constant 0 : index
    %31 = vector.load %arg1[%c0_34, %c2_35, %c0_36, %c0_37] : memref<1x18x18x128xbf16, #tpu.memory_space<vmem>>, vector<1x16x16x128xbf16>
    %32 = vector.shape_cast %31 : vector<1x16x16x128xbf16> to vector<256x128xbf16>
    %c768 = arith.constant 768 : index
    %c0_38 = arith.constant 0 : index
    %33 = vector.load %arg2[%c768, %c0_38] : memref<1152x128xbf16, #tpu.memory_space<vmem>>, vector<128x128xbf16>
    %cst_39 = arith.constant dense<0.000000e+00> : vector<256x128xf32>
    %34 = tpu.matmul %32, %33, %cst_39 {dimension_numbers = #tpu.dot_dimension_numbers<[1], [0], [0], [1], [0, 0, 1, 1], [], []>} : vector<256x128xbf16>, vector<128x128xbf16>, vector<256x128xf32> -> vector<256x128xf32>
    %35 = arith.addf %30, %34 : vector<256x128xf32>
    %c0_40 = arith.constant 0 : index
    %c2_41 = arith.constant 2 : index
    %c1_42 = arith.constant 1 : index
    %c0_43 = arith.constant 0 : index
    %36 = vector.load %arg1[%c0_40, %c2_41, %c1_42, %c0_43] : memref<1x18x18x128xbf16, #tpu.memory_space<vmem>>, vector<1x16x16x128xbf16>
    %37 = vector.shape_cast %36 : vector<1x16x16x128xbf16> to vector<256x128xbf16>
    %c896 = arith.constant 896 : index
    %c0_44 = arith.constant 0 : index
    %38 = vector.load %arg2[%c896, %c0_44] : memref<1152x128xbf16, #tpu.memory_space<vmem>>, vector<128x128xbf16>
    %cst_45 = arith.constant dense<0.000000e+00> : vector<256x128xf32>
    %39 = tpu.matmul %37, %38, %cst_45 {dimension_numbers = #tpu.dot_dimension_numbers<[1], [0], [0], [1], [0, 0, 1, 1], [], []>} : vector<256x128xbf16>, vector<128x128xbf16>, vector<256x128xf32> -> vector<256x128xf32>
    %40 = arith.addf %35, %39 : vector<256x128xf32>
    %c0_46 = arith.constant 0 : index
    %c2_47 = arith.constant 2 : index
    %c2_48 = arith.constant 2 : index
    %c0_49 = arith.constant 0 : index
    %41 = vector.load %arg1[%c0_46, %c2_47, %c2_48, %c0_49] : memref<1x18x18x128xbf16, #tpu.memory_space<vmem>>, vector<1x16x16x128xbf16>
    %42 = vector.shape_cast %41 : vector<1x16x16x128xbf16> to vector<256x128xbf16>
    %c1024 = arith.constant 1024 : index
    %c0_50 = arith.constant 0 : index
    %43 = vector.load %arg2[%c1024, %c0_50] : memref<1152x128xbf16, #tpu.memory_space<vmem>>, vector<128x128xbf16>
    %cst_51 = arith.constant dense<0.000000e+00> : vector<256x128xf32>
    %44 = tpu.matmul %42, %43, %cst_51 {dimension_numbers = #tpu.dot_dimension_numbers<[1], [0], [0], [1], [0, 0, 1, 1], [], []>} : vector<256x128xbf16>, vector<128x128xbf16>, vector<256x128xf32> -> vector<256x128xf32>
    %45 = arith.addf %40, %44 : vector<256x128xf32>
    %c0_52 = arith.constant 0 : index
    %c0_53 = arith.constant 0 : index
    %46 = vector.load %arg3[%c0_52, %c0_53] : memref<1x128xf32, #tpu.memory_space<vmem>>, vector<1x128xf32>
    %47 = vector.broadcast %46 : vector<1x128xf32> to vector<256x128xf32>
    %48 = arith.addf %45, %47 : vector<256x128xf32>
    %cst_54 = arith.constant 0.000000e+00 : f32
    %49 = vector.broadcast %cst_54 : f32 to vector<256x128xf32>
    %50 = arith.maximumf %48, %49 : vector<256x128xf32>
    %cst_55 = arith.constant 0.000000e+00 : bf16
    %51 = vector.broadcast %cst_55 : bf16 to vector<1x1x18x128xbf16>
    %c0_56 = arith.constant 0 : index
    %c0_57 = arith.constant 0 : index
    %c0_58 = arith.constant 0 : index
    %c0_59 = arith.constant 0 : index
    %52 = vector.load %arg7[%c0_56, %c0_57, %c0_58, %c0_59] : memref<1x18x18x128xbf16, #tpu.memory_space<vmem>>, vector<1x1x18x128xbf16>
    tpu.vector_store %arg7[%c0_56, %c0_57, %c0_58, %c0_59], %51 {strides = array<i32>} : memref<1x18x18x128xbf16, #tpu.memory_space<vmem>>, vector<1x1x18x128xbf16>,
    %cst_60 = arith.constant 0.000000e+00 : bf16
    %53 = vector.broadcast %cst_60 : bf16 to vector<1x1x18x128xbf16>
    %c0_61 = arith.constant 0 : index
    %c17 = arith.constant 17 : index
    %c0_62 = arith.constant 0 : index
    %c0_63 = arith.constant 0 : index
    %54 = vector.load %arg7[%c0_61, %c17, %c0_62, %c0_63] : memref<1x18x18x128xbf16, #tpu.memory_space<vmem>>, vector<1x1x18x128xbf16>
    tpu.vector_store %arg7[%c0_61, %c17, %c0_62, %c0_63], %53 {strides = array<i32>} : memref<1x18x18x128xbf16, #tpu.memory_space<vmem>>, vector<1x1x18x128xbf16>,
    %cst_64 = arith.constant 0.000000e+00 : bf16
    %55 = vector.broadcast %cst_64 : bf16 to vector<1x18x1x128xbf16>
    %c0_65 = arith.constant 0 : index
    %c0_66 = arith.constant 0 : index
    %c0_67 = arith.constant 0 : index
    %c0_68 = arith.constant 0 : index
    %56 = vector.load %arg7[%c0_65, %c0_66, %c0_67, %c0_68] : memref<1x18x18x128xbf16, #tpu.memory_space<vmem>>, vector<1x18x1x128xbf16>
    tpu.vector_store %arg7[%c0_65, %c0_66, %c0_67, %c0_68], %55 {strides = array<i32>} : memref<1x18x18x128xbf16, #tpu.memory_space<vmem>>, vector<1x18x1x128xbf16>,
    %cst_69 = arith.constant 0.000000e+00 : bf16
    %57 = vector.broadcast %cst_69 : bf16 to vector<1x18x1x128xbf16>
    %c0_70 = arith.constant 0 : index
    %c0_71 = arith.constant 0 : index
    %c17_72 = arith.constant 17 : index
    %c0_73 = arith.constant 0 : index
    %58 = vector.load %arg7[%c0_70, %c0_71, %c17_72, %c0_73] : memref<1x18x18x128xbf16, #tpu.memory_space<vmem>>, vector<1x18x1x128xbf16>
    tpu.vector_store %arg7[%c0_70, %c0_71, %c17_72, %c0_73], %57 {strides = array<i32>} : memref<1x18x18x128xbf16, #tpu.memory_space<vmem>>, vector<1x18x1x128xbf16>,
    %59 = vector.shape_cast %50 : vector<256x128xf32> to vector<1x16x16x128xf32>
    %60 = arith.truncf %59 : vector<1x16x16x128xf32> to vector<1x16x16x128xbf16>
    %c0_74 = arith.constant 0 : index
    %c1_75 = arith.constant 1 : index
    %c1_76 = arith.constant 1 : index
    %c0_77 = arith.constant 0 : index
    %61 = vector.load %arg7[%c0_74, %c1_75, %c1_76, %c0_77] : memref<1x18x18x128xbf16, #tpu.memory_space<vmem>>, vector<1x16x16x128xbf16>
    tpu.vector_store %arg7[%c0_74, %c1_75, %c1_76, %c0_77], %60 {strides = array<i32>} : memref<1x18x18x128xbf16, #tpu.memory_space<vmem>>, vector<1x16x16x128xbf16>,
    %cst_78 = arith.constant 0.000000e+00 : f32
    %62 = vector.broadcast %cst_78 : f32 to vector<256x128xf32>
    %c0_79 = arith.constant 0 : index
    %c0_80 = arith.constant 0 : index
    %c0_81 = arith.constant 0 : index
    %c0_82 = arith.constant 0 : index
    %63 = vector.load %arg7[%c0_79, %c0_80, %c0_81, %c0_82] : memref<1x18x18x128xbf16, #tpu.memory_space<vmem>>, vector<1x16x16x128xbf16>
    %64 = vector.shape_cast %63 : vector<1x16x16x128xbf16> to vector<256x128xbf16>
    %c0_83 = arith.constant 0 : index
    %c0_84 = arith.constant 0 : index
    %65 = vector.load %arg4[%c0_83, %c0_84] : memref<1152x128xbf16, #tpu.memory_space<vmem>>, vector<128x128xbf16>
    %cst_85 = arith.constant dense<0.000000e+00> : vector<256x128xf32>
    %66 = tpu.matmul %64, %65, %cst_85 {dimension_numbers = #tpu.dot_dimension_numbers<[1], [0], [0], [1], [0, 0, 1, 1], [], []>} : vector<256x128xbf16>, vector<128x128xbf16>, vector<256x128xf32> -> vector<256x128xf32>
    %67 = arith.addf %62, %66 : vector<256x128xf32>
    %c0_86 = arith.constant 0 : index
    %c0_87 = arith.constant 0 : index
    %c1_88 = arith.constant 1 : index
    %c0_89 = arith.constant 0 : index
    %68 = vector.load %arg7[%c0_86, %c0_87, %c1_88, %c0_89] : memref<1x18x18x128xbf16, #tpu.memory_space<vmem>>, vector<1x16x16x128xbf16>
    %69 = vector.shape_cast %68 : vector<1x16x16x128xbf16> to vector<256x128xbf16>
    %c128_90 = arith.constant 128 : index
    %c0_91 = arith.constant 0 : index
    %70 = vector.load %arg4[%c128_90, %c0_91] : memref<1152x128xbf16, #tpu.memory_space<vmem>>, vector<128x128xbf16>
    %cst_92 = arith.constant dense<0.000000e+00> : vector<256x128xf32>
    %71 = tpu.matmul %69, %70, %cst_92 {dimension_numbers = #tpu.dot_dimension_numbers<[1], [0], [0], [1], [0, 0, 1, 1], [], []>} : vector<256x128xbf16>, vector<128x128xbf16>, vector<256x128xf32> -> vector<256x128xf32>
    %72 = arith.addf %67, %71 : vector<256x128xf32>
    %c0_93 = arith.constant 0 : index
    %c0_94 = arith.constant 0 : index
    %c2_95 = arith.constant 2 : index
    %c0_96 = arith.constant 0 : index
    %73 = vector.load %arg7[%c0_93, %c0_94, %c2_95, %c0_96] : memref<1x18x18x128xbf16, #tpu.memory_space<vmem>>, vector<1x16x16x128xbf16>
    %74 = vector.shape_cast %73 : vector<1x16x16x128xbf16> to vector<256x128xbf16>
    %c256_97 = arith.constant 256 : index
    %c0_98 = arith.constant 0 : index
    %75 = vector.load %arg4[%c256_97, %c0_98] : memref<1152x128xbf16, #tpu.memory_space<vmem>>, vector<128x128xbf16>
    %cst_99 = arith.constant dense<0.000000e+00> : vector<256x128xf32>
    %76 = tpu.matmul %74, %75, %cst_99 {dimension_numbers = #tpu.dot_dimension_numbers<[1], [0], [0], [1], [0, 0, 1, 1], [], []>} : vector<256x128xbf16>, vector<128x128xbf16>, vector<256x128xf32> -> vector<256x128xf32>
    %77 = arith.addf %72, %76 : vector<256x128xf32>
    %c0_100 = arith.constant 0 : index
    %c1_101 = arith.constant 1 : index
    %c0_102 = arith.constant 0 : index
    %c0_103 = arith.constant 0 : index
    %78 = vector.load %arg7[%c0_100, %c1_101, %c0_102, %c0_103] : memref<1x18x18x128xbf16, #tpu.memory_space<vmem>>, vector<1x16x16x128xbf16>
    %79 = vector.shape_cast %78 : vector<1x16x16x128xbf16> to vector<256x128xbf16>
    %c384_104 = arith.constant 384 : index
    %c0_105 = arith.constant 0 : index
    %80 = vector.load %arg4[%c384_104, %c0_105] : memref<1152x128xbf16, #tpu.memory_space<vmem>>, vector<128x128xbf16>
    %cst_106 = arith.constant dense<0.000000e+00> : vector<256x128xf32>
    %81 = tpu.matmul %79, %80, %cst_106 {dimension_numbers = #tpu.dot_dimension_numbers<[1], [0], [0], [1], [0, 0, 1, 1], [], []>} : vector<256x128xbf16>, vector<128x128xbf16>, vector<256x128xf32> -> vector<256x128xf32>
    %82 = arith.addf %77, %81 : vector<256x128xf32>
    %c0_107 = arith.constant 0 : index
    %c1_108 = arith.constant 1 : index
    %c1_109 = arith.constant 1 : index
    %c0_110 = arith.constant 0 : index
    %83 = vector.load %arg7[%c0_107, %c1_108, %c1_109, %c0_110] : memref<1x18x18x128xbf16, #tpu.memory_space<vmem>>, vector<1x16x16x128xbf16>
    %84 = vector.shape_cast %83 : vector<1x16x16x128xbf16> to vector<256x128xbf16>
    %c512_111 = arith.constant 512 : index
    %c0_112 = arith.constant 0 : index
    %85 = vector.load %arg4[%c512_111, %c0_112] : memref<1152x128xbf16, #tpu.memory_space<vmem>>, vector<128x128xbf16>
    %cst_113 = arith.constant dense<0.000000e+00> : vector<256x128xf32>
    %86 = tpu.matmul %84, %85, %cst_113 {dimension_numbers = #tpu.dot_dimension_numbers<[1], [0], [0], [1], [0, 0, 1, 1], [], []>} : vector<256x128xbf16>, vector<128x128xbf16>, vector<256x128xf32> -> vector<256x128xf32>
    %87 = arith.addf %82, %86 : vector<256x128xf32>
    %c0_114 = arith.constant 0 : index
    %c1_115 = arith.constant 1 : index
    %c2_116 = arith.constant 2 : index
    %c0_117 = arith.constant 0 : index
    %88 = vector.load %arg7[%c0_114, %c1_115, %c2_116, %c0_117] : memref<1x18x18x128xbf16, #tpu.memory_space<vmem>>, vector<1x16x16x128xbf16>
    %89 = vector.shape_cast %88 : vector<1x16x16x128xbf16> to vector<256x128xbf16>
    %c640_118 = arith.constant 640 : index
    %c0_119 = arith.constant 0 : index
    %90 = vector.load %arg4[%c640_118, %c0_119] : memref<1152x128xbf16, #tpu.memory_space<vmem>>, vector<128x128xbf16>
    %cst_120 = arith.constant dense<0.000000e+00> : vector<256x128xf32>
    %91 = tpu.matmul %89, %90, %cst_120 {dimension_numbers = #tpu.dot_dimension_numbers<[1], [0], [0], [1], [0, 0, 1, 1], [], []>} : vector<256x128xbf16>, vector<128x128xbf16>, vector<256x128xf32> -> vector<256x128xf32>
    %92 = arith.addf %87, %91 : vector<256x128xf32>
    %c0_121 = arith.constant 0 : index
    %c2_122 = arith.constant 2 : index
    %c0_123 = arith.constant 0 : index
    %c0_124 = arith.constant 0 : index
    %93 = vector.load %arg7[%c0_121, %c2_122, %c0_123, %c0_124] : memref<1x18x18x128xbf16, #tpu.memory_space<vmem>>, vector<1x16x16x128xbf16>
    %94 = vector.shape_cast %93 : vector<1x16x16x128xbf16> to vector<256x128xbf16>
    %c768_125 = arith.constant 768 : index
    %c0_126 = arith.constant 0 : index
    %95 = vector.load %arg4[%c768_125, %c0_126] : memref<1152x128xbf16, #tpu.memory_space<vmem>>, vector<128x128xbf16>
    %cst_127 = arith.constant dense<0.000000e+00> : vector<256x128xf32>
    %96 = tpu.matmul %94, %95, %cst_127 {dimension_numbers = #tpu.dot_dimension_numbers<[1], [0], [0], [1], [0, 0, 1, 1], [], []>} : vector<256x128xbf16>, vector<128x128xbf16>, vector<256x128xf32> -> vector<256x128xf32>
    %97 = arith.addf %92, %96 : vector<256x128xf32>
    %c0_128 = arith.constant 0 : index
    %c2_129 = arith.constant 2 : index
    %c1_130 = arith.constant 1 : index
    %c0_131 = arith.constant 0 : index
    %98 = vector.load %arg7[%c0_128, %c2_129, %c1_130, %c0_131] : memref<1x18x18x128xbf16, #tpu.memory_space<vmem>>, vector<1x16x16x128xbf16>
    %99 = vector.shape_cast %98 : vector<1x16x16x128xbf16> to vector<256x128xbf16>
    %c896_132 = arith.constant 896 : index
    %c0_133 = arith.constant 0 : index
    %100 = vector.load %arg4[%c896_132, %c0_133] : memref<1152x128xbf16, #tpu.memory_space<vmem>>, vector<128x128xbf16>
    %cst_134 = arith.constant dense<0.000000e+00> : vector<256x128xf32>
    %101 = tpu.matmul %99, %100, %cst_134 {dimension_numbers = #tpu.dot_dimension_numbers<[1], [0], [0], [1], [0, 0, 1, 1], [], []>} : vector<256x128xbf16>, vector<128x128xbf16>, vector<256x128xf32> -> vector<256x128xf32>
    %102 = arith.addf %97, %101 : vector<256x128xf32>
    %c0_135 = arith.constant 0 : index
    %c2_136 = arith.constant 2 : index
    %c2_137 = arith.constant 2 : index
    %c0_138 = arith.constant 0 : index
    %103 = vector.load %arg7[%c0_135, %c2_136, %c2_137, %c0_138] : memref<1x18x18x128xbf16, #tpu.memory_space<vmem>>, vector<1x16x16x128xbf16>
    %104 = vector.shape_cast %103 : vector<1x16x16x128xbf16> to vector<256x128xbf16>
    %c1024_139 = arith.constant 1024 : index
    %c0_140 = arith.constant 0 : index
    %105 = vector.load %arg4[%c1024_139, %c0_140] : memref<1152x128xbf16, #tpu.memory_space<vmem>>, vector<128x128xbf16>
    %cst_141 = arith.constant dense<0.000000e+00> : vector<256x128xf32>
    %106 = tpu.matmul %104, %105, %cst_141 {dimension_numbers = #tpu.dot_dimension_numbers<[1], [0], [0], [1], [0, 0, 1, 1], [], []>} : vector<256x128xbf16>, vector<128x128xbf16>, vector<256x128xf32> -> vector<256x128xf32>
    %107 = arith.addf %102, %106 : vector<256x128xf32>
    %c0_142 = arith.constant 0 : index
    %c0_143 = arith.constant 0 : index
    %108 = vector.load %arg5[%c0_142, %c0_143] : memref<1x128xf32, #tpu.memory_space<vmem>>, vector<1x128xf32>
    %109 = vector.broadcast %108 : vector<1x128xf32> to vector<256x128xf32>
    %110 = arith.addf %107, %109 : vector<256x128xf32>
    %c0_144 = arith.constant 0 : index
    %c1_145 = arith.constant 1 : index
    %c1_146 = arith.constant 1 : index
    %c0_147 = arith.constant 0 : index
    %111 = vector.load %arg1[%c0_144, %c1_145, %c1_146, %c0_147] : memref<1x18x18x128xbf16, #tpu.memory_space<vmem>>, vector<1x16x16x128xbf16>
    %112 = vector.shape_cast %111 : vector<1x16x16x128xbf16> to vector<256x128xbf16>
    %113 = arith.extf %112 : vector<256x128xbf16> to vector<256x128xf32>
    %114 = arith.addf %110, %113 : vector<256x128xf32>
    %cst_148 = arith.constant 0.000000e+00 : f32
    %115 = vector.broadcast %cst_148 : f32 to vector<256x128xf32>
    %116 = arith.maximumf %114, %115 : vector<256x128xf32>
    %117 = vector.shape_cast %116 : vector<256x128xf32> to vector<1x16x16x128xf32>
    %c0_149 = arith.constant 0 : index
    %c0_150 = arith.constant 0 : index
    %c0_151 = arith.constant 0 : index
    %c0_152 = arith.constant 0 : index
    %118 = vector.load %arg6[%c0_149, %c0_150, %c0_151, %c0_152] : memref<1x16x16x128xf32, #tpu.memory_space<vmem>>, vector<1x16x16x128xf32>
    tpu.vector_store %arg6[%c0_149, %c0_150, %c0_151, %c0_152], %117 {strides = array<i32>} : memref<1x16x16x128xf32, #tpu.memory_space<vmem>>, vector<1x16x16x128xf32>,
    return
  }
  func.func @transform_0(%arg0: i32) -> (i32, i32, i32, i32) {
    %c0_i32 = arith.constant 0 : i32
    %c0_i32_0 = arith.constant 0 : i32
    %c0_i32_1 = arith.constant 0 : i32
    %c0_i32_2 = arith.constant 0 : i32
    return %arg0, %c0_i32, %c0_i32_0, %c0_i32_1 : i32, i32, i32, i32
  }
  func.func @transform_1(%arg0: i32) -> (i32, i32) {
    %c0_i32 = arith.constant 0 : i32
    %c0_i32_0 = arith.constant 0 : i32
    %c0_i32_1 = arith.constant 0 : i32
    return %c0_i32, %c0_i32_0 : i32, i32
  }
  func.func @transform_2(%arg0: i32) -> (i32, i32) {
    %c0_i32 = arith.constant 0 : i32
    %c0_i32_0 = arith.constant 0 : i32
    %c0_i32_1 = arith.constant 0 : i32
    return %c0_i32, %c0_i32_0 : i32, i32
  }
  func.func @transform_3(%arg0: i32) -> (i32, i32) {
    %c0_i32 = arith.constant 0 : i32
    %c0_i32_0 = arith.constant 0 : i32
    %c0_i32_1 = arith.constant 0 : i32
    return %c0_i32, %c0_i32_0 : i32, i32
  }
  func.func @transform_4(%arg0: i32) -> (i32, i32) {
    %c0_i32 = arith.constant 0 : i32
    %c0_i32_0 = arith.constant 0 : i32
    %c0_i32_1 = arith.constant 0 : i32
    return %c0_i32, %c0_i32_0 : i32, i32
  }
  func.func @transform_5(%arg0: i32) -> (i32, i32, i32, i32) {
    %c0_i32 = arith.constant 0 : i32
    %c0_i32_0 = arith.constant 0 : i32
    %c0_i32_1 = arith.constant 0 : i32
    %c0_i32_2 = arith.constant 0 : i32
    return %arg0, %c0_i32, %c0_i32_0, %c0_i32_1 : i32, i32, i32, i32
  }
}

</mosaic_0001>

<llo_original>
// kernel: tpu_custom_call.1
$region0: #{tpu_custom_call.1}
  #allocation0 [shape = 'u32[]', space=smem, size = 0x4, offset = 0x4, fixed_abs, tag = 'smem constant byte address 0x4 - core index']
  #allocation1 [shape = 'u32[144,128]{1,0:T(1,128)}', space=vmem, size = 0x12000, scoped, tag = 'internal scratch']
  #allocation2 [shape = 'bf16[1,18,18,128]{3,2,1,0:T(8,128)(2,1)}', space=vmem, size = 0x1b000, scoped, tag = 'scratch operand']
  %s0 = inlined_call_operand.vmem [shape: bf16[2,18,18,128], index: 0, kind: input, shape index: {}]
  %s1 = inlined_call_operand.vmem [shape: bf16[1152,128], index: 1, kind: input, shape index: {}]
  %s2 = inlined_call_operand.vmem [shape: f32[1,128], index: 2, kind: input, shape index: {}]
  %s3 = inlined_call_operand.hbm [shape: bf16[1152,128], index: 3, kind: input, shape index: {}]
  %s4 = inlined_call_operand.vmem [shape: f32[1,128], index: 4, kind: input, shape index: {}]
  %s5 = inlined_call_operand.hbm [shape: f32[2,16,16,128], index: 5, kind: output, shape index: {}]
  %s6 = sld [smem:[#allocation0]]
  $region57: #{tpu_custom_call.1} parent=0
    _
  %s8 = ssub.s32 1, %s6
  %s9 = scalar_select 0, %s8, %s6
  $region1: #{tpu_custom_call.1} parent=0
    #allocation3 [shape = 'u8[294912]{0}', space=vmem, size = 0x48000, scoped, tag = 'input window, operand 3, single buffered']
    #allocation4 [shape = 's32[2]{0}', space=sflag, size = 0x8, scoped, tag = 'scoped memory for tpu_custom_call.1']
    #allocation5 [shape = 's32[2]{0}', space=sflag, size = 0x8, scoped, tag = 'scoped memory for tpu_custom_call.1']
    #allocation6 [shape = 'u8[262144]{0}', space=vmem, size = 0x40000, scoped, tag = 'output window, operand 0']
    %10 = vsyncpa [#allocation4], 0
    %11 = vsyncpa [#allocation5], 0
    %s12 = scalar_lea.sflag [#allocation5], 1
    %13 = vsyncpa %s12, 0
    loop: start=0, step=1, limit=4
    $region2: #{tpu_custom_call.1} parent=1 // loop_pre_header
      _
    $region3: #{tpu_custom_call.1} parent=1 // loop_header
      %s15 = sphi 0, %s19
      %p16 = scmp.ge.s32.totalorder %s15, 4
      %s25 = sphi 0, %s27
      %s28 = sphi 0, %s25
      %s29 = sphi 0, %s28
      %s45 = sphi 0, %s29
      %s49 = sphi 0, %s49
      %s51 = sphi 0, %s49
      %s52 = sphi 0, %s51
      %s66 = sphi 0, %s52
      %s70 = sphi 0, %s70
      %s72 = sphi 0, %s70
      %s73 = sphi 0, %s72
      %s87 = sphi 0, %s73
      %s91 = sphi 0, %s91
      %s93 = sphi 0, %s91
      %s94 = sphi 0, %s93
      %s108 = sphi 0, %s94
      %s112 = sphi 0, %s112
      %s114 = sphi 0, %s112
      %s115 = sphi 0, %s114
      %s129 = sphi 0, %s115
      %s135 = sphi 0, %s137
      %s138 = sphi 0, %s135
      %s139 = sphi 0, %s138
      %s155 = sphi 0, %s139
    $region4: #{tpu_custom_call.1} parent=1 // loop_header_branch
      %18 = sbr.rel (%p16) target = $region8
    $region5: #{tpu_custom_call.1} parent=1 // loop_body
      %s20 = ssub.s32 %s15, 1
      %s21 = ssub.s32 %s15, 2
      %s22 = sadd.s32 %s15, 1
      %s23 = ssub.s32 %s15, %s22
      %p24 = scmp.eq.s32.totalorder %s23, 0
      %s26 = sadd.s32 %s25, 1
      %s27 = scalar_select %p24, %s25, %s26
      %p30 = pneg %p24
      %p31 = scmp.eq.s32.totalorder %s15, 1
      %p32 = por %p30, %p31
      %p33 = scmp.ne.s32.totalorder %s25, %s28
      %p34 = scmp.eq.s32.totalorder %s15, 0
      %p35 = por %p33, %p34
      %p36 = scmp.ne.s32.totalorder %s25, %s28
      %p37 = scmp.eq.s32.totalorder %s20, 1
      %p38 = por %p36, %p37
      %p39 = scmp.ne.s32.totalorder %s28, %s29
      %p40 = scmp.eq.s32.totalorder %s20, 0
      %p41 = por %p39, %p40
      %p42 = scmp.ne.s32.totalorder %s28, %s29
      %p43 = scmp.eq.s32.totalorder %s21, 1
      %p44 = por %p42, %p43
      %p46 = scmp.ne.s32.totalorder %s29, %s45
      %p47 = scmp.eq.s32.totalorder %s21, 0
      %p48 = por %p46, %p47
      %s50 = sadd.s32 %s49, 1
      %p53 = scmp.eq.s32.totalorder %s15, 1
      %p54 = scmp.ne.s32.totalorder %s49, %s51
      %p55 = scmp.eq.s32.totalorder %s15, 0
      %p56 = por %p54, %p55
      %p57 = scmp.ne.s32.totalorder %s49, %s51
      %p58 = scmp.eq.s32.totalorder %s20, 1
      %p59 = por %p57, %p58
      %p60 = scmp.ne.s32.totalorder %s51, %s52
      %p61 = scmp.eq.s32.totalorder %s20, 0
      %p62 = por %p60, %p61
      %p63 = scmp.ne.s32.totalorder %s51, %s52
      %p64 = scmp.eq.s32.totalorder %s21, 1
      %p65 = por %p63, %p64
      %p67 = scmp.ne.s32.totalorder %s52, %s66
      %p68 = scmp.eq.s32.totalorder %s21, 0
      %p69 = por %p67, %p68
      %s71 = sadd.s32 %s70, 1
      %p74 = scmp.eq.s32.totalorder %s15, 1
      %p75 = scmp.ne.s32.totalorder %s70, %s72
      %p76 = scmp.eq.s32.totalorder %s15, 0
      %p77 = por %p75, %p76
      %p78 = scmp.ne.s32.totalorder %s70, %s72
      %p79 = scmp.eq.s32.totalorder %s20, 1
      %p80 = por %p78, %p79
      %p81 = scmp.ne.s32.totalorder %s72, %s73
      %p82 = scmp.eq.s32.totalorder %s20, 0
      %p83 = por %p81, %p82
      %p84 = scmp.ne.s32.totalorder %s72, %s73
      %p85 = scmp.eq.s32.totalorder %s21, 1
      %p86 = por %p84, %p85
      %p88 = scmp.ne.s32.totalorder %s73, %s87
      %p89 = scmp.eq.s32.totalorder %s21, 0
      %p90 = por %p88, %p89
      %s92 = sadd.s32 %s91, 1
      %p95 = scmp.eq.s32.totalorder %s15, 1
      %p96 = scmp.ne.s32.totalorder %s91, %s93
      %p97 = scmp.eq.s32.totalorder %s15, 0
      %p98 = por %p96, %p97
      %p99 = scmp.ne.s32.totalorder %s91, %s93
      %p100 = scmp.eq.s32.totalorder %s20, 1
      %p101 = por %p99, %p100
      %p102 = scmp.ne.s32.totalorder %s93, %s94
      %p103 = scmp.eq.s32.totalorder %s20, 0
      %p104 = por %p102, %p103
      %p105 = scmp.ne.s32.totalorder %s93, %s94
      %p106 = scmp.eq.s32.totalorder %s21, 1
      %p107 = por %p105, %p106
      %p109 = scmp.ne.s32.totalorder %s94, %s108
      %p110 = scmp.eq.s32.totalorder %s21, 0
      %p111 = por %p109, %p110
      %s113 = sadd.s32 %s112, 1
      %p116 = scmp.eq.s32.totalorder %s15, 1
      %p117 = scmp.ne.s32.totalorder %s112, %s114
      %p118 = scmp.eq.s32.totalorder %s15, 0
      %p119 = por %p117, %p118
      %p120 = scmp.ne.s32.totalorder %s112, %s114
      %p121 = scmp.eq.s32.totalorder %s20, 1
      %p122 = por %p120, %p121
      %p123 = scmp.ne.s32.totalorder %s114, %s115
      %p124 = scmp.eq.s32.totalorder %s20, 0
      %p125 = por %p123, %p124
      %p126 = scmp.ne.s32.totalorder %s114, %s115
      %p127 = scmp.eq.s32.totalorder %s21, 1
      %p128 = por %p126, %p127
      %p130 = scmp.ne.s32.totalorder %s115, %s129
      %p131 = scmp.eq.s32.totalorder %s21, 0
      %p132 = por %p130, %p131
      %s133 = ssub.s32 %s15, %s22
      %p134 = scmp.eq.s32.totalorder %s133, 0
      %s136 = sadd.s32 %s135, 1
      %s137 = scalar_select %p134, %s135, %s136
      %p140 = pneg %p134
      %p141 = scmp.eq.s32.totalorder %s15, 1
      %p142 = por %p140, %p141
      %p143 = scmp.ne.s32.totalorder %s135, %s138
      %p144 = scmp.eq.s32.totalorder %s15, 0
      %p145 = por %p143, %p144
      %p146 = scmp.ne.s32.totalorder %s135, %s138
      %p147 = scmp.eq.s32.totalorder %s20, 1
      %p148 = por %p146, %p147
      %p149 = scmp.ne.s32.totalorder %s138, %s139
      %p150 = scmp.eq.s32.totalorder %s20, 0
      %p151 = por %p149, %p150
      %p152 = scmp.ne.s32.totalorder %s138, %s139
      %p153 = scmp.eq.s32.totalorder %s21, 1
      %p154 = por %p152, %p153
      %p156 = scmp.ne.s32.totalorder %s139, %s155
      %p157 = scmp.eq.s32.totalorder %s21, 0
      %p158 = por %p156, %p157
      %p159 = scmp.le.s32.totalorder 1, %s15
      %p160 = scmp.lt.s32.totalorder %s15, 3
      %p161 = pnand %p159, %p160
      %p162 = pneg %p161
      // Predicated region
      $region9: #{tpu_custom_call.1} parent=5 // pred_check
        _
      $region10: #{tpu_custom_call.1} parent=5 // pred_check_branch
        %164 = sbr.rel (%p161) target = $region12
      $region11: #{tpu_custom_call.1} parent=5 // pred_region
        %s165 = ssub.s32 %s15, 1
        // Predicated region
        $region13: #{tpu_custom_call.1} parent=11 // pred_check
          %p166 = pneg %p62
        $region14: #{tpu_custom_call.1} parent=11 // pred_check_branch
          %168 = sbr.rel (%p166) target = $region16
        $region15: #{tpu_custom_call.1} parent=11 // pred_region
          _
        $region16: #{tpu_custom_call.1} parent=11 // pred_fallthru
          _
        // Predicated region
        $region17: #{tpu_custom_call.1} parent=11 // pred_check
          %p169 = pneg %p83
        $region18: #{tpu_custom_call.1} parent=11 // pred_check_branch
          %171 = sbr.rel (%p169) target = $region20
        $region19: #{tpu_custom_call.1} parent=11 // pred_region
          _
        $region20: #{tpu_custom_call.1} parent=11 // pred_fallthru
          _
        // Predicated region
        $region21: #{tpu_custom_call.1} parent=11 // pred_check
          %p172 = pneg %p104
        $region22: #{tpu_custom_call.1} parent=11 // pred_check_branch
          %174 = sbr.rel (%p172) target = $region24
        $region23: #{tpu_custom_call.1} parent=11 // pred_region
          %s176 = ssub.s32 9216, 9216
          %177 = vsyncadd [#allocation4], %s176
          %s178 = sshll.u32 [#allocation3], 4
          %s179 = int_to_ptr.vmem [resolvable:$true] %s178
          %184 = dma.hbm_to_vmem [thread:$0]  %s3, 9216, %s179, [#allocation4], 64, 64, 4
        $region24: #{tpu_custom_call.1} parent=11 // pred_fallthru
          _
        // Predicated region
        $region25: #{tpu_custom_call.1} parent=11 // pred_check
          %p185 = pneg %p125
        $region26: #{tpu_custom_call.1} parent=11 // pred_check_branch
          %187 = sbr.rel (%p185) target = $region28
        $region27: #{tpu_custom_call.1} parent=11 // pred_region
          _
        $region28: #{tpu_custom_call.1} parent=11 // pred_fallthru
          _
      $region12: #{tpu_custom_call.1} parent=5 // pred_fallthru
        _
      %p188 = scmp.lt.s32.totalorder %s15, 2
      // Predicated region
      $region29: #{tpu_custom_call.1} parent=5 // pred_check
        %p189 = pneg %p188
      $region30: #{tpu_custom_call.1} parent=5 // pred_check_branch
        %191 = sbr.rel (%p189) target = $region32
      $region31: #{tpu_custom_call.1} parent=5 // pred_region
        // Predicated region
        $region33: #{tpu_custom_call.1} parent=31 // pred_check
          %p192 = pneg %p35
        $region34: #{tpu_custom_call.1} parent=31 // pred_check_branch
          %194 = sbr.rel (%p192) target = $region36
        $region35: #{tpu_custom_call.1} parent=31 // pred_region
          %p195 = scmp.lt.s32.totalorder %s15, 1
          %s196 = scalar_select %p195, %s15, 1
          %s197 = smul.addr %s196, 54
          %s198 = smul.addr %s197, 4
          %s199 = scalar_lea.vmem %s0, %s198
        $region36: #{tpu_custom_call.1} parent=31 // pred_fallthru
          _
      $region32: #{tpu_custom_call.1} parent=5 // pred_fallthru
        _
      %p200 = scmp.le.s32.totalorder 1, %s15
      %p201 = scmp.lt.s32.totalorder %s15, 3
      %p202 = pnand %p200, %p201
      %p203 = pneg %p202
      // Predicated region
      $region37: #{tpu_custom_call.1} parent=5 // pred_check
        _
      $region38: #{tpu_custom_call.1} parent=5 // pred_check_branch
        %205 = sbr.rel (%p202) target = $region40
      $region39: #{tpu_custom_call.1} parent=5 // pred_region
        %s206 = ssub.s32 %s15, 1
        // Predicated region
        $region41: #{tpu_custom_call.1} parent=39 // pred_check
          %p207 = pneg %p104
        $region42: #{tpu_custom_call.1} parent=39 // pred_check_branch
          %209 = sbr.rel (%p207) target = $region44
        $region43: #{tpu_custom_call.1} parent=39 // pred_region
          %210 = dma.done [#allocation4], 9216
        $region44: #{tpu_custom_call.1} parent=39 // pred_fallthru
          _
        %p211 = scmp.lt.s32.totalorder %s20, 1
        %s212 = scalar_select %p211, %s20, 1
        %s213 = smul.addr %s212, 54
        %s214 = smul.addr %s213, 4
        %s215 = scalar_lea.vmem %s0, %s214
        %p216 = pneg %p41
        %p217 = pneg %p38
        %p218 = pneg %p62
        %p219 = pneg %p59
        %p220 = pneg %p83
        %p221 = pneg %p80
        %p222 = pneg %p104
        %p223 = pneg %p101
        %p224 = pneg %p125
        %p225 = pneg %p122
        %p226 = pneg %p151
        %p227 = pneg %p148
        %s228 = sand.u32 %s138, 1
        %s229 = scalar_lea.sflag [#allocation5], %s228
        %s230 = sand.u32 %s138, 1
        %s231 = smul.addr %s230, 256
        %s232 = scalar_lea.vmem [#allocation6], %s231
        %p233 = scmp.lt.s32.totalorder %s20, 1
        %s234 = scalar_select %p233, %s20, 1
        %s235 = smul.addr %s234, 54
        %s236 = smul.addr %s235, 4
        %s237 = scalar_lea.vmem %s0, %s236
        %v239 = vld [vmem:[%s237] sm:$0xf]
        %v240 = vld [vmem:[%s237 + $0x4] sm:$0xf]
        %v241 = vld [vmem:[%s237 + $0xc] sm:$0xf]
        %v242 = vld [vmem:[%s237 + $0x10] sm:$0xf]
        %v243 = vld [vmem:[%s237 + $0x18] sm:$0xf]
        %v244 = vld [vmem:[%s237 + $0x1c] sm:$0xf]
        %v245 = vld [vmem:[%s237 + $0x24] sm:$0xf]
        %v246 = vld [vmem:[%s237 + $0x28] sm:$0xf]
        %v247 = vld [vmem:[%s237 + $0x30] sm:$0xf]
        %v248 = vld [vmem:[%s237 + $0x34] sm:$0xf]
        %v249 = vld [vmem:[%s237 + $0x3c] sm:$0xf]
        %v250 = vld [vmem:[%s237 + $0x40] sm:$0xf]
        %v251 = vld [vmem:[%s237 + $0x48] sm:$0xf]
        %v252 = vld [vmem:[%s237 + $0x4c] sm:$0xf]
        %v253 = vld [vmem:[%s237 + $0x54] sm:$0xf]
        %v254 = vld [vmem:[%s237 + $0x58] sm:$0xf]
        %v255 = vld [vmem:[%s237 + $0x60] sm:$0xf]
        %v256 = vld [vmem:[%s237 + $0x64] sm:$0xf]
        %v257 = vld [vmem:[%s237 + $0x6c] sm:$0xf]
        %v258 = vld [vmem:[%s237 + $0x70] sm:$0xf]
        %v259 = vld [vmem:[%s237 + $0x78] sm:$0xf]
        %v260 = vld [vmem:[%s237 + $0x7c] sm:$0xf]
        %v261 = vld [vmem:[%s237 + $0x84] sm:$0xf]
        %v262 = vld [vmem:[%s237 + $0x88] sm:$0xf]
        %v263 = vld [vmem:[%s237 + $0x90] sm:$0xf]
        %v264 = vld [vmem:[%s237 + $0x94] sm:$0xf]
        %v265 = vld [vmem:[%s237 + $0x9c] sm:$0xf]
        %v266 = vld [vmem:[%s237 + $0xa0] sm:$0xf]
        %v267 = vld [vmem:[%s237 + $0xa8] sm:$0xf]
        %v268 = vld [vmem:[%s237 + $0xac] sm:$0xf]
        %v269 = vld [vmem:[%s237 + $0xb4] sm:$0xf]
        %v270 = vld [vmem:[%s237 + $0xb8] sm:$0xf]
        %v271 = vld [vmem:[%s1] sm:$0xf]
        %v272 = vld [vmem:[%s1 + $0x4] sm:$0xf]
        %v273 = vld [vmem:[%s1 + $0x8] sm:$0xf]
        %v274 = vld [vmem:[%s1 + $0xc] sm:$0xf]
        %v275 = vld [vmem:[%s1 + $0x10] sm:$0xf]
        %v276 = vld [vmem:[%s1 + $0x14] sm:$0xf]
        %v277 = vld [vmem:[%s1 + $0x18] sm:$0xf]
        %v278 = vld [vmem:[%s1 + $0x1c] sm:$0xf]
        %v279 = vld [vmem:[%s1 + $0x20] sm:$0xf]
        %v280 = vld [vmem:[%s1 + $0x24] sm:$0xf]
        %v281 = vld [vmem:[%s1 + $0x28] sm:$0xf]
        %v282 = vld [vmem:[%s1 + $0x2c] sm:$0xf]
        %v283 = vld [vmem:[%s1 + $0x30] sm:$0xf]
        %v284 = vld [vmem:[%s1 + $0x34] sm:$0xf]
        %v285 = vld [vmem:[%s1 + $0x38] sm:$0xf]
        %v286 = vld [vmem:[%s1 + $0x3c] sm:$0xf]
        %v287 = vld [vmem:[%s237 + $0x8] sm:$0x1]
        %v288 = vld [vmem:[%s237 + $0x14] sm:$0x1]
        %v289 = vld [vmem:[%s237 + $0x20] sm:$0x1]
        %v290 = vld [vmem:[%s237 + $0x2c] sm:$0x1]
        %v291 = vld [vmem:[%s237 + $0x38] sm:$0x1]
        %v292 = vld [vmem:[%s237 + $0x44] sm:$0x1]
        %v293 = vld [vmem:[%s237 + $0x50] sm:$0x1]
        %v294 = vld [vmem:[%s237 + $0x5c] sm:$0x1]
        %v295 = vld [vmem:[%s237 + $0x68] sm:$0x1]
        %v296 = vld [vmem:[%s237 + $0x74] sm:$0x1]
        %v297 = vld [vmem:[%s237 + $0x80] sm:$0x1]
        %v298 = vld [vmem:[%s237 + $0x8c] sm:$0x1]
        %v299 = vld [vmem:[%s237 + $0x98] sm:$0x1]
        %v300 = vld [vmem:[%s237 + $0xa4] sm:$0x1]
        %v301 = vld [vmem:[%s237 + $0xb0] sm:$0x1]
        %v302 = vld [vmem:[%s237 + $0xbc] sm:$0x1]
        %vm303 = vsmask.f32 3328
        %vm304 = vsmask.f32 7440
        %vm305 = vmor %vm303, %vm304
        %v307 = vshrl.u32 %v239, 16
        %v309 = vrot.slane %v307, 4
        %v310 = vshll.u32 %v239, 16
        %v312 = vrot.slane %v310, 5
        %v313 = vor.u32 %v309, %v312
        %v314 = vrot.slane %v313, 4
        %v316 = vshll.u32 %v240, 16
        %v318 = vrot.slane %v316, 5
        %v319 = vsel %vm305, %v314, %v318
        %v320 = vshrl.u32 %v240, 16
        %v322 = vrot.slane %v320, 4
        %v323 = vor.u32 %v322, %v318
        %v324 = vrot.slane %v323, 4
        %v326 = vshll.u32 %v287, 16
        %v328 = vrot.slane %v326, 5
        %v329 = vsel %vm305, %v324, %v328
        %v331 = vshrl.u32 %v241, 16
        %v333 = vrot.slane %v331, 4
        %v334 = vshll.u32 %v241, 16
        %v336 = vrot.slane %v334, 5
        %v337 = vor.u32 %v333, %v336
        %v338 = vrot.slane %v337, 4
        %v340 = vshll.u32 %v242, 16
        %v342 = vrot.slane %v340, 5
        %v343 = vsel %vm305, %v338, %v342
        %v344 = vshrl.u32 %v242, 16
        %v346 = vrot.slane %v344, 4
        %v347 = vor.u32 %v346, %v342
        %v348 = vrot.slane %v347, 4
        %v350 = vshll.u32 %v288, 16
        %v352 = vrot.slane %v350, 5
        %v353 = vsel %vm305, %v348, %v352
        %v355 = vshrl.u32 %v243, 16
        %v357 = vrot.slane %v355, 4
        %v358 = vshll.u32 %v243, 16
        %v360 = vrot.slane %v358, 5
        %v361 = vor.u32 %v357, %v360
        %v362 = vrot.slane %v361, 4
        %v364 = vshll.u32 %v244, 16
        %v366 = vrot.slane %v364, 5
        %v367 = vsel %vm305, %v362, %v366
        %v368 = vshrl.u32 %v244, 16
        %v370 = vrot.slane %v368, 4
        %v371 = vor.u32 %v370, %v366
        %v372 = vrot.slane %v371, 4
        %v374 = vshll.u32 %v289, 16
        %v376 = vrot.slane %v374, 5
        %v377 = vsel %vm305, %v372, %v376
        %v379 = vshrl.u32 %v245, 16
        %v381 = vrot.slane %v379, 4
        %v382 = vshll.u32 %v245, 16
        %v384 = vrot.slane %v382, 5
        %v385 = vor.u32 %v381, %v384
        %v386 = vrot.slane %v385, 4
        %v388 = vshll.u32 %v246, 16
        %v390 = vrot.slane %v388, 5
        %v391 = vsel %vm305, %v386, %v390
        %v392 = vshrl.u32 %v246, 16
        %v394 = vrot.slane %v392, 4
        %v395 = vor.u32 %v394, %v390
        %v396 = vrot.slane %v395, 4
        %v398 = vshll.u32 %v290, 16
        %v400 = vrot.slane %v398, 5
        %v401 = vsel %vm305, %v396, %v400
        %v403 = vshrl.u32 %v247, 16
        %v405 = vrot.slane %v403, 4
        %v406 = vshll.u32 %v247, 16
        %v408 = vrot.slane %v406, 5
        %v409 = vor.u32 %v405, %v408
        %v410 = vrot.slane %v409, 4
        %v412 = vshll.u32 %v248, 16
        %v414 = vrot.slane %v412, 5
        %v415 = vsel %vm305, %v410, %v414
        %v416 = vshrl.u32 %v248, 16
        %v418 = vrot.slane %v416, 4
        %v419 = vor.u32 %v418, %v414
        %v420 = vrot.slane %v419, 4
        %v422 = vshll.u32 %v291, 16
        %v424 = vrot.slane %v422, 5
        %v425 = vsel %vm305, %v420, %v424
        %v427 = vshrl.u32 %v249, 16
        %v429 = vrot.slane %v427, 4
        %v430 = vshll.u32 %v249, 16
        %v432 = vrot.slane %v430, 5
        %v433 = vor.u32 %v429, %v432
        %v434 = vrot.slane %v433, 4
        %v436 = vshll.u32 %v250, 16
        %v438 = vrot.slane %v436, 5
        %v439 = vsel %vm305, %v434, %v438
        %v440 = vshrl.u32 %v250, 16
        %v442 = vrot.slane %v440, 4
        %v443 = vor.u32 %v442, %v438
        %v444 = vrot.slane %v443, 4
        %v446 = vshll.u32 %v292, 16
        %v448 = vrot.slane %v446, 5
        %v449 = vsel %vm305, %v444, %v448
        %v451 = vshrl.u32 %v251, 16
        %v453 = vrot.slane %v451, 4
        %v454 = vshll.u32 %v251, 16
        %v456 = vrot.slane %v454, 5
        %v457 = vor.u32 %v453, %v456
        %v458 = vrot.slane %v457, 4
        %v460 = vshll.u32 %v252, 16
        %v462 = vrot.slane %v460, 5
        %v463 = vsel %vm305, %v458, %v462
        %v464 = vshrl.u32 %v252, 16
        %v466 = vrot.slane %v464, 4
        %v467 = vor.u32 %v466, %v462
        %v468 = vrot.slane %v467, 4
        %v470 = vshll.u32 %v293, 16
        %v472 = vrot.slane %v470, 5
        %v473 = vsel %vm305, %v468, %v472
        %v475 = vshrl.u32 %v253, 16
        %v477 = vrot.slane %v475, 4
        %v478 = vshll.u32 %v253, 16
        %v480 = vrot.slane %v478, 5
        %v481 = vor.u32 %v477, %v480
        %v482 = vrot.slane %v481, 4
        %v484 = vshll.u32 %v254, 16
        %v486 = vrot.slane %v484, 5
        %v487 = vsel %vm305, %v482, %v486
        %v488 = vshrl.u32 %v254, 16
        %v490 = vrot.slane %v488, 4
        %v491 = vor.u32 %v490, %v486
        %v492 = vrot.slane %v491, 4
        %v494 = vshll.u32 %v294, 16
        %v496 = vrot.slane %v494, 5
        %v497 = vsel %vm305, %v492, %v496
        %v499 = vshrl.u32 %v255, 16
        %v501 = vrot.slane %v499, 4
        %v502 = vshll.u32 %v255, 16
        %v504 = vrot.slane %v502, 5
        %v505 = vor.u32 %v501, %v504
        %v506 = vrot.slane %v505, 4
        %v508 = vshll.u32 %v256, 16
        %v510 = vrot.slane %v508, 5
        %v511 = vsel %vm305, %v506, %v510
        %v512 = vshrl.u32 %v256, 16
        %v514 = vrot.slane %v512, 4
        %v515 = vor.u32 %v514, %v510
        %v516 = vrot.slane %v515, 4
        %v518 = vshll.u32 %v295, 16
        %v520 = vrot.slane %v518, 5
        %v521 = vsel %vm305, %v516, %v520
        %v523 = vshrl.u32 %v257, 16
        %v525 = vrot.slane %v523, 4
        %v526 = vshll.u32 %v257, 16
        %v528 = vrot.slane %v526, 5
        %v529 = vor.u32 %v525, %v528
        %v530 = vrot.slane %v529, 4
        %v532 = vshll.u32 %v258, 16
        %v534 = vrot.slane %v532, 5
        %v535 = vsel %vm305, %v530, %v534
        %v536 = vshrl.u32 %v258, 16
        %v538 = vrot.slane %v536, 4
        %v539 = vor.u32 %v538, %v534
        %v540 = vrot.slane %v539, 4
        %v542 = vshll.u32 %v296, 16
        %v544 = vrot.slane %v542, 5
        %v545 = vsel %vm305, %v540, %v544
        %v547 = vshrl.u32 %v259, 16
        %v549 = vrot.slane %v547, 4
        %v550 = vshll.u32 %v259, 16
        %v552 = vrot.slane %v550, 5
        %v553 = vor.u32 %v549, %v552
        %v554 = vrot.slane %v553, 4
        %v556 = vshll.u32 %v260, 16
        %v558 = vrot.slane %v556, 5
        %v559 = vsel %vm305, %v554, %v558
        %v560 = vshrl.u32 %v260, 16
        %v562 = vrot.slane %v560, 4
        %v563 = vor.u32 %v562, %v558
        %v564 = vrot.slane %v563, 4
        %v566 = vshll.u32 %v297, 16
        %v568 = vrot.slane %v566, 5
        %v569 = vsel %vm305, %v564, %v568
        %v571 = vshrl.u32 %v261, 16
        %v573 = vrot.slane %v571, 4
        %v574 = vshll.u32 %v261, 16
        %v576 = vrot.slane %v574, 5
        %v577 = vor.u32 %v573, %v576
        %v578 = vrot.slane %v577, 4
        %v580 = vshll.u32 %v262, 16
        %v582 = vrot.slane %v580, 5
        %v583 = vsel %vm305, %v578, %v582
        %v584 = vshrl.u32 %v262, 16
        %v586 = vrot.slane %v584, 4
        %v587 = vor.u32 %v586, %v582
        %v588 = vrot.slane %v587, 4
        %v590 = vshll.u32 %v298, 16
        %v592 = vrot.slane %v590, 5
        %v593 = vsel %vm305, %v588, %v592
        %v595 = vshrl.u32 %v263, 16
        %v597 = vrot.slane %v595, 4
        %v598 = vshll.u32 %v263, 16
        %v600 = vrot.slane %v598, 5
        %v601 = vor.u32 %v597, %v600
        %v602 = vrot.slane %v601, 4
        %v604 = vshll.u32 %v264, 16
        %v606 = vrot.slane %v604, 5
        %v607 = vsel %vm305, %v602, %v606
        %v608 = vshrl.u32 %v264, 16
        %v610 = vrot.slane %v608, 4
        %v611 = vor.u32 %v610, %v606
        %v612 = vrot.slane %v611, 4
        %v614 = vshll.u32 %v299, 16
        %v616 = vrot.slane %v614, 5
        %v617 = vsel %vm305, %v612, %v616
        %v619 = vshrl.u32 %v265, 16
        %v621 = vrot.slane %v619, 4
        %v622 = vshll.u32 %v265, 16
        %v624 = vrot.slane %v622, 5
        %v625 = vor.u32 %v621, %v624
        %v626 = vrot.slane %v625, 4
        %v628 = vshll.u32 %v266, 16
        %v630 = vrot.slane %v628, 5
        %v631 = vsel %vm305, %v626, %v630
        %v632 = vshrl.u32 %v266, 16
        %v634 = vrot.slane %v632, 4
        %v635 = vor.u32 %v634, %v630
        %v636 = vrot.slane %v635, 4
        %v638 = vshll.u32 %v300, 16
        %v640 = vrot.slane %v638, 5
        %v641 = vsel %vm305, %v636, %v640
        %v643 = vshrl.u32 %v267, 16
        %v645 = vrot.slane %v643, 4
        %v646 = vshll.u32 %v267, 16
        %v648 = vrot.slane %v646, 5
        %v649 = vor.u32 %v645, %v648
        %v650 = vrot.slane %v649, 4
        %v652 = vshll.u32 %v268, 16
        %v654 = vrot.slane %v652, 5
        %v655 = vsel %vm305, %v650, %v654
        %v656 = vshrl.u32 %v268, 16
        %v658 = vrot.slane %v656, 4
        %v659 = vor.u32 %v658, %v654
        %v660 = vrot.slane %v659, 4
        %v662 = vshll.u32 %v301, 16
        %v664 = vrot.slane %v662, 5
        %v665 = vsel %vm305, %v660, %v664
        %v667 = vshrl.u32 %v269, 16
        %v669 = vrot.slane %v667, 4
        %v670 = vshll.u32 %v269, 16
        %v672 = vrot.slane %v670, 5
        %v673 = vor.u32 %v669, %v672
        %v674 = vrot.slane %v673, 4
        %v676 = vshll.u32 %v270, 16
        %v678 = vrot.slane %v676, 5
        %v679 = vsel %vm305, %v674, %v678
        %v680 = vshrl.u32 %v270, 16
        %v682 = vrot.slane %v680, 4
        %v683 = vor.u32 %v682, %v678
        %v684 = vrot.slane %v683, 4
        %v686 = vshll.u32 %v302, 16
        %v688 = vrot.slane %v686, 5
        %v689 = vsel %vm305, %v684, %v688
        %v690 = vld [vmem:[%s1 + $0x40] sm:$0xf]
        %v691 = vld [vmem:[%s1 + $0x44] sm:$0xf]
        %v692 = vld [vmem:[%s1 + $0x48] sm:$0xf]
        %v693 = vld [vmem:[%s1 + $0x4c] sm:$0xf]
        %v694 = vld [vmem:[%s1 + $0x50] sm:$0xf]
        %v695 = vld [vmem:[%s1 + $0x54] sm:$0xf]
        %v696 = vld [vmem:[%s1 + $0x58] sm:$0xf]
        %v697 = vld [vmem:[%s1 + $0x5c] sm:$0xf]
        %v698 = vld [vmem:[%s1 + $0x60] sm:$0xf]
        %v699 = vld [vmem:[%s1 + $0x64] sm:$0xf]
        %v700 = vld [vmem:[%s1 + $0x68] sm:$0xf]
        %v701 = vld [vmem:[%s1 + $0x6c] sm:$0xf]
        %v702 = vld [vmem:[%s1 + $0x70] sm:$0xf]
        %v703 = vld [vmem:[%s1 + $0x74] sm:$0xf]
        %v704 = vld [vmem:[%s1 + $0x78] sm:$0xf]
        %v705 = vld [vmem:[%s1 + $0x7c] sm:$0xf]
        %v706 = vunpack.c.l.b16 %v319
        %v707 = vunpack.c.l.b16 %v329
        %v708 = vunpack.c.l.b16 %v343
        %v709 = vunpack.c.l.b16 %v353
        %v710 = vunpack.c.l.b16 %v367
        %v711 = vunpack.c.l.b16 %v377
        %v712 = vunpack.c.l.b16 %v391
        %v713 = vunpack.c.l.b16 %v401
        %v714 = vunpack.c.l.b16 %v415
        %v715 = vunpack.c.l.b16 %v425
        %v716 = vunpack.c.l.b16 %v439
        %v717 = vunpack.c.l.b16 %v449
        %v718 = vunpack.c.l.b16 %v463
        %v719 = vunpack.c.l.b16 %v473
        %v720 = vunpack.c.l.b16 %v487
        %v721 = vunpack.c.l.b16 %v497
        %v722 = vunpack.c.l.b16 %v511
        %v723 = vunpack.c.l.b16 %v521
        %v724 = vunpack.c.l.b16 %v535
        %v725 = vunpack.c.l.b16 %v545
        %v726 = vunpack.c.l.b16 %v559
        %v727 = vunpack.c.l.b16 %v569
        %v728 = vunpack.c.l.b16 %v583
        %v729 = vunpack.c.l.b16 %v593
        %v730 = vunpack.c.l.b16 %v607
        %v731 = vunpack.c.l.b16 %v617
        %v732 = vunpack.c.l.b16 %v631
        %v733 = vunpack.c.l.b16 %v641
        %v734 = vunpack.c.l.b16 %v655
        %v735 = vunpack.c.l.b16 %v665
        %v736 = vunpack.c.l.b16 %v679
        %v737 = vunpack.c.l.b16 %v689
        %v738 = vpack.c.b16 %v707, %v706
        %v739 = vpack.c.b16 %v709, %v708
        %v740 = vpack.c.b16 %v711, %v710
        %v741 = vpack.c.b16 %v713, %v712
        %v742 = vpack.c.b16 %v715, %v714
        %v743 = vpack.c.b16 %v717, %v716
        %v744 = vpack.c.b16 %v719, %v718
        %v745 = vpack.c.b16 %v721, %v720
        %v746 = vpack.c.b16 %v723, %v722
        %v747 = vpack.c.b16 %v725, %v724
        %v748 = vpack.c.b16 %v727, %v726
        %v749 = vpack.c.b16 %v729, %v728
        %v750 = vpack.c.b16 %v731, %v730
        %v751 = vpack.c.b16 %v733, %v732
        %v752 = vpack.c.b16 %v735, %v734
        %v753 = vpack.c.b16 %v737, %v736
        %v786 = vunpack.c.l.b16 %v690
        %v787 = vunpack.c.l.b16 %v691
        %v788 = vunpack.c.l.b16 %v692
        %v789 = vunpack.c.l.b16 %v693
        %v790 = vunpack.c.l.b16 %v694
        %v791 = vunpack.c.l.b16 %v695
        %v792 = vunpack.c.l.b16 %v696
        %v793 = vunpack.c.l.b16 %v697
        %v794 = vunpack.c.l.b16 %v698
        %v795 = vunpack.c.l.b16 %v699
        %v796 = vunpack.c.l.b16 %v700
        %v797 = vunpack.c.l.b16 %v701
        %v798 = vunpack.c.l.b16 %v702
        %v799 = vunpack.c.l.b16 %v703
        %v800 = vunpack.c.l.b16 %v704
        %v801 = vunpack.c.l.b16 %v705
        %v802 = vpack.c.b16 %v787, %v786
        %v803 = vpack.c.b16 %v789, %v788
        %v804 = vpack.c.b16 %v791, %v790
        %v805 = vpack.c.b16 %v793, %v792
        %v806 = vpack.c.b16 %v795, %v794
        %v807 = vpack.c.b16 %v797, %v796
        %v808 = vpack.c.b16 %v799, %v798
        %v809 = vpack.c.b16 %v801, %v800
        %818 = vmatprep.subr.bf16.mxu0 0
        %819 = vmatpush1.bf16.msra.mxu0 %v809
        %820 = vmatprep.subr.bf16.mxu0 0
        %821 = vmatpush1.bf16.msra.mxu0 %v808
        %822 = vmatprep.subr.bf16.mxu0 0
        %823 = vmatpush1.bf16.msra.mxu0 %v807
        %824 = vmatprep.subr.bf16.mxu0 0
        %825 = vmatpush1.bf16.msra.mxu0 %v806
        %826 = vmatprep.subr.bf16.mxu0 0
        %827 = vmatpush1.bf16.msra.mxu0 %v805
        %828 = vmatprep.subr.bf16.mxu0 0
        %829 = vmatpush1.bf16.msra.mxu0 %v804
        %830 = vmatprep.subr.bf16.mxu0 0
        %831 = vmatpush1.bf16.msra.mxu0 %v803
        %832 = vmatprep.subr.bf16.mxu0 0
        %833 = vmatpush1.bf16.msra.mxu0 %v802
        %834 = vmatprep.subr.bf16.mxu0 0
        %835 = vmatpush2.bf16.msra.mxu0 0
        %836 = vmatprep.subr.bf16.mxu0 0
        %837 = vmatpush2.bf16.msra.mxu0 0
        %838 = vmatprep.subr.bf16.mxu0 0
        %839 = vmatpush2.bf16.msra.mxu0 0
        %840 = vmatprep.subr.bf16.mxu0 0
        %841 = vmatpush2.bf16.msra.mxu0 0
        %842 = vmatprep.subr.bf16.mxu0 0
        %843 = vmatpush2.bf16.msra.mxu0 0
        %844 = vmatprep.subr.bf16.mxu0 0
        %845 = vmatpush2.bf16.msra.mxu0 0
        %846 = vmatprep.subr.bf16.mxu0 0
        %847 = vmatpush2.bf16.msra.mxu0 0
        %848 = vmatprep.subr.bf16.mxu0 0
        %849 = vmatpush2.bf16.msra.mxu0 0
        %850 = vmatprep.mubr.bf16.mxu0 0
        %851 = vmatmul.mubr.bf16.gmra.mxu0 %v738
        %v852 = vpop.f32.mrf.mxu0
        %v853 = vadd.f32 0.0, %v852
        %v854 = vpop.f32.mrf.mxu0
        %v855 = vpop.f32.mrf.mxu0
        %v856 = vadd.f32 0.0, %v855
        %v857 = vpop.f32.mrf.mxu0
        %858 = vmatprep.mubr.bf16.mxu0 0
        %859 = vmatmul.mubr.bf16.gmra.mxu0 %v739
        %v860 = vpop.f32.mrf.mxu0
        %v861 = vadd.f32 0.0, %v860
        %v862 = vpop.f32.mrf.mxu0
        %v863 = vpop.f32.mrf.mxu0
        %v864 = vadd.f32 0.0, %v863
        %v865 = vpop.f32.mrf.mxu0
        %866 = vmatprep.mubr.bf16.mxu0 0
        %867 = vmatmul.mubr.bf16.gmra.mxu0 %v740
        %v868 = vpop.f32.mrf.mxu0
        %v869 = vadd.f32 0.0, %v868
        %v870 = vpop.f32.mrf.mxu0
        %v871 = vpop.f32.mrf.mxu0
        %v872 = vadd.f32 0.0, %v871
        %v873 = vpop.f32.mrf.mxu0
        %874 = vmatprep.mubr.bf16.mxu0 0
        %875 = vmatmul.mubr.bf16.gmra.mxu0 %v741
        %v876 = vpop.f32.mrf.mxu0
        %v877 = vadd.f32 0.0, %v876
        %v878 = vpop.f32.mrf.mxu0
        %v879 = vpop.f32.mrf.mxu0
        %v880 = vadd.f32 0.0, %v879
        %v881 = vpop.f32.mrf.mxu0
        %882 = vmatprep.mubr.bf16.mxu0 0
        %883 = vmatmul.mubr.bf16.gmra.mxu0 %v742
        %v884 = vpop.f32.mrf.mxu0
        %v885 = vadd.f32 0.0, %v884
        %v886 = vpop.f32.mrf.mxu0
        %v887 = vpop.f32.mrf.mxu0
        %v888 = vadd.f32 0.0, %v887
        %v889 = vpop.f32.mrf.mxu0
        %890 = vmatprep.mubr.bf16.mxu0 0
        %891 = vmatmul.mubr.bf16.gmra.mxu0 %v743
        %v892 = vpop.f32.mrf.mxu0
        %v893 = vadd.f32 0.0, %v892
        %v894 = vpop.f32.mrf.mxu0
        %v895 = vpop.f32.mrf.mxu0
        %v896 = vadd.f32 0.0, %v895
        %v897 = vpop.f32.mrf.mxu0
        %898 = vmatprep.mubr.bf16.mxu0 0
        %899 = vmatmul.mubr.bf16.gmra.mxu0 %v744
        %v900 = vpop.f32.mrf.mxu0
        %v901 = vadd.f32 0.0, %v900
        %v902 = vpop.f32.mrf.mxu0
        %v903 = vpop.f32.mrf.mxu0
        %v904 = vadd.f32 0.0, %v903
        %v905 = vpop.f32.mrf.mxu0
        %906 = vmatprep.mubr.bf16.mxu0 0
        %907 = vmatmul.mubr.bf16.gmra.mxu0 %v745
        %v908 = vpop.f32.mrf.mxu0
        %v909 = vadd.f32 0.0, %v908
        %v910 = vpop.f32.mrf.mxu0
        %v911 = vpop.f32.mrf.mxu0
        %v912 = vadd.f32 0.0, %v911
        %v913 = vpop.f32.mrf.mxu0
        %914 = vmatprep.mubr.bf16.mxu0 0
        %915 = vmatmul.mubr.bf16.gmra.mxu0 %v746
        %v916 = vpop.f32.mrf.mxu0
        %v917 = vadd.f32 0.0, %v916
        %v918 = vpop.f32.mrf.mxu0
        %v919 = vpop.f32.mrf.mxu0
        %v920 = vadd.f32 0.0, %v919
        %v921 = vpop.f32.mrf.mxu0
        %922 = vmatprep.mubr.bf16.mxu0 0
        %923 = vmatmul.mubr.bf16.gmra.mxu0 %v747
        %v924 = vpop.f32.mrf.mxu0
        %v925 = vadd.f32 0.0, %v924
        %v926 = vpop.f32.mrf.mxu0
        %v927 = vpop.f32.mrf.mxu0
        %v928 = vadd.f32 0.0, %v927
        %v929 = vpop.f32.mrf.mxu0
        %930 = vmatprep.mubr.bf16.mxu0 0
        %931 = vmatmul.mubr.bf16.gmra.mxu0 %v748
        %v932 = vpop.f32.mrf.mxu0
        %v933 = vadd.f32 0.0, %v932
        %v934 = vpop.f32.mrf.mxu0
        %v935 = vpop.f32.mrf.mxu0
        %v936 = vadd.f32 0.0, %v935
        %v937 = vpop.f32.mrf.mxu0
        %938 = vmatprep.mubr.bf16.mxu0 0
        %939 = vmatmul.mubr.bf16.gmra.mxu0 %v749
        %v940 = vpop.f32.mrf.mxu0
        %v941 = vadd.f32 0.0, %v940
        %v942 = vpop.f32.mrf.mxu0
        %v943 = vpop.f32.mrf.mxu0
        %v944 = vadd.f32 0.0, %v943
        %v945 = vpop.f32.mrf.mxu0
        %946 = vmatprep.mubr.bf16.mxu0 0
        %947 = vmatmul.mubr.bf16.gmra.mxu0 %v750
        %v948 = vpop.f32.mrf.mxu0
        %v949 = vadd.f32 0.0, %v948
        %v950 = vpop.f32.mrf.mxu0
        %v951 = vpop.f32.mrf.mxu0
        %v952 = vadd.f32 0.0, %v951
        %v953 = vpop.f32.mrf.mxu0
        %954 = vmatprep.mubr.bf16.mxu0 0
        %955 = vmatmul.mubr.bf16.gmra.mxu0 %v751
        %v956 = vpop.f32.mrf.mxu0
        %v957 = vadd.f32 0.0, %v956
        %v958 = vpop.f32.mrf.mxu0
        %v959 = vpop.f32.mrf.mxu0
        %v960 = vadd.f32 0.0, %v959
        %v961 = vpop.f32.mrf.mxu0
        %962 = vmatprep.mubr.bf16.mxu0 0
        %963 = vmatmul.mubr.bf16.gmra.mxu0 %v752
        %v964 = vpop.f32.mrf.mxu0
        %v965 = vadd.f32 0.0, %v964
        %v966 = vpop.f32.mrf.mxu0
        %v967 = vpop.f32.mrf.mxu0
        %v968 = vadd.f32 0.0, %v967
        %v969 = vpop.f32.mrf.mxu0
        %970 = vmatprep.mubr.bf16.mxu0 0
        %971 = vmatmul.mubr.bf16.gmra.mxu0 %v753
        %v972 = vpop.f32.mrf.mxu0
        %v973 = vadd.f32 0.0, %v972
        %v974 = vpop.f32.mrf.mxu0
        %v975 = vpop.f32.mrf.mxu0
        %v976 = vadd.f32 0.0, %v975
        %v977 = vpop.f32.mrf.mxu0
        %978 = vdwg.mxu0
        %v1011 = vunpack.c.l.b16 %v239
        %v1012 = vunpack.c.l.b16 %v240
        %v1013 = vunpack.c.l.b16 %v241
        %v1014 = vunpack.c.l.b16 %v242
        %v1015 = vunpack.c.l.b16 %v243
        %v1016 = vunpack.c.l.b16 %v244
        %v1017 = vunpack.c.l.b16 %v245
        %v1018 = vunpack.c.l.b16 %v246
        %v1019 = vunpack.c.l.b16 %v247
        %v1020 = vunpack.c.l.b16 %v248
        %v1021 = vunpack.c.l.b16 %v249
        %v1022 = vunpack.c.l.b16 %v250
        %v1023 = vunpack.c.l.b16 %v251
        %v1024 = vunpack.c.l.b16 %v252
        %v1025 = vunpack.c.l.b16 %v253
        %v1026 = vunpack.c.l.b16 %v254
        %v1027 = vunpack.c.l.b16 %v255
        %v1028 = vunpack.c.l.b16 %v256
        %v1029 = vunpack.c.l.b16 %v257
        %v1030 = vunpack.c.l.b16 %v258
        %v1031 = vunpack.c.l.b16 %v259
        %v1032 = vunpack.c.l.b16 %v260
        %v1033 = vunpack.c.l.b16 %v261
        %v1034 = vunpack.c.l.b16 %v262
        %v1035 = vunpack.c.l.b16 %v263
        %v1036 = vunpack.c.l.b16 %v264
        %v1037 = vunpack.c.l.b16 %v265
        %v1038 = vunpack.c.l.b16 %v266
        %v1039 = vunpack.c.l.b16 %v267
        %v1040 = vunpack.c.l.b16 %v268
        %v1041 = vunpack.c.l.b16 %v269
        %v1042 = vunpack.c.l.b16 %v270
        %v1043 = vpack.c.b16 %v1012, %v1011
        %v1044 = vpack.c.b16 %v1014, %v1013
        %v1045 = vpack.c.b16 %v1016, %v1015
        %v1046 = vpack.c.b16 %v1018, %v1017
        %v1047 = vpack.c.b16 %v1020, %v1019
        %v1048 = vpack.c.b16 %v1022, %v1021
        %v1049 = vpack.c.b16 %v1024, %v1023
        %v1050 = vpack.c.b16 %v1026, %v1025
        %v1051 = vpack.c.b16 %v1028, %v1027
        %v1052 = vpack.c.b16 %v1030, %v1029
        %v1053 = vpack.c.b16 %v1032, %v1031
        %v1054 = vpack.c.b16 %v1034, %v1033
        %v1055 = vpack.c.b16 %v1036, %v1035
        %v1056 = vpack.c.b16 %v1038, %v1037
        %v1057 = vpack.c.b16 %v1040, %v1039
        %v1058 = vpack.c.b16 %v1042, %v1041
        %v1091 = vunpack.c.l.b16 %v271
        %v1092 = vunpack.c.l.b16 %v272
        %v1093 = vunpack.c.l.b16 %v273
        %v1094 = vunpack.c.l.b16 %v274
        %v1095 = vunpack.c.l.b16 %v275
        %v1096 = vunpack.c.l.b16 %v276
        %v1097 = vunpack.c.l.b16 %v277
        %v1098 = vunpack.c.l.b16 %v278
        %v1099 = vunpack.c.l.b16 %v279
        %v1100 = vunpack.c.l.b16 %v280
        %v1101 = vunpack.c.l.b16 %v281
        %v1102 = vunpack.c.l.b16 %v282
        %v1103 = vunpack.c.l.b16 %v283
        %v1104 = vunpack.c.l.b16 %v284
        %v1105 = vunpack.c.l.b16 %v285
        %v1106 = vunpack.c.l.b16 %v286
        %v1107 = vpack.c.b16 %v1092, %v1091
        %v1108 = vpack.c.b16 %v1094, %v1093
        %v1109 = vpack.c.b16 %v1096, %v1095
        %v1110 = vpack.c.b16 %v1098, %v1097
        %v1111 = vpack.c.b16 %v1100, %v1099
        %v1112 = vpack.c.b16 %v1102, %v1101
        %v1113 = vpack.c.b16 %v1104, %v1103
        %v1114 = vpack.c.b16 %v1106, %v1105
        %1123 = vmatprep.subr.bf16.mxu0 0
        %1124 = vmatpush1.bf16.msra.mxu0 %v1114
        %1125 = vmatprep.subr.bf16.mxu0 0
        %1126 = vmatpush1.bf16.msra.mxu0 %v1113
        %1127 = vmatprep.subr.bf16.mxu0 0
        %1128 = vmatpush1.bf16.msra.mxu0 %v1112
        %1129 = vmatprep.subr.bf16.mxu0 0
        %1130 = vmatpush1.bf16.msra.mxu0 %v1111
        %1131 = vmatprep.subr.bf16.mxu0 0
        %1132 = vmatpush1.bf16.msra.mxu0 %v1110
        %1133 = vmatprep.subr.bf16.mxu0 0
        %1134 = vmatpush1.bf16.msra.mxu0 %v1109
        %1135 = vmatprep.subr.bf16.mxu0 0
        %1136 = vmatpush1.bf16.msra.mxu0 %v1108
        %1137 = vmatprep.subr.bf16.mxu0 0
        %1138 = vmatpush1.bf16.msra.mxu0 %v1107
        %1139 = vmatprep.subr.bf16.mxu0 0
        %1140 = vmatpush2.bf16.msra.mxu0 0
        %1141 = vmatprep.subr.bf16.mxu0 0
        %1142 = vmatpush2.bf16.msra.mxu0 0
        %1143 = vmatprep.subr.bf16.mxu0 0
        %1144 = vmatpush2.bf16.msra.mxu0 0
        %1145 = vmatprep.subr.bf16.mxu0 0
        %1146 = vmatpush2.bf16.msra.mxu0 0
        %1147 = vmatprep.subr.bf16.mxu0 0
        %1148 = vmatpush2.bf16.msra.mxu0 0
        %1149 = vmatprep.subr.bf16.mxu0 0
        %1150 = vmatpush2.bf16.msra.mxu0 0
        %1151 = vmatprep.subr.bf16.mxu0 0
        %1152 = vmatpush2.bf16.msra.mxu0 0
        %1153 = vmatprep.subr.bf16.mxu0 0
        %1154 = vmatpush2.bf16.msra.mxu0 0
        %1155 = vmatprep.mubr.bf16.mxu0 0
        %1156 = vmatmul.mubr.bf16.gmra.mxu0 %v1043
        %v1157 = vpop.f32.mrf.mxu0
        %v1158 = vadd.f32 %v853, %v1157
        %v1159 = vpop.f32.mrf.mxu0
        %v1160 = vpop.f32.mrf.mxu0
        %v1161 = vadd.f32 %v856, %v1160
        %v1162 = vpop.f32.mrf.mxu0
        %1163 = vmatprep.mubr.bf16.mxu0 0
        %1164 = vmatmul.mubr.bf16.gmra.mxu0 %v1044
        %v1165 = vpop.f32.mrf.mxu0
        %v1166 = vadd.f32 %v861, %v1165
        %v1167 = vpop.f32.mrf.mxu0
        %v1168 = vpop.f32.mrf.mxu0
        %v1169 = vadd.f32 %v864, %v1168
        %v1170 = vpop.f32.mrf.mxu0
        %1171 = vmatprep.mubr.bf16.mxu0 0
        %1172 = vmatmul.mubr.bf16.gmra.mxu0 %v1045
        %v1173 = vpop.f32.mrf.mxu0
        %v1174 = vadd.f32 %v869, %v1173
        %v1175 = vpop.f32.mrf.mxu0
        %v1176 = vpop.f32.mrf.mxu0
        %v1177 = vadd.f32 %v872, %v1176
        %v1178 = vpop.f32.mrf.mxu0
        %1179 = vmatprep.mubr.bf16.mxu0 0
        %1180 = vmatmul.mubr.bf16.gmra.mxu0 %v1046
        %v1181 = vpop.f32.mrf.mxu0
        %v1182 = vadd.f32 %v877, %v1181
        %v1183 = vpop.f32.mrf.mxu0
        %v1184 = vpop.f32.mrf.mxu0
        %v1185 = vadd.f32 %v880, %v1184
        %v1186 = vpop.f32.mrf.mxu0
        %1187 = vmatprep.mubr.bf16.mxu0 0
        %1188 = vmatmul.mubr.bf16.gmra.mxu0 %v1047
        %v1189 = vpop.f32.mrf.mxu0
        %v1190 = vadd.f32 %v885, %v1189
        %v1191 = vpop.f32.mrf.mxu0
        %v1192 = vpop.f32.mrf.mxu0
        %v1193 = vadd.f32 %v888, %v1192
        %v1194 = vpop.f32.mrf.mxu0
        %1195 = vmatprep.mubr.bf16.mxu0 0
        %1196 = vmatmul.mubr.bf16.gmra.mxu0 %v1048
        %v1197 = vpop.f32.mrf.mxu0
        %v1198 = vadd.f32 %v893, %v1197
        %v1199 = vpop.f32.mrf.mxu0
        %v1200 = vpop.f32.mrf.mxu0
        %v1201 = vadd.f32 %v896, %v1200
        %v1202 = vpop.f32.mrf.mxu0
        %1203 = vmatprep.mubr.bf16.mxu0 0
        %1204 = vmatmul.mubr.bf16.gmra.mxu0 %v1049
        %v1205 = vpop.f32.mrf.mxu0
        %v1206 = vadd.f32 %v901, %v1205
        %v1207 = vpop.f32.mrf.mxu0
        %v1208 = vpop.f32.mrf.mxu0
        %v1209 = vadd.f32 %v904, %v1208
        %v1210 = vpop.f32.mrf.mxu0
        %1211 = vmatprep.mubr.bf16.mxu0 0
        %1212 = vmatmul.mubr.bf16.gmra.mxu0 %v1050
        %v1213 = vpop.f32.mrf.mxu0
        %v1214 = vadd.f32 %v909, %v1213
        %v1215 = vpop.f32.mrf.mxu0
        %v1216 = vpop.f32.mrf.mxu0
        %v1217 = vadd.f32 %v912, %v1216
        %v1218 = vpop.f32.mrf.mxu0
        %1219 = vmatprep.mubr.bf16.mxu0 0
        %1220 = vmatmul.mubr.bf16.gmra.mxu0 %v1051
        %v1221 = vpop.f32.mrf.mxu0
        %v1222 = vadd.f32 %v917, %v1221
        %v1223 = vpop.f32.mrf.mxu0
        %v1224 = vpop.f32.mrf.mxu0
        %v1225 = vadd.f32 %v920, %v1224
        %v1226 = vpop.f32.mrf.mxu0
        %1227 = vmatprep.mubr.bf16.mxu0 0
        %1228 = vmatmul.mubr.bf16.gmra.mxu0 %v1052
        %v1229 = vpop.f32.mrf.mxu0
        %v1230 = vadd.f32 %v925, %v1229
        %v1231 = vpop.f32.mrf.mxu0
        %v1232 = vpop.f32.mrf.mxu0
        %v1233 = vadd.f32 %v928, %v1232
        %v1234 = vpop.f32.mrf.mxu0
        %1235 = vmatprep.mubr.bf16.mxu0 0
        %1236 = vmatmul.mubr.bf16.gmra.mxu0 %v1053
        %v1237 = vpop.f32.mrf.mxu0
        %v1238 = vadd.f32 %v933, %v1237
        %v1239 = vpop.f32.mrf.mxu0
        %v1240 = vpop.f32.mrf.mxu0
        %v1241 = vadd.f32 %v936, %v1240
        %v1242 = vpop.f32.mrf.mxu0
        %1243 = vmatprep.mubr.bf16.mxu0 0
        %1244 = vmatmul.mubr.bf16.gmra.mxu0 %v1054
        %v1245 = vpop.f32.mrf.mxu0
        %v1246 = vadd.f32 %v941, %v1245
        %v1247 = vpop.f32.mrf.mxu0
        %v1248 = vpop.f32.mrf.mxu0
        %v1249 = vadd.f32 %v944, %v1248
        %v1250 = vpop.f32.mrf.mxu0
        %1251 = vmatprep.mubr.bf16.mxu0 0
        %1252 = vmatmul.mubr.bf16.gmra.mxu0 %v1055
        %v1253 = vpop.f32.mrf.mxu0
        %v1254 = vadd.f32 %v949, %v1253
        %v1255 = vpop.f32.mrf.mxu0
        %v1256 = vpop.f32.mrf.mxu0
        %v1257 = vadd.f32 %v952, %v1256
        %v1258 = vpop.f32.mrf.mxu0
        %1259 = vmatprep.mubr.bf16.mxu0 0
        %1260 = vmatmul.mubr.bf16.gmra.mxu0 %v1056
        %v1261 = vpop.f32.mrf.mxu0
        %v1262 = vadd.f32 %v957, %v1261
        %v1263 = vpop.f32.mrf.mxu0
        %v1264 = vpop.f32.mrf.mxu0
        %v1265 = vadd.f32 %v960, %v1264
        %v1266 = vpop.f32.mrf.mxu0
        %1267 = vmatprep.mubr.bf16.mxu0 0
        %1268 = vmatmul.mubr.bf16.gmra.mxu0 %v1057
        %v1269 = vpop.f32.mrf.mxu0
        %v1270 = vadd.f32 %v965, %v1269
        %v1271 = vpop.f32.mrf.mxu0
        %v1272 = vpop.f32.mrf.mxu0
        %v1273 = vadd.f32 %v968, %v1272
        %v1274 = vpop.f32.mrf.mxu0
        %1275 = vmatprep.mubr.bf16.mxu0 0
        %1276 = vmatmul.mubr.bf16.gmra.mxu0 %v1058
        %v1277 = vpop.f32.mrf.mxu0
        %v1278 = vadd.f32 %v973, %v1277
        %v1279 = vpop.f32.mrf.mxu0
        %v1280 = vpop.f32.mrf.mxu0
        %v1281 = vadd.f32 %v976, %v1280
        %v1282 = vpop.f32.mrf.mxu0
        %1283 = vdwg.mxu0
        %v1284 = vld [vmem:[%s237] sm:$0xe]
        %v1285 = vld [vmem:[%s237 + $0xc] sm:$0xe]
        %v1286 = vld [vmem:[%s237 + $0x18] sm:$0xe]
        %v1287 = vld [vmem:[%s237 + $0x24] sm:$0xe]
        %v1288 = vld [vmem:[%s237 + $0x30] sm:$0xe]
        %v1289 = vld [vmem:[%s237 + $0x3c] sm:$0xe]
        %v1290 = vld [vmem:[%s237 + $0x48] sm:$0xe]
        %v1291 = vld [vmem:[%s237 + $0x54] sm:$0xe]
        %v1292 = vld [vmem:[%s237 + $0x60] sm:$0xe]
        %v1293 = vld [vmem:[%s237 + $0x6c] sm:$0xe]
        %v1294 = vld [vmem:[%s237 + $0x78] sm:$0xe]
        %v1295 = vld [vmem:[%s237 + $0x84] sm:$0xe]
        %v1296 = vld [vmem:[%s237 + $0x90] sm:$0xe]
        %v1297 = vld [vmem:[%s237 + $0x9c] sm:$0xe]
        %v1298 = vld [vmem:[%s237 + $0xa8] sm:$0xe]
        %v1299 = vld [vmem:[%s237 + $0xb4] sm:$0xe]
        %vm1332 = vcmask 1042432
        %vm1333 = vcmask 1046532
        %vm1334 = vmor %vm1332, %vm1333
        %v1335 = vrot.slane %v1284, 5
        %v1336 = vrot.slane %v1335, 4
        %v1337 = vrot.slane %v240, 5
        %v1338 = vsel %vm1334, %v1336, %v1337
        %v1339 = vrot.slane %v1337, 4
        %v1340 = vrot.slane %v287, 5
        %v1341 = vsel %vm1334, %v1339, %v1340
        %v1342 = vrot.slane %v1285, 5
        %v1343 = vrot.slane %v1342, 4
        %v1344 = vrot.slane %v242, 5
        %v1345 = vsel %vm1334, %v1343, %v1344
        %v1346 = vrot.slane %v1344, 4
        %v1347 = vrot.slane %v288, 5
        %v1348 = vsel %vm1334, %v1346, %v1347
        %v1349 = vrot.slane %v1286, 5
        %v1350 = vrot.slane %v1349, 4
        %v1351 = vrot.slane %v244, 5
        %v1352 = vsel %vm1334, %v1350, %v1351
        %v1353 = vrot.slane %v1351, 4
        %v1354 = vrot.slane %v289, 5
        %v1355 = vsel %vm1334, %v1353, %v1354
        %v1356 = vrot.slane %v1287, 5
        %v1357 = vrot.slane %v1356, 4
        %v1358 = vrot.slane %v246, 5
        %v1359 = vsel %vm1334, %v1357, %v1358
        %v1360 = vrot.slane %v1358, 4
        %v1361 = vrot.slane %v290, 5
        %v1362 = vsel %vm1334, %v1360, %v1361
        %v1363 = vrot.slane %v1288, 5
        %v1364 = vrot.slane %v1363, 4
        %v1365 = vrot.slane %v248, 5
        %v1366 = vsel %vm1334, %v1364, %v1365
        %v1367 = vrot.slane %v1365, 4
        %v1368 = vrot.slane %v291, 5
        %v1369 = vsel %vm1334, %v1367, %v1368
        %v1370 = vrot.slane %v1289, 5
        %v1371 = vrot.slane %v1370, 4
        %v1372 = vrot.slane %v250, 5
        %v1373 = vsel %vm1334, %v1371, %v1372
        %v1374 = vrot.slane %v1372, 4
        %v1375 = vrot.slane %v292, 5
        %v1376 = vsel %vm1334, %v1374, %v1375
        %v1377 = vrot.slane %v1290, 5
        %v1378 = vrot.slane %v1377, 4
        %v1379 = vrot.slane %v252, 5
        %v1380 = vsel %vm1334, %v1378, %v1379
        %v1381 = vrot.slane %v1379, 4
        %v1382 = vrot.slane %v293, 5
        %v1383 = vsel %vm1334, %v1381, %v1382
        %v1384 = vrot.slane %v1291, 5
        %v1385 = vrot.slane %v1384, 4
        %v1386 = vrot.slane %v254, 5
        %v1387 = vsel %vm1334, %v1385, %v1386
        %v1388 = vrot.slane %v1386, 4
        %v1389 = vrot.slane %v294, 5
        %v1390 = vsel %vm1334, %v1388, %v1389
        %v1391 = vrot.slane %v1292, 5
        %v1392 = vrot.slane %v1391, 4
        %v1393 = vrot.slane %v256, 5
        %v1394 = vsel %vm1334, %v1392, %v1393
        %v1395 = vrot.slane %v1393, 4
        %v1396 = vrot.slane %v295, 5
        %v1397 = vsel %vm1334, %v1395, %v1396
        %v1398 = vrot.slane %v1293, 5
        %v1399 = vrot.slane %v1398, 4
        %v1400 = vrot.slane %v258, 5
        %v1401 = vsel %vm1334, %v1399, %v1400
        %v1402 = vrot.slane %v1400, 4
        %v1403 = vrot.slane %v296, 5
        %v1404 = vsel %vm1334, %v1402, %v1403
        %v1405 = vrot.slane %v1294, 5
        %v1406 = vrot.slane %v1405, 4
        %v1407 = vrot.slane %v260, 5
        %v1408 = vsel %vm1334, %v1406, %v1407
        %v1409 = vrot.slane %v1407, 4
        %v1410 = vrot.slane %v297, 5
        %v1411 = vsel %vm1334, %v1409, %v1410
        %v1412 = vrot.slane %v1295, 5
        %v1413 = vrot.slane %v1412, 4
        %v1414 = vrot.slane %v262, 5
        %v1415 = vsel %vm1334, %v1413, %v1414
        %v1416 = vrot.slane %v1414, 4
        %v1417 = vrot.slane %v298, 5
        %v1418 = vsel %vm1334, %v1416, %v1417
        %v1419 = vrot.slane %v1296, 5
        %v1420 = vrot.slane %v1419, 4
        %v1421 = vrot.slane %v264, 5
        %v1422 = vsel %vm1334, %v1420, %v1421
        %v1423 = vrot.slane %v1421, 4
        %v1424 = vrot.slane %v299, 5
        %v1425 = vsel %vm1334, %v1423, %v1424
        %v1426 = vrot.slane %v1297, 5
        %v1427 = vrot.slane %v1426, 4
        %v1428 = vrot.slane %v266, 5
        %v1429 = vsel %vm1334, %v1427, %v1428
        %v1430 = vrot.slane %v1428, 4
        %v1431 = vrot.slane %v300, 5
        %v1432 = vsel %vm1334, %v1430, %v1431
        %v1433 = vrot.slane %v1298, 5
        %v1434 = vrot.slane %v1433, 4
        %v1435 = vrot.slane %v268, 5
        %v1436 = vsel %vm1334, %v1434, %v1435
        %v1437 = vrot.slane %v1435, 4
        %v1438 = vrot.slane %v301, 5
        %v1439 = vsel %vm1334, %v1437, %v1438
        %v1440 = vrot.slane %v1299, 5
        %v1441 = vrot.slane %v1440, 4
        %v1442 = vrot.slane %v270, 5
        %v1443 = vsel %vm1334, %v1441, %v1442
        %v1444 = vrot.slane %v1442, 4
        %v1445 = vrot.slane %v302, 5
        %v1446 = vsel %vm1334, %v1444, %v1445
        %v1447 = vld [vmem:[%s1 + $0x80] sm:$0xf]
        %v1448 = vld [vmem:[%s1 + $0x84] sm:$0xf]
        %v1449 = vld [vmem:[%s1 + $0x88] sm:$0xf]
        %v1450 = vld [vmem:[%s1 + $0x8c] sm:$0xf]
        %v1451 = vld [vmem:[%s1 + $0x90] sm:$0xf]
        %v1452 = vld [vmem:[%s1 + $0x94] sm:$0xf]
        %v1453 = vld [vmem:[%s1 + $0x98] sm:$0xf]
        %v1454 = vld [vmem:[%s1 + $0x9c] sm:$0xf]
        %v1455 = vld [vmem:[%s1 + $0xa0] sm:$0xf]
        %v1456 = vld [vmem:[%s1 + $0xa4] sm:$0xf]
        %v1457 = vld [vmem:[%s1 + $0xa8] sm:$0xf]
        %v1458 = vld [vmem:[%s1 + $0xac] sm:$0xf]
        %v1459 = vld [vmem:[%s1 + $0xb0] sm:$0xf]
        %v1460 = vld [vmem:[%s1 + $0xb4] sm:$0xf]
        %v1461 = vld [vmem:[%s1 + $0xb8] sm:$0xf]
        %v1462 = vld [vmem:[%s1 + $0xbc] sm:$0xf]
        %v1463 = vunpack.c.l.b16 %v1338
        %v1464 = vunpack.c.l.b16 %v1341
        %v1465 = vunpack.c.l.b16 %v1345
        %v1466 = vunpack.c.l.b16 %v1348
        %v1467 = vunpack.c.l.b16 %v1352
        %v1468 = vunpack.c.l.b16 %v1355
        %v1469 = vunpack.c.l.b16 %v1359
        %v1470 = vunpack.c.l.b16 %v1362
        %v1471 = vunpack.c.l.b16 %v1366
        %v1472 = vunpack.c.l.b16 %v1369
        %v1473 = vunpack.c.l.b16 %v1373
        %v1474 = vunpack.c.l.b16 %v1376
        %v1475 = vunpack.c.l.b16 %v1380
        %v1476 = vunpack.c.l.b16 %v1383
        %v1477 = vunpack.c.l.b16 %v1387
        %v1478 = vunpack.c.l.b16 %v1390
        %v1479 = vunpack.c.l.b16 %v1394
        %v1480 = vunpack.c.l.b16 %v1397
        %v1481 = vunpack.c.l.b16 %v1401
        %v1482 = vunpack.c.l.b16 %v1404
        %v1483 = vunpack.c.l.b16 %v1408
        %v1484 = vunpack.c.l.b16 %v1411
        %v1485 = vunpack.c.l.b16 %v1415
        %v1486 = vunpack.c.l.b16 %v1418
        %v1487 = vunpack.c.l.b16 %v1422
        %v1488 = vunpack.c.l.b16 %v1425
        %v1489 = vunpack.c.l.b16 %v1429
        %v1490 = vunpack.c.l.b16 %v1432
        %v1491 = vunpack.c.l.b16 %v1436
        %v1492 = vunpack.c.l.b16 %v1439
        %v1493 = vunpack.c.l.b16 %v1443
        %v1494 = vunpack.c.l.b16 %v1446
        %v1495 = vpack.c.b16 %v1464, %v1463
        %v1496 = vpack.c.b16 %v1466, %v1465
        %v1497 = vpack.c.b16 %v1468, %v1467
        %v1498 = vpack.c.b16 %v1470, %v1469
        %v1499 = vpack.c.b16 %v1472, %v1471
        %v1500 = vpack.c.b16 %v1474, %v1473
        %v1501 = vpack.c.b16 %v1476, %v1475
        %v1502 = vpack.c.b16 %v1478, %v1477
        %v1503 = vpack.c.b16 %v1480, %v1479
        %v1504 = vpack.c.b16 %v1482, %v1481
        %v1505 = vpack.c.b16 %v1484, %v1483
        %v1506 = vpack.c.b16 %v1486, %v1485
        %v1507 = vpack.c.b16 %v1488, %v1487
        %v1508 = vpack.c.b16 %v1490, %v1489
        %v1509 = vpack.c.b16 %v1492, %v1491
        %v1510 = vpack.c.b16 %v1494, %v1493
        %v1543 = vunpack.c.l.b16 %v1447
        %v1544 = vunpack.c.l.b16 %v1448
        %v1545 = vunpack.c.l.b16 %v1449
        %v1546 = vunpack.c.l.b16 %v1450
        %v1547 = vunpack.c.l.b16 %v1451
        %v1548 = vunpack.c.l.b16 %v1452
        %v1549 = vunpack.c.l.b16 %v1453
        %v1550 = vunpack.c.l.b16 %v1454
        %v1551 = vunpack.c.l.b16 %v1455
        %v1552 = vunpack.c.l.b16 %v1456
        %v1553 = vunpack.c.l.b16 %v1457
        %v1554 = vunpack.c.l.b16 %v1458
        %v1555 = vunpack.c.l.b16 %v1459
        %v1556 = vunpack.c.l.b16 %v1460
        %v1557 = vunpack.c.l.b16 %v1461
        %v1558 = vunpack.c.l.b16 %v1462
        %v1559 = vpack.c.b16 %v1544, %v1543
        %v1560 = vpack.c.b16 %v1546, %v1545
        %v1561 = vpack.c.b16 %v1548, %v1547
        %v1562 = vpack.c.b16 %v1550, %v1549
        %v1563 = vpack.c.b16 %v1552, %v1551
        %v1564 = vpack.c.b16 %v1554, %v1553
        %v1565 = vpack.c.b16 %v1556, %v1555
        %v1566 = vpack.c.b16 %v1558, %v1557
        %1575 = vmatprep.subr.bf16.mxu0 0
        %1576 = vmatpush1.bf16.msra.mxu0 %v1566
        %1577 = vmatprep.subr.bf16.mxu0 0
        %1578 = vmatpush1.bf16.msra.mxu0 %v1565
        %1579 = vmatprep.subr.bf16.mxu0 0
        %1580 = vmatpush1.bf16.msra.mxu0 %v1564
        %1581 = vmatprep.subr.bf16.mxu0 0
        %1582 = vmatpush1.bf16.msra.mxu0 %v1563
        %1583 = vmatprep.subr.bf16.mxu0 0
        %1584 = vmatpush1.bf16.msra.mxu0 %v1562
        %1585 = vmatprep.subr.bf16.mxu0 0
        %1586 = vmatpush1.bf16.msra.mxu0 %v1561
        %1587 = vmatprep.subr.bf16.mxu0 0
        %1588 = vmatpush1.bf16.msra.mxu0 %v1560
        %1589 = vmatprep.subr.bf16.mxu0 0
        %1590 = vmatpush1.bf16.msra.mxu0 %v1559
        %1591 = vmatprep.subr.bf16.mxu0 0
        %1592 = vmatpush2.bf16.msra.mxu0 0
        %1593 = vmatprep.subr.bf16.mxu0 0
        %1594 = vmatpush2.bf16.msra.mxu0 0
        %1595 = vmatprep.subr.bf16.mxu0 0
        %1596 = vmatpush2.bf16.msra.mxu0 0
        %1597 = vmatprep.subr.bf16.mxu0 0
        %1598 = vmatpush2.bf16.msra.mxu0 0
        %1599 = vmatprep.subr.bf16.mxu0 0
        %1600 = vmatpush2.bf16.msra.mxu0 0
        %1601 = vmatprep.subr.bf16.mxu0 0
        %1602 = vmatpush2.bf16.msra.mxu0 0
        %1603 = vmatprep.subr.bf16.mxu0 0
        %1604 = vmatpush2.bf16.msra.mxu0 0
        %1605 = vmatprep.subr.bf16.mxu0 0
        %1606 = vmatpush2.bf16.msra.mxu0 0
        %1607 = vmatprep.mubr.bf16.mxu0 0
        %1608 = vmatmul.mubr.bf16.gmra.mxu0 %v1495
        %v1609 = vpop.f32.mrf.mxu0
        %v1610 = vadd.f32 0.0, %v1609
        %v1611 = vpop.f32.mrf.mxu0
        %v1612 = vpop.f32.mrf.mxu0
        %v1613 = vadd.f32 0.0, %v1612
        %v1614 = vpop.f32.mrf.mxu0
        %1615 = vmatprep.mubr.bf16.mxu0 0
        %1616 = vmatmul.mubr.bf16.gmra.mxu0 %v1496
        %v1617 = vpop.f32.mrf.mxu0
        %v1618 = vadd.f32 0.0, %v1617
        %v1619 = vpop.f32.mrf.mxu0
        %v1620 = vpop.f32.mrf.mxu0
        %v1621 = vadd.f32 0.0, %v1620
        %v1622 = vpop.f32.mrf.mxu0
        %1623 = vmatprep.mubr.bf16.mxu0 0
        %1624 = vmatmul.mubr.bf16.gmra.mxu0 %v1497
        %v1625 = vpop.f32.mrf.mxu0
        %v1626 = vadd.f32 0.0, %v1625
        %v1627 = vpop.f32.mrf.mxu0
        %v1628 = vpop.f32.mrf.mxu0
        %v1629 = vadd.f32 0.0, %v1628
        %v1630 = vpop.f32.mrf.mxu0
        %1631 = vmatprep.mubr.bf16.mxu0 0
        %1632 = vmatmul.mubr.bf16.gmra.mxu0 %v1498
        %v1633 = vpop.f32.mrf.mxu0
        %v1634 = vadd.f32 0.0, %v1633
        %v1635 = vpop.f32.mrf.mxu0
        %v1636 = vpop.f32.mrf.mxu0
        %v1637 = vadd.f32 0.0, %v1636
        %v1638 = vpop.f32.mrf.mxu0
        %1639 = vmatprep.mubr.bf16.mxu0 0
        %1640 = vmatmul.mubr.bf16.gmra.mxu0 %v1499
        %v1641 = vpop.f32.mrf.mxu0
        %v1642 = vadd.f32 0.0, %v1641
        %v1643 = vpop.f32.mrf.mxu0
        %v1644 = vpop.f32.mrf.mxu0
        %v1645 = vadd.f32 0.0, %v1644
        %v1646 = vpop.f32.mrf.mxu0
        %1647 = vmatprep.mubr.bf16.mxu0 0
        %1648 = vmatmul.mubr.bf16.gmra.mxu0 %v1500
        %v1649 = vpop.f32.mrf.mxu0
        %v1650 = vadd.f32 0.0, %v1649
        %v1651 = vpop.f32.mrf.mxu0
        %v1652 = vpop.f32.mrf.mxu0
        %v1653 = vadd.f32 0.0, %v1652
        %v1654 = vpop.f32.mrf.mxu0
        %1655 = vmatprep.mubr.bf16.mxu0 0
        %1656 = vmatmul.mubr.bf16.gmra.mxu0 %v1501
        %v1657 = vpop.f32.mrf.mxu0
        %v1658 = vadd.f32 0.0, %v1657
        %v1659 = vpop.f32.mrf.mxu0
        %v1660 = vpop.f32.mrf.mxu0
        %v1661 = vadd.f32 0.0, %v1660
        %v1662 = vpop.f32.mrf.mxu0
        %1663 = vmatprep.mubr.bf16.mxu0 0
        %1664 = vmatmul.mubr.bf16.gmra.mxu0 %v1502
        %v1665 = vpop.f32.mrf.mxu0
        %v1666 = vadd.f32 0.0, %v1665
        %v1667 = vpop.f32.mrf.mxu0
        %v1668 = vpop.f32.mrf.mxu0
        %v1669 = vadd.f32 0.0, %v1668
        %v1670 = vpop.f32.mrf.mxu0
        %1671 = vmatprep.mubr.bf16.mxu0 0
        %1672 = vmatmul.mubr.bf16.gmra.mxu0 %v1503
        %v1673 = vpop.f32.mrf.mxu0
        %v1674 = vadd.f32 0.0, %v1673
        %v1675 = vpop.f32.mrf.mxu0
        %v1676 = vpop.f32.mrf.mxu0
        %v1677 = vadd.f32 0.0, %v1676
        %v1678 = vpop.f32.mrf.mxu0
        %1679 = vmatprep.mubr.bf16.mxu0 0
        %1680 = vmatmul.mubr.bf16.gmra.mxu0 %v1504
        %v1681 = vpop.f32.mrf.mxu0
        %v1682 = vadd.f32 0.0, %v1681
        %v1683 = vpop.f32.mrf.mxu0
        %v1684 = vpop.f32.mrf.mxu0
        %v1685 = vadd.f32 0.0, %v1684
        %v1686 = vpop.f32.mrf.mxu0
        %1687 = vmatprep.mubr.bf16.mxu0 0
        %1688 = vmatmul.mubr.bf16.gmra.mxu0 %v1505
        %v1689 = vpop.f32.mrf.mxu0
        %v1690 = vadd.f32 0.0, %v1689
        %v1691 = vpop.f32.mrf.mxu0
        %v1692 = vpop.f32.mrf.mxu0
        %v1693 = vadd.f32 0.0, %v1692
        %v1694 = vpop.f32.mrf.mxu0
        %1695 = vmatprep.mubr.bf16.mxu0 0
        %1696 = vmatmul.mubr.bf16.gmra.mxu0 %v1506
        %v1697 = vpop.f32.mrf.mxu0
        %v1698 = vadd.f32 0.0, %v1697
        %v1699 = vpop.f32.mrf.mxu0
        %v1700 = vpop.f32.mrf.mxu0
        %v1701 = vadd.f32 0.0, %v1700
        %v1702 = vpop.f32.mrf.mxu0
        %1703 = vmatprep.mubr.bf16.mxu0 0
        %1704 = vmatmul.mubr.bf16.gmra.mxu0 %v1507
        %v1705 = vpop.f32.mrf.mxu0
        %v1706 = vadd.f32 0.0, %v1705
        %v1707 = vpop.f32.mrf.mxu0
        %v1708 = vpop.f32.mrf.mxu0
        %v1709 = vadd.f32 0.0, %v1708
        %v1710 = vpop.f32.mrf.mxu0
        %1711 = vmatprep.mubr.bf16.mxu0 0
        %1712 = vmatmul.mubr.bf16.gmra.mxu0 %v1508
        %v1713 = vpop.f32.mrf.mxu0
        %v1714 = vadd.f32 0.0, %v1713
        %v1715 = vpop.f32.mrf.mxu0
        %v1716 = vpop.f32.mrf.mxu0
        %v1717 = vadd.f32 0.0, %v1716
        %v1718 = vpop.f32.mrf.mxu0
        %1719 = vmatprep.mubr.bf16.mxu0 0
        %1720 = vmatmul.mubr.bf16.gmra.mxu0 %v1509
        %v1721 = vpop.f32.mrf.mxu0
        %v1722 = vadd.f32 0.0, %v1721
        %v1723 = vpop.f32.mrf.mxu0
        %v1724 = vpop.f32.mrf.mxu0
        %v1725 = vadd.f32 0.0, %v1724
        %v1726 = vpop.f32.mrf.mxu0
        %1727 = vmatprep.mubr.bf16.mxu0 0
        %1728 = vmatmul.mubr.bf16.gmra.mxu0 %v1510
        %v1729 = vpop.f32.mrf.mxu0
        %v1730 = vadd.f32 0.0, %v1729
        %v1731 = vpop.f32.mrf.mxu0
        %v1732 = vpop.f32.mrf.mxu0
        %v1733 = vadd.f32 0.0, %v1732
        %v1734 = vpop.f32.mrf.mxu0
        %1735 = vdwg.mxu0
        %v1736 = vadd.f32 %v1158, %v1610
        %v1737 = vadd.f32 %v1161, %v1613
        %v1738 = vadd.f32 %v1166, %v1618
        %v1739 = vadd.f32 %v1169, %v1621
        %v1740 = vadd.f32 %v1174, %v1626
        %v1741 = vadd.f32 %v1177, %v1629
        %v1742 = vadd.f32 %v1182, %v1634
        %v1743 = vadd.f32 %v1185, %v1637
        %v1744 = vadd.f32 %v1190, %v1642
        %v1745 = vadd.f32 %v1193, %v1645
        %v1746 = vadd.f32 %v1198, %v1650
        %v1747 = vadd.f32 %v1201, %v1653
        %v1748 = vadd.f32 %v1206, %v1658
        %v1749 = vadd.f32 %v1209, %v1661
        %v1750 = vadd.f32 %v1214, %v1666
        %v1751 = vadd.f32 %v1217, %v1669
        %v1752 = vadd.f32 %v1222, %v1674
        %v1753 = vadd.f32 %v1225, %v1677
        %v1754 = vadd.f32 %v1230, %v1682
        %v1755 = vadd.f32 %v1233, %v1685
        %v1756 = vadd.f32 %v1238, %v1690
        %v1757 = vadd.f32 %v1241, %v1693
        %v1758 = vadd.f32 %v1246, %v1698
        %v1759 = vadd.f32 %v1249, %v1701
        %v1760 = vadd.f32 %v1254, %v1706
        %v1761 = vadd.f32 %v1257, %v1709
        %v1762 = vadd.f32 %v1262, %v1714
        %v1763 = vadd.f32 %v1265, %v1717
        %v1764 = vadd.f32 %v1270, %v1722
        %v1765 = vadd.f32 %v1273, %v1725
        %v1766 = vadd.f32 %v1278, %v1730
        %v1767 = vadd.f32 %v1281, %v1733
        %s1768 = scalar_lea.vmem %s237, 12
        %v1769 = vld [vmem:[%s1768] sm:$0xf]
        %v1770 = vld [vmem:[%s1768 + $0x4] sm:$0xf]
        %v1771 = vld [vmem:[%s1768 + $0xc] sm:$0xf]
        %v1772 = vld [vmem:[%s1768 + $0x10] sm:$0xf]
        %v1773 = vld [vmem:[%s1768 + $0x18] sm:$0xf]
        %v1774 = vld [vmem:[%s1768 + $0x1c] sm:$0xf]
        %v1775 = vld [vmem:[%s1768 + $0x24] sm:$0xf]
        %v1776 = vld [vmem:[%s1768 + $0x28] sm:$0xf]
        %v1777 = vld [vmem:[%s1768 + $0x30] sm:$0xf]
        %v1778 = vld [vmem:[%s1768 + $0x34] sm:$0xf]
        %v1779 = vld [vmem:[%s1768 + $0x3c] sm:$0xf]
        %v1780 = vld [vmem:[%s1768 + $0x40] sm:$0xf]
        %v1781 = vld [vmem:[%s1768 + $0x48] sm:$0xf]
        %v1782 = vld [vmem:[%s1768 + $0x4c] sm:$0xf]
        %v1783 = vld [vmem:[%s1768 + $0x54] sm:$0xf]
        %v1784 = vld [vmem:[%s1768 + $0x58] sm:$0xf]
        %v1785 = vld [vmem:[%s1768 + $0x60] sm:$0xf]
        %v1786 = vld [vmem:[%s1768 + $0x64] sm:$0xf]
        %v1787 = vld [vmem:[%s1768 + $0x6c] sm:$0xf]
        %v1788 = vld [vmem:[%s1768 + $0x70] sm:$0xf]
        %v1789 = vld [vmem:[%s1768 + $0x78] sm:$0xf]
        %v1790 = vld [vmem:[%s1768 + $0x7c] sm:$0xf]
        %v1791 = vld [vmem:[%s1768 + $0x84] sm:$0xf]
        %v1792 = vld [vmem:[%s1768 + $0x88] sm:$0xf]
        %v1793 = vld [vmem:[%s1768 + $0x90] sm:$0xf]
        %v1794 = vld [vmem:[%s1768 + $0x94] sm:$0xf]
        %v1795 = vld [vmem:[%s1768 + $0x9c] sm:$0xf]
        %v1796 = vld [vmem:[%s1768 + $0xa0] sm:$0xf]
        %v1797 = vld [vmem:[%s1768 + $0xa8] sm:$0xf]
        %v1798 = vld [vmem:[%s1768 + $0xac] sm:$0xf]
        %v1799 = vld [vmem:[%s1768 + $0xb4] sm:$0xf]
        %v1800 = vld [vmem:[%s1768 + $0xb8] sm:$0xf]
        %v1801 = vld [vmem:[%s1 + $0xc0] sm:$0xf]
        %v1802 = vld [vmem:[%s1 + $0xc4] sm:$0xf]
        %v1803 = vld [vmem:[%s1 + $0xc8] sm:$0xf]
        %v1804 = vld [vmem:[%s1 + $0xcc] sm:$0xf]
        %v1805 = vld [vmem:[%s1 + $0xd0] sm:$0xf]
        %v1806 = vld [vmem:[%s1 + $0xd4] sm:$0xf]
        %v1807 = vld [vmem:[%s1 + $0xd8] sm:$0xf]
        %v1808 = vld [vmem:[%s1 + $0xdc] sm:$0xf]
        %v1809 = vld [vmem:[%s1 + $0xe0] sm:$0xf]
        %v1810 = vld [vmem:[%s1 + $0xe4] sm:$0xf]
        %v1811 = vld [vmem:[%s1 + $0xe8] sm:$0xf]
        %v1812 = vld [vmem:[%s1 + $0xec] sm:$0xf]
        %v1813 = vld [vmem:[%s1 + $0xf0] sm:$0xf]
        %v1814 = vld [vmem:[%s1 + $0xf4] sm:$0xf]
        %v1815 = vld [vmem:[%s1 + $0xf8] sm:$0xf]
        %v1816 = vld [vmem:[%s1 + $0xfc] sm:$0xf]
        %v1849 = vunpack.c.l.b16 %v1769
        %v1850 = vunpack.c.l.b16 %v1770
        %v1851 = vunpack.c.l.b16 %v1771
        %v1852 = vunpack.c.l.b16 %v1772
        %v1853 = vunpack.c.l.b16 %v1773
        %v1854 = vunpack.c.l.b16 %v1774
        %v1855 = vunpack.c.l.b16 %v1775
        %v1856 = vunpack.c.l.b16 %v1776
        %v1857 = vunpack.c.l.b16 %v1777
        %v1858 = vunpack.c.l.b16 %v1778
        %v1859 = vunpack.c.l.b16 %v1779
        %v1860 = vunpack.c.l.b16 %v1780
        %v1861 = vunpack.c.l.b16 %v1781
        %v1862 = vunpack.c.l.b16 %v1782
        %v1863 = vunpack.c.l.b16 %v1783
        %v1864 = vunpack.c.l.b16 %v1784
        %v1865 = vunpack.c.l.b16 %v1785
        %v1866 = vunpack.c.l.b16 %v1786
        %v1867 = vunpack.c.l.b16 %v1787
        %v1868 = vunpack.c.l.b16 %v1788
        %v1869 = vunpack.c.l.b16 %v1789
        %v1870 = vunpack.c.l.b16 %v1790
        %v1871 = vunpack.c.l.b16 %v1791
        %v1872 = vunpack.c.l.b16 %v1792
        %v1873 = vunpack.c.l.b16 %v1793
        %v1874 = vunpack.c.l.b16 %v1794
        %v1875 = vunpack.c.l.b16 %v1795
        %v1876 = vunpack.c.l.b16 %v1796
        %v1877 = vunpack.c.l.b16 %v1797
        %v1878 = vunpack.c.l.b16 %v1798
        %v1879 = vunpack.c.l.b16 %v1799
        %v1880 = vunpack.c.l.b16 %v1800
        %v1881 = vpack.c.b16 %v1850, %v1849
        %v1882 = vpack.c.b16 %v1852, %v1851
        %v1883 = vpack.c.b16 %v1854, %v1853
        %v1884 = vpack.c.b16 %v1856, %v1855
        %v1885 = vpack.c.b16 %v1858, %v1857
        %v1886 = vpack.c.b16 %v1860, %v1859
        %v1887 = vpack.c.b16 %v1862, %v1861
        %v1888 = vpack.c.b16 %v1864, %v1863
        %v1889 = vpack.c.b16 %v1866, %v1865
        %v1890 = vpack.c.b16 %v1868, %v1867
        %v1891 = vpack.c.b16 %v1870, %v1869
        %v1892 = vpack.c.b16 %v1872, %v1871
        %v1893 = vpack.c.b16 %v1874, %v1873
        %v1894 = vpack.c.b16 %v1876, %v1875
        %v1895 = vpack.c.b16 %v1878, %v1877
        %v1896 = vpack.c.b16 %v1880, %v1879
        %v1929 = vunpack.c.l.b16 %v1801
        %v1930 = vunpack.c.l.b16 %v1802
        %v1931 = vunpack.c.l.b16 %v1803
        %v1932 = vunpack.c.l.b16 %v1804
        %v1933 = vunpack.c.l.b16 %v1805
        %v1934 = vunpack.c.l.b16 %v1806
        %v1935 = vunpack.c.l.b16 %v1807
        %v1936 = vunpack.c.l.b16 %v1808
        %v1937 = vunpack.c.l.b16 %v1809
        %v1938 = vunpack.c.l.b16 %v1810
        %v1939 = vunpack.c.l.b16 %v1811
        %v1940 = vunpack.c.l.b16 %v1812
        %v1941 = vunpack.c.l.b16 %v1813
        %v1942 = vunpack.c.l.b16 %v1814
        %v1943 = vunpack.c.l.b16 %v1815
        %v1944 = vunpack.c.l.b16 %v1816
        %v1945 = vpack.c.b16 %v1930, %v1929
        %v1946 = vpack.c.b16 %v1932, %v1931
        %v1947 = vpack.c.b16 %v1934, %v1933
        %v1948 = vpack.c.b16 %v1936, %v1935
        %v1949 = vpack.c.b16 %v1938, %v1937
        %v1950 = vpack.c.b16 %v1940, %v1939
        %v1951 = vpack.c.b16 %v1942, %v1941
        %v1952 = vpack.c.b16 %v1944, %v1943
        %1961 = vmatprep.subr.bf16.mxu0 0
        %1962 = vmatpush1.bf16.msra.mxu0 %v1952
        %1963 = vmatprep.subr.bf16.mxu0 0
        %1964 = vmatpush1.bf16.msra.mxu0 %v1951
        %1965 = vmatprep.subr.bf16.mxu0 0
        %1966 = vmatpush1.bf16.msra.mxu0 %v1950
        %1967 = vmatprep.subr.bf16.mxu0 0
        %1968 = vmatpush1.bf16.msra.mxu0 %v1949
        %1969 = vmatprep.subr.bf16.mxu0 0
        %1970 = vmatpush1.bf16.msra.mxu0 %v1948
        %1971 = vmatprep.subr.bf16.mxu0 0
        %1972 = vmatpush1.bf16.msra.mxu0 %v1947
        %1973 = vmatprep.subr.bf16.mxu0 0
        %1974 = vmatpush1.bf16.msra.mxu0 %v1946
        %1975 = vmatprep.subr.bf16.mxu0 0
        %1976 = vmatpush1.bf16.msra.mxu0 %v1945
        %1977 = vmatprep.subr.bf16.mxu0 0
        %1978 = vmatpush2.bf16.msra.mxu0 0
        %1979 = vmatprep.subr.bf16.mxu0 0
        %1980 = vmatpush2.bf16.msra.mxu0 0
        %1981 = vmatprep.subr.bf16.mxu0 0
        %1982 = vmatpush2.bf16.msra.mxu0 0
        %1983 = vmatprep.subr.bf16.mxu0 0
        %1984 = vmatpush2.bf16.msra.mxu0 0
        %1985 = vmatprep.subr.bf16.mxu0 0
        %1986 = vmatpush2.bf16.msra.mxu0 0
        %1987 = vmatprep.subr.bf16.mxu0 0
        %1988 = vmatpush2.bf16.msra.mxu0 0
        %1989 = vmatprep.subr.bf16.mxu0 0
        %1990 = vmatpush2.bf16.msra.mxu0 0
        %1991 = vmatprep.subr.bf16.mxu0 0
        %1992 = vmatpush2.bf16.msra.mxu0 0
        %1993 = vmatprep.mubr.bf16.mxu0 0
        %1994 = vmatmul.mubr.bf16.gmra.mxu0 %v1881
        %v1995 = vpop.f32.mrf.mxu0
        %v1996 = vadd.f32 0.0, %v1995
        %v1997 = vpop.f32.mrf.mxu0
        %v1998 = vpop.f32.mrf.mxu0
        %v1999 = vadd.f32 0.0, %v1998
        %v2000 = vpop.f32.mrf.mxu0
        %2001 = vmatprep.mubr.bf16.mxu0 0
        %2002 = vmatmul.mubr.bf16.gmra.mxu0 %v1882
        %v2003 = vpop.f32.mrf.mxu0
        %v2004 = vadd.f32 0.0, %v2003
        %v2005 = vpop.f32.mrf.mxu0
        %v2006 = vpop.f32.mrf.mxu0
        %v2007 = vadd.f32 0.0, %v2006
        %v2008 = vpop.f32.mrf.mxu0
        %2009 = vmatprep.mubr.bf16.mxu0 0
        %2010 = vmatmul.mubr.bf16.gmra.mxu0 %v1883
        %v2011 = vpop.f32.mrf.mxu0
        %v2012 = vadd.f32 0.0, %v2011
        %v2013 = vpop.f32.mrf.mxu0
        %v2014 = vpop.f32.mrf.mxu0
        %v2015 = vadd.f32 0.0, %v2014
        %v2016 = vpop.f32.mrf.mxu0
        %2017 = vmatprep.mubr.bf16.mxu0 0
        %2018 = vmatmul.mubr.bf16.gmra.mxu0 %v1884
        %v2019 = vpop.f32.mrf.mxu0
        %v2020 = vadd.f32 0.0, %v2019
        %v2021 = vpop.f32.mrf.mxu0
        %v2022 = vpop.f32.mrf.mxu0
        %v2023 = vadd.f32 0.0, %v2022
        %v2024 = vpop.f32.mrf.mxu0
        %2025 = vmatprep.mubr.bf16.mxu0 0
        %2026 = vmatmul.mubr.bf16.gmra.mxu0 %v1885
        %v2027 = vpop.f32.mrf.mxu0
        %v2028 = vadd.f32 0.0, %v2027
        %v2029 = vpop.f32.mrf.mxu0
        %v2030 = vpop.f32.mrf.mxu0
        %v2031 = vadd.f32 0.0, %v2030
        %v2032 = vpop.f32.mrf.mxu0
        %2033 = vmatprep.mubr.bf16.mxu0 0
        %2034 = vmatmul.mubr.bf16.gmra.mxu0 %v1886
        %v2035 = vpop.f32.mrf.mxu0
        %v2036 = vadd.f32 0.0, %v2035
        %v2037 = vpop.f32.mrf.mxu0
        %v2038 = vpop.f32.mrf.mxu0
        %v2039 = vadd.f32 0.0, %v2038
        %v2040 = vpop.f32.mrf.mxu0
        %2041 = vmatprep.mubr.bf16.mxu0 0
        %2042 = vmatmul.mubr.bf16.gmra.mxu0 %v1887
        %v2043 = vpop.f32.mrf.mxu0
        %v2044 = vadd.f32 0.0, %v2043
        %v2045 = vpop.f32.mrf.mxu0
        %v2046 = vpop.f32.mrf.mxu0
        %v2047 = vadd.f32 0.0, %v2046
        %v2048 = vpop.f32.mrf.mxu0
        %2049 = vmatprep.mubr.bf16.mxu0 0
        %2050 = vmatmul.mubr.bf16.gmra.mxu0 %v1888
        %v2051 = vpop.f32.mrf.mxu0
        %v2052 = vadd.f32 0.0, %v2051
        %v2053 = vpop.f32.mrf.mxu0
        %v2054 = vpop.f32.mrf.mxu0
        %v2055 = vadd.f32 0.0, %v2054
        %v2056 = vpop.f32.mrf.mxu0
        %2057 = vmatprep.mubr.bf16.mxu0 0
        %2058 = vmatmul.mubr.bf16.gmra.mxu0 %v1889
        %v2059 = vpop.f32.mrf.mxu0
        %v2060 = vadd.f32 0.0, %v2059
        %v2061 = vpop.f32.mrf.mxu0
        %v2062 = vpop.f32.mrf.mxu0
        %v2063 = vadd.f32 0.0, %v2062
        %v2064 = vpop.f32.mrf.mxu0
        %2065 = vmatprep.mubr.bf16.mxu0 0
        %2066 = vmatmul.mubr.bf16.gmra.mxu0 %v1890
        %v2067 = vpop.f32.mrf.mxu0
        %v2068 = vadd.f32 0.0, %v2067
        %v2069 = vpop.f32.mrf.mxu0
        %v2070 = vpop.f32.mrf.mxu0
        %v2071 = vadd.f32 0.0, %v2070
        %v2072 = vpop.f32.mrf.mxu0
        %2073 = vmatprep.mubr.bf16.mxu0 0
        %2074 = vmatmul.mubr.bf16.gmra.mxu0 %v1891
        %v2075 = vpop.f32.mrf.mxu0
        %v2076 = vadd.f32 0.0, %v2075
        %v2077 = vpop.f32.mrf.mxu0
        %v2078 = vpop.f32.mrf.mxu0
        %v2079 = vadd.f32 0.0, %v2078
        %v2080 = vpop.f32.mrf.mxu0
        %2081 = vmatprep.mubr.bf16.mxu0 0
        %2082 = vmatmul.mubr.bf16.gmra.mxu0 %v1892
        %v2083 = vpop.f32.mrf.mxu0
        %v2084 = vadd.f32 0.0, %v2083
        %v2085 = vpop.f32.mrf.mxu0
        %v2086 = vpop.f32.mrf.mxu0
        %v2087 = vadd.f32 0.0, %v2086
        %v2088 = vpop.f32.mrf.mxu0
        %2089 = vmatprep.mubr.bf16.mxu0 0
        %2090 = vmatmul.mubr.bf16.gmra.mxu0 %v1893
        %v2091 = vpop.f32.mrf.mxu0
        %v2092 = vadd.f32 0.0, %v2091
        %v2093 = vpop.f32.mrf.mxu0
        %v2094 = vpop.f32.mrf.mxu0
        %v2095 = vadd.f32 0.0, %v2094
        %v2096 = vpop.f32.mrf.mxu0
        %2097 = vmatprep.mubr.bf16.mxu0 0
        %2098 = vmatmul.mubr.bf16.gmra.mxu0 %v1894
        %v2099 = vpop.f32.mrf.mxu0
        %v2100 = vadd.f32 0.0, %v2099
        %v2101 = vpop.f32.mrf.mxu0
        %v2102 = vpop.f32.mrf.mxu0
        %v2103 = vadd.f32 0.0, %v2102
        %v2104 = vpop.f32.mrf.mxu0
        %2105 = vmatprep.mubr.bf16.mxu0 0
        %2106 = vmatmul.mubr.bf16.gmra.mxu0 %v1895
        %v2107 = vpop.f32.mrf.mxu0
        %v2108 = vadd.f32 0.0, %v2107
        %v2109 = vpop.f32.mrf.mxu0
        %v2110 = vpop.f32.mrf.mxu0
        %v2111 = vadd.f32 0.0, %v2110
        %v2112 = vpop.f32.mrf.mxu0
        %2113 = vmatprep.mubr.bf16.mxu0 0
        %2114 = vmatmul.mubr.bf16.gmra.mxu0 %v1896
        %v2115 = vpop.f32.mrf.mxu0
        %v2116 = vadd.f32 0.0, %v2115
        %v2117 = vpop.f32.mrf.mxu0
        %v2118 = vpop.f32.mrf.mxu0
        %v2119 = vadd.f32 0.0, %v2118
        %v2120 = vpop.f32.mrf.mxu0
        %2121 = vdwg.mxu0
        %v2122 = vadd.f32 %v1736, %v1996
        %v2123 = vadd.f32 %v1737, %v1999
        %v2124 = vadd.f32 %v1738, %v2004
        %v2125 = vadd.f32 %v1739, %v2007
        %v2126 = vadd.f32 %v1740, %v2012
        %v2127 = vadd.f32 %v1741, %v2015
        %v2128 = vadd.f32 %v1742, %v2020
        %v2129 = vadd.f32 %v1743, %v2023
        %v2130 = vadd.f32 %v1744, %v2028
        %v2131 = vadd.f32 %v1745, %v2031
        %v2132 = vadd.f32 %v1746, %v2036
        %v2133 = vadd.f32 %v1747, %v2039
        %v2134 = vadd.f32 %v1748, %v2044
        %v2135 = vadd.f32 %v1749, %v2047
        %v2136 = vadd.f32 %v1750, %v2052
        %v2137 = vadd.f32 %v1751, %v2055
        %v2138 = vadd.f32 %v1752, %v2060
        %v2139 = vadd.f32 %v1753, %v2063
        %v2140 = vadd.f32 %v1754, %v2068
        %v2141 = vadd.f32 %v1755, %v2071
        %v2142 = vadd.f32 %v1756, %v2076
        %v2143 = vadd.f32 %v1757, %v2079
        %v2144 = vadd.f32 %v1758, %v2084
        %v2145 = vadd.f32 %v1759, %v2087
        %v2146 = vadd.f32 %v1760, %v2092
        %v2147 = vadd.f32 %v1761, %v2095
        %v2148 = vadd.f32 %v1762, %v2100
        %v2149 = vadd.f32 %v1763, %v2103
        %v2150 = vadd.f32 %v1764, %v2108
        %v2151 = vadd.f32 %v1765, %v2111
        %v2152 = vadd.f32 %v1766, %v2116
        %v2153 = vadd.f32 %v1767, %v2119
        %v2154 = vld [vmem:[%s1768] sm:$0xf]
        %v2155 = vld [vmem:[%s1768 + $0x4] sm:$0xf]
        %v2156 = vld [vmem:[%s1768 + $0x8] sm:$0x1]
        %v2157 = vld [vmem:[%s1768 + $0xc] sm:$0xf]
        %v2158 = vld [vmem:[%s1768 + $0x10] sm:$0xf]
        %v2159 = vld [vmem:[%s1768 + $0x14] sm:$0x1]
        %v2160 = vld [vmem:[%s1768 + $0x18] sm:$0xf]
        %v2161 = vld [vmem:[%s1768 + $0x1c] sm:$0xf]
        %v2162 = vld [vmem:[%s1768 + $0x20] sm:$0x1]
        %v2163 = vld [vmem:[%s1768 + $0x24] sm:$0xf]
        %v2164 = vld [vmem:[%s1768 + $0x28] sm:$0xf]
        %v2165 = vld [vmem:[%s1768 + $0x2c] sm:$0x1]
        %v2166 = vld [vmem:[%s1768 + $0x30] sm:$0xf]
        %v2167 = vld [vmem:[%s1768 + $0x34] sm:$0xf]
        %v2168 = vld [vmem:[%s1768 + $0x38] sm:$0x1]
        %v2169 = vld [vmem:[%s1768 + $0x3c] sm:$0xf]
        %v2170 = vld [vmem:[%s1768 + $0x40] sm:$0xf]
        %v2171 = vld [vmem:[%s1768 + $0x44] sm:$0x1]
        %v2172 = vld [vmem:[%s1768 + $0x48] sm:$0xf]
        %v2173 = vld [vmem:[%s1768 + $0x4c] sm:$0xf]
        %v2174 = vld [vmem:[%s1768 + $0x50] sm:$0x1]
        %v2175 = vld [vmem:[%s1768 + $0x54] sm:$0xf]
        %v2176 = vld [vmem:[%s1768 + $0x58] sm:$0xf]
        %v2177 = vld [vmem:[%s1768 + $0x5c] sm:$0x1]
        %v2178 = vld [vmem:[%s1768 + $0x60] sm:$0xf]
        %v2179 = vld [vmem:[%s1768 + $0x64] sm:$0xf]
        %v2180 = vld [vmem:[%s1768 + $0x68] sm:$0x1]
        %v2181 = vld [vmem:[%s1768 + $0x6c] sm:$0xf]
        %v2182 = vld [vmem:[%s1768 + $0x70] sm:$0xf]
        %v2183 = vld [vmem:[%s1768 + $0x74] sm:$0x1]
        %v2184 = vld [vmem:[%s1768 + $0x78] sm:$0xf]
        %v2185 = vld [vmem:[%s1768 + $0x7c] sm:$0xf]
        %v2186 = vld [vmem:[%s1768 + $0x80] sm:$0x1]
        %v2187 = vld [vmem:[%s1768 + $0x84] sm:$0xf]
        %v2188 = vld [vmem:[%s1768 + $0x88] sm:$0xf]
        %v2189 = vld [vmem:[%s1768 + $0x8c] sm:$0x1]
        %v2190 = vld [vmem:[%s1768 + $0x90] sm:$0xf]
        %v2191 = vld [vmem:[%s1768 + $0x94] sm:$0xf]
        %v2192 = vld [vmem:[%s1768 + $0x98] sm:$0x1]
        %v2193 = vld [vmem:[%s1768 + $0x9c] sm:$0xf]
        %v2194 = vld [vmem:[%s1768 + $0xa0] sm:$0xf]
        %v2195 = vld [vmem:[%s1768 + $0xa4] sm:$0x1]
        %v2196 = vld [vmem:[%s1768 + $0xa8] sm:$0xf]
        %v2197 = vld [vmem:[%s1768 + $0xac] sm:$0xf]
        %v2198 = vld [vmem:[%s1768 + $0xb0] sm:$0x1]
        %v2199 = vld [vmem:[%s1768 + $0xb4] sm:$0xf]
        %v2200 = vld [vmem:[%s1768 + $0xb8] sm:$0xf]
        %v2201 = vld [vmem:[%s1768 + $0xbc] sm:$0x1]
        %v2203 = vshrl.u32 %v2154, 16
        %v2205 = vrot.slane %v2203, 4
        %v2206 = vshll.u32 %v2154, 16
        %v2208 = vrot.slane %v2206, 5
        %v2209 = vor.u32 %v2205, %v2208
        %v2210 = vrot.slane %v2209, 4
        %v2212 = vshll.u32 %v2155, 16
        %v2214 = vrot.slane %v2212, 5
        %v2215 = vsel %vm305, %v2210, %v2214
        %v2216 = vshrl.u32 %v2155, 16
        %v2218 = vrot.slane %v2216, 4
        %v2219 = vor.u32 %v2218, %v2214
        %v2220 = vrot.slane %v2219, 4
        %v2222 = vshll.u32 %v2156, 16
        %v2224 = vrot.slane %v2222, 5
        %v2225 = vsel %vm305, %v2220, %v2224
        %v2227 = vshrl.u32 %v2157, 16
        %v2229 = vrot.slane %v2227, 4
        %v2230 = vshll.u32 %v2157, 16
        %v2232 = vrot.slane %v2230, 5
        %v2233 = vor.u32 %v2229, %v2232
        %v2234 = vrot.slane %v2233, 4
        %v2236 = vshll.u32 %v2158, 16
        %v2238 = vrot.slane %v2236, 5
        %v2239 = vsel %vm305, %v2234, %v2238
        %v2240 = vshrl.u32 %v2158, 16
        %v2242 = vrot.slane %v2240, 4
        %v2243 = vor.u32 %v2242, %v2238
        %v2244 = vrot.slane %v2243, 4
        %v2246 = vshll.u32 %v2159, 16
        %v2248 = vrot.slane %v2246, 5
        %v2249 = vsel %vm305, %v2244, %v2248
        %v2251 = vshrl.u32 %v2160, 16
        %v2253 = vrot.slane %v2251, 4
        %v2254 = vshll.u32 %v2160, 16
        %v2256 = vrot.slane %v2254, 5
        %v2257 = vor.u32 %v2253, %v2256
        %v2258 = vrot.slane %v2257, 4
        %v2260 = vshll.u32 %v2161, 16
        %v2262 = vrot.slane %v2260, 5
        %v2263 = vsel %vm305, %v2258, %v2262
        %v2264 = vshrl.u32 %v2161, 16
        %v2266 = vrot.slane %v2264, 4
        %v2267 = vor.u32 %v2266, %v2262
        %v2268 = vrot.slane %v2267, 4
        %v2270 = vshll.u32 %v2162, 16
        %v2272 = vrot.slane %v2270, 5
        %v2273 = vsel %vm305, %v2268, %v2272
        %v2275 = vshrl.u32 %v2163, 16
        %v2277 = vrot.slane %v2275, 4
        %v2278 = vshll.u32 %v2163, 16
        %v2280 = vrot.slane %v2278, 5
        %v2281 = vor.u32 %v2277, %v2280
        %v2282 = vrot.slane %v2281, 4
        %v2284 = vshll.u32 %v2164, 16
        %v2286 = vrot.slane %v2284, 5
        %v2287 = vsel %vm305, %v2282, %v2286
        %v2288 = vshrl.u32 %v2164, 16
        %v2290 = vrot.slane %v2288, 4
        %v2291 = vor.u32 %v2290, %v2286
        %v2292 = vrot.slane %v2291, 4
        %v2294 = vshll.u32 %v2165, 16
        %v2296 = vrot.slane %v2294, 5
        %v2297 = vsel %vm305, %v2292, %v2296
        %v2299 = vshrl.u32 %v2166, 16
        %v2301 = vrot.slane %v2299, 4
        %v2302 = vshll.u32 %v2166, 16
        %v2304 = vrot.slane %v2302, 5
        %v2305 = vor.u32 %v2301, %v2304
        %v2306 = vrot.slane %v2305, 4
        %v2308 = vshll.u32 %v2167, 16
        %v2310 = vrot.slane %v2308, 5
        %v2311 = vsel %vm305, %v2306, %v2310
        %v2312 = vshrl.u32 %v2167, 16
        %v2314 = vrot.slane %v2312, 4
        %v2315 = vor.u32 %v2314, %v2310
        %v2316 = vrot.slane %v2315, 4
        %v2318 = vshll.u32 %v2168, 16
        %v2320 = vrot.slane %v2318, 5
        %v2321 = vsel %vm305, %v2316, %v2320
        %v2323 = vshrl.u32 %v2169, 16
        %v2325 = vrot.slane %v2323, 4
        %v2326 = vshll.u32 %v2169, 16
        %v2328 = vrot.slane %v2326, 5
        %v2329 = vor.u32 %v2325, %v2328
        %v2330 = vrot.slane %v2329, 4
        %v2332 = vshll.u32 %v2170, 16
        %v2334 = vrot.slane %v2332, 5
        %v2335 = vsel %vm305, %v2330, %v2334
        %v2336 = vshrl.u32 %v2170, 16
        %v2338 = vrot.slane %v2336, 4
        %v2339 = vor.u32 %v2338, %v2334
        %v2340 = vrot.slane %v2339, 4
        %v2342 = vshll.u32 %v2171, 16
        %v2344 = vrot.slane %v2342, 5
        %v2345 = vsel %vm305, %v2340, %v2344
        %v2347 = vshrl.u32 %v2172, 16
        %v2349 = vrot.slane %v2347, 4
        %v2350 = vshll.u32 %v2172, 16
        %v2352 = vrot.slane %v2350, 5
        %v2353 = vor.u32 %v2349, %v2352
        %v2354 = vrot.slane %v2353, 4
        %v2356 = vshll.u32 %v2173, 16
        %v2358 = vrot.slane %v2356, 5
        %v2359 = vsel %vm305, %v2354, %v2358
        %v2360 = vshrl.u32 %v2173, 16
        %v2362 = vrot.slane %v2360, 4
        %v2363 = vor.u32 %v2362, %v2358
        %v2364 = vrot.slane %v2363, 4
        %v2366 = vshll.u32 %v2174, 16
        %v2368 = vrot.slane %v2366, 5
        %v2369 = vsel %vm305, %v2364, %v2368
        %v2371 = vshrl.u32 %v2175, 16
        %v2373 = vrot.slane %v2371, 4
        %v2374 = vshll.u32 %v2175, 16
        %v2376 = vrot.slane %v2374, 5
        %v2377 = vor.u32 %v2373, %v2376
        %v2378 = vrot.slane %v2377, 4
        %v2380 = vshll.u32 %v2176, 16
        %v2382 = vrot.slane %v2380, 5
        %v2383 = vsel %vm305, %v2378, %v2382
        %v2384 = vshrl.u32 %v2176, 16
        %v2386 = vrot.slane %v2384, 4
        %v2387 = vor.u32 %v2386, %v2382
        %v2388 = vrot.slane %v2387, 4
        %v2390 = vshll.u32 %v2177, 16
        %v2392 = vrot.slane %v2390, 5
        %v2393 = vsel %vm305, %v2388, %v2392
        %v2395 = vshrl.u32 %v2178, 16
        %v2397 = vrot.slane %v2395, 4
        %v2398 = vshll.u32 %v2178, 16
        %v2400 = vrot.slane %v2398, 5
        %v2401 = vor.u32 %v2397, %v2400
        %v2402 = vrot.slane %v2401, 4
        %v2404 = vshll.u32 %v2179, 16
        %v2406 = vrot.slane %v2404, 5
        %v2407 = vsel %vm305, %v2402, %v2406
        %v2408 = vshrl.u32 %v2179, 16
        %v2410 = vrot.slane %v2408, 4
        %v2411 = vor.u32 %v2410, %v2406
        %v2412 = vrot.slane %v2411, 4
        %v2414 = vshll.u32 %v2180, 16
        %v2416 = vrot.slane %v2414, 5
        %v2417 = vsel %vm305, %v2412, %v2416
        %v2419 = vshrl.u32 %v2181, 16
        %v2421 = vrot.slane %v2419, 4
        %v2422 = vshll.u32 %v2181, 16
        %v2424 = vrot.slane %v2422, 5
        %v2425 = vor.u32 %v2421, %v2424
        %v2426 = vrot.slane %v2425, 4
        %v2428 = vshll.u32 %v2182, 16
        %v2430 = vrot.slane %v2428, 5
        %v2431 = vsel %vm305, %v2426, %v2430
        %v2432 = vshrl.u32 %v2182, 16
        %v2434 = vrot.slane %v2432, 4
        %v2435 = vor.u32 %v2434, %v2430
        %v2436 = vrot.slane %v2435, 4
        %v2438 = vshll.u32 %v2183, 16
        %v2440 = vrot.slane %v2438, 5
        %v2441 = vsel %vm305, %v2436, %v2440
        %v2443 = vshrl.u32 %v2184, 16
        %v2445 = vrot.slane %v2443, 4
        %v2446 = vshll.u32 %v2184, 16
        %v2448 = vrot.slane %v2446, 5
        %v2449 = vor.u32 %v2445, %v2448
        %v2450 = vrot.slane %v2449, 4
        %v2452 = vshll.u32 %v2185, 16
        %v2454 = vrot.slane %v2452, 5
        %v2455 = vsel %vm305, %v2450, %v2454
        %v2456 = vshrl.u32 %v2185, 16
        %v2458 = vrot.slane %v2456, 4
        %v2459 = vor.u32 %v2458, %v2454
        %v2460 = vrot.slane %v2459, 4
        %v2462 = vshll.u32 %v2186, 16
        %v2464 = vrot.slane %v2462, 5
        %v2465 = vsel %vm305, %v2460, %v2464
        %v2467 = vshrl.u32 %v2187, 16
        %v2469 = vrot.slane %v2467, 4
        %v2470 = vshll.u32 %v2187, 16
        %v2472 = vrot.slane %v2470, 5
        %v2473 = vor.u32 %v2469, %v2472
        %v2474 = vrot.slane %v2473, 4
        %v2476 = vshll.u32 %v2188, 16
        %v2478 = vrot.slane %v2476, 5
        %v2479 = vsel %vm305, %v2474, %v2478
        %v2480 = vshrl.u32 %v2188, 16
        %v2482 = vrot.slane %v2480, 4
        %v2483 = vor.u32 %v2482, %v2478
        %v2484 = vrot.slane %v2483, 4
        %v2486 = vshll.u32 %v2189, 16
        %v2488 = vrot.slane %v2486, 5
        %v2489 = vsel %vm305, %v2484, %v2488
        %v2491 = vshrl.u32 %v2190, 16
        %v2493 = vrot.slane %v2491, 4
        %v2494 = vshll.u32 %v2190, 16
        %v2496 = vrot.slane %v2494, 5
        %v2497 = vor.u32 %v2493, %v2496
        %v2498 = vrot.slane %v2497, 4
        %v2500 = vshll.u32 %v2191, 16
        %v2502 = vrot.slane %v2500, 5
        %v2503 = vsel %vm305, %v2498, %v2502
        %v2504 = vshrl.u32 %v2191, 16
        %v2506 = vrot.slane %v2504, 4
        %v2507 = vor.u32 %v2506, %v2502
        %v2508 = vrot.slane %v2507, 4
        %v2510 = vshll.u32 %v2192, 16
        %v2512 = vrot.slane %v2510, 5
        %v2513 = vsel %vm305, %v2508, %v2512
        %v2515 = vshrl.u32 %v2193, 16
        %v2517 = vrot.slane %v2515, 4
        %v2518 = vshll.u32 %v2193, 16
        %v2520 = vrot.slane %v2518, 5
        %v2521 = vor.u32 %v2517, %v2520
        %v2522 = vrot.slane %v2521, 4
        %v2524 = vshll.u32 %v2194, 16
        %v2526 = vrot.slane %v2524, 5
        %v2527 = vsel %vm305, %v2522, %v2526
        %v2528 = vshrl.u32 %v2194, 16
        %v2530 = vrot.slane %v2528, 4
        %v2531 = vor.u32 %v2530, %v2526
        %v2532 = vrot.slane %v2531, 4
        %v2534 = vshll.u32 %v2195, 16
        %v2536 = vrot.slane %v2534, 5
        %v2537 = vsel %vm305, %v2532, %v2536
        %v2539 = vshrl.u32 %v2196, 16
        %v2541 = vrot.slane %v2539, 4
        %v2542 = vshll.u32 %v2196, 16
        %v2544 = vrot.slane %v2542, 5
        %v2545 = vor.u32 %v2541, %v2544
        %v2546 = vrot.slane %v2545, 4
        %v2548 = vshll.u32 %v2197, 16
        %v2550 = vrot.slane %v2548, 5
        %v2551 = vsel %vm305, %v2546, %v2550
        %v2552 = vshrl.u32 %v2197, 16
        %v2554 = vrot.slane %v2552, 4
        %v2555 = vor.u32 %v2554, %v2550
        %v2556 = vrot.slane %v2555, 4
        %v2558 = vshll.u32 %v2198, 16
        %v2560 = vrot.slane %v2558, 5
        %v2561 = vsel %vm305, %v2556, %v2560
        %v2563 = vshrl.u32 %v2199, 16
        %v2565 = vrot.slane %v2563, 4
        %v2566 = vshll.u32 %v2199, 16
        %v2568 = vrot.slane %v2566, 5
        %v2569 = vor.u32 %v2565, %v2568
        %v2570 = vrot.slane %v2569, 4
        %v2572 = vshll.u32 %v2200, 16
        %v2574 = vrot.slane %v2572, 5
        %v2575 = vsel %vm305, %v2570, %v2574
        %v2576 = vshrl.u32 %v2200, 16
        %v2578 = vrot.slane %v2576, 4
        %v2579 = vor.u32 %v2578, %v2574
        %v2580 = vrot.slane %v2579, 4
        %v2582 = vshll.u32 %v2201, 16
        %v2584 = vrot.slane %v2582, 5
        %v2585 = vsel %vm305, %v2580, %v2584
        %v2586 = vld [vmem:[%s1 + $0x100] sm:$0xf]
        %v2587 = vld [vmem:[%s1 + $0x104] sm:$0xf]
        %v2588 = vld [vmem:[%s1 + $0x108] sm:$0xf]
        %v2589 = vld [vmem:[%s1 + $0x10c] sm:$0xf]
        %v2590 = vld [vmem:[%s1 + $0x110] sm:$0xf]
        %v2591 = vld [vmem:[%s1 + $0x114] sm:$0xf]
        %v2592 = vld [vmem:[%s1 + $0x118] sm:$0xf]
        %v2593 = vld [vmem:[%s1 + $0x11c] sm:$0xf]
        %v2594 = vld [vmem:[%s1 + $0x120] sm:$0xf]
        %v2595 = vld [vmem:[%s1 + $0x124] sm:$0xf]
        %v2596 = vld [vmem:[%s1 + $0x128] sm:$0xf]
        %v2597 = vld [vmem:[%s1 + $0x12c] sm:$0xf]
        %v2598 = vld [vmem:[%s1 + $0x130] sm:$0xf]
        %v2599 = vld [vmem:[%s1 + $0x134] sm:$0xf]
        %v2600 = vld [vmem:[%s1 + $0x138] sm:$0xf]
        %v2601 = vld [vmem:[%s1 + $0x13c] sm:$0xf]
        %v2602 = vunpack.c.l.b16 %v2215
        %v2603 = vunpack.c.l.b16 %v2225
        %v2604 = vunpack.c.l.b16 %v2239
        %v2605 = vunpack.c.l.b16 %v2249
        %v2606 = vunpack.c.l.b16 %v2263
        %v2607 = vunpack.c.l.b16 %v2273
        %v2608 = vunpack.c.l.b16 %v2287
        %v2609 = vunpack.c.l.b16 %v2297
        %v2610 = vunpack.c.l.b16 %v2311
        %v2611 = vunpack.c.l.b16 %v2321
        %v2612 = vunpack.c.l.b16 %v2335
        %v2613 = vunpack.c.l.b16 %v2345
        %v2614 = vunpack.c.l.b16 %v2359
        %v2615 = vunpack.c.l.b16 %v2369
        %v2616 = vunpack.c.l.b16 %v2383
        %v2617 = vunpack.c.l.b16 %v2393
        %v2618 = vunpack.c.l.b16 %v2407
        %v2619 = vunpack.c.l.b16 %v2417
        %v2620 = vunpack.c.l.b16 %v2431
        %v2621 = vunpack.c.l.b16 %v2441
        %v2622 = vunpack.c.l.b16 %v2455
        %v2623 = vunpack.c.l.b16 %v2465
        %v2624 = vunpack.c.l.b16 %v2479
        %v2625 = vunpack.c.l.b16 %v2489
        %v2626 = vunpack.c.l.b16 %v2503
        %v2627 = vunpack.c.l.b16 %v2513
        %v2628 = vunpack.c.l.b16 %v2527
        %v2629 = vunpack.c.l.b16 %v2537
        %v2630 = vunpack.c.l.b16 %v2551
        %v2631 = vunpack.c.l.b16 %v2561
        %v2632 = vunpack.c.l.b16 %v2575
        %v2633 = vunpack.c.l.b16 %v2585
        %v2634 = vpack.c.b16 %v2603, %v2602
        %v2635 = vpack.c.b16 %v2605, %v2604
        %v2636 = vpack.c.b16 %v2607, %v2606
        %v2637 = vpack.c.b16 %v2609, %v2608
        %v2638 = vpack.c.b16 %v2611, %v2610
        %v2639 = vpack.c.b16 %v2613, %v2612
        %v2640 = vpack.c.b16 %v2615, %v2614
        %v2641 = vpack.c.b16 %v2617, %v2616
        %v2642 = vpack.c.b16 %v2619, %v2618
        %v2643 = vpack.c.b16 %v2621, %v2620
        %v2644 = vpack.c.b16 %v2623, %v2622
        %v2645 = vpack.c.b16 %v2625, %v2624
        %v2646 = vpack.c.b16 %v2627, %v2626
        %v2647 = vpack.c.b16 %v2629, %v2628
        %v2648 = vpack.c.b16 %v2631, %v2630
        %v2649 = vpack.c.b16 %v2633, %v2632
        %v2682 = vunpack.c.l.b16 %v2586
        %v2683 = vunpack.c.l.b16 %v2587
        %v2684 = vunpack.c.l.b16 %v2588
        %v2685 = vunpack.c.l.b16 %v2589
        %v2686 = vunpack.c.l.b16 %v2590
        %v2687 = vunpack.c.l.b16 %v2591
        %v2688 = vunpack.c.l.b16 %v2592
        %v2689 = vunpack.c.l.b16 %v2593
        %v2690 = vunpack.c.l.b16 %v2594
        %v2691 = vunpack.c.l.b16 %v2595
        %v2692 = vunpack.c.l.b16 %v2596
        %v2693 = vunpack.c.l.b16 %v2597
        %v2694 = vunpack.c.l.b16 %v2598
        %v2695 = vunpack.c.l.b16 %v2599
        %v2696 = vunpack.c.l.b16 %v2600
        %v2697 = vunpack.c.l.b16 %v2601
        %v2698 = vpack.c.b16 %v2683, %v2682
        %v2699 = vpack.c.b16 %v2685, %v2684
        %v2700 = vpack.c.b16 %v2687, %v2686
        %v2701 = vpack.c.b16 %v2689, %v2688
        %v2702 = vpack.c.b16 %v2691, %v2690
        %v2703 = vpack.c.b16 %v2693, %v2692
        %v2704 = vpack.c.b16 %v2695, %v2694
        %v2705 = vpack.c.b16 %v2697, %v2696
        %2714 = vmatprep.subr.bf16.mxu0 0
        %2715 = vmatpush1.bf16.msra.mxu0 %v2705
        %2716 = vmatprep.subr.bf16.mxu0 0
        %2717 = vmatpush1.bf16.msra.mxu0 %v2704
        %2718 = vmatprep.subr.bf16.mxu0 0
        %2719 = vmatpush1.bf16.msra.mxu0 %v2703
        %2720 = vmatprep.subr.bf16.mxu0 0
        %2721 = vmatpush1.bf16.msra.mxu0 %v2702
        %2722 = vmatprep.subr.bf16.mxu0 0
        %2723 = vmatpush1.bf16.msra.mxu0 %v2701
        %2724 = vmatprep.subr.bf16.mxu0 0
        %2725 = vmatpush1.bf16.msra.mxu0 %v2700
        %2726 = vmatprep.subr.bf16.mxu0 0
        %2727 = vmatpush1.bf16.msra.mxu0 %v2699
        %2728 = vmatprep.subr.bf16.mxu0 0
        %2729 = vmatpush1.bf16.msra.mxu0 %v2698
        %2730 = vmatprep.subr.bf16.mxu0 0
        %2731 = vmatpush2.bf16.msra.mxu0 0
        %2732 = vmatprep.subr.bf16.mxu0 0
        %2733 = vmatpush2.bf16.msra.mxu0 0
        %2734 = vmatprep.subr.bf16.mxu0 0
        %2735 = vmatpush2.bf16.msra.mxu0 0
        %2736 = vmatprep.subr.bf16.mxu0 0
        %2737 = vmatpush2.bf16.msra.mxu0 0
        %2738 = vmatprep.subr.bf16.mxu0 0
        %2739 = vmatpush2.bf16.msra.mxu0 0
        %2740 = vmatprep.subr.bf16.mxu0 0
        %2741 = vmatpush2.bf16.msra.mxu0 0
        %2742 = vmatprep.subr.bf16.mxu0 0
        %2743 = vmatpush2.bf16.msra.mxu0 0
        %2744 = vmatprep.subr.bf16.mxu0 0
        %2745 = vmatpush2.bf16.msra.mxu0 0
        %2746 = vmatprep.mubr.bf16.mxu0 0
        %2747 = vmatmul.mubr.bf16.gmra.mxu0 %v2634
        %v2748 = vpop.f32.mrf.mxu0
        %v2749 = vadd.f32 0.0, %v2748
        %v2750 = vpop.f32.mrf.mxu0
        %v2751 = vpop.f32.mrf.mxu0
        %v2752 = vadd.f32 0.0, %v2751
        %v2753 = vpop.f32.mrf.mxu0
        %2754 = vmatprep.mubr.bf16.mxu0 0
        %2755 = vmatmul.mubr.bf16.gmra.mxu0 %v2635
        %v2756 = vpop.f32.mrf.mxu0
        %v2757 = vadd.f32 0.0, %v2756
        %v2758 = vpop.f32.mrf.mxu0
        %v2759 = vpop.f32.mrf.mxu0
        %v2760 = vadd.f32 0.0, %v2759
        %v2761 = vpop.f32.mrf.mxu0
        %2762 = vmatprep.mubr.bf16.mxu0 0
        %2763 = vmatmul.mubr.bf16.gmra.mxu0 %v2636
        %v2764 = vpop.f32.mrf.mxu0
        %v2765 = vadd.f32 0.0, %v2764
        %v2766 = vpop.f32.mrf.mxu0
        %v2767 = vpop.f32.mrf.mxu0
        %v2768 = vadd.f32 0.0, %v2767
        %v2769 = vpop.f32.mrf.mxu0
        %2770 = vmatprep.mubr.bf16.mxu0 0
        %2771 = vmatmul.mubr.bf16.gmra.mxu0 %v2637
        %v2772 = vpop.f32.mrf.mxu0
        %v2773 = vadd.f32 0.0, %v2772
        %v2774 = vpop.f32.mrf.mxu0
        %v2775 = vpop.f32.mrf.mxu0
        %v2776 = vadd.f32 0.0, %v2775
        %v2777 = vpop.f32.mrf.mxu0
        %2778 = vmatprep.mubr.bf16.mxu0 0
        %2779 = vmatmul.mubr.bf16.gmra.mxu0 %v2638
        %v2780 = vpop.f32.mrf.mxu0
        %v2781 = vadd.f32 0.0, %v2780
        %v2782 = vpop.f32.mrf.mxu0
        %v2783 = vpop.f32.mrf.mxu0
        %v2784 = vadd.f32 0.0, %v2783
        %v2785 = vpop.f32.mrf.mxu0
        %2786 = vmatprep.mubr.bf16.mxu0 0
        %2787 = vmatmul.mubr.bf16.gmra.mxu0 %v2639
        %v2788 = vpop.f32.mrf.mxu0
        %v2789 = vadd.f32 0.0, %v2788
        %v2790 = vpop.f32.mrf.mxu0
        %v2791 = vpop.f32.mrf.mxu0
        %v2792 = vadd.f32 0.0, %v2791
        %v2793 = vpop.f32.mrf.mxu0
        %2794 = vmatprep.mubr.bf16.mxu0 0
        %2795 = vmatmul.mubr.bf16.gmra.mxu0 %v2640
        %v2796 = vpop.f32.mrf.mxu0
        %v2797 = vadd.f32 0.0, %v2796
        %v2798 = vpop.f32.mrf.mxu0
        %v2799 = vpop.f32.mrf.mxu0
        %v2800 = vadd.f32 0.0, %v2799
        %v2801 = vpop.f32.mrf.mxu0
        %2802 = vmatprep.mubr.bf16.mxu0 0
        %2803 = vmatmul.mubr.bf16.gmra.mxu0 %v2641
        %v2804 = vpop.f32.mrf.mxu0
        %v2805 = vadd.f32 0.0, %v2804
        %v2806 = vpop.f32.mrf.mxu0
        %v2807 = vpop.f32.mrf.mxu0
        %v2808 = vadd.f32 0.0, %v2807
        %v2809 = vpop.f32.mrf.mxu0
        %2810 = vmatprep.mubr.bf16.mxu0 0
        %2811 = vmatmul.mubr.bf16.gmra.mxu0 %v2642
        %v2812 = vpop.f32.mrf.mxu0
        %v2813 = vadd.f32 0.0, %v2812
        %v2814 = vpop.f32.mrf.mxu0
        %v2815 = vpop.f32.mrf.mxu0
        %v2816 = vadd.f32 0.0, %v2815
        %v2817 = vpop.f32.mrf.mxu0
        %2818 = vmatprep.mubr.bf16.mxu0 0
        %2819 = vmatmul.mubr.bf16.gmra.mxu0 %v2643
        %v2820 = vpop.f32.mrf.mxu0
        %v2821 = vadd.f32 0.0, %v2820
        %v2822 = vpop.f32.mrf.mxu0
        %v2823 = vpop.f32.mrf.mxu0
        %v2824 = vadd.f32 0.0, %v2823
        %v2825 = vpop.f32.mrf.mxu0
        %2826 = vmatprep.mubr.bf16.mxu0 0
        %2827 = vmatmul.mubr.bf16.gmra.mxu0 %v2644
        %v2828 = vpop.f32.mrf.mxu0
        %v2829 = vadd.f32 0.0, %v2828
        %v2830 = vpop.f32.mrf.mxu0
        %v2831 = vpop.f32.mrf.mxu0
        %v2832 = vadd.f32 0.0, %v2831
        %v2833 = vpop.f32.mrf.mxu0
        %2834 = vmatprep.mubr.bf16.mxu0 0
        %2835 = vmatmul.mubr.bf16.gmra.mxu0 %v2645
        %v2836 = vpop.f32.mrf.mxu0
        %v2837 = vadd.f32 0.0, %v2836
        %v2838 = vpop.f32.mrf.mxu0
        %v2839 = vpop.f32.mrf.mxu0
        %v2840 = vadd.f32 0.0, %v2839
        %v2841 = vpop.f32.mrf.mxu0
        %2842 = vmatprep.mubr.bf16.mxu0 0
        %2843 = vmatmul.mubr.bf16.gmra.mxu0 %v2646
        %v2844 = vpop.f32.mrf.mxu0
        %v2845 = vadd.f32 0.0, %v2844
        %v2846 = vpop.f32.mrf.mxu0
        %v2847 = vpop.f32.mrf.mxu0
        %v2848 = vadd.f32 0.0, %v2847
        %v2849 = vpop.f32.mrf.mxu0
        %2850 = vmatprep.mubr.bf16.mxu0 0
        %2851 = vmatmul.mubr.bf16.gmra.mxu0 %v2647
        %v2852 = vpop.f32.mrf.mxu0
        %v2853 = vadd.f32 0.0, %v2852
        %v2854 = vpop.f32.mrf.mxu0
        %v2855 = vpop.f32.mrf.mxu0
        %v2856 = vadd.f32 0.0, %v2855
        %v2857 = vpop.f32.mrf.mxu0
        %2858 = vmatprep.mubr.bf16.mxu0 0
        %2859 = vmatmul.mubr.bf16.gmra.mxu0 %v2648
        %v2860 = vpop.f32.mrf.mxu0
        %v2861 = vadd.f32 0.0, %v2860
        %v2862 = vpop.f32.mrf.mxu0
        %v2863 = vpop.f32.mrf.mxu0
        %v2864 = vadd.f32 0.0, %v2863
        %v2865 = vpop.f32.mrf.mxu0
        %2866 = vmatprep.mubr.bf16.mxu0 0
        %2867 = vmatmul.mubr.bf16.gmra.mxu0 %v2649
        %v2868 = vpop.f32.mrf.mxu0
        %v2869 = vadd.f32 0.0, %v2868
        %v2870 = vpop.f32.mrf.mxu0
        %v2871 = vpop.f32.mrf.mxu0
        %v2872 = vadd.f32 0.0, %v2871
        %v2873 = vpop.f32.mrf.mxu0
        %2874 = vdwg.mxu0
        %v2875 = vadd.f32 %v2122, %v2749
        %v2876 = vadd.f32 %v2123, %v2752
        %v2877 = vadd.f32 %v2124, %v2757
        %v2878 = vadd.f32 %v2125, %v2760
        %v2879 = vadd.f32 %v2126, %v2765
        %v2880 = vadd.f32 %v2127, %v2768
        %v2881 = vadd.f32 %v2128, %v2773
        %v2882 = vadd.f32 %v2129, %v2776
        %v2883 = vadd.f32 %v2130, %v2781
        %v2884 = vadd.f32 %v2131, %v2784
        %v2885 = vadd.f32 %v2132, %v2789
        %v2886 = vadd.f32 %v2133, %v2792
        %v2887 = vadd.f32 %v2134, %v2797
        %v2888 = vadd.f32 %v2135, %v2800
        %v2889 = vadd.f32 %v2136, %v2805
        %v2890 = vadd.f32 %v2137, %v2808
        %v2891 = vadd.f32 %v2138, %v2813
        %v2892 = vadd.f32 %v2139, %v2816
        %v2893 = vadd.f32 %v2140, %v2821
        %v2894 = vadd.f32 %v2141, %v2824
        %v2895 = vadd.f32 %v2142, %v2829
        %v2896 = vadd.f32 %v2143, %v2832
        %v2897 = vadd.f32 %v2144, %v2837
        %v2898 = vadd.f32 %v2145, %v2840
        %v2899 = vadd.f32 %v2146, %v2845
        %v2900 = vadd.f32 %v2147, %v2848
        %v2901 = vadd.f32 %v2148, %v2853
        %v2902 = vadd.f32 %v2149, %v2856
        %v2903 = vadd.f32 %v2150, %v2861
        %v2904 = vadd.f32 %v2151, %v2864
        %v2905 = vadd.f32 %v2152, %v2869
        %v2906 = vadd.f32 %v2153, %v2872
        %v2907 = vld [vmem:[%s1768] sm:$0xe]
        %v2908 = vld [vmem:[%s1768 + $0xc] sm:$0xe]
        %v2909 = vld [vmem:[%s1768 + $0x18] sm:$0xe]
        %v2910 = vld [vmem:[%s1768 + $0x24] sm:$0xe]
        %v2911 = vld [vmem:[%s1768 + $0x30] sm:$0xe]
        %v2912 = vld [vmem:[%s1768 + $0x3c] sm:$0xe]
        %v2913 = vld [vmem:[%s1768 + $0x48] sm:$0xe]
        %v2914 = vld [vmem:[%s1768 + $0x54] sm:$0xe]
        %v2915 = vld [vmem:[%s1768 + $0x60] sm:$0xe]
        %v2916 = vld [vmem:[%s1768 + $0x6c] sm:$0xe]
        %v2917 = vld [vmem:[%s1768 + $0x78] sm:$0xe]
        %v2918 = vld [vmem:[%s1768 + $0x84] sm:$0xe]
        %v2919 = vld [vmem:[%s1768 + $0x90] sm:$0xe]
        %v2920 = vld [vmem:[%s1768 + $0x9c] sm:$0xe]
        %v2921 = vld [vmem:[%s1768 + $0xa8] sm:$0xe]
        %v2922 = vld [vmem:[%s1768 + $0xb4] sm:$0xe]
        %v2971 = vrot.slane %v2907, 5
        %v2972 = vrot.slane %v2971, 4
        %v2973 = vrot.slane %v2155, 5
        %v2974 = vsel %vm1334, %v2972, %v2973
        %v2975 = vrot.slane %v2973, 4
        %v2976 = vrot.slane %v2156, 5
        %v2977 = vsel %vm1334, %v2975, %v2976
        %v2978 = vrot.slane %v2908, 5
        %v2979 = vrot.slane %v2978, 4
        %v2980 = vrot.slane %v2158, 5
        %v2981 = vsel %vm1334, %v2979, %v2980
        %v2982 = vrot.slane %v2980, 4
        %v2983 = vrot.slane %v2159, 5
        %v2984 = vsel %vm1334, %v2982, %v2983
        %v2985 = vrot.slane %v2909, 5
        %v2986 = vrot.slane %v2985, 4
        %v2987 = vrot.slane %v2161, 5
        %v2988 = vsel %vm1334, %v2986, %v2987
        %v2989 = vrot.slane %v2987, 4
        %v2990 = vrot.slane %v2162, 5
        %v2991 = vsel %vm1334, %v2989, %v2990
        %v2992 = vrot.slane %v2910, 5
        %v2993 = vrot.slane %v2992, 4
        %v2994 = vrot.slane %v2164, 5
        %v2995 = vsel %vm1334, %v2993, %v2994
        %v2996 = vrot.slane %v2994, 4
        %v2997 = vrot.slane %v2165, 5
        %v2998 = vsel %vm1334, %v2996, %v2997
        %v2999 = vrot.slane %v2911, 5
        %v3000 = vrot.slane %v2999, 4
        %v3001 = vrot.slane %v2167, 5
        %v3002 = vsel %vm1334, %v3000, %v3001
        %v3003 = vrot.slane %v3001, 4
        %v3004 = vrot.slane %v2168, 5
        %v3005 = vsel %vm1334, %v3003, %v3004
        %v3006 = vrot.slane %v2912, 5
        %v3007 = vrot.slane %v3006, 4
        %v3008 = vrot.slane %v2170, 5
        %v3009 = vsel %vm1334, %v3007, %v3008
        %v3010 = vrot.slane %v3008, 4
        %v3011 = vrot.slane %v2171, 5
        %v3012 = vsel %vm1334, %v3010, %v3011
        %v3013 = vrot.slane %v2913, 5
        %v3014 = vrot.slane %v3013, 4
        %v3015 = vrot.slane %v2173, 5
        %v3016 = vsel %vm1334, %v3014, %v3015
        %v3017 = vrot.slane %v3015, 4
        %v3018 = vrot.slane %v2174, 5
        %v3019 = vsel %vm1334, %v3017, %v3018
        %v3020 = vrot.slane %v2914, 5
        %v3021 = vrot.slane %v3020, 4
        %v3022 = vrot.slane %v2176, 5
        %v3023 = vsel %vm1334, %v3021, %v3022
        %v3024 = vrot.slane %v3022, 4
        %v3025 = vrot.slane %v2177, 5
        %v3026 = vsel %vm1334, %v3024, %v3025
        %v3027 = vrot.slane %v2915, 5
        %v3028 = vrot.slane %v3027, 4
        %v3029 = vrot.slane %v2179, 5
        %v3030 = vsel %vm1334, %v3028, %v3029
        %v3031 = vrot.slane %v3029, 4
        %v3032 = vrot.slane %v2180, 5
        %v3033 = vsel %vm1334, %v3031, %v3032
        %v3034 = vrot.slane %v2916, 5
        %v3035 = vrot.slane %v3034, 4
        %v3036 = vrot.slane %v2182, 5
        %v3037 = vsel %vm1334, %v3035, %v3036
        %v3038 = vrot.slane %v3036, 4
        %v3039 = vrot.slane %v2183, 5
        %v3040 = vsel %vm1334, %v3038, %v3039
        %v3041 = vrot.slane %v2917, 5
        %v3042 = vrot.slane %v3041, 4
        %v3043 = vrot.slane %v2185, 5
        %v3044 = vsel %vm1334, %v3042, %v3043
        %v3045 = vrot.slane %v3043, 4
        %v3046 = vrot.slane %v2186, 5
        %v3047 = vsel %vm1334, %v3045, %v3046
        %v3048 = vrot.slane %v2918, 5
        %v3049 = vrot.slane %v3048, 4
        %v3050 = vrot.slane %v2188, 5
        %v3051 = vsel %vm1334, %v3049, %v3050
        %v3052 = vrot.slane %v3050, 4
        %v3053 = vrot.slane %v2189, 5
        %v3054 = vsel %vm1334, %v3052, %v3053
        %v3055 = vrot.slane %v2919, 5
        %v3056 = vrot.slane %v3055, 4
        %v3057 = vrot.slane %v2191, 5
        %v3058 = vsel %vm1334, %v3056, %v3057
        %v3059 = vrot.slane %v3057, 4
        %v3060 = vrot.slane %v2192, 5
        %v3061 = vsel %vm1334, %v3059, %v3060
        %v3062 = vrot.slane %v2920, 5
        %v3063 = vrot.slane %v3062, 4
        %v3064 = vrot.slane %v2194, 5
        %v3065 = vsel %vm1334, %v3063, %v3064
        %v3066 = vrot.slane %v3064, 4
        %v3067 = vrot.slane %v2195, 5
        %v3068 = vsel %vm1334, %v3066, %v3067
        %v3069 = vrot.slane %v2921, 5
        %v3070 = vrot.slane %v3069, 4
        %v3071 = vrot.slane %v2197, 5
        %v3072 = vsel %vm1334, %v3070, %v3071
        %v3073 = vrot.slane %v3071, 4
        %v3074 = vrot.slane %v2198, 5
        %v3075 = vsel %vm1334, %v3073, %v3074
        %v3076 = vrot.slane %v2922, 5
        %v3077 = vrot.slane %v3076, 4
        %v3078 = vrot.slane %v2200, 5
        %v3079 = vsel %vm1334, %v3077, %v3078
        %v3080 = vrot.slane %v3078, 4
        %v3081 = vrot.slane %v2201, 5
        %v3082 = vsel %vm1334, %v3080, %v3081
        %v3083 = vld [vmem:[%s1 + $0x140] sm:$0xf]
        %v3084 = vld [vmem:[%s1 + $0x144] sm:$0xf]
        %v3085 = vld [vmem:[%s1 + $0x148] sm:$0xf]
        %v3086 = vld [vmem:[%s1 + $0x14c] sm:$0xf]
        %v3087 = vld [vmem:[%s1 + $0x150] sm:$0xf]
        %v3088 = vld [vmem:[%s1 + $0x154] sm:$0xf]
        %v3089 = vld [vmem:[%s1 + $0x158] sm:$0xf]
        %v3090 = vld [vmem:[%s1 + $0x15c] sm:$0xf]
        %v3091 = vld [vmem:[%s1 + $0x160] sm:$0xf]
        %v3092 = vld [vmem:[%s1 + $0x164] sm:$0xf]
        %v3093 = vld [vmem:[%s1 + $0x168] sm:$0xf]
        %v3094 = vld [vmem:[%s1 + $0x16c] sm:$0xf]
        %v3095 = vld [vmem:[%s1 + $0x170] sm:$0xf]
        %v3096 = vld [vmem:[%s1 + $0x174] sm:$0xf]
        %v3097 = vld [vmem:[%s1 + $0x178] sm:$0xf]
        %v3098 = vld [vmem:[%s1 + $0x17c] sm:$0xf]
        %v3099 = vunpack.c.l.b16 %v2974
        %v3100 = vunpack.c.l.b16 %v2977
        %v3101 = vunpack.c.l.b16 %v2981
        %v3102 = vunpack.c.l.b16 %v2984
        %v3103 = vunpack.c.l.b16 %v2988
        %v3104 = vunpack.c.l.b16 %v2991
        %v3105 = vunpack.c.l.b16 %v2995
        %v3106 = vunpack.c.l.b16 %v2998
        %v3107 = vunpack.c.l.b16 %v3002
        %v3108 = vunpack.c.l.b16 %v3005
        %v3109 = vunpack.c.l.b16 %v3009
        %v3110 = vunpack.c.l.b16 %v3012
        %v3111 = vunpack.c.l.b16 %v3016
        %v3112 = vunpack.c.l.b16 %v3019
        %v3113 = vunpack.c.l.b16 %v3023
        %v3114 = vunpack.c.l.b16 %v3026
        %v3115 = vunpack.c.l.b16 %v3030
        %v3116 = vunpack.c.l.b16 %v3033
        %v3117 = vunpack.c.l.b16 %v3037
        %v3118 = vunpack.c.l.b16 %v3040
        %v3119 = vunpack.c.l.b16 %v3044
        %v3120 = vunpack.c.l.b16 %v3047
        %v3121 = vunpack.c.l.b16 %v3051
        %v3122 = vunpack.c.l.b16 %v3054
        %v3123 = vunpack.c.l.b16 %v3058
        %v3124 = vunpack.c.l.b16 %v3061
        %v3125 = vunpack.c.l.b16 %v3065
        %v3126 = vunpack.c.l.b16 %v3068
        %v3127 = vunpack.c.l.b16 %v3072
        %v3128 = vunpack.c.l.b16 %v3075
        %v3129 = vunpack.c.l.b16 %v3079
        %v3130 = vunpack.c.l.b16 %v3082
        %v3131 = vpack.c.b16 %v3100, %v3099
        %v3132 = vpack.c.b16 %v3102, %v3101
        %v3133 = vpack.c.b16 %v3104, %v3103
        %v3134 = vpack.c.b16 %v3106, %v3105
        %v3135 = vpack.c.b16 %v3108, %v3107
        %v3136 = vpack.c.b16 %v3110, %v3109
        %v3137 = vpack.c.b16 %v3112, %v3111
        %v3138 = vpack.c.b16 %v3114, %v3113
        %v3139 = vpack.c.b16 %v3116, %v3115
        %v3140 = vpack.c.b16 %v3118, %v3117
        %v3141 = vpack.c.b16 %v3120, %v3119
        %v3142 = vpack.c.b16 %v3122, %v3121
        %v3143 = vpack.c.b16 %v3124, %v3123
        %v3144 = vpack.c.b16 %v3126, %v3125
        %v3145 = vpack.c.b16 %v3128, %v3127
        %v3146 = vpack.c.b16 %v3130, %v3129
        %v3179 = vunpack.c.l.b16 %v3083
        %v3180 = vunpack.c.l.b16 %v3084
        %v3181 = vunpack.c.l.b16 %v3085
        %v3182 = vunpack.c.l.b16 %v3086
        %v3183 = vunpack.c.l.b16 %v3087
        %v3184 = vunpack.c.l.b16 %v3088
        %v3185 = vunpack.c.l.b16 %v3089
        %v3186 = vunpack.c.l.b16 %v3090
        %v3187 = vunpack.c.l.b16 %v3091
        %v3188 = vunpack.c.l.b16 %v3092
        %v3189 = vunpack.c.l.b16 %v3093
        %v3190 = vunpack.c.l.b16 %v3094
        %v3191 = vunpack.c.l.b16 %v3095
        %v3192 = vunpack.c.l.b16 %v3096
        %v3193 = vunpack.c.l.b16 %v3097
        %v3194 = vunpack.c.l.b16 %v3098
        %v3195 = vpack.c.b16 %v3180, %v3179
        %v3196 = vpack.c.b16 %v3182, %v3181
        %v3197 = vpack.c.b16 %v3184, %v3183
        %v3198 = vpack.c.b16 %v3186, %v3185
        %v3199 = vpack.c.b16 %v3188, %v3187
        %v3200 = vpack.c.b16 %v3190, %v3189
        %v3201 = vpack.c.b16 %v3192, %v3191
        %v3202 = vpack.c.b16 %v3194, %v3193
        %3211 = vmatprep.subr.bf16.mxu0 0
        %3212 = vmatpush1.bf16.msra.mxu0 %v3202
        %3213 = vmatprep.subr.bf16.mxu0 0
        %3214 = vmatpush1.bf16.msra.mxu0 %v3201
        %3215 = vmatprep.subr.bf16.mxu0 0
        %3216 = vmatpush1.bf16.msra.mxu0 %v3200
        %3217 = vmatprep.subr.bf16.mxu0 0
        %3218 = vmatpush1.bf16.msra.mxu0 %v3199
        %3219 = vmatprep.subr.bf16.mxu0 0
        %3220 = vmatpush1.bf16.msra.mxu0 %v3198
        %3221 = vmatprep.subr.bf16.mxu0 0
        %3222 = vmatpush1.bf16.msra.mxu0 %v3197
        %3223 = vmatprep.subr.bf16.mxu0 0
        %3224 = vmatpush1.bf16.msra.mxu0 %v3196
        %3225 = vmatprep.subr.bf16.mxu0 0
        %3226 = vmatpush1.bf16.msra.mxu0 %v3195
        %3227 = vmatprep.subr.bf16.mxu0 0
        %3228 = vmatpush2.bf16.msra.mxu0 0
        %3229 = vmatprep.subr.bf16.mxu0 0
        %3230 = vmatpush2.bf16.msra.mxu0 0
        %3231 = vmatprep.subr.bf16.mxu0 0
        %3232 = vmatpush2.bf16.msra.mxu0 0
        %3233 = vmatprep.subr.bf16.mxu0 0
        %3234 = vmatpush2.bf16.msra.mxu0 0
        %3235 = vmatprep.subr.bf16.mxu0 0
        %3236 = vmatpush2.bf16.msra.mxu0 0
        %3237 = vmatprep.subr.bf16.mxu0 0
        %3238 = vmatpush2.bf16.msra.mxu0 0
        %3239 = vmatprep.subr.bf16.mxu0 0
        %3240 = vmatpush2.bf16.msra.mxu0 0
        %3241 = vmatprep.subr.bf16.mxu0 0
        %3242 = vmatpush2.bf16.msra.mxu0 0
        %3243 = vmatprep.mubr.bf16.mxu0 0
        %3244 = vmatmul.mubr.bf16.gmra.mxu0 %v3131
        %v3245 = vpop.f32.mrf.mxu0
        %v3246 = vadd.f32 0.0, %v3245
        %v3247 = vpop.f32.mrf.mxu0
        %v3248 = vpop.f32.mrf.mxu0
        %v3249 = vadd.f32 0.0, %v3248
        %v3250 = vpop.f32.mrf.mxu0
        %3251 = vmatprep.mubr.bf16.mxu0 0
        %3252 = vmatmul.mubr.bf16.gmra.mxu0 %v3132
        %v3253 = vpop.f32.mrf.mxu0
        %v3254 = vadd.f32 0.0, %v3253
        %v3255 = vpop.f32.mrf.mxu0
        %v3256 = vpop.f32.mrf.mxu0
        %v3257 = vadd.f32 0.0, %v3256
        %v3258 = vpop.f32.mrf.mxu0
        %3259 = vmatprep.mubr.bf16.mxu0 0
        %3260 = vmatmul.mubr.bf16.gmra.mxu0 %v3133
        %v3261 = vpop.f32.mrf.mxu0
        %v3262 = vadd.f32 0.0, %v3261
        %v3263 = vpop.f32.mrf.mxu0
        %v3264 = vpop.f32.mrf.mxu0
        %v3265 = vadd.f32 0.0, %v3264
        %v3266 = vpop.f32.mrf.mxu0
        %3267 = vmatprep.mubr.bf16.mxu0 0
        %3268 = vmatmul.mubr.bf16.gmra.mxu0 %v3134
        %v3269 = vpop.f32.mrf.mxu0
        %v3270 = vadd.f32 0.0, %v3269
        %v3271 = vpop.f32.mrf.mxu0
        %v3272 = vpop.f32.mrf.mxu0
        %v3273 = vadd.f32 0.0, %v3272
        %v3274 = vpop.f32.mrf.mxu0
        %3275 = vmatprep.mubr.bf16.mxu0 0
        %3276 = vmatmul.mubr.bf16.gmra.mxu0 %v3135
        %v3277 = vpop.f32.mrf.mxu0
        %v3278 = vadd.f32 0.0, %v3277
        %v3279 = vpop.f32.mrf.mxu0
        %v3280 = vpop.f32.mrf.mxu0
        %v3281 = vadd.f32 0.0, %v3280
        %v3282 = vpop.f32.mrf.mxu0
        %3283 = vmatprep.mubr.bf16.mxu0 0
        %3284 = vmatmul.mubr.bf16.gmra.mxu0 %v3136
        %v3285 = vpop.f32.mrf.mxu0
        %v3286 = vadd.f32 0.0, %v3285
        %v3287 = vpop.f32.mrf.mxu0
        %v3288 = vpop.f32.mrf.mxu0
        %v3289 = vadd.f32 0.0, %v3288
        %v3290 = vpop.f32.mrf.mxu0
        %3291 = vmatprep.mubr.bf16.mxu0 0
        %3292 = vmatmul.mubr.bf16.gmra.mxu0 %v3137
        %v3293 = vpop.f32.mrf.mxu0
        %v3294 = vadd.f32 0.0, %v3293
        %v3295 = vpop.f32.mrf.mxu0
        %v3296 = vpop.f32.mrf.mxu0
        %v3297 = vadd.f32 0.0, %v3296
        %v3298 = vpop.f32.mrf.mxu0
        %3299 = vmatprep.mubr.bf16.mxu0 0
        %3300 = vmatmul.mubr.bf16.gmra.mxu0 %v3138
        %v3301 = vpop.f32.mrf.mxu0
        %v3302 = vadd.f32 0.0, %v3301
        %v3303 = vpop.f32.mrf.mxu0
        %v3304 = vpop.f32.mrf.mxu0
        %v3305 = vadd.f32 0.0, %v3304
        %v3306 = vpop.f32.mrf.mxu0
        %3307 = vmatprep.mubr.bf16.mxu0 0
        %3308 = vmatmul.mubr.bf16.gmra.mxu0 %v3139
        %v3309 = vpop.f32.mrf.mxu0
        %v3310 = vadd.f32 0.0, %v3309
        %v3311 = vpop.f32.mrf.mxu0
        %v3312 = vpop.f32.mrf.mxu0
        %v3313 = vadd.f32 0.0, %v3312
        %v3314 = vpop.f32.mrf.mxu0
        %3315 = vmatprep.mubr.bf16.mxu0 0
        %3316 = vmatmul.mubr.bf16.gmra.mxu0 %v3140
        %v3317 = vpop.f32.mrf.mxu0
        %v3318 = vadd.f32 0.0, %v3317
        %v3319 = vpop.f32.mrf.mxu0
        %v3320 = vpop.f32.mrf.mxu0
        %v3321 = vadd.f32 0.0, %v3320
        %v3322 = vpop.f32.mrf.mxu0
        %3323 = vmatprep.mubr.bf16.mxu0 0
        %3324 = vmatmul.mubr.bf16.gmra.mxu0 %v3141
        %v3325 = vpop.f32.mrf.mxu0
        %v3326 = vadd.f32 0.0, %v3325
        %v3327 = vpop.f32.mrf.mxu0
        %v3328 = vpop.f32.mrf.mxu0
        %v3329 = vadd.f32 0.0, %v3328
        %v3330 = vpop.f32.mrf.mxu0
        %3331 = vmatprep.mubr.bf16.mxu0 0
        %3332 = vmatmul.mubr.bf16.gmra.mxu0 %v3142
        %v3333 = vpop.f32.mrf.mxu0
        %v3334 = vadd.f32 0.0, %v3333
        %v3335 = vpop.f32.mrf.mxu0
        %v3336 = vpop.f32.mrf.mxu0
        %v3337 = vadd.f32 0.0, %v3336
        %v3338 = vpop.f32.mrf.mxu0
        %3339 = vmatprep.mubr.bf16.mxu0 0
        %3340 = vmatmul.mubr.bf16.gmra.mxu0 %v3143
        %v3341 = vpop.f32.mrf.mxu0
        %v3342 = vadd.f32 0.0, %v3341
        %v3343 = vpop.f32.mrf.mxu0
        %v3344 = vpop.f32.mrf.mxu0
        %v3345 = vadd.f32 0.0, %v3344
        %v3346 = vpop.f32.mrf.mxu0
        %3347 = vmatprep.mubr.bf16.mxu0 0
        %3348 = vmatmul.mubr.bf16.gmra.mxu0 %v3144
        %v3349 = vpop.f32.mrf.mxu0
        %v3350 = vadd.f32 0.0, %v3349
        %v3351 = vpop.f32.mrf.mxu0
        %v3352 = vpop.f32.mrf.mxu0
        %v3353 = vadd.f32 0.0, %v3352
        %v3354 = vpop.f32.mrf.mxu0
        %3355 = vmatprep.mubr.bf16.mxu0 0
        %3356 = vmatmul.mubr.bf16.gmra.mxu0 %v3145
        %v3357 = vpop.f32.mrf.mxu0
        %v3358 = vadd.f32 0.0, %v3357
        %v3359 = vpop.f32.mrf.mxu0
        %v3360 = vpop.f32.mrf.mxu0
        %v3361 = vadd.f32 0.0, %v3360
        %v3362 = vpop.f32.mrf.mxu0
        %3363 = vmatprep.mubr.bf16.mxu0 0
        %3364 = vmatmul.mubr.bf16.gmra.mxu0 %v3146
        %v3365 = vpop.f32.mrf.mxu0
        %v3366 = vadd.f32 0.0, %v3365
        %v3367 = vpop.f32.mrf.mxu0
        %v3368 = vpop.f32.mrf.mxu0
        %v3369 = vadd.f32 0.0, %v3368
        %v3370 = vpop.f32.mrf.mxu0
        %3371 = vdwg.mxu0
        %v3372 = vadd.f32 %v2875, %v3246
        %v3373 = vadd.f32 %v2876, %v3249
        %v3374 = vadd.f32 %v2877, %v3254
        %v3375 = vadd.f32 %v2878, %v3257
        %v3376 = vadd.f32 %v2879, %v3262
        %v3377 = vadd.f32 %v2880, %v3265
        %v3378 = vadd.f32 %v2881, %v3270
        %v3379 = vadd.f32 %v2882, %v3273
        %v3380 = vadd.f32 %v2883, %v3278
        %v3381 = vadd.f32 %v2884, %v3281
        %v3382 = vadd.f32 %v2885, %v3286
        %v3383 = vadd.f32 %v2886, %v3289
        %v3384 = vadd.f32 %v2887, %v3294
        %v3385 = vadd.f32 %v2888, %v3297
        %v3386 = vadd.f32 %v2889, %v3302
        %v3387 = vadd.f32 %v2890, %v3305
        %v3388 = vadd.f32 %v2891, %v3310
        %v3389 = vadd.f32 %v2892, %v3313
        %v3390 = vadd.f32 %v2893, %v3318
        %v3391 = vadd.f32 %v2894, %v3321
        %v3392 = vadd.f32 %v2895, %v3326
        %v3393 = vadd.f32 %v2896, %v3329
        %v3394 = vadd.f32 %v2897, %v3334
        %v3395 = vadd.f32 %v2898, %v3337
        %v3396 = vadd.f32 %v2899, %v3342
        %v3397 = vadd.f32 %v2900, %v3345
        %v3398 = vadd.f32 %v2901, %v3350
        %v3399 = vadd.f32 %v2902, %v3353
        %v3400 = vadd.f32 %v2903, %v3358
        %v3401 = vadd.f32 %v2904, %v3361
        %v3402 = vadd.f32 %v2905, %v3366
        %v3403 = vadd.f32 %v2906, %v3369
        %s3404 = scalar_lea.vmem %s237, 24
        %v3405 = vld [vmem:[%s3404] sm:$0xf]
        %v3406 = vld [vmem:[%s3404 + $0x4] sm:$0xf]
        %v3407 = vld [vmem:[%s3404 + $0xc] sm:$0xf]
        %v3408 = vld [vmem:[%s3404 + $0x10] sm:$0xf]
        %v3409 = vld [vmem:[%s3404 + $0x18] sm:$0xf]
        %v3410 = vld [vmem:[%s3404 + $0x1c] sm:$0xf]
        %v3411 = vld [vmem:[%s3404 + $0x24] sm:$0xf]
        %v3412 = vld [vmem:[%s3404 + $0x28] sm:$0xf]
        %v3413 = vld [vmem:[%s3404 + $0x30] sm:$0xf]
        %v3414 = vld [vmem:[%s3404 + $0x34] sm:$0xf]
        %v3415 = vld [vmem:[%s3404 + $0x3c] sm:$0xf]
        %v3416 = vld [vmem:[%s3404 + $0x40] sm:$0xf]
        %v3417 = vld [vmem:[%s3404 + $0x48] sm:$0xf]
        %v3418 = vld [vmem:[%s3404 + $0x4c] sm:$0xf]
        %v3419 = vld [vmem:[%s3404 + $0x54] sm:$0xf]
        %v3420 = vld [vmem:[%s3404 + $0x58] sm:$0xf]
        %v3421 = vld [vmem:[%s3404 + $0x60] sm:$0xf]
        %v3422 = vld [vmem:[%s3404 + $0x64] sm:$0xf]
        %v3423 = vld [vmem:[%s3404 + $0x6c] sm:$0xf]
        %v3424 = vld [vmem:[%s3404 + $0x70] sm:$0xf]
        %v3425 = vld [vmem:[%s3404 + $0x78] sm:$0xf]
        %v3426 = vld [vmem:[%s3404 + $0x7c] sm:$0xf]
        %v3427 = vld [vmem:[%s3404 + $0x84] sm:$0xf]
        %v3428 = vld [vmem:[%s3404 + $0x88] sm:$0xf]
        %v3429 = vld [vmem:[%s3404 + $0x90] sm:$0xf]
        %v3430 = vld [vmem:[%s3404 + $0x94] sm:$0xf]
        %v3431 = vld [vmem:[%s3404 + $0x9c] sm:$0xf]
        %v3432 = vld [vmem:[%s3404 + $0xa0] sm:$0xf]
        %v3433 = vld [vmem:[%s3404 + $0xa8] sm:$0xf]
        %v3434 = vld [vmem:[%s3404 + $0xac] sm:$0xf]
        %v3435 = vld [vmem:[%s3404 + $0xb4] sm:$0xf]
        %v3436 = vld [vmem:[%s3404 + $0xb8] sm:$0xf]
        %v3437 = vld [vmem:[%s1 + $0x180] sm:$0xf]
        %v3438 = vld [vmem:[%s1 + $0x184] sm:$0xf]
        %v3439 = vld [vmem:[%s1 + $0x188] sm:$0xf]
        %v3440 = vld [vmem:[%s1 + $0x18c] sm:$0xf]
        %v3441 = vld [vmem:[%s1 + $0x190] sm:$0xf]
        %v3442 = vld [vmem:[%s1 + $0x194] sm:$0xf]
        %v3443 = vld [vmem:[%s1 + $0x198] sm:$0xf]
        %v3444 = vld [vmem:[%s1 + $0x19c] sm:$0xf]
        %v3445 = vld [vmem:[%s1 + $0x1a0] sm:$0xf]
        %v3446 = vld [vmem:[%s1 + $0x1a4] sm:$0xf]
        %v3447 = vld [vmem:[%s1 + $0x1a8] sm:$0xf]
        %v3448 = vld [vmem:[%s1 + $0x1ac] sm:$0xf]
        %v3449 = vld [vmem:[%s1 + $0x1b0] sm:$0xf]
        %v3450 = vld [vmem:[%s1 + $0x1b4] sm:$0xf]
        %v3451 = vld [vmem:[%s1 + $0x1b8] sm:$0xf]
        %v3452 = vld [vmem:[%s1 + $0x1bc] sm:$0xf]
        %v3485 = vunpack.c.l.b16 %v3405
        %v3486 = vunpack.c.l.b16 %v3406
        %v3487 = vunpack.c.l.b16 %v3407
        %v3488 = vunpack.c.l.b16 %v3408
        %v3489 = vunpack.c.l.b16 %v3409
        %v3490 = vunpack.c.l.b16 %v3410
        %v3491 = vunpack.c.l.b16 %v3411
        %v3492 = vunpack.c.l.b16 %v3412
        %v3493 = vunpack.c.l.b16 %v3413
        %v3494 = vunpack.c.l.b16 %v3414
        %v3495 = vunpack.c.l.b16 %v3415
        %v3496 = vunpack.c.l.b16 %v3416
        %v3497 = vunpack.c.l.b16 %v3417
        %v3498 = vunpack.c.l.b16 %v3418
        %v3499 = vunpack.c.l.b16 %v3419
        %v3500 = vunpack.c.l.b16 %v3420
        %v3501 = vunpack.c.l.b16 %v3421
        %v3502 = vunpack.c.l.b16 %v3422
        %v3503 = vunpack.c.l.b16 %v3423
        %v3504 = vunpack.c.l.b16 %v3424
        %v3505 = vunpack.c.l.b16 %v3425
        %v3506 = vunpack.c.l.b16 %v3426
        %v3507 = vunpack.c.l.b16 %v3427
        %v3508 = vunpack.c.l.b16 %v3428
        %v3509 = vunpack.c.l.b16 %v3429
        %v3510 = vunpack.c.l.b16 %v3430
        %v3511 = vunpack.c.l.b16 %v3431
        %v3512 = vunpack.c.l.b16 %v3432
        %v3513 = vunpack.c.l.b16 %v3433
        %v3514 = vunpack.c.l.b16 %v3434
        %v3515 = vunpack.c.l.b16 %v3435
        %v3516 = vunpack.c.l.b16 %v3436
        %v3517 = vpack.c.b16 %v3486, %v3485
        %v3518 = vpack.c.b16 %v3488, %v3487
        %v3519 = vpack.c.b16 %v3490, %v3489
        %v3520 = vpack.c.b16 %v3492, %v3491
        %v3521 = vpack.c.b16 %v3494, %v3493
        %v3522 = vpack.c.b16 %v3496, %v3495
        %v3523 = vpack.c.b16 %v3498, %v3497
        %v3524 = vpack.c.b16 %v3500, %v3499
        %v3525 = vpack.c.b16 %v3502, %v3501
        %v3526 = vpack.c.b16 %v3504, %v3503
        %v3527 = vpack.c.b16 %v3506, %v3505
        %v3528 = vpack.c.b16 %v3508, %v3507
        %v3529 = vpack.c.b16 %v3510, %v3509
        %v3530 = vpack.c.b16 %v3512, %v3511
        %v3531 = vpack.c.b16 %v3514, %v3513
        %v3532 = vpack.c.b16 %v3516, %v3515
        %v3565 = vunpack.c.l.b16 %v3437
        %v3566 = vunpack.c.l.b16 %v3438
        %v3567 = vunpack.c.l.b16 %v3439
        %v3568 = vunpack.c.l.b16 %v3440
        %v3569 = vunpack.c.l.b16 %v3441
        %v3570 = vunpack.c.l.b16 %v3442
        %v3571 = vunpack.c.l.b16 %v3443
        %v3572 = vunpack.c.l.b16 %v3444
        %v3573 = vunpack.c.l.b16 %v3445
        %v3574 = vunpack.c.l.b16 %v3446
        %v3575 = vunpack.c.l.b16 %v3447
        %v3576 = vunpack.c.l.b16 %v3448
        %v3577 = vunpack.c.l.b16 %v3449
        %v3578 = vunpack.c.l.b16 %v3450
        %v3579 = vunpack.c.l.b16 %v3451
        %v3580 = vunpack.c.l.b16 %v3452
        %v3581 = vpack.c.b16 %v3566, %v3565
        %v3582 = vpack.c.b16 %v3568, %v3567
        %v3583 = vpack.c.b16 %v3570, %v3569
        %v3584 = vpack.c.b16 %v3572, %v3571
        %v3585 = vpack.c.b16 %v3574, %v3573
        %v3586 = vpack.c.b16 %v3576, %v3575
        %v3587 = vpack.c.b16 %v3578, %v3577
        %v3588 = vpack.c.b16 %v3580, %v3579
        %3597 = vmatprep.subr.bf16.mxu0 0
        %3598 = vmatpush1.bf16.msra.mxu0 %v3588
        %3599 = vmatprep.subr.bf16.mxu0 0
        %3600 = vmatpush1.bf16.msra.mxu0 %v3587
        %3601 = vmatprep.subr.bf16.mxu0 0
        %3602 = vmatpush1.bf16.msra.mxu0 %v3586
        %3603 = vmatprep.subr.bf16.mxu0 0
        %3604 = vmatpush1.bf16.msra.mxu0 %v3585
        %3605 = vmatprep.subr.bf16.mxu0 0
        %3606 = vmatpush1.bf16.msra.mxu0 %v3584
        %3607 = vmatprep.subr.bf16.mxu0 0
        %3608 = vmatpush1.bf16.msra.mxu0 %v3583
        %3609 = vmatprep.subr.bf16.mxu0 0
        %3610 = vmatpush1.bf16.msra.mxu0 %v3582
        %3611 = vmatprep.subr.bf16.mxu0 0
        %3612 = vmatpush1.bf16.msra.mxu0 %v3581
        %3613 = vmatprep.subr.bf16.mxu0 0
        %3614 = vmatpush2.bf16.msra.mxu0 0
        %3615 = vmatprep.subr.bf16.mxu0 0
        %3616 = vmatpush2.bf16.msra.mxu0 0
        %3617 = vmatprep.subr.bf16.mxu0 0
        %3618 = vmatpush2.bf16.msra.mxu0 0
        %3619 = vmatprep.subr.bf16.mxu0 0
        %3620 = vmatpush2.bf16.msra.mxu0 0
        %3621 = vmatprep.subr.bf16.mxu0 0
        %3622 = vmatpush2.bf16.msra.mxu0 0
        %3623 = vmatprep.subr.bf16.mxu0 0
        %3624 = vmatpush2.bf16.msra.mxu0 0
        %3625 = vmatprep.subr.bf16.mxu0 0
        %3626 = vmatpush2.bf16.msra.mxu0 0
        %3627 = vmatprep.subr.bf16.mxu0 0
        %3628 = vmatpush2.bf16.msra.mxu0 0
        %3629 = vmatprep.mubr.bf16.mxu0 0
        %3630 = vmatmul.mubr.bf16.gmra.mxu0 %v3517
        %v3631 = vpop.f32.mrf.mxu0
        %v3632 = vadd.f32 0.0, %v3631
        %v3633 = vpop.f32.mrf.mxu0
        %v3634 = vpop.f32.mrf.mxu0
        %v3635 = vadd.f32 0.0, %v3634
        %v3636 = vpop.f32.mrf.mxu0
        %3637 = vmatprep.mubr.bf16.mxu0 0
        %3638 = vmatmul.mubr.bf16.gmra.mxu0 %v3518
        %v3639 = vpop.f32.mrf.mxu0
        %v3640 = vadd.f32 0.0, %v3639
        %v3641 = vpop.f32.mrf.mxu0
        %v3642 = vpop.f32.mrf.mxu0
        %v3643 = vadd.f32 0.0, %v3642
        %v3644 = vpop.f32.mrf.mxu0
        %3645 = vmatprep.mubr.bf16.mxu0 0
        %3646 = vmatmul.mubr.bf16.gmra.mxu0 %v3519
        %v3647 = vpop.f32.mrf.mxu0
        %v3648 = vadd.f32 0.0, %v3647
        %v3649 = vpop.f32.mrf.mxu0
        %v3650 = vpop.f32.mrf.mxu0
        %v3651 = vadd.f32 0.0, %v3650
        %v3652 = vpop.f32.mrf.mxu0
        %3653 = vmatprep.mubr.bf16.mxu0 0
        %3654 = vmatmul.mubr.bf16.gmra.mxu0 %v3520
        %v3655 = vpop.f32.mrf.mxu0
        %v3656 = vadd.f32 0.0, %v3655
        %v3657 = vpop.f32.mrf.mxu0
        %v3658 = vpop.f32.mrf.mxu0
        %v3659 = vadd.f32 0.0, %v3658
        %v3660 = vpop.f32.mrf.mxu0
        %3661 = vmatprep.mubr.bf16.mxu0 0
        %3662 = vmatmul.mubr.bf16.gmra.mxu0 %v3521
        %v3663 = vpop.f32.mrf.mxu0
        %v3664 = vadd.f32 0.0, %v3663
        %v3665 = vpop.f32.mrf.mxu0
        %v3666 = vpop.f32.mrf.mxu0
        %v3667 = vadd.f32 0.0, %v3666
        %v3668 = vpop.f32.mrf.mxu0
        %3669 = vmatprep.mubr.bf16.mxu0 0
        %3670 = vmatmul.mubr.bf16.gmra.mxu0 %v3522
        %v3671 = vpop.f32.mrf.mxu0
        %v3672 = vadd.f32 0.0, %v3671
        %v3673 = vpop.f32.mrf.mxu0
        %v3674 = vpop.f32.mrf.mxu0
        %v3675 = vadd.f32 0.0, %v3674
        %v3676 = vpop.f32.mrf.mxu0
        %3677 = vmatprep.mubr.bf16.mxu0 0
        %3678 = vmatmul.mubr.bf16.gmra.mxu0 %v3523
        %v3679 = vpop.f32.mrf.mxu0
        %v3680 = vadd.f32 0.0, %v3679
        %v3681 = vpop.f32.mrf.mxu0
        %v3682 = vpop.f32.mrf.mxu0
        %v3683 = vadd.f32 0.0, %v3682
        %v3684 = vpop.f32.mrf.mxu0
        %3685 = vmatprep.mubr.bf16.mxu0 0
        %3686 = vmatmul.mubr.bf16.gmra.mxu0 %v3524
        %v3687 = vpop.f32.mrf.mxu0
        %v3688 = vadd.f32 0.0, %v3687
        %v3689 = vpop.f32.mrf.mxu0
        %v3690 = vpop.f32.mrf.mxu0
        %v3691 = vadd.f32 0.0, %v3690
        %v3692 = vpop.f32.mrf.mxu0
        %3693 = vmatprep.mubr.bf16.mxu0 0
        %3694 = vmatmul.mubr.bf16.gmra.mxu0 %v3525
        %v3695 = vpop.f32.mrf.mxu0
        %v3696 = vadd.f32 0.0, %v3695
        %v3697 = vpop.f32.mrf.mxu0
        %v3698 = vpop.f32.mrf.mxu0
        %v3699 = vadd.f32 0.0, %v3698
        %v3700 = vpop.f32.mrf.mxu0
        %3701 = vmatprep.mubr.bf16.mxu0 0
        %3702 = vmatmul.mubr.bf16.gmra.mxu0 %v3526
        %v3703 = vpop.f32.mrf.mxu0
        %v3704 = vadd.f32 0.0, %v3703
        %v3705 = vpop.f32.mrf.mxu0
        %v3706 = vpop.f32.mrf.mxu0
        %v3707 = vadd.f32 0.0, %v3706
        %v3708 = vpop.f32.mrf.mxu0
        %3709 = vmatprep.mubr.bf16.mxu0 0
        %3710 = vmatmul.mubr.bf16.gmra.mxu0 %v3527
        %v3711 = vpop.f32.mrf.mxu0
        %v3712 = vadd.f32 0.0, %v3711
        %v3713 = vpop.f32.mrf.mxu0
        %v3714 = vpop.f32.mrf.mxu0
        %v3715 = vadd.f32 0.0, %v3714
        %v3716 = vpop.f32.mrf.mxu0
        %3717 = vmatprep.mubr.bf16.mxu0 0
        %3718 = vmatmul.mubr.bf16.gmra.mxu0 %v3528
        %v3719 = vpop.f32.mrf.mxu0
        %v3720 = vadd.f32 0.0, %v3719
        %v3721 = vpop.f32.mrf.mxu0
        %v3722 = vpop.f32.mrf.mxu0
        %v3723 = vadd.f32 0.0, %v3722
        %v3724 = vpop.f32.mrf.mxu0
        %3725 = vmatprep.mubr.bf16.mxu0 0
        %3726 = vmatmul.mubr.bf16.gmra.mxu0 %v3529
        %v3727 = vpop.f32.mrf.mxu0
        %v3728 = vadd.f32 0.0, %v3727
        %v3729 = vpop.f32.mrf.mxu0
        %v3730 = vpop.f32.mrf.mxu0
        %v3731 = vadd.f32 0.0, %v3730
        %v3732 = vpop.f32.mrf.mxu0
        %3733 = vmatprep.mubr.bf16.mxu0 0
        %3734 = vmatmul.mubr.bf16.gmra.mxu0 %v3530
        %v3735 = vpop.f32.mrf.mxu0
        %v3736 = vadd.f32 0.0, %v3735
        %v3737 = vpop.f32.mrf.mxu0
        %v3738 = vpop.f32.mrf.mxu0
        %v3739 = vadd.f32 0.0, %v3738
        %v3740 = vpop.f32.mrf.mxu0
        %3741 = vmatprep.mubr.bf16.mxu0 0
        %3742 = vmatmul.mubr.bf16.gmra.mxu0 %v3531
        %v3743 = vpop.f32.mrf.mxu0
        %v3744 = vadd.f32 0.0, %v3743
        %v3745 = vpop.f32.mrf.mxu0
        %v3746 = vpop.f32.mrf.mxu0
        %v3747 = vadd.f32 0.0, %v3746
        %v3748 = vpop.f32.mrf.mxu0
        %3749 = vmatprep.mubr.bf16.mxu0 0
        %3750 = vmatmul.mubr.bf16.gmra.mxu0 %v3532
        %v3751 = vpop.f32.mrf.mxu0
        %v3752 = vadd.f32 0.0, %v3751
        %v3753 = vpop.f32.mrf.mxu0
        %v3754 = vpop.f32.mrf.mxu0
        %v3755 = vadd.f32 0.0, %v3754
        %v3756 = vpop.f32.mrf.mxu0
        %3757 = vdwg.mxu0
        %v3758 = vadd.f32 %v3372, %v3632
        %v3759 = vadd.f32 %v3373, %v3635
        %v3760 = vadd.f32 %v3374, %v3640
        %v3761 = vadd.f32 %v3375, %v3643
        %v3762 = vadd.f32 %v3376, %v3648
        %v3763 = vadd.f32 %v3377, %v3651
        %v3764 = vadd.f32 %v3378, %v3656
        %v3765 = vadd.f32 %v3379, %v3659
        %v3766 = vadd.f32 %v3380, %v3664
        %v3767 = vadd.f32 %v3381, %v3667
        %v3768 = vadd.f32 %v3382, %v3672
        %v3769 = vadd.f32 %v3383, %v3675
        %v3770 = vadd.f32 %v3384, %v3680
        %v3771 = vadd.f32 %v3385, %v3683
        %v3772 = vadd.f32 %v3386, %v3688
        %v3773 = vadd.f32 %v3387, %v3691
        %v3774 = vadd.f32 %v3388, %v3696
        %v3775 = vadd.f32 %v3389, %v3699
        %v3776 = vadd.f32 %v3390, %v3704
        %v3777 = vadd.f32 %v3391, %v3707
        %v3778 = vadd.f32 %v3392, %v3712
        %v3779 = vadd.f32 %v3393, %v3715
        %v3780 = vadd.f32 %v3394, %v3720
        %v3781 = vadd.f32 %v3395, %v3723
        %v3782 = vadd.f32 %v3396, %v3728
        %v3783 = vadd.f32 %v3397, %v3731
        %v3784 = vadd.f32 %v3398, %v3736
        %v3785 = vadd.f32 %v3399, %v3739
        %v3786 = vadd.f32 %v3400, %v3744
        %v3787 = vadd.f32 %v3401, %v3747
        %v3788 = vadd.f32 %v3402, %v3752
        %v3789 = vadd.f32 %v3403, %v3755
        %v3790 = vld [vmem:[%s3404] sm:$0xf]
        %v3791 = vld [vmem:[%s3404 + $0x4] sm:$0xf]
        %v3792 = vld [vmem:[%s3404 + $0x8] sm:$0x1]
        %v3793 = vld [vmem:[%s3404 + $0xc] sm:$0xf]
        %v3794 = vld [vmem:[%s3404 + $0x10] sm:$0xf]
        %v3795 = vld [vmem:[%s3404 + $0x14] sm:$0x1]
        %v3796 = vld [vmem:[%s3404 + $0x18] sm:$0xf]
        %v3797 = vld [vmem:[%s3404 + $0x1c] sm:$0xf]
        %v3798 = vld [vmem:[%s3404 + $0x20] sm:$0x1]
        %v3799 = vld [vmem:[%s3404 + $0x24] sm:$0xf]
        %v3800 = vld [vmem:[%s3404 + $0x28] sm:$0xf]
        %v3801 = vld [vmem:[%s3404 + $0x2c] sm:$0x1]
        %v3802 = vld [vmem:[%s3404 + $0x30] sm:$0xf]
        %v3803 = vld [vmem:[%s3404 + $0x34] sm:$0xf]
        %v3804 = vld [vmem:[%s3404 + $0x38] sm:$0x1]
        %v3805 = vld [vmem:[%s3404 + $0x3c] sm:$0xf]
        %v3806 = vld [vmem:[%s3404 + $0x40] sm:$0xf]
        %v3807 = vld [vmem:[%s3404 + $0x44] sm:$0x1]
        %v3808 = vld [vmem:[%s3404 + $0x48] sm:$0xf]
        %v3809 = vld [vmem:[%s3404 + $0x4c] sm:$0xf]
        %v3810 = vld [vmem:[%s3404 + $0x50] sm:$0x1]
        %v3811 = vld [vmem:[%s3404 + $0x54] sm:$0xf]
        %v3812 = vld [vmem:[%s3404 + $0x58] sm:$0xf]
        %v3813 = vld [vmem:[%s3404 + $0x5c] sm:$0x1]
        %v3814 = vld [vmem:[%s3404 + $0x60] sm:$0xf]
        %v3815 = vld [vmem:[%s3404 + $0x64] sm:$0xf]
        %v3816 = vld [vmem:[%s3404 + $0x68] sm:$0x1]
        %v3817 = vld [vmem:[%s3404 + $0x6c] sm:$0xf]
        %v3818 = vld [vmem:[%s3404 + $0x70] sm:$0xf]
        %v3819 = vld [vmem:[%s3404 + $0x74] sm:$0x1]
        %v3820 = vld [vmem:[%s3404 + $0x78] sm:$0xf]
        %v3821 = vld [vmem:[%s3404 + $0x7c] sm:$0xf]
        %v3822 = vld [vmem:[%s3404 + $0x80] sm:$0x1]
        %v3823 = vld [vmem:[%s3404 + $0x84] sm:$0xf]
        %v3824 = vld [vmem:[%s3404 + $0x88] sm:$0xf]
        %v3825 = vld [vmem:[%s3404 + $0x8c] sm:$0x1]
        %v3826 = vld [vmem:[%s3404 + $0x90] sm:$0xf]
        %v3827 = vld [vmem:[%s3404 + $0x94] sm:$0xf]
        %v3828 = vld [vmem:[%s3404 + $0x98] sm:$0x1]
        %v3829 = vld [vmem:[%s3404 + $0x9c] sm:$0xf]
        %v3830 = vld [vmem:[%s3404 + $0xa0] sm:$0xf]
        %v3831 = vld [vmem:[%s3404 + $0xa4] sm:$0x1]
        %v3832 = vld [vmem:[%s3404 + $0xa8] sm:$0xf]
        %v3833 = vld [vmem:[%s3404 + $0xac] sm:$0xf]
        %v3834 = vld [vmem:[%s3404 + $0xb0] sm:$0x1]
        %v3835 = vld [vmem:[%s3404 + $0xb4] sm:$0xf]
        %v3836 = vld [vmem:[%s3404 + $0xb8] sm:$0xf]
        %v3837 = vld [vmem:[%s3404 + $0xbc] sm:$0x1]
        %v3839 = vshrl.u32 %v3790, 16
        %v3841 = vrot.slane %v3839, 4
        %v3842 = vshll.u32 %v3790, 16
        %v3844 = vrot.slane %v3842, 5
        %v3845 = vor.u32 %v3841, %v3844
        %v3846 = vrot.slane %v3845, 4
        %v3848 = vshll.u32 %v3791, 16
        %v3850 = vrot.slane %v3848, 5
        %v3851 = vsel %vm305, %v3846, %v3850
        %v3852 = vshrl.u32 %v3791, 16
        %v3854 = vrot.slane %v3852, 4
        %v3855 = vor.u32 %v3854, %v3850
        %v3856 = vrot.slane %v3855, 4
        %v3858 = vshll.u32 %v3792, 16
        %v3860 = vrot.slane %v3858, 5
        %v3861 = vsel %vm305, %v3856, %v3860
        %v3863 = vshrl.u32 %v3793, 16
        %v3865 = vrot.slane %v3863, 4
        %v3866 = vshll.u32 %v3793, 16
        %v3868 = vrot.slane %v3866, 5
        %v3869 = vor.u32 %v3865, %v3868
        %v3870 = vrot.slane %v3869, 4
        %v3872 = vshll.u32 %v3794, 16
        %v3874 = vrot.slane %v3872, 5
        %v3875 = vsel %vm305, %v3870, %v3874
        %v3876 = vshrl.u32 %v3794, 16
        %v3878 = vrot.slane %v3876, 4
        %v3879 = vor.u32 %v3878, %v3874
        %v3880 = vrot.slane %v3879, 4
        %v3882 = vshll.u32 %v3795, 16
        %v3884 = vrot.slane %v3882, 5
        %v3885 = vsel %vm305, %v3880, %v3884
        %v3887 = vshrl.u32 %v3796, 16
        %v3889 = vrot.slane %v3887, 4
        %v3890 = vshll.u32 %v3796, 16
        %v3892 = vrot.slane %v3890, 5
        %v3893 = vor.u32 %v3889, %v3892
        %v3894 = vrot.slane %v3893, 4
        %v3896 = vshll.u32 %v3797, 16
        %v3898 = vrot.slane %v3896, 5
        %v3899 = vsel %vm305, %v3894, %v3898
        %v3900 = vshrl.u32 %v3797, 16
        %v3902 = vrot.slane %v3900, 4
        %v3903 = vor.u32 %v3902, %v3898
        %v3904 = vrot.slane %v3903, 4
        %v3906 = vshll.u32 %v3798, 16
        %v3908 = vrot.slane %v3906, 5
        %v3909 = vsel %vm305, %v3904, %v3908
        %v3911 = vshrl.u32 %v3799, 16
        %v3913 = vrot.slane %v3911, 4
        %v3914 = vshll.u32 %v3799, 16
        %v3916 = vrot.slane %v3914, 5
        %v3917 = vor.u32 %v3913, %v3916
        %v3918 = vrot.slane %v3917, 4
        %v3920 = vshll.u32 %v3800, 16
        %v3922 = vrot.slane %v3920, 5
        %v3923 = vsel %vm305, %v3918, %v3922
        %v3924 = vshrl.u32 %v3800, 16
        %v3926 = vrot.slane %v3924, 4
        %v3927 = vor.u32 %v3926, %v3922
        %v3928 = vrot.slane %v3927, 4
        %v3930 = vshll.u32 %v3801, 16
        %v3932 = vrot.slane %v3930, 5
        %v3933 = vsel %vm305, %v3928, %v3932
        %v3935 = vshrl.u32 %v3802, 16
        %v3937 = vrot.slane %v3935, 4
        %v3938 = vshll.u32 %v3802, 16
        %v3940 = vrot.slane %v3938, 5
        %v3941 = vor.u32 %v3937, %v3940
        %v3942 = vrot.slane %v3941, 4
        %v3944 = vshll.u32 %v3803, 16
        %v3946 = vrot.slane %v3944, 5
        %v3947 = vsel %vm305, %v3942, %v3946
        %v3948 = vshrl.u32 %v3803, 16
        %v3950 = vrot.slane %v3948, 4
        %v3951 = vor.u32 %v3950, %v3946
        %v3952 = vrot.slane %v3951, 4
        %v3954 = vshll.u32 %v3804, 16
        %v3956 = vrot.slane %v3954, 5
        %v3957 = vsel %vm305, %v3952, %v3956
        %v3959 = vshrl.u32 %v3805, 16
        %v3961 = vrot.slane %v3959, 4
        %v3962 = vshll.u32 %v3805, 16
        %v3964 = vrot.slane %v3962, 5
        %v3965 = vor.u32 %v3961, %v3964
        %v3966 = vrot.slane %v3965, 4
        %v3968 = vshll.u32 %v3806, 16
        %v3970 = vrot.slane %v3968, 5
        %v3971 = vsel %vm305, %v3966, %v3970
        %v3972 = vshrl.u32 %v3806, 16
        %v3974 = vrot.slane %v3972, 4
        %v3975 = vor.u32 %v3974, %v3970
        %v3976 = vrot.slane %v3975, 4
        %v3978 = vshll.u32 %v3807, 16
        %v3980 = vrot.slane %v3978, 5
        %v3981 = vsel %vm305, %v3976, %v3980
        %v3983 = vshrl.u32 %v3808, 16
        %v3985 = vrot.slane %v3983, 4
        %v3986 = vshll.u32 %v3808, 16
        %v3988 = vrot.slane %v3986, 5
        %v3989 = vor.u32 %v3985, %v3988
        %v3990 = vrot.slane %v3989, 4
        %v3992 = vshll.u32 %v3809, 16
        %v3994 = vrot.slane %v3992, 5
        %v3995 = vsel %vm305, %v3990, %v3994
        %v3996 = vshrl.u32 %v3809, 16
        %v3998 = vrot.slane %v3996, 4
        %v3999 = vor.u32 %v3998, %v3994
        %v4000 = vrot.slane %v3999, 4
        %v4002 = vshll.u32 %v3810, 16
        %v4004 = vrot.slane %v4002, 5
        %v4005 = vsel %vm305, %v4000, %v4004
        %v4007 = vshrl.u32 %v3811, 16
        %v4009 = vrot.slane %v4007, 4
        %v4010 = vshll.u32 %v3811, 16
        %v4012 = vrot.slane %v4010, 5
        %v4013 = vor.u32 %v4009, %v4012
        %v4014 = vrot.slane %v4013, 4
        %v4016 = vshll.u32 %v3812, 16
        %v4018 = vrot.slane %v4016, 5
        %v4019 = vsel %vm305, %v4014, %v4018
        %v4020 = vshrl.u32 %v3812, 16
        %v4022 = vrot.slane %v4020, 4
        %v4023 = vor.u32 %v4022, %v4018
        %v4024 = vrot.slane %v4023, 4
        %v4026 = vshll.u32 %v3813, 16
        %v4028 = vrot.slane %v4026, 5
        %v4029 = vsel %vm305, %v4024, %v4028
        %v4031 = vshrl.u32 %v3814, 16
        %v4033 = vrot.slane %v4031, 4
        %v4034 = vshll.u32 %v3814, 16
        %v4036 = vrot.slane %v4034, 5
        %v4037 = vor.u32 %v4033, %v4036
        %v4038 = vrot.slane %v4037, 4
        %v4040 = vshll.u32 %v3815, 16
        %v4042 = vrot.slane %v4040, 5
        %v4043 = vsel %vm305, %v4038, %v4042
        %v4044 = vshrl.u32 %v3815, 16
        %v4046 = vrot.slane %v4044, 4
        %v4047 = vor.u32 %v4046, %v4042
        %v4048 = vrot.slane %v4047, 4
        %v4050 = vshll.u32 %v3816, 16
        %v4052 = vrot.slane %v4050, 5
        %v4053 = vsel %vm305, %v4048, %v4052
        %v4055 = vshrl.u32 %v3817, 16
        %v4057 = vrot.slane %v4055, 4
        %v4058 = vshll.u32 %v3817, 16
        %v4060 = vrot.slane %v4058, 5
        %v4061 = vor.u32 %v4057, %v4060
        %v4062 = vrot.slane %v4061, 4
        %v4064 = vshll.u32 %v3818, 16
        %v4066 = vrot.slane %v4064, 5
        %v4067 = vsel %vm305, %v4062, %v4066
        %v4068 = vshrl.u32 %v3818, 16
        %v4070 = vrot.slane %v4068, 4
        %v4071 = vor.u32 %v4070, %v4066
        %v4072 = vrot.slane %v4071, 4
        %v4074 = vshll.u32 %v3819, 16
        %v4076 = vrot.slane %v4074, 5
        %v4077 = vsel %vm305, %v4072, %v4076
        %v4079 = vshrl.u32 %v3820, 16
        %v4081 = vrot.slane %v4079, 4
        %v4082 = vshll.u32 %v3820, 16
        %v4084 = vrot.slane %v4082, 5
        %v4085 = vor.u32 %v4081, %v4084
        %v4086 = vrot.slane %v4085, 4
        %v4088 = vshll.u32 %v3821, 16
        %v4090 = vrot.slane %v4088, 5
        %v4091 = vsel %vm305, %v4086, %v4090
        %v4092 = vshrl.u32 %v3821, 16
        %v4094 = vrot.slane %v4092, 4
        %v4095 = vor.u32 %v4094, %v4090
        %v4096 = vrot.slane %v4095, 4
        %v4098 = vshll.u32 %v3822, 16
        %v4100 = vrot.slane %v4098, 5
        %v4101 = vsel %vm305, %v4096, %v4100
        %v4103 = vshrl.u32 %v3823, 16
        %v4105 = vrot.slane %v4103, 4
        %v4106 = vshll.u32 %v3823, 16
        %v4108 = vrot.slane %v4106, 5
        %v4109 = vor.u32 %v4105, %v4108
        %v4110 = vrot.slane %v4109, 4
        %v4112 = vshll.u32 %v3824, 16
        %v4114 = vrot.slane %v4112, 5
        %v4115 = vsel %vm305, %v4110, %v4114
        %v4116 = vshrl.u32 %v3824, 16
        %v4118 = vrot.slane %v4116, 4
        %v4119 = vor.u32 %v4118, %v4114
        %v4120 = vrot.slane %v4119, 4
        %v4122 = vshll.u32 %v3825, 16
        %v4124 = vrot.slane %v4122, 5
        %v4125 = vsel %vm305, %v4120, %v4124
        %v4127 = vshrl.u32 %v3826, 16
        %v4129 = vrot.slane %v4127, 4
        %v4130 = vshll.u32 %v3826, 16
        %v4132 = vrot.slane %v4130, 5
        %v4133 = vor.u32 %v4129, %v4132
        %v4134 = vrot.slane %v4133, 4
        %v4136 = vshll.u32 %v3827, 16
        %v4138 = vrot.slane %v4136, 5
        %v4139 = vsel %vm305, %v4134, %v4138
        %v4140 = vshrl.u32 %v3827, 16
        %v4142 = vrot.slane %v4140, 4
        %v4143 = vor.u32 %v4142, %v4138
        %v4144 = vrot.slane %v4143, 4
        %v4146 = vshll.u32 %v3828, 16
        %v4148 = vrot.slane %v4146, 5
        %v4149 = vsel %vm305, %v4144, %v4148
        %v4151 = vshrl.u32 %v3829, 16
        %v4153 = vrot.slane %v4151, 4
        %v4154 = vshll.u32 %v3829, 16
        %v4156 = vrot.slane %v4154, 5
        %v4157 = vor.u32 %v4153, %v4156
        %v4158 = vrot.slane %v4157, 4
        %v4160 = vshll.u32 %v3830, 16
        %v4162 = vrot.slane %v4160, 5
        %v4163 = vsel %vm305, %v4158, %v4162
        %v4164 = vshrl.u32 %v3830, 16
        %v4166 = vrot.slane %v4164, 4
        %v4167 = vor.u32 %v4166, %v4162
        %v4168 = vrot.slane %v4167, 4
        %v4170 = vshll.u32 %v3831, 16
        %v4172 = vrot.slane %v4170, 5
        %v4173 = vsel %vm305, %v4168, %v4172
        %v4175 = vshrl.u32 %v3832, 16
        %v4177 = vrot.slane %v4175, 4
        %v4178 = vshll.u32 %v3832, 16
        %v4180 = vrot.slane %v4178, 5
        %v4181 = vor.u32 %v4177, %v4180
        %v4182 = vrot.slane %v4181, 4
        %v4184 = vshll.u32 %v3833, 16
        %v4186 = vrot.slane %v4184, 5
        %v4187 = vsel %vm305, %v4182, %v4186
        %v4188 = vshrl.u32 %v3833, 16
        %v4190 = vrot.slane %v4188, 4
        %v4191 = vor.u32 %v4190, %v4186
        %v4192 = vrot.slane %v4191, 4
        %v4194 = vshll.u32 %v3834, 16
        %v4196 = vrot.slane %v4194, 5
        %v4197 = vsel %vm305, %v4192, %v4196
        %v4199 = vshrl.u32 %v3835, 16
        %v4201 = vrot.slane %v4199, 4
        %v4202 = vshll.u32 %v3835, 16
        %v4204 = vrot.slane %v4202, 5
        %v4205 = vor.u32 %v4201, %v4204
        %v4206 = vrot.slane %v4205, 4
        %v4208 = vshll.u32 %v3836, 16
        %v4210 = vrot.slane %v4208, 5
        %v4211 = vsel %vm305, %v4206, %v4210
        %v4212 = vshrl.u32 %v3836, 16
        %v4214 = vrot.slane %v4212, 4
        %v4215 = vor.u32 %v4214, %v4210
        %v4216 = vrot.slane %v4215, 4
        %v4218 = vshll.u32 %v3837, 16
        %v4220 = vrot.slane %v4218, 5
        %v4221 = vsel %vm305, %v4216, %v4220
        %v4222 = vld [vmem:[%s1 + $0x1c0] sm:$0xf]
        %v4223 = vld [vmem:[%s1 + $0x1c4] sm:$0xf]
        %v4224 = vld [vmem:[%s1 + $0x1c8] sm:$0xf]
        %v4225 = vld [vmem:[%s1 + $0x1cc] sm:$0xf]
        %v4226 = vld [vmem:[%s1 + $0x1d0] sm:$0xf]
        %v4227 = vld [vmem:[%s1 + $0x1d4] sm:$0xf]
        %v4228 = vld [vmem:[%s1 + $0x1d8] sm:$0xf]
        %v4229 = vld [vmem:[%s1 + $0x1dc] sm:$0xf]
        %v4230 = vld [vmem:[%s1 + $0x1e0] sm:$0xf]
        %v4231 = vld [vmem:[%s1 + $0x1e4] sm:$0xf]
        %v4232 = vld [vmem:[%s1 + $0x1e8] sm:$0xf]
        %v4233 = vld [vmem:[%s1 + $0x1ec] sm:$0xf]
        %v4234 = vld [vmem:[%s1 + $0x1f0] sm:$0xf]
        %v4235 = vld [vmem:[%s1 + $0x1f4] sm:$0xf]
        %v4236 = vld [vmem:[%s1 + $0x1f8] sm:$0xf]
        %v4237 = vld [vmem:[%s1 + $0x1fc] sm:$0xf]
        %v4238 = vunpack.c.l.b16 %v3851
        %v4239 = vunpack.c.l.b16 %v3861
        %v4240 = vunpack.c.l.b16 %v3875
        %v4241 = vunpack.c.l.b16 %v3885
        %v4242 = vunpack.c.l.b16 %v3899
        %v4243 = vunpack.c.l.b16 %v3909
        %v4244 = vunpack.c.l.b16 %v3923
        %v4245 = vunpack.c.l.b16 %v3933
        %v4246 = vunpack.c.l.b16 %v3947
        %v4247 = vunpack.c.l.b16 %v3957
        %v4248 = vunpack.c.l.b16 %v3971
        %v4249 = vunpack.c.l.b16 %v3981
        %v4250 = vunpack.c.l.b16 %v3995
        %v4251 = vunpack.c.l.b16 %v4005
        %v4252 = vunpack.c.l.b16 %v4019
        %v4253 = vunpack.c.l.b16 %v4029
        %v4254 = vunpack.c.l.b16 %v4043
        %v4255 = vunpack.c.l.b16 %v4053
        %v4256 = vunpack.c.l.b16 %v4067
        %v4257 = vunpack.c.l.b16 %v4077
        %v4258 = vunpack.c.l.b16 %v4091
        %v4259 = vunpack.c.l.b16 %v4101
        %v4260 = vunpack.c.l.b16 %v4115
        %v4261 = vunpack.c.l.b16 %v4125
        %v4262 = vunpack.c.l.b16 %v4139
        %v4263 = vunpack.c.l.b16 %v4149
        %v4264 = vunpack.c.l.b16 %v4163
        %v4265 = vunpack.c.l.b16 %v4173
        %v4266 = vunpack.c.l.b16 %v4187
        %v4267 = vunpack.c.l.b16 %v4197
        %v4268 = vunpack.c.l.b16 %v4211
        %v4269 = vunpack.c.l.b16 %v4221
        %v4270 = vpack.c.b16 %v4239, %v4238
        %v4271 = vpack.c.b16 %v4241, %v4240
        %v4272 = vpack.c.b16 %v4243, %v4242
        %v4273 = vpack.c.b16 %v4245, %v4244
        %v4274 = vpack.c.b16 %v4247, %v4246
        %v4275 = vpack.c.b16 %v4249, %v4248
        %v4276 = vpack.c.b16 %v4251, %v4250
        %v4277 = vpack.c.b16 %v4253, %v4252
        %v4278 = vpack.c.b16 %v4255, %v4254
        %v4279 = vpack.c.b16 %v4257, %v4256
        %v4280 = vpack.c.b16 %v4259, %v4258
        %v4281 = vpack.c.b16 %v4261, %v4260
        %v4282 = vpack.c.b16 %v4263, %v4262
        %v4283 = vpack.c.b16 %v4265, %v4264
        %v4284 = vpack.c.b16 %v4267, %v4266
        %v4285 = vpack.c.b16 %v4269, %v4268
        %v4318 = vunpack.c.l.b16 %v4222
        %v4319 = vunpack.c.l.b16 %v4223
        %v4320 = vunpack.c.l.b16 %v4224
        %v4321 = vunpack.c.l.b16 %v4225
        %v4322 = vunpack.c.l.b16 %v4226
        %v4323 = vunpack.c.l.b16 %v4227
        %v4324 = vunpack.c.l.b16 %v4228
        %v4325 = vunpack.c.l.b16 %v4229
        %v4326 = vunpack.c.l.b16 %v4230
        %v4327 = vunpack.c.l.b16 %v4231
        %v4328 = vunpack.c.l.b16 %v4232
        %v4329 = vunpack.c.l.b16 %v4233
        %v4330 = vunpack.c.l.b16 %v4234
        %v4331 = vunpack.c.l.b16 %v4235
        %v4332 = vunpack.c.l.b16 %v4236
        %v4333 = vunpack.c.l.b16 %v4237
        %v4334 = vpack.c.b16 %v4319, %v4318
        %v4335 = vpack.c.b16 %v4321, %v4320
        %v4336 = vpack.c.b16 %v4323, %v4322
        %v4337 = vpack.c.b16 %v4325, %v4324
        %v4338 = vpack.c.b16 %v4327, %v4326
        %v4339 = vpack.c.b16 %v4329, %v4328
        %v4340 = vpack.c.b16 %v4331, %v4330
        %v4341 = vpack.c.b16 %v4333, %v4332
        %4350 = vmatprep.subr.bf16.mxu0 0
        %4351 = vmatpush1.bf16.msra.mxu0 %v4341
        %4352 = vmatprep.subr.bf16.mxu0 0
        %4353 = vmatpush1.bf16.msra.mxu0 %v4340
        %4354 = vmatprep.subr.bf16.mxu0 0
        %4355 = vmatpush1.bf16.msra.mxu0 %v4339
        %4356 = vmatprep.subr.bf16.mxu0 0
        %4357 = vmatpush1.bf16.msra.mxu0 %v4338
        %4358 = vmatprep.subr.bf16.mxu0 0
        %4359 = vmatpush1.bf16.msra.mxu0 %v4337
        %4360 = vmatprep.subr.bf16.mxu0 0
        %4361 = vmatpush1.bf16.msra.mxu0 %v4336
        %4362 = vmatprep.subr.bf16.mxu0 0
        %4363 = vmatpush1.bf16.msra.mxu0 %v4335
        %4364 = vmatprep.subr.bf16.mxu0 0
        %4365 = vmatpush1.bf16.msra.mxu0 %v4334
        %4366 = vmatprep.subr.bf16.mxu0 0
        %4367 = vmatpush2.bf16.msra.mxu0 0
        %4368 = vmatprep.subr.bf16.mxu0 0
        %4369 = vmatpush2.bf16.msra.mxu0 0
        %4370 = vmatprep.subr.bf16.mxu0 0
        %4371 = vmatpush2.bf16.msra.mxu0 0
        %4372 = vmatprep.subr.bf16.mxu0 0
        %4373 = vmatpush2.bf16.msra.mxu0 0
        %4374 = vmatprep.subr.bf16.mxu0 0
        %4375 = vmatpush2.bf16.msra.mxu0 0
        %4376 = vmatprep.subr.bf16.mxu0 0
        %4377 = vmatpush2.bf16.msra.mxu0 0
        %4378 = vmatprep.subr.bf16.mxu0 0
        %4379 = vmatpush2.bf16.msra.mxu0 0
        %4380 = vmatprep.subr.bf16.mxu0 0
        %4381 = vmatpush2.bf16.msra.mxu0 0
        %4382 = vmatprep.mubr.bf16.mxu0 0
        %4383 = vmatmul.mubr.bf16.gmra.mxu0 %v4270
        %v4384 = vpop.f32.mrf.mxu0
        %v4385 = vadd.f32 0.0, %v4384
        %v4386 = vpop.f32.mrf.mxu0
        %v4387 = vpop.f32.mrf.mxu0
        %v4388 = vadd.f32 0.0, %v4387
        %v4389 = vpop.f32.mrf.mxu0
        %4390 = vmatprep.mubr.bf16.mxu0 0
        %4391 = vmatmul.mubr.bf16.gmra.mxu0 %v4271
        %v4392 = vpop.f32.mrf.mxu0
        %v4393 = vadd.f32 0.0, %v4392
        %v4394 = vpop.f32.mrf.mxu0
        %v4395 = vpop.f32.mrf.mxu0
        %v4396 = vadd.f32 0.0, %v4395
        %v4397 = vpop.f32.mrf.mxu0
        %4398 = vmatprep.mubr.bf16.mxu0 0
        %4399 = vmatmul.mubr.bf16.gmra.mxu0 %v4272
        %v4400 = vpop.f32.mrf.mxu0
        %v4401 = vadd.f32 0.0, %v4400
        %v4402 = vpop.f32.mrf.mxu0
        %v4403 = vpop.f32.mrf.mxu0
        %v4404 = vadd.f32 0.0, %v4403
        %v4405 = vpop.f32.mrf.mxu0
        %4406 = vmatprep.mubr.bf16.mxu0 0
        %4407 = vmatmul.mubr.bf16.gmra.mxu0 %v4273
        %v4408 = vpop.f32.mrf.mxu0
        %v4409 = vadd.f32 0.0, %v4408
        %v4410 = vpop.f32.mrf.mxu0
        %v4411 = vpop.f32.mrf.mxu0
        %v4412 = vadd.f32 0.0, %v4411
        %v4413 = vpop.f32.mrf.mxu0
        %4414 = vmatprep.mubr.bf16.mxu0 0
        %4415 = vmatmul.mubr.bf16.gmra.mxu0 %v4274
        %v4416 = vpop.f32.mrf.mxu0
        %v4417 = vadd.f32 0.0, %v4416
        %v4418 = vpop.f32.mrf.mxu0
        %v4419 = vpop.f32.mrf.mxu0
        %v4420 = vadd.f32 0.0, %v4419
        %v4421 = vpop.f32.mrf.mxu0
        %4422 = vmatprep.mubr.bf16.mxu0 0
        %4423 = vmatmul.mubr.bf16.gmra.mxu0 %v4275
        %v4424 = vpop.f32.mrf.mxu0
        %v4425 = vadd.f32 0.0, %v4424
        %v4426 = vpop.f32.mrf.mxu0
        %v4427 = vpop.f32.mrf.mxu0
        %v4428 = vadd.f32 0.0, %v4427
        %v4429 = vpop.f32.mrf.mxu0
        %4430 = vmatprep.mubr.bf16.mxu0 0
        %4431 = vmatmul.mubr.bf16.gmra.mxu0 %v4276
        %v4432 = vpop.f32.mrf.mxu0
        %v4433 = vadd.f32 0.0, %v4432
        %v4434 = vpop.f32.mrf.mxu0
        %v4435 = vpop.f32.mrf.mxu0
        %v4436 = vadd.f32 0.0, %v4435
        %v4437 = vpop.f32.mrf.mxu0
        %4438 = vmatprep.mubr.bf16.mxu0 0
        %4439 = vmatmul.mubr.bf16.gmra.mxu0 %v4277
        %v4440 = vpop.f32.mrf.mxu0
        %v4441 = vadd.f32 0.0, %v4440
        %v4442 = vpop.f32.mrf.mxu0
        %v4443 = vpop.f32.mrf.mxu0
        %v4444 = vadd.f32 0.0, %v4443
        %v4445 = vpop.f32.mrf.mxu0
        %4446 = vmatprep.mubr.bf16.mxu0 0
        %4447 = vmatmul.mubr.bf16.gmra.mxu0 %v4278
        %v4448 = vpop.f32.mrf.mxu0
        %v4449 = vadd.f32 0.0, %v4448
        %v4450 = vpop.f32.mrf.mxu0
        %v4451 = vpop.f32.mrf.mxu0
        %v4452 = vadd.f32 0.0, %v4451
        %v4453 = vpop.f32.mrf.mxu0
        %4454 = vmatprep.mubr.bf16.mxu0 0
        %4455 = vmatmul.mubr.bf16.gmra.mxu0 %v4279
        %v4456 = vpop.f32.mrf.mxu0
        %v4457 = vadd.f32 0.0, %v4456
        %v4458 = vpop.f32.mrf.mxu0
        %v4459 = vpop.f32.mrf.mxu0
        %v4460 = vadd.f32 0.0, %v4459
        %v4461 = vpop.f32.mrf.mxu0
        %4462 = vmatprep.mubr.bf16.mxu0 0
        %4463 = vmatmul.mubr.bf16.gmra.mxu0 %v4280
        %v4464 = vpop.f32.mrf.mxu0
        %v4465 = vadd.f32 0.0, %v4464
        %v4466 = vpop.f32.mrf.mxu0
        %v4467 = vpop.f32.mrf.mxu0
        %v4468 = vadd.f32 0.0, %v4467
        %v4469 = vpop.f32.mrf.mxu0
        %4470 = vmatprep.mubr.bf16.mxu0 0
        %4471 = vmatmul.mubr.bf16.gmra.mxu0 %v4281
        %v4472 = vpop.f32.mrf.mxu0
        %v4473 = vadd.f32 0.0, %v4472
        %v4474 = vpop.f32.mrf.mxu0
        %v4475 = vpop.f32.mrf.mxu0
        %v4476 = vadd.f32 0.0, %v4475
        %v4477 = vpop.f32.mrf.mxu0
        %4478 = vmatprep.mubr.bf16.mxu0 0
        %4479 = vmatmul.mubr.bf16.gmra.mxu0 %v4282
        %v4480 = vpop.f32.mrf.mxu0
        %v4481 = vadd.f32 0.0, %v4480
        %v4482 = vpop.f32.mrf.mxu0
        %v4483 = vpop.f32.mrf.mxu0
        %v4484 = vadd.f32 0.0, %v4483
        %v4485 = vpop.f32.mrf.mxu0
        %4486 = vmatprep.mubr.bf16.mxu0 0
        %4487 = vmatmul.mubr.bf16.gmra.mxu0 %v4283
        %v4488 = vpop.f32.mrf.mxu0
        %v4489 = vadd.f32 0.0, %v4488
        %v4490 = vpop.f32.mrf.mxu0
        %v4491 = vpop.f32.mrf.mxu0
        %v4492 = vadd.f32 0.0, %v4491
        %v4493 = vpop.f32.mrf.mxu0
        %4494 = vmatprep.mubr.bf16.mxu0 0
        %4495 = vmatmul.mubr.bf16.gmra.mxu0 %v4284
        %v4496 = vpop.f32.mrf.mxu0
        %v4497 = vadd.f32 0.0, %v4496
        %v4498 = vpop.f32.mrf.mxu0
        %v4499 = vpop.f32.mrf.mxu0
        %v4500 = vadd.f32 0.0, %v4499
        %v4501 = vpop.f32.mrf.mxu0
        %4502 = vmatprep.mubr.bf16.mxu0 0
        %4503 = vmatmul.mubr.bf16.gmra.mxu0 %v4285
        %v4504 = vpop.f32.mrf.mxu0
        %v4505 = vadd.f32 0.0, %v4504
        %v4506 = vpop.f32.mrf.mxu0
        %v4507 = vpop.f32.mrf.mxu0
        %v4508 = vadd.f32 0.0, %v4507
        %v4509 = vpop.f32.mrf.mxu0
        %4510 = vdwg.mxu0
        %v4511 = vadd.f32 %v3758, %v4385
        %v4512 = vadd.f32 %v3759, %v4388
        %v4513 = vadd.f32 %v3760, %v4393
        %v4514 = vadd.f32 %v3761, %v4396
        %v4515 = vadd.f32 %v3762, %v4401
        %v4516 = vadd.f32 %v3763, %v4404
        %v4517 = vadd.f32 %v3764, %v4409
        %v4518 = vadd.f32 %v3765, %v4412
        %v4519 = vadd.f32 %v3766, %v4417
        %v4520 = vadd.f32 %v3767, %v4420
        %v4521 = vadd.f32 %v3768, %v4425
        %v4522 = vadd.f32 %v3769, %v4428
        %v4523 = vadd.f32 %v3770, %v4433
        %v4524 = vadd.f32 %v3771, %v4436
        %v4525 = vadd.f32 %v3772, %v4441
        %v4526 = vadd.f32 %v3773, %v4444
        %v4527 = vadd.f32 %v3774, %v4449
        %v4528 = vadd.f32 %v3775, %v4452
        %v4529 = vadd.f32 %v3776, %v4457
        %v4530 = vadd.f32 %v3777, %v4460
        %v4531 = vadd.f32 %v3778, %v4465
        %v4532 = vadd.f32 %v3779, %v4468
        %v4533 = vadd.f32 %v3780, %v4473
        %v4534 = vadd.f32 %v3781, %v4476
        %v4535 = vadd.f32 %v3782, %v4481
        %v4536 = vadd.f32 %v3783, %v4484
        %v4537 = vadd.f32 %v3784, %v4489
        %v4538 = vadd.f32 %v3785, %v4492
        %v4539 = vadd.f32 %v3786, %v4497
        %v4540 = vadd.f32 %v3787, %v4500
        %v4541 = vadd.f32 %v3788, %v4505
        %v4542 = vadd.f32 %v3789, %v4508
        %v4543 = vld [vmem:[%s3404] sm:$0xe]
        %v4544 = vld [vmem:[%s3404 + $0xc] sm:$0xe]
        %v4545 = vld [vmem:[%s3404 + $0x18] sm:$0xe]
        %v4546 = vld [vmem:[%s3404 + $0x24] sm:$0xe]
        %v4547 = vld [vmem:[%s3404 + $0x30] sm:$0xe]
        %v4548 = vld [vmem:[%s3404 + $0x3c] sm:$0xe]
        %v4549 = vld [vmem:[%s3404 + $0x48] sm:$0xe]
        %v4550 = vld [vmem:[%s3404 + $0x54] sm:$0xe]
        %v4551 = vld [vmem:[%s3404 + $0x60] sm:$0xe]
        %v4552 = vld [vmem:[%s3404 + $0x6c] sm:$0xe]
        %v4553 = vld [vmem:[%s3404 + $0x78] sm:$0xe]
        %v4554 = vld [vmem:[%s3404 + $0x84] sm:$0xe]
        %v4555 = vld [vmem:[%s3404 + $0x90] sm:$0xe]
        %v4556 = vld [vmem:[%s3404 + $0x9c] sm:$0xe]
        %v4557 = vld [vmem:[%s3404 + $0xa8] sm:$0xe]
        %v4558 = vld [vmem:[%s3404 + $0xb4] sm:$0xe]
        %v4607 = vrot.slane %v4543, 5
        %v4608 = vrot.slane %v4607, 4
        %v4609 = vrot.slane %v3791, 5
        %v4610 = vsel %vm1334, %v4608, %v4609
        %v4611 = vrot.slane %v4609, 4
        %v4612 = vrot.slane %v3792, 5
        %v4613 = vsel %vm1334, %v4611, %v4612
        %v4614 = vrot.slane %v4544, 5
        %v4615 = vrot.slane %v4614, 4
        %v4616 = vrot.slane %v3794, 5
        %v4617 = vsel %vm1334, %v4615, %v4616
        %v4618 = vrot.slane %v4616, 4
        %v4619 = vrot.slane %v3795, 5
        %v4620 = vsel %vm1334, %v4618, %v4619
        %v4621 = vrot.slane %v4545, 5
        %v4622 = vrot.slane %v4621, 4
        %v4623 = vrot.slane %v3797, 5
        %v4624 = vsel %vm1334, %v4622, %v4623
        %v4625 = vrot.slane %v4623, 4
        %v4626 = vrot.slane %v3798, 5
        %v4627 = vsel %vm1334, %v4625, %v4626
        %v4628 = vrot.slane %v4546, 5
        %v4629 = vrot.slane %v4628, 4
        %v4630 = vrot.slane %v3800, 5
        %v4631 = vsel %vm1334, %v4629, %v4630
        %v4632 = vrot.slane %v4630, 4
        %v4633 = vrot.slane %v3801, 5
        %v4634 = vsel %vm1334, %v4632, %v4633
        %v4635 = vrot.slane %v4547, 5
        %v4636 = vrot.slane %v4635, 4
        %v4637 = vrot.slane %v3803, 5
        %v4638 = vsel %vm1334, %v4636, %v4637
        %v4639 = vrot.slane %v4637, 4
        %v4640 = vrot.slane %v3804, 5
        %v4641 = vsel %vm1334, %v4639, %v4640
        %v4642 = vrot.slane %v4548, 5
        %v4643 = vrot.slane %v4642, 4
        %v4644 = vrot.slane %v3806, 5
        %v4645 = vsel %vm1334, %v4643, %v4644
        %v4646 = vrot.slane %v4644, 4
        %v4647 = vrot.slane %v3807, 5
        %v4648 = vsel %vm1334, %v4646, %v4647
        %v4649 = vrot.slane %v4549, 5
        %v4650 = vrot.slane %v4649, 4
        %v4651 = vrot.slane %v3809, 5
        %v4652 = vsel %vm1334, %v4650, %v4651
        %v4653 = vrot.slane %v4651, 4
        %v4654 = vrot.slane %v3810, 5
        %v4655 = vsel %vm1334, %v4653, %v4654
        %v4656 = vrot.slane %v4550, 5
        %v4657 = vrot.slane %v4656, 4
        %v4658 = vrot.slane %v3812, 5
        %v4659 = vsel %vm1334, %v4657, %v4658
        %v4660 = vrot.slane %v4658, 4
        %v4661 = vrot.slane %v3813, 5
        %v4662 = vsel %vm1334, %v4660, %v4661
        %v4663 = vrot.slane %v4551, 5
        %v4664 = vrot.slane %v4663, 4
        %v4665 = vrot.slane %v3815, 5
        %v4666 = vsel %vm1334, %v4664, %v4665
        %v4667 = vrot.slane %v4665, 4
        %v4668 = vrot.slane %v3816, 5
        %v4669 = vsel %vm1334, %v4667, %v4668
        %v4670 = vrot.slane %v4552, 5
        %v4671 = vrot.slane %v4670, 4
        %v4672 = vrot.slane %v3818, 5
        %v4673 = vsel %vm1334, %v4671, %v4672
        %v4674 = vrot.slane %v4672, 4
        %v4675 = vrot.slane %v3819, 5
        %v4676 = vsel %vm1334, %v4674, %v4675
        %v4677 = vrot.slane %v4553, 5
        %v4678 = vrot.slane %v4677, 4
        %v4679 = vrot.slane %v3821, 5
        %v4680 = vsel %vm1334, %v4678, %v4679
        %v4681 = vrot.slane %v4679, 4
        %v4682 = vrot.slane %v3822, 5
        %v4683 = vsel %vm1334, %v4681, %v4682
        %v4684 = vrot.slane %v4554, 5
        %v4685 = vrot.slane %v4684, 4
        %v4686 = vrot.slane %v3824, 5
        %v4687 = vsel %vm1334, %v4685, %v4686
        %v4688 = vrot.slane %v4686, 4
        %v4689 = vrot.slane %v3825, 5
        %v4690 = vsel %vm1334, %v4688, %v4689
        %v4691 = vrot.slane %v4555, 5
        %v4692 = vrot.slane %v4691, 4
        %v4693 = vrot.slane %v3827, 5
        %v4694 = vsel %vm1334, %v4692, %v4693
        %v4695 = vrot.slane %v4693, 4
        %v4696 = vrot.slane %v3828, 5
        %v4697 = vsel %vm1334, %v4695, %v4696
        %v4698 = vrot.slane %v4556, 5
        %v4699 = vrot.slane %v4698, 4
        %v4700 = vrot.slane %v3830, 5
        %v4701 = vsel %vm1334, %v4699, %v4700
        %v4702 = vrot.slane %v4700, 4
        %v4703 = vrot.slane %v3831, 5
        %v4704 = vsel %vm1334, %v4702, %v4703
        %v4705 = vrot.slane %v4557, 5
        %v4706 = vrot.slane %v4705, 4
        %v4707 = vrot.slane %v3833, 5
        %v4708 = vsel %vm1334, %v4706, %v4707
        %v4709 = vrot.slane %v4707, 4
        %v4710 = vrot.slane %v3834, 5
        %v4711 = vsel %vm1334, %v4709, %v4710
        %v4712 = vrot.slane %v4558, 5
        %v4713 = vrot.slane %v4712, 4
        %v4714 = vrot.slane %v3836, 5
        %v4715 = vsel %vm1334, %v4713, %v4714
        %v4716 = vrot.slane %v4714, 4
        %v4717 = vrot.slane %v3837, 5
        %v4718 = vsel %vm1334, %v4716, %v4717
        %v4719 = vld [vmem:[%s1 + $0x200] sm:$0xf]
        %v4720 = vld [vmem:[%s1 + $0x204] sm:$0xf]
        %v4721 = vld [vmem:[%s1 + $0x208] sm:$0xf]
        %v4722 = vld [vmem:[%s1 + $0x20c] sm:$0xf]
        %v4723 = vld [vmem:[%s1 + $0x210] sm:$0xf]
        %v4724 = vld [vmem:[%s1 + $0x214] sm:$0xf]
        %v4725 = vld [vmem:[%s1 + $0x218] sm:$0xf]
        %v4726 = vld [vmem:[%s1 + $0x21c] sm:$0xf]
        %v4727 = vld [vmem:[%s1 + $0x220] sm:$0xf]
        %v4728 = vld [vmem:[%s1 + $0x224] sm:$0xf]
        %v4729 = vld [vmem:[%s1 + $0x228] sm:$0xf]
        %v4730 = vld [vmem:[%s1 + $0x22c] sm:$0xf]
        %v4731 = vld [vmem:[%s1 + $0x230] sm:$0xf]
        %v4732 = vld [vmem:[%s1 + $0x234] sm:$0xf]
        %v4733 = vld [vmem:[%s1 + $0x238] sm:$0xf]
        %v4734 = vld [vmem:[%s1 + $0x23c] sm:$0xf]
        %v4735 = vunpack.c.l.b16 %v4610
        %v4736 = vunpack.c.l.b16 %v4613
        %v4737 = vunpack.c.l.b16 %v4617
        %v4738 = vunpack.c.l.b16 %v4620
        %v4739 = vunpack.c.l.b16 %v4624
        %v4740 = vunpack.c.l.b16 %v4627
        %v4741 = vunpack.c.l.b16 %v4631
        %v4742 = vunpack.c.l.b16 %v4634
        %v4743 = vunpack.c.l.b16 %v4638
        %v4744 = vunpack.c.l.b16 %v4641
        %v4745 = vunpack.c.l.b16 %v4645
        %v4746 = vunpack.c.l.b16 %v4648
        %v4747 = vunpack.c.l.b16 %v4652
        %v4748 = vunpack.c.l.b16 %v4655
        %v4749 = vunpack.c.l.b16 %v4659
        %v4750 = vunpack.c.l.b16 %v4662
        %v4751 = vunpack.c.l.b16 %v4666
        %v4752 = vunpack.c.l.b16 %v4669
        %v4753 = vunpack.c.l.b16 %v4673
        %v4754 = vunpack.c.l.b16 %v4676
        %v4755 = vunpack.c.l.b16 %v4680
        %v4756 = vunpack.c.l.b16 %v4683
        %v4757 = vunpack.c.l.b16 %v4687
        %v4758 = vunpack.c.l.b16 %v4690
        %v4759 = vunpack.c.l.b16 %v4694
        %v4760 = vunpack.c.l.b16 %v4697
        %v4761 = vunpack.c.l.b16 %v4701
        %v4762 = vunpack.c.l.b16 %v4704
        %v4763 = vunpack.c.l.b16 %v4708
        %v4764 = vunpack.c.l.b16 %v4711
        %v4765 = vunpack.c.l.b16 %v4715
        %v4766 = vunpack.c.l.b16 %v4718
        %v4767 = vpack.c.b16 %v4736, %v4735
        %v4768 = vpack.c.b16 %v4738, %v4737
        %v4769 = vpack.c.b16 %v4740, %v4739
        %v4770 = vpack.c.b16 %v4742, %v4741
        %v4771 = vpack.c.b16 %v4744, %v4743
        %v4772 = vpack.c.b16 %v4746, %v4745
        %v4773 = vpack.c.b16 %v4748, %v4747
        %v4774 = vpack.c.b16 %v4750, %v4749
        %v4775 = vpack.c.b16 %v4752, %v4751
        %v4776 = vpack.c.b16 %v4754, %v4753
        %v4777 = vpack.c.b16 %v4756, %v4755
        %v4778 = vpack.c.b16 %v4758, %v4757
        %v4779 = vpack.c.b16 %v4760, %v4759
        %v4780 = vpack.c.b16 %v4762, %v4761
        %v4781 = vpack.c.b16 %v4764, %v4763
        %v4782 = vpack.c.b16 %v4766, %v4765
        %v4815 = vunpack.c.l.b16 %v4719
        %v4816 = vunpack.c.l.b16 %v4720
        %v4817 = vunpack.c.l.b16 %v4721
        %v4818 = vunpack.c.l.b16 %v4722
        %v4819 = vunpack.c.l.b16 %v4723
        %v4820 = vunpack.c.l.b16 %v4724
        %v4821 = vunpack.c.l.b16 %v4725
        %v4822 = vunpack.c.l.b16 %v4726
        %v4823 = vunpack.c.l.b16 %v4727
        %v4824 = vunpack.c.l.b16 %v4728
        %v4825 = vunpack.c.l.b16 %v4729
        %v4826 = vunpack.c.l.b16 %v4730
        %v4827 = vunpack.c.l.b16 %v4731
        %v4828 = vunpack.c.l.b16 %v4732
        %v4829 = vunpack.c.l.b16 %v4733
        %v4830 = vunpack.c.l.b16 %v4734
        %v4831 = vpack.c.b16 %v4816, %v4815
        %v4832 = vpack.c.b16 %v4818, %v4817
        %v4833 = vpack.c.b16 %v4820, %v4819
        %v4834 = vpack.c.b16 %v4822, %v4821
        %v4835 = vpack.c.b16 %v4824, %v4823
        %v4836 = vpack.c.b16 %v4826, %v4825
        %v4837 = vpack.c.b16 %v4828, %v4827
        %v4838 = vpack.c.b16 %v4830, %v4829
        %4847 = vmatprep.subr.bf16.mxu0 0
        %4848 = vmatpush1.bf16.msra.mxu0 %v4838
        %4849 = vmatprep.subr.bf16.mxu0 0
        %4850 = vmatpush1.bf16.msra.mxu0 %v4837
        %4851 = vmatprep.subr.bf16.mxu0 0
        %4852 = vmatpush1.bf16.msra.mxu0 %v4836
        %4853 = vmatprep.subr.bf16.mxu0 0
        %4854 = vmatpush1.bf16.msra.mxu0 %v4835
        %4855 = vmatprep.subr.bf16.mxu0 0
        %4856 = vmatpush1.bf16.msra.mxu0 %v4834
        %4857 = vmatprep.subr.bf16.mxu0 0
        %4858 = vmatpush1.bf16.msra.mxu0 %v4833
        %4859 = vmatprep.subr.bf16.mxu0 0
        %4860 = vmatpush1.bf16.msra.mxu0 %v4832
        %4861 = vmatprep.subr.bf16.mxu0 0
        %4862 = vmatpush1.bf16.msra.mxu0 %v4831
        %4863 = vmatprep.subr.bf16.mxu0 0
        %4864 = vmatpush2.bf16.msra.mxu0 0
        %4865 = vmatprep.subr.bf16.mxu0 0
        %4866 = vmatpush2.bf16.msra.mxu0 0
        %4867 = vmatprep.subr.bf16.mxu0 0
        %4868 = vmatpush2.bf16.msra.mxu0 0
        %4869 = vmatprep.subr.bf16.mxu0 0
        %4870 = vmatpush2.bf16.msra.mxu0 0
        %4871 = vmatprep.subr.bf16.mxu0 0
        %4872 = vmatpush2.bf16.msra.mxu0 0
        %4873 = vmatprep.subr.bf16.mxu0 0
        %4874 = vmatpush2.bf16.msra.mxu0 0
        %4875 = vmatprep.subr.bf16.mxu0 0
        %4876 = vmatpush2.bf16.msra.mxu0 0
        %4877 = vmatprep.subr.bf16.mxu0 0
        %4878 = vmatpush2.bf16.msra.mxu0 0
        %4879 = vmatprep.mubr.bf16.mxu0 0
        %4880 = vmatmul.mubr.bf16.gmra.mxu0 %v4767
        %v4881 = vpop.f32.mrf.mxu0
        %v4882 = vadd.f32 0.0, %v4881
        %v4883 = vpop.f32.mrf.mxu0
        %v4884 = vpop.f32.mrf.mxu0
        %v4885 = vadd.f32 0.0, %v4884
        %v4886 = vpop.f32.mrf.mxu0
        %4887 = vmatprep.mubr.bf16.mxu0 0
        %4888 = vmatmul.mubr.bf16.gmra.mxu0 %v4768
        %v4889 = vpop.f32.mrf.mxu0
        %v4890 = vadd.f32 0.0, %v4889
        %v4891 = vpop.f32.mrf.mxu0
        %v4892 = vpop.f32.mrf.mxu0
        %v4893 = vadd.f32 0.0, %v4892
        %v4894 = vpop.f32.mrf.mxu0
        %4895 = vmatprep.mubr.bf16.mxu0 0
        %4896 = vmatmul.mubr.bf16.gmra.mxu0 %v4769
        %v4897 = vpop.f32.mrf.mxu0
        %v4898 = vadd.f32 0.0, %v4897
        %v4899 = vpop.f32.mrf.mxu0
        %v4900 = vpop.f32.mrf.mxu0
        %v4901 = vadd.f32 0.0, %v4900
        %v4902 = vpop.f32.mrf.mxu0
        %4903 = vmatprep.mubr.bf16.mxu0 0
        %4904 = vmatmul.mubr.bf16.gmra.mxu0 %v4770
        %v4905 = vpop.f32.mrf.mxu0
        %v4906 = vadd.f32 0.0, %v4905
        %v4907 = vpop.f32.mrf.mxu0
        %v4908 = vpop.f32.mrf.mxu0
        %v4909 = vadd.f32 0.0, %v4908
        %v4910 = vpop.f32.mrf.mxu0
        %4911 = vmatprep.mubr.bf16.mxu0 0
        %4912 = vmatmul.mubr.bf16.gmra.mxu0 %v4771
        %v4913 = vpop.f32.mrf.mxu0
        %v4914 = vadd.f32 0.0, %v4913
        %v4915 = vpop.f32.mrf.mxu0
        %v4916 = vpop.f32.mrf.mxu0
        %v4917 = vadd.f32 0.0, %v4916
        %v4918 = vpop.f32.mrf.mxu0
        %4919 = vmatprep.mubr.bf16.mxu0 0
        %4920 = vmatmul.mubr.bf16.gmra.mxu0 %v4772
        %v4921 = vpop.f32.mrf.mxu0
        %v4922 = vadd.f32 0.0, %v4921
        %v4923 = vpop.f32.mrf.mxu0
        %v4924 = vpop.f32.mrf.mxu0
        %v4925 = vadd.f32 0.0, %v4924
        %v4926 = vpop.f32.mrf.mxu0
        %4927 = vmatprep.mubr.bf16.mxu0 0
        %4928 = vmatmul.mubr.bf16.gmra.mxu0 %v4773
        %v4929 = vpop.f32.mrf.mxu0
        %v4930 = vadd.f32 0.0, %v4929
        %v4931 = vpop.f32.mrf.mxu0
        %v4932 = vpop.f32.mrf.mxu0
        %v4933 = vadd.f32 0.0, %v4932
        %v4934 = vpop.f32.mrf.mxu0
        %4935 = vmatprep.mubr.bf16.mxu0 0
        %4936 = vmatmul.mubr.bf16.gmra.mxu0 %v4774
        %v4937 = vpop.f32.mrf.mxu0
        %v4938 = vadd.f32 0.0, %v4937
        %v4939 = vpop.f32.mrf.mxu0
        %v4940 = vpop.f32.mrf.mxu0
        %v4941 = vadd.f32 0.0, %v4940
        %v4942 = vpop.f32.mrf.mxu0
        %4943 = vmatprep.mubr.bf16.mxu0 0
        %4944 = vmatmul.mubr.bf16.gmra.mxu0 %v4775
        %v4945 = vpop.f32.mrf.mxu0
        %v4946 = vadd.f32 0.0, %v4945
        %v4947 = vpop.f32.mrf.mxu0
        %v4948 = vpop.f32.mrf.mxu0
        %v4949 = vadd.f32 0.0, %v4948
        %v4950 = vpop.f32.mrf.mxu0
        %4951 = vmatprep.mubr.bf16.mxu0 0
        %4952 = vmatmul.mubr.bf16.gmra.mxu0 %v4776
        %v4953 = vpop.f32.mrf.mxu0
        %v4954 = vadd.f32 0.0, %v4953
        %v4955 = vpop.f32.mrf.mxu0
        %v4956 = vpop.f32.mrf.mxu0
        %v4957 = vadd.f32 0.0, %v4956
        %v4958 = vpop.f32.mrf.mxu0
        %4959 = vmatprep.mubr.bf16.mxu0 0
        %4960 = vmatmul.mubr.bf16.gmra.mxu0 %v4777
        %v4961 = vpop.f32.mrf.mxu0
        %v4962 = vadd.f32 0.0, %v4961
        %v4963 = vpop.f32.mrf.mxu0
        %v4964 = vpop.f32.mrf.mxu0
        %v4965 = vadd.f32 0.0, %v4964
        %v4966 = vpop.f32.mrf.mxu0
        %4967 = vmatprep.mubr.bf16.mxu0 0
        %4968 = vmatmul.mubr.bf16.gmra.mxu0 %v4778
        %v4969 = vpop.f32.mrf.mxu0
        %v4970 = vadd.f32 0.0, %v4969
        %v4971 = vpop.f32.mrf.mxu0
        %v4972 = vpop.f32.mrf.mxu0
        %v4973 = vadd.f32 0.0, %v4972
        %v4974 = vpop.f32.mrf.mxu0
        %4975 = vmatprep.mubr.bf16.mxu0 0
        %4976 = vmatmul.mubr.bf16.gmra.mxu0 %v4779
        %v4977 = vpop.f32.mrf.mxu0
        %v4978 = vadd.f32 0.0, %v4977
        %v4979 = vpop.f32.mrf.mxu0
        %v4980 = vpop.f32.mrf.mxu0
        %v4981 = vadd.f32 0.0, %v4980
        %v4982 = vpop.f32.mrf.mxu0
        %4983 = vmatprep.mubr.bf16.mxu0 0
        %4984 = vmatmul.mubr.bf16.gmra.mxu0 %v4780
        %v4985 = vpop.f32.mrf.mxu0
        %v4986 = vadd.f32 0.0, %v4985
        %v4987 = vpop.f32.mrf.mxu0
        %v4988 = vpop.f32.mrf.mxu0
        %v4989 = vadd.f32 0.0, %v4988
        %v4990 = vpop.f32.mrf.mxu0
        %4991 = vmatprep.mubr.bf16.mxu0 0
        %4992 = vmatmul.mubr.bf16.gmra.mxu0 %v4781
        %v4993 = vpop.f32.mrf.mxu0
        %v4994 = vadd.f32 0.0, %v4993
        %v4995 = vpop.f32.mrf.mxu0
        %v4996 = vpop.f32.mrf.mxu0
        %v4997 = vadd.f32 0.0, %v4996
        %v4998 = vpop.f32.mrf.mxu0
        %4999 = vmatprep.mubr.bf16.mxu0 0
        %5000 = vmatmul.mubr.bf16.gmra.mxu0 %v4782
        %v5001 = vpop.f32.mrf.mxu0
        %v5002 = vadd.f32 0.0, %v5001
        %v5003 = vpop.f32.mrf.mxu0
        %v5004 = vpop.f32.mrf.mxu0
        %v5005 = vadd.f32 0.0, %v5004
        %v5006 = vpop.f32.mrf.mxu0
        %5007 = vdwg.mxu0
        %v5008 = vadd.f32 %v4511, %v4882
        %v5009 = vadd.f32 %v4512, %v4885
        %v5010 = vadd.f32 %v4513, %v4890
        %v5011 = vadd.f32 %v4514, %v4893
        %v5012 = vadd.f32 %v4515, %v4898
        %v5013 = vadd.f32 %v4516, %v4901
        %v5014 = vadd.f32 %v4517, %v4906
        %v5015 = vadd.f32 %v4518, %v4909
        %v5016 = vadd.f32 %v4519, %v4914
        %v5017 = vadd.f32 %v4520, %v4917
        %v5018 = vadd.f32 %v4521, %v4922
        %v5019 = vadd.f32 %v4522, %v4925
        %v5020 = vadd.f32 %v4523, %v4930
        %v5021 = vadd.f32 %v4524, %v4933
        %v5022 = vadd.f32 %v4525, %v4938
        %v5023 = vadd.f32 %v4526, %v4941
        %v5024 = vadd.f32 %v4527, %v4946
        %v5025 = vadd.f32 %v4528, %v4949
        %v5026 = vadd.f32 %v4529, %v4954
        %v5027 = vadd.f32 %v4530, %v4957
        %v5028 = vadd.f32 %v4531, %v4962
        %v5029 = vadd.f32 %v4532, %v4965
        %v5030 = vadd.f32 %v4533, %v4970
        %v5031 = vadd.f32 %v4534, %v4973
        %v5032 = vadd.f32 %v4535, %v4978
        %v5033 = vadd.f32 %v4536, %v4981
        %v5034 = vadd.f32 %v4537, %v4986
        %v5035 = vadd.f32 %v4538, %v4989
        %v5036 = vadd.f32 %v4539, %v4994
        %v5037 = vadd.f32 %v4540, %v4997
        %v5038 = vadd.f32 %v4541, %v5002
        %v5039 = vadd.f32 %v4542, %v5005
        %v5040 = vld [vmem:[%s2] sm:$0x1]
        %v5042 = vlaneseq
        %v5043 = vshrl.u32 %v5042, 7
        %v5044 = vsub.s32 0, %v5043
        %v5045 = vrot.slane %v5040, %v5044
        %v5047 = vadd.f32 %v5008, %v5045
        %v5048 = vadd.f32 %v5009, %v5045
        %v5049 = vadd.f32 %v5010, %v5045
        %v5050 = vadd.f32 %v5011, %v5045
        %v5051 = vadd.f32 %v5012, %v5045
        %v5052 = vadd.f32 %v5013, %v5045
        %v5053 = vadd.f32 %v5014, %v5045
        %v5054 = vadd.f32 %v5015, %v5045
        %v5055 = vadd.f32 %v5016, %v5045
        %v5056 = vadd.f32 %v5017, %v5045
        %v5057 = vadd.f32 %v5018, %v5045
        %v5058 = vadd.f32 %v5019, %v5045
        %v5059 = vadd.f32 %v5020, %v5045
        %v5060 = vadd.f32 %v5021, %v5045
        %v5061 = vadd.f32 %v5022, %v5045
        %v5062 = vadd.f32 %v5023, %v5045
        %v5063 = vadd.f32 %v5024, %v5045
        %v5064 = vadd.f32 %v5025, %v5045
        %v5065 = vadd.f32 %v5026, %v5045
        %v5066 = vadd.f32 %v5027, %v5045
        %v5067 = vadd.f32 %v5028, %v5045
        %v5068 = vadd.f32 %v5029, %v5045
        %v5069 = vadd.f32 %v5030, %v5045
        %v5070 = vadd.f32 %v5031, %v5045
        %v5071 = vadd.f32 %v5032, %v5045
        %v5072 = vadd.f32 %v5033, %v5045
        %v5073 = vadd.f32 %v5034, %v5045
        %v5074 = vadd.f32 %v5035, %v5045
        %v5075 = vadd.f32 %v5036, %v5045
        %v5076 = vadd.f32 %v5037, %v5045
        %v5077 = vadd.f32 %v5038, %v5045
        %v5078 = vadd.f32 %v5039, %v5045
        %v5079 = vmax.f32 %v5047, 0.0
        %v5080 = vmax.f32 %v5048, 0.0
        %v5081 = vmax.f32 %v5049, 0.0
        %v5082 = vmax.f32 %v5050, 0.0
        %v5083 = vmax.f32 %v5051, 0.0
        %v5084 = vmax.f32 %v5052, 0.0
        %v5085 = vmax.f32 %v5053, 0.0
        %v5086 = vmax.f32 %v5054, 0.0
        %v5087 = vmax.f32 %v5055, 0.0
        %v5088 = vmax.f32 %v5056, 0.0
        %v5089 = vmax.f32 %v5057, 0.0
        %v5090 = vmax.f32 %v5058, 0.0
        %v5091 = vmax.f32 %v5059, 0.0
        %v5092 = vmax.f32 %v5060, 0.0
        %v5093 = vmax.f32 %v5061, 0.0
        %v5094 = vmax.f32 %v5062, 0.0
        %v5095 = vmax.f32 %v5063, 0.0
        %v5096 = vmax.f32 %v5064, 0.0
        %v5097 = vmax.f32 %v5065, 0.0
        %v5098 = vmax.f32 %v5066, 0.0
        %v5099 = vmax.f32 %v5067, 0.0
        %v5100 = vmax.f32 %v5068, 0.0
        %v5101 = vmax.f32 %v5069, 0.0
        %v5102 = vmax.f32 %v5070, 0.0
        %v5103 = vmax.f32 %v5071, 0.0
        %v5104 = vmax.f32 %v5072, 0.0
        %v5105 = vmax.f32 %v5073, 0.0
        %v5106 = vmax.f32 %v5074, 0.0
        %v5107 = vmax.f32 %v5075, 0.0
        %v5108 = vmax.f32 %v5076, 0.0
        %v5109 = vmax.f32 %v5077, 0.0
        %v5110 = vmax.f32 %v5078, 0.0
        %5111 = vst [vmem:[#allocation2] sm:$0xf] 0
        %5112 = vst [vmem:[#allocation2 + $0x4] sm:$0xf] 0
        %5113 = vst [vmem:[#allocation2 + $0x8] sm:$0x1] 0
        %s5114 = scalar_lea.vmem [#allocation2], 204
        %5115 = vst [vmem:[%s5114] sm:$0xf] 0
        %5116 = vst [vmem:[%s5114 + $0x4] sm:$0xf] 0
        %5117 = vst [vmem:[%s5114 + $0x8] sm:$0x1] 0
        %vm5118 = vcmask 1040384
        %vm5119 = vsmask.f32 256
        %vm5120 = vmand %vm5118, %vm5119
        %v5121 = vld [vmem:[#allocation2] sm:$0x1]
        %v5122 = vsel %vm5120, 0, %v5121
        %5123 = vst [vmem:[#allocation2] sm:$0x1] %v5122
        %v5124 = vld [vmem:[#allocation2 + $0xc] sm:$0x1]
        %v5125 = vsel %vm5120, 0, %v5124
        %5126 = vst [vmem:[#allocation2 + $0xc] sm:$0x1] %v5125
        %v5127 = vld [vmem:[#allocation2 + $0x18] sm:$0x1]
        %v5128 = vsel %vm5120, 0, %v5127
        %5129 = vst [vmem:[#allocation2 + $0x18] sm:$0x1] %v5128
        %v5130 = vld [vmem:[#allocation2 + $0x24] sm:$0x1]
        %v5131 = vsel %vm5120, 0, %v5130
        %5132 = vst [vmem:[#allocation2 + $0x24] sm:$0x1] %v5131
        %v5133 = vld [vmem:[#allocation2 + $0x30] sm:$0x1]
        %v5134 = vsel %vm5120, 0, %v5133
        %5135 = vst [vmem:[#allocation2 + $0x30] sm:$0x1] %v5134
        %v5136 = vld [vmem:[#allocation2 + $0x3c] sm:$0x1]
        %v5137 = vsel %vm5120, 0, %v5136
        %5138 = vst [vmem:[#allocation2 + $0x3c] sm:$0x1] %v5137
        %v5139 = vld [vmem:[#allocation2 + $0x48] sm:$0x1]
        %v5140 = vsel %vm5120, 0, %v5139
        %5141 = vst [vmem:[#allocation2 + $0x48] sm:$0x1] %v5140
        %v5142 = vld [vmem:[#allocation2 + $0x54] sm:$0x1]
        %v5143 = vsel %vm5120, 0, %v5142
        %5144 = vst [vmem:[#allocation2 + $0x54] sm:$0x1] %v5143
        %v5145 = vld [vmem:[#allocation2 + $0x60] sm:$0x1]
        %v5146 = vsel %vm5120, 0, %v5145
        %5147 = vst [vmem:[#allocation2 + $0x60] sm:$0x1] %v5146
        %v5148 = vld [vmem:[#allocation2 + $0x6c] sm:$0x1]
        %v5149 = vsel %vm5120, 0, %v5148
        %5150 = vst [vmem:[#allocation2 + $0x6c] sm:$0x1] %v5149
        %v5151 = vld [vmem:[#allocation2 + $0x78] sm:$0x1]
        %v5152 = vsel %vm5120, 0, %v5151
        %5153 = vst [vmem:[#allocation2 + $0x78] sm:$0x1] %v5152
        %v5154 = vld [vmem:[#allocation2 + $0x84] sm:$0x1]
        %v5155 = vsel %vm5120, 0, %v5154
        %5156 = vst [vmem:[#allocation2 + $0x84] sm:$0x1] %v5155
        %v5157 = vld [vmem:[#allocation2 + $0x90] sm:$0x1]
        %v5158 = vsel %vm5120, 0, %v5157
        %5159 = vst [vmem:[#allocation2 + $0x90] sm:$0x1] %v5158
        %v5160 = vld [vmem:[#allocation2 + $0x9c] sm:$0x1]
        %v5161 = vsel %vm5120, 0, %v5160
        %5162 = vst [vmem:[#allocation2 + $0x9c] sm:$0x1] %v5161
        %v5163 = vld [vmem:[#allocation2 + $0xa8] sm:$0x1]
        %v5164 = vsel %vm5120, 0, %v5163
        %5165 = vst [vmem:[#allocation2 + $0xa8] sm:$0x1] %v5164
        %v5166 = vld [vmem:[#allocation2 + $0xb4] sm:$0x1]
        %v5167 = vsel %vm5120, 0, %v5166
        %5168 = vst [vmem:[#allocation2 + $0xb4] sm:$0x1] %v5167
        %v5169 = vld [vmem:[#allocation2 + $0xc0] sm:$0x1]
        %v5170 = vsel %vm5120, 0, %v5169
        %5171 = vst [vmem:[#allocation2 + $0xc0] sm:$0x1] %v5170
        %v5172 = vld [vmem:[#allocation2 + $0xcc] sm:$0x1]
        %v5173 = vsel %vm5120, 0, %v5172
        %5174 = vst [vmem:[#allocation2 + $0xcc] sm:$0x1] %v5173
        %vm5175 = vsmask.f32 7938
        %vm5176 = vmand %vm5118, %vm5175
        %v5177 = vld [vmem:[#allocation2 + $0x8] sm:$0x1]
        %v5178 = vsel %vm5176, 0, %v5177
        %5179 = vst [vmem:[#allocation2 + $0x8] sm:$0x1] %v5178
        %v5180 = vld [vmem:[#allocation2 + $0x14] sm:$0x1]
        %v5181 = vsel %vm5176, 0, %v5180
        %5182 = vst [vmem:[#allocation2 + $0x14] sm:$0x1] %v5181
        %v5183 = vld [vmem:[#allocation2 + $0x20] sm:$0x1]
        %v5184 = vsel %vm5176, 0, %v5183
        %5185 = vst [vmem:[#allocation2 + $0x20] sm:$0x1] %v5184
        %v5186 = vld [vmem:[#allocation2 + $0x2c] sm:$0x1]
        %v5187 = vsel %vm5176, 0, %v5186
        %5188 = vst [vmem:[#allocation2 + $0x2c] sm:$0x1] %v5187
        %v5189 = vld [vmem:[#allocation2 + $0x38] sm:$0x1]
        %v5190 = vsel %vm5176, 0, %v5189
        %5191 = vst [vmem:[#allocation2 + $0x38] sm:$0x1] %v5190
        %v5192 = vld [vmem:[#allocation2 + $0x44] sm:$0x1]
        %v5193 = vsel %vm5176, 0, %v5192
        %5194 = vst [vmem:[#allocation2 + $0x44] sm:$0x1] %v5193
        %v5195 = vld [vmem:[#allocation2 + $0x50] sm:$0x1]
        %v5196 = vsel %vm5176, 0, %v5195
        %5197 = vst [vmem:[#allocation2 + $0x50] sm:$0x1] %v5196
        %v5198 = vld [vmem:[#allocation2 + $0x5c] sm:$0x1]
        %v5199 = vsel %vm5176, 0, %v5198
        %5200 = vst [vmem:[#allocation2 + $0x5c] sm:$0x1] %v5199
        %v5201 = vld [vmem:[#allocation2 + $0x68] sm:$0x1]
        %v5202 = vsel %vm5176, 0, %v5201
        %5203 = vst [vmem:[#allocation2 + $0x68] sm:$0x1] %v5202
        %v5204 = vld [vmem:[#allocation2 + $0x74] sm:$0x1]
        %v5205 = vsel %vm5176, 0, %v5204
        %5206 = vst [vmem:[#allocation2 + $0x74] sm:$0x1] %v5205
        %v5207 = vld [vmem:[#allocation2 + $0x80] sm:$0x1]
        %v5208 = vsel %vm5176, 0, %v5207
        %5209 = vst [vmem:[#allocation2 + $0x80] sm:$0x1] %v5208
        %v5210 = vld [vmem:[#allocation2 + $0x8c] sm:$0x1]
        %v5211 = vsel %vm5176, 0, %v5210
        %5212 = vst [vmem:[#allocation2 + $0x8c] sm:$0x1] %v5211
        %v5213 = vld [vmem:[#allocation2 + $0x98] sm:$0x1]
        %v5214 = vsel %vm5176, 0, %v5213
        %5215 = vst [vmem:[#allocation2 + $0x98] sm:$0x1] %v5214
        %v5216 = vld [vmem:[#allocation2 + $0xa4] sm:$0x1]
        %v5217 = vsel %vm5176, 0, %v5216
        %5218 = vst [vmem:[#allocation2 + $0xa4] sm:$0x1] %v5217
        %v5219 = vld [vmem:[#allocation2 + $0xb0] sm:$0x1]
        %v5220 = vsel %vm5176, 0, %v5219
        %5221 = vst [vmem:[#allocation2 + $0xb0] sm:$0x1] %v5220
        %v5222 = vld [vmem:[#allocation2 + $0xbc] sm:$0x1]
        %v5223 = vsel %vm5176, 0, %v5222
        %5224 = vst [vmem:[#allocation2 + $0xbc] sm:$0x1] %v5223
        %v5225 = vld [vmem:[#allocation2 + $0xc8] sm:$0x1]
        %v5226 = vsel %vm5176, 0, %v5225
        %5227 = vst [vmem:[#allocation2 + $0xc8] sm:$0x1] %v5226
        %v5228 = vld [vmem:[#allocation2 + $0xd4] sm:$0x1]
        %v5229 = vsel %vm5176, 0, %v5228
        %5230 = vst [vmem:[#allocation2 + $0xd4] sm:$0x1] %v5229
        %v5231 = vpack.c.bf16 %v5080, %v5079
        %v5232 = vpack.c.bf16 %v5082, %v5081
        %v5233 = vpack.c.bf16 %v5084, %v5083
        %v5234 = vpack.c.bf16 %v5086, %v5085
        %v5235 = vpack.c.bf16 %v5088, %v5087
        %v5236 = vpack.c.bf16 %v5090, %v5089
        %v5237 = vpack.c.bf16 %v5092, %v5091
        %v5238 = vpack.c.bf16 %v5094, %v5093
        %v5239 = vpack.c.bf16 %v5096, %v5095
        %v5240 = vpack.c.bf16 %v5098, %v5097
        %v5241 = vpack.c.bf16 %v5100, %v5099
        %v5242 = vpack.c.bf16 %v5102, %v5101
        %v5243 = vpack.c.bf16 %v5104, %v5103
        %v5244 = vpack.c.bf16 %v5106, %v5105
        %v5245 = vpack.c.bf16 %v5108, %v5107
        %v5246 = vpack.c.bf16 %v5110, %v5109
        %v5263 = vunpack.c.l.b16 %v5231
        %v5264 = vunpack.c.h.b16 %v5231
        %v5265 = vunpack.c.l.b16 %v5232
        %v5266 = vunpack.c.h.b16 %v5232
        %v5267 = vunpack.c.l.b16 %v5233
        %v5268 = vunpack.c.h.b16 %v5233
        %v5269 = vunpack.c.l.b16 %v5234
        %v5270 = vunpack.c.h.b16 %v5234
        %v5271 = vunpack.c.l.b16 %v5235
        %v5272 = vunpack.c.h.b16 %v5235
        %v5273 = vunpack.c.l.b16 %v5236
        %v5274 = vunpack.c.h.b16 %v5236
        %v5275 = vunpack.c.l.b16 %v5237
        %v5276 = vunpack.c.h.b16 %v5237
        %v5277 = vunpack.c.l.b16 %v5238
        %v5278 = vunpack.c.h.b16 %v5238
        %v5279 = vunpack.c.l.b16 %v5239
        %v5280 = vunpack.c.h.b16 %v5239
        %v5281 = vunpack.c.l.b16 %v5240
        %v5282 = vunpack.c.h.b16 %v5240
        %v5283 = vunpack.c.l.b16 %v5241
        %v5284 = vunpack.c.h.b16 %v5241
        %v5285 = vunpack.c.l.b16 %v5242
        %v5286 = vunpack.c.h.b16 %v5242
        %v5287 = vunpack.c.l.b16 %v5243
        %v5288 = vunpack.c.h.b16 %v5243
        %v5289 = vunpack.c.l.b16 %v5244
        %v5290 = vunpack.c.h.b16 %v5244
        %v5291 = vunpack.c.l.b16 %v5245
        %v5292 = vunpack.c.h.b16 %v5245
        %v5293 = vunpack.c.l.b16 %v5246
        %v5294 = vunpack.c.h.b16 %v5246
        %v5295 = vpack.c.b16 %v5263, %v5263
        %v5296 = vpack.c.b16 %v5264, %v5264
        %v5297 = vpack.c.b16 %v5265, %v5265
        %v5298 = vpack.c.b16 %v5266, %v5266
        %v5299 = vpack.c.b16 %v5267, %v5267
        %v5300 = vpack.c.b16 %v5268, %v5268
        %v5301 = vpack.c.b16 %v5269, %v5269
        %v5302 = vpack.c.b16 %v5270, %v5270
        %v5303 = vpack.c.b16 %v5271, %v5271
        %v5304 = vpack.c.b16 %v5272, %v5272
        %v5305 = vpack.c.b16 %v5273, %v5273
        %v5306 = vpack.c.b16 %v5274, %v5274
        %v5307 = vpack.c.b16 %v5275, %v5275
        %v5308 = vpack.c.b16 %v5276, %v5276
        %v5309 = vpack.c.b16 %v5277, %v5277
        %v5310 = vpack.c.b16 %v5278, %v5278
        %v5311 = vpack.c.b16 %v5279, %v5279
        %v5312 = vpack.c.b16 %v5280, %v5280
        %v5313 = vpack.c.b16 %v5281, %v5281
        %v5314 = vpack.c.b16 %v5282, %v5282
        %v5315 = vpack.c.b16 %v5283, %v5283
        %v5316 = vpack.c.b16 %v5284, %v5284
        %v5317 = vpack.c.b16 %v5285, %v5285
        %v5318 = vpack.c.b16 %v5286, %v5286
        %v5319 = vpack.c.b16 %v5287, %v5287
        %v5320 = vpack.c.b16 %v5288, %v5288
        %v5321 = vpack.c.b16 %v5289, %v5289
        %v5322 = vpack.c.b16 %v5290, %v5290
        %v5323 = vpack.c.b16 %v5291, %v5291
        %v5324 = vpack.c.b16 %v5292, %v5292
        %v5325 = vpack.c.b16 %v5293, %v5293
        %v5326 = vpack.c.b16 %v5294, %v5294
        %vm5327 = vsmask.f32 4368
        %vm5328 = vmor %vm5119, %vm5327
        %v5330 = vshrl.u32 %v5295, 16
        %v5332 = vrot.slane %v5330, 7
        %v5333 = vshll.u32 %v5295, 16
        %v5335 = vor.u32 %v5332, %v5333
        %v5336 = vrot.slane %v5332, 4
        %v5338 = vshrl.u32 %v5296, 16
        %v5340 = vrot.slane %v5338, 7
        %v5341 = vshll.u32 %v5296, 16
        %v5343 = vor.u32 %v5340, %v5341
        %v5344 = vsel %vm5328, %v5336, %v5343
        %v5345 = vrot.slane %v5340, 4
        %v5347 = vshrl.u32 %v5297, 16
        %v5349 = vrot.slane %v5347, 7
        %v5350 = vshll.u32 %v5297, 16
        %v5352 = vor.u32 %v5349, %v5350
        %v5353 = vrot.slane %v5349, 4
        %v5355 = vshrl.u32 %v5298, 16
        %v5357 = vrot.slane %v5355, 7
        %v5358 = vshll.u32 %v5298, 16
        %v5360 = vor.u32 %v5357, %v5358
        %v5361 = vsel %vm5328, %v5353, %v5360
        %v5362 = vrot.slane %v5357, 4
        %v5364 = vshrl.u32 %v5299, 16
        %v5366 = vrot.slane %v5364, 7
        %v5367 = vshll.u32 %v5299, 16
        %v5369 = vor.u32 %v5366, %v5367
        %v5370 = vrot.slane %v5366, 4
        %v5372 = vshrl.u32 %v5300, 16
        %v5374 = vrot.slane %v5372, 7
        %v5375 = vshll.u32 %v5300, 16
        %v5377 = vor.u32 %v5374, %v5375
        %v5378 = vsel %vm5328, %v5370, %v5377
        %v5379 = vrot.slane %v5374, 4
        %v5381 = vshrl.u32 %v5301, 16
        %v5383 = vrot.slane %v5381, 7
        %v5384 = vshll.u32 %v5301, 16
        %v5386 = vor.u32 %v5383, %v5384
        %v5387 = vrot.slane %v5383, 4
        %v5389 = vshrl.u32 %v5302, 16
        %v5391 = vrot.slane %v5389, 7
        %v5392 = vshll.u32 %v5302, 16
        %v5394 = vor.u32 %v5391, %v5392
        %v5395 = vsel %vm5328, %v5387, %v5394
        %v5396 = vrot.slane %v5391, 4
        %v5398 = vshrl.u32 %v5303, 16
        %v5400 = vrot.slane %v5398, 7
        %v5401 = vshll.u32 %v5303, 16
        %v5403 = vor.u32 %v5400, %v5401
        %v5404 = vrot.slane %v5400, 4
        %v5406 = vshrl.u32 %v5304, 16
        %v5408 = vrot.slane %v5406, 7
        %v5409 = vshll.u32 %v5304, 16
        %v5411 = vor.u32 %v5408, %v5409
        %v5412 = vsel %vm5328, %v5404, %v5411
        %v5413 = vrot.slane %v5408, 4
        %v5415 = vshrl.u32 %v5305, 16
        %v5417 = vrot.slane %v5415, 7
        %v5418 = vshll.u32 %v5305, 16
        %v5420 = vor.u32 %v5417, %v5418
        %v5421 = vrot.slane %v5417, 4
        %v5423 = vshrl.u32 %v5306, 16
        %v5425 = vrot.slane %v5423, 7
        %v5426 = vshll.u32 %v5306, 16
        %v5428 = vor.u32 %v5425, %v5426
        %v5429 = vsel %vm5328, %v5421, %v5428
        %v5430 = vrot.slane %v5425, 4
        %v5432 = vshrl.u32 %v5307, 16
        %v5434 = vrot.slane %v5432, 7
        %v5435 = vshll.u32 %v5307, 16
        %v5437 = vor.u32 %v5434, %v5435
        %v5438 = vrot.slane %v5434, 4
        %v5440 = vshrl.u32 %v5308, 16
        %v5442 = vrot.slane %v5440, 7
        %v5443 = vshll.u32 %v5308, 16
        %v5445 = vor.u32 %v5442, %v5443
        %v5446 = vsel %vm5328, %v5438, %v5445
        %v5447 = vrot.slane %v5442, 4
        %v5449 = vshrl.u32 %v5309, 16
        %v5451 = vrot.slane %v5449, 7
        %v5452 = vshll.u32 %v5309, 16
        %v5454 = vor.u32 %v5451, %v5452
        %v5455 = vrot.slane %v5451, 4
        %v5457 = vshrl.u32 %v5310, 16
        %v5459 = vrot.slane %v5457, 7
        %v5460 = vshll.u32 %v5310, 16
        %v5462 = vor.u32 %v5459, %v5460
        %v5463 = vsel %vm5328, %v5455, %v5462
        %v5464 = vrot.slane %v5459, 4
        %v5466 = vshrl.u32 %v5311, 16
        %v5468 = vrot.slane %v5466, 7
        %v5469 = vshll.u32 %v5311, 16
        %v5471 = vor.u32 %v5468, %v5469
        %v5472 = vrot.slane %v5468, 4
        %v5474 = vshrl.u32 %v5312, 16
        %v5476 = vrot.slane %v5474, 7
        %v5477 = vshll.u32 %v5312, 16
        %v5479 = vor.u32 %v5476, %v5477
        %v5480 = vsel %vm5328, %v5472, %v5479
        %v5481 = vrot.slane %v5476, 4
        %v5483 = vshrl.u32 %v5313, 16
        %v5485 = vrot.slane %v5483, 7
        %v5486 = vshll.u32 %v5313, 16
        %v5488 = vor.u32 %v5485, %v5486
        %v5489 = vrot.slane %v5485, 4
        %v5491 = vshrl.u32 %v5314, 16
        %v5493 = vrot.slane %v5491, 7
        %v5494 = vshll.u32 %v5314, 16
        %v5496 = vor.u32 %v5493, %v5494
        %v5497 = vsel %vm5328, %v5489, %v5496
        %v5498 = vrot.slane %v5493, 4
        %v5500 = vshrl.u32 %v5315, 16
        %v5502 = vrot.slane %v5500, 7
        %v5503 = vshll.u32 %v5315, 16
        %v5505 = vor.u32 %v5502, %v5503
        %v5506 = vrot.slane %v5502, 4
        %v5508 = vshrl.u32 %v5316, 16
        %v5510 = vrot.slane %v5508, 7
        %v5511 = vshll.u32 %v5316, 16
        %v5513 = vor.u32 %v5510, %v5511
        %v5514 = vsel %vm5328, %v5506, %v5513
        %v5515 = vrot.slane %v5510, 4
        %v5517 = vshrl.u32 %v5317, 16
        %v5519 = vrot.slane %v5517, 7
        %v5520 = vshll.u32 %v5317, 16
        %v5522 = vor.u32 %v5519, %v5520
        %v5523 = vrot.slane %v5519, 4
        %v5525 = vshrl.u32 %v5318, 16
        %v5527 = vrot.slane %v5525, 7
        %v5528 = vshll.u32 %v5318, 16
        %v5530 = vor.u32 %v5527, %v5528
        %v5531 = vsel %vm5328, %v5523, %v5530
        %v5532 = vrot.slane %v5527, 4
        %v5534 = vshrl.u32 %v5319, 16
        %v5536 = vrot.slane %v5534, 7
        %v5537 = vshll.u32 %v5319, 16
        %v5539 = vor.u32 %v5536, %v5537
        %v5540 = vrot.slane %v5536, 4
        %v5542 = vshrl.u32 %v5320, 16
        %v5544 = vrot.slane %v5542, 7
        %v5545 = vshll.u32 %v5320, 16
        %v5547 = vor.u32 %v5544, %v5545
        %v5548 = vsel %vm5328, %v5540, %v5547
        %v5549 = vrot.slane %v5544, 4
        %v5551 = vshrl.u32 %v5321, 16
        %v5553 = vrot.slane %v5551, 7
        %v5554 = vshll.u32 %v5321, 16
        %v5556 = vor.u32 %v5553, %v5554
        %v5557 = vrot.slane %v5553, 4
        %v5559 = vshrl.u32 %v5322, 16
        %v5561 = vrot.slane %v5559, 7
        %v5562 = vshll.u32 %v5322, 16
        %v5564 = vor.u32 %v5561, %v5562
        %v5565 = vsel %vm5328, %v5557, %v5564
        %v5566 = vrot.slane %v5561, 4
        %v5568 = vshrl.u32 %v5323, 16
        %v5570 = vrot.slane %v5568, 7
        %v5571 = vshll.u32 %v5323, 16
        %v5573 = vor.u32 %v5570, %v5571
        %v5574 = vrot.slane %v5570, 4
        %v5576 = vshrl.u32 %v5324, 16
        %v5578 = vrot.slane %v5576, 7
        %v5579 = vshll.u32 %v5324, 16
        %v5581 = vor.u32 %v5578, %v5579
        %v5582 = vsel %vm5328, %v5574, %v5581
        %v5583 = vrot.slane %v5578, 4
        %v5585 = vshrl.u32 %v5325, 16
        %v5587 = vrot.slane %v5585, 7
        %v5588 = vshll.u32 %v5325, 16
        %v5590 = vor.u32 %v5587, %v5588
        %v5591 = vrot.slane %v5587, 4
        %v5593 = vshrl.u32 %v5326, 16
        %v5595 = vrot.slane %v5593, 7
        %v5596 = vshll.u32 %v5326, 16
        %v5598 = vor.u32 %v5595, %v5596
        %v5599 = vsel %vm5328, %v5591, %v5598
        %v5600 = vrot.slane %v5595, 4
        %s5649 = scalar_lea.vmem [#allocation2], 12
        %vm5650 = vcmask 1043456
        %vm5651 = vmand %vm5650, %vm5175
        %v5652 = vld [vmem:[%s5649] sm:$0xf]
        %v5653 = vsel %vm5651, %v5335, %v5652
        %5654 = vst [vmem:[%s5649] sm:$0xf] %v5653
        %5655 = vst [vmem:[%s5649 + $0x4] sm:$0xf] %v5344
        %v5656 = vld [vmem:[%s5649 + $0x8] sm:$0x1]
        %v5657 = vsel %vm5120, %v5345, %v5656
        %5658 = vst [vmem:[%s5649 + $0x8] sm:$0x1] %v5657
        %v5659 = vld [vmem:[%s5649 + $0xc] sm:$0xf]
        %v5660 = vsel %vm5651, %v5352, %v5659
        %5661 = vst [vmem:[%s5649 + $0xc] sm:$0xf] %v5660
        %5662 = vst [vmem:[%s5649 + $0x10] sm:$0xf] %v5361
        %v5663 = vld [vmem:[%s5649 + $0x14] sm:$0x1]
        %v5664 = vsel %vm5120, %v5362, %v5663
        %5665 = vst [vmem:[%s5649 + $0x14] sm:$0x1] %v5664
        %v5666 = vld [vmem:[%s5649 + $0x18] sm:$0xf]
        %v5667 = vsel %vm5651, %v5369, %v5666
        %5668 = vst [vmem:[%s5649 + $0x18] sm:$0xf] %v5667
        %5669 = vst [vmem:[%s5649 + $0x1c] sm:$0xf] %v5378
        %v5670 = vld [vmem:[%s5649 + $0x20] sm:$0x1]
        %v5671 = vsel %vm5120, %v5379, %v5670
        %5672 = vst [vmem:[%s5649 + $0x20] sm:$0x1] %v5671
        %v5673 = vld [vmem:[%s5649 + $0x24] sm:$0xf]
        %v5674 = vsel %vm5651, %v5386, %v5673
        %5675 = vst [vmem:[%s5649 + $0x24] sm:$0xf] %v5674
        %5676 = vst [vmem:[%s5649 + $0x28] sm:$0xf] %v5395
        %v5677 = vld [vmem:[%s5649 + $0x2c] sm:$0x1]
        %v5678 = vsel %vm5120, %v5396, %v5677
        %5679 = vst [vmem:[%s5649 + $0x2c] sm:$0x1] %v5678
        %v5680 = vld [vmem:[%s5649 + $0x30] sm:$0xf]
        %v5681 = vsel %vm5651, %v5403, %v5680
        %5682 = vst [vmem:[%s5649 + $0x30] sm:$0xf] %v5681
        %5683 = vst [vmem:[%s5649 + $0x34] sm:$0xf] %v5412
        %v5684 = vld [vmem:[%s5649 + $0x38] sm:$0x1]
        %v5685 = vsel %vm5120, %v5413, %v5684
        %5686 = vst [vmem:[%s5649 + $0x38] sm:$0x1] %v5685
        %v5687 = vld [vmem:[%s5649 + $0x3c] sm:$0xf]
        %v5688 = vsel %vm5651, %v5420, %v5687
        %5689 = vst [vmem:[%s5649 + $0x3c] sm:$0xf] %v5688
        %5690 = vst [vmem:[%s5649 + $0x40] sm:$0xf] %v5429
        %v5691 = vld [vmem:[%s5649 + $0x44] sm:$0x1]
        %v5692 = vsel %vm5120, %v5430, %v5691
        %5693 = vst [vmem:[%s5649 + $0x44] sm:$0x1] %v5692
        %v5694 = vld [vmem:[%s5649 + $0x48] sm:$0xf]
        %v5695 = vsel %vm5651, %v5437, %v5694
        %5696 = vst [vmem:[%s5649 + $0x48] sm:$0xf] %v5695
        %5697 = vst [vmem:[%s5649 + $0x4c] sm:$0xf] %v5446
        %v5698 = vld [vmem:[%s5649 + $0x50] sm:$0x1]
        %v5699 = vsel %vm5120, %v5447, %v5698
        %5700 = vst [vmem:[%s5649 + $0x50] sm:$0x1] %v5699
        %v5701 = vld [vmem:[%s5649 + $0x54] sm:$0xf]
        %v5702 = vsel %vm5651, %v5454, %v5701
        %5703 = vst [vmem:[%s5649 + $0x54] sm:$0xf] %v5702
        %5704 = vst [vmem:[%s5649 + $0x58] sm:$0xf] %v5463
        %v5705 = vld [vmem:[%s5649 + $0x5c] sm:$0x1]
        %v5706 = vsel %vm5120, %v5464, %v5705
        %5707 = vst [vmem:[%s5649 + $0x5c] sm:$0x1] %v5706
        %v5708 = vld [vmem:[%s5649 + $0x60] sm:$0xf]
        %v5709 = vsel %vm5651, %v5471, %v5708
        %5710 = vst [vmem:[%s5649 + $0x60] sm:$0xf] %v5709
        %5711 = vst [vmem:[%s5649 + $0x64] sm:$0xf] %v5480
        %v5712 = vld [vmem:[%s5649 + $0x68] sm:$0x1]
        %v5713 = vsel %vm5120, %v5481, %v5712
        %5714 = vst [vmem:[%s5649 + $0x68] sm:$0x1] %v5713
        %v5715 = vld [vmem:[%s5649 + $0x6c] sm:$0xf]
        %v5716 = vsel %vm5651, %v5488, %v5715
        %5717 = vst [vmem:[%s5649 + $0x6c] sm:$0xf] %v5716
        %5718 = vst [vmem:[%s5649 + $0x70] sm:$0xf] %v5497
        %v5719 = vld [vmem:[%s5649 + $0x74] sm:$0x1]
        %v5720 = vsel %vm5120, %v5498, %v5719
        %5721 = vst [vmem:[%s5649 + $0x74] sm:$0x1] %v5720
        %v5722 = vld [vmem:[%s5649 + $0x78] sm:$0xf]
        %v5723 = vsel %vm5651, %v5505, %v5722
        %5724 = vst [vmem:[%s5649 + $0x78] sm:$0xf] %v5723
        %5725 = vst [vmem:[%s5649 + $0x7c] sm:$0xf] %v5514
        %v5726 = vld [vmem:[%s5649 + $0x80] sm:$0x1]
        %v5727 = vsel %vm5120, %v5515, %v5726
        %5728 = vst [vmem:[%s5649 + $0x80] sm:$0x1] %v5727
        %v5729 = vld [vmem:[%s5649 + $0x84] sm:$0xf]
        %v5730 = vsel %vm5651, %v5522, %v5729
        %5731 = vst [vmem:[%s5649 + $0x84] sm:$0xf] %v5730
        %5732 = vst [vmem:[%s5649 + $0x88] sm:$0xf] %v5531
        %v5733 = vld [vmem:[%s5649 + $0x8c] sm:$0x1]
        %v5734 = vsel %vm5120, %v5532, %v5733
        %5735 = vst [vmem:[%s5649 + $0x8c] sm:$0x1] %v5734
        %v5736 = vld [vmem:[%s5649 + $0x90] sm:$0xf]
        %v5737 = vsel %vm5651, %v5539, %v5736
        %5738 = vst [vmem:[%s5649 + $0x90] sm:$0xf] %v5737
        %5739 = vst [vmem:[%s5649 + $0x94] sm:$0xf] %v5548
        %v5740 = vld [vmem:[%s5649 + $0x98] sm:$0x1]
        %v5741 = vsel %vm5120, %v5549, %v5740
        %5742 = vst [vmem:[%s5649 + $0x98] sm:$0x1] %v5741
        %v5743 = vld [vmem:[%s5649 + $0x9c] sm:$0xf]
        %v5744 = vsel %vm5651, %v5556, %v5743
        %5745 = vst [vmem:[%s5649 + $0x9c] sm:$0xf] %v5744
        %5746 = vst [vmem:[%s5649 + $0xa0] sm:$0xf] %v5565
        %v5747 = vld [vmem:[%s5649 + $0xa4] sm:$0x1]
        %v5748 = vsel %vm5120, %v5566, %v5747
        %5749 = vst [vmem:[%s5649 + $0xa4] sm:$0x1] %v5748
        %v5750 = vld [vmem:[%s5649 + $0xa8] sm:$0xf]
        %v5751 = vsel %vm5651, %v5573, %v5750
        %5752 = vst [vmem:[%s5649 + $0xa8] sm:$0xf] %v5751
        %5753 = vst [vmem:[%s5649 + $0xac] sm:$0xf] %v5582
        %v5754 = vld [vmem:[%s5649 + $0xb0] sm:$0x1]
        %v5755 = vsel %vm5120, %v5583, %v5754
        %5756 = vst [vmem:[%s5649 + $0xb0] sm:$0x1] %v5755
        %v5757 = vld [vmem:[%s5649 + $0xb4] sm:$0xf]
        %v5758 = vsel %vm5651, %v5590, %v5757
        %5759 = vst [vmem:[%s5649 + $0xb4] sm:$0xf] %v5758
        %5760 = vst [vmem:[%s5649 + $0xb8] sm:$0xf] %v5599
        %v5761 = vld [vmem:[%s5649 + $0xbc] sm:$0x1]
        %v5762 = vsel %vm5120, %v5600, %v5761
        %5763 = vst [vmem:[%s5649 + $0xbc] sm:$0x1] %v5762
        %v5764 = vld [vmem:[#allocation2] sm:$0xf]
        %v5765 = vld [vmem:[#allocation2 + $0x4] sm:$0xf]
        %v5766 = vld [vmem:[#allocation2 + $0xc] sm:$0xf]
        %v5767 = vld [vmem:[#allocation2 + $0x10] sm:$0xf]
        %v5768 = vld [vmem:[#allocation2 + $0x18] sm:$0xf]
        %v5769 = vld [vmem:[#allocation2 + $0x1c] sm:$0xf]
        %v5770 = vld [vmem:[#allocation2 + $0x24] sm:$0xf]
        %v5771 = vld [vmem:[#allocation2 + $0x28] sm:$0xf]
        %v5772 = vld [vmem:[#allocation2 + $0x30] sm:$0xf]
        %v5773 = vld [vmem:[#allocation2 + $0x34] sm:$0xf]
        %v5774 = vld [vmem:[#allocation2 + $0x3c] sm:$0xf]
        %v5775 = vld [vmem:[#allocation2 + $0x40] sm:$0xf]
        %v5776 = vld [vmem:[#allocation2 + $0x48] sm:$0xf]
        %v5777 = vld [vmem:[#allocation2 + $0x4c] sm:$0xf]
        %v5778 = vld [vmem:[#allocation2 + $0x54] sm:$0xf]
        %v5779 = vld [vmem:[#allocation2 + $0x58] sm:$0xf]
        %v5780 = vld [vmem:[#allocation2 + $0x60] sm:$0xf]
        %v5781 = vld [vmem:[#allocation2 + $0x64] sm:$0xf]
        %v5782 = vld [vmem:[#allocation2 + $0x6c] sm:$0xf]
        %v5783 = vld [vmem:[#allocation2 + $0x70] sm:$0xf]
        %v5784 = vld [vmem:[#allocation2 + $0x78] sm:$0xf]
        %v5785 = vld [vmem:[#allocation2 + $0x7c] sm:$0xf]
        %v5786 = vld [vmem:[#allocation2 + $0x84] sm:$0xf]
        %v5787 = vld [vmem:[#allocation2 + $0x88] sm:$0xf]
        %v5788 = vld [vmem:[#allocation2 + $0x90] sm:$0xf]
        %v5789 = vld [vmem:[#allocation2 + $0x94] sm:$0xf]
        %v5790 = vld [vmem:[#allocation2 + $0x9c] sm:$0xf]
        %v5791 = vld [vmem:[#allocation2 + $0xa0] sm:$0xf]
        %v5792 = vld [vmem:[#allocation2 + $0xa8] sm:$0xf]
        %v5793 = vld [vmem:[#allocation2 + $0xac] sm:$0xf]
        %v5794 = vld [vmem:[#allocation2 + $0xb4] sm:$0xf]
        %v5795 = vld [vmem:[#allocation2 + $0xb8] sm:$0xf]
        %v5796 = vld [vmem:[#allocation3] sm:$0xf]
        %v5797 = vld [vmem:[#allocation3 + $0x4] sm:$0xf]
        %v5798 = vld [vmem:[#allocation3 + $0x8] sm:$0xf]
        %v5799 = vld [vmem:[#allocation3 + $0xc] sm:$0xf]
        %v5800 = vld [vmem:[#allocation3 + $0x10] sm:$0xf]
        %v5801 = vld [vmem:[#allocation3 + $0x14] sm:$0xf]
        %v5802 = vld [vmem:[#allocation3 + $0x18] sm:$0xf]
        %v5803 = vld [vmem:[#allocation3 + $0x1c] sm:$0xf]
        %v5804 = vld [vmem:[#allocation3 + $0x20] sm:$0xf]
        %v5805 = vld [vmem:[#allocation3 + $0x24] sm:$0xf]
        %v5806 = vld [vmem:[#allocation3 + $0x28] sm:$0xf]
        %v5807 = vld [vmem:[#allocation3 + $0x2c] sm:$0xf]
        %v5808 = vld [vmem:[#allocation3 + $0x30] sm:$0xf]
        %v5809 = vld [vmem:[#allocation3 + $0x34] sm:$0xf]
        %v5810 = vld [vmem:[#allocation3 + $0x38] sm:$0xf]
        %v5811 = vld [vmem:[#allocation3 + $0x3c] sm:$0xf]
        %v5812 = vld [vmem:[#allocation2 + $0x8] sm:$0x1]
        %v5813 = vld [vmem:[#allocation2 + $0x14] sm:$0x1]
        %v5814 = vld [vmem:[#allocation2 + $0x20] sm:$0x1]
        %v5815 = vld [vmem:[#allocation2 + $0x2c] sm:$0x1]
        %v5816 = vld [vmem:[#allocation2 + $0x38] sm:$0x1]
        %v5817 = vld [vmem:[#allocation2 + $0x44] sm:$0x1]
        %v5818 = vld [vmem:[#allocation2 + $0x50] sm:$0x1]
        %v5819 = vld [vmem:[#allocation2 + $0x5c] sm:$0x1]
        %v5820 = vld [vmem:[#allocation2 + $0x68] sm:$0x1]
        %v5821 = vld [vmem:[#allocation2 + $0x74] sm:$0x1]
        %v5822 = vld [vmem:[#allocation2 + $0x80] sm:$0x1]
        %v5823 = vld [vmem:[#allocation2 + $0x8c] sm:$0x1]
        %v5824 = vld [vmem:[#allocation2 + $0x98] sm:$0x1]
        %v5825 = vld [vmem:[#allocation2 + $0xa4] sm:$0x1]
        %v5826 = vld [vmem:[#allocation2 + $0xb0] sm:$0x1]
        %v5827 = vld [vmem:[#allocation2 + $0xbc] sm:$0x1]
        %v5829 = vshrl.u32 %v5764, 16
        %v5831 = vrot.slane %v5829, 4
        %v5832 = vshll.u32 %v5764, 16
        %v5834 = vrot.slane %v5832, 5
        %v5835 = vor.u32 %v5831, %v5834
        %v5836 = vrot.slane %v5835, 4
        %v5838 = vshll.u32 %v5765, 16
        %v5840 = vrot.slane %v5838, 5
        %v5841 = vsel %vm305, %v5836, %v5840
        %v5842 = vshrl.u32 %v5765, 16
        %v5844 = vrot.slane %v5842, 4
        %v5845 = vor.u32 %v5844, %v5840
        %v5846 = vrot.slane %v5845, 4
        %v5848 = vshll.u32 %v5812, 16
        %v5850 = vrot.slane %v5848, 5
        %v5851 = vsel %vm305, %v5846, %v5850
        %v5853 = vshrl.u32 %v5766, 16
        %v5855 = vrot.slane %v5853, 4
        %v5856 = vshll.u32 %v5766, 16
        %v5858 = vrot.slane %v5856, 5
        %v5859 = vor.u32 %v5855, %v5858
        %v5860 = vrot.slane %v5859, 4
        %v5862 = vshll.u32 %v5767, 16
        %v5864 = vrot.slane %v5862, 5
        %v5865 = vsel %vm305, %v5860, %v5864
        %v5866 = vshrl.u32 %v5767, 16
        %v5868 = vrot.slane %v5866, 4
        %v5869 = vor.u32 %v5868, %v5864
        %v5870 = vrot.slane %v5869, 4
        %v5872 = vshll.u32 %v5813, 16
        %v5874 = vrot.slane %v5872, 5
        %v5875 = vsel %vm305, %v5870, %v5874
        %v5877 = vshrl.u32 %v5768, 16
        %v5879 = vrot.slane %v5877, 4
        %v5880 = vshll.u32 %v5768, 16
        %v5882 = vrot.slane %v5880, 5
        %v5883 = vor.u32 %v5879, %v5882
        %v5884 = vrot.slane %v5883, 4
        %v5886 = vshll.u32 %v5769, 16
        %v5888 = vrot.slane %v5886, 5
        %v5889 = vsel %vm305, %v5884, %v5888
        %v5890 = vshrl.u32 %v5769, 16
        %v5892 = vrot.slane %v5890, 4
        %v5893 = vor.u32 %v5892, %v5888
        %v5894 = vrot.slane %v5893, 4
        %v5896 = vshll.u32 %v5814, 16
        %v5898 = vrot.slane %v5896, 5
        %v5899 = vsel %vm305, %v5894, %v5898
        %v5901 = vshrl.u32 %v5770, 16
        %v5903 = vrot.slane %v5901, 4
        %v5904 = vshll.u32 %v5770, 16
        %v5906 = vrot.slane %v5904, 5
        %v5907 = vor.u32 %v5903, %v5906
        %v5908 = vrot.slane %v5907, 4
        %v5910 = vshll.u32 %v5771, 16
        %v5912 = vrot.slane %v5910, 5
        %v5913 = vsel %vm305, %v5908, %v5912
        %v5914 = vshrl.u32 %v5771, 16
        %v5916 = vrot.slane %v5914, 4
        %v5917 = vor.u32 %v5916, %v5912
        %v5918 = vrot.slane %v5917, 4
        %v5920 = vshll.u32 %v5815, 16
        %v5922 = vrot.slane %v5920, 5
        %v5923 = vsel %vm305, %v5918, %v5922
        %v5925 = vshrl.u32 %v5772, 16
        %v5927 = vrot.slane %v5925, 4
        %v5928 = vshll.u32 %v5772, 16
        %v5930 = vrot.slane %v5928, 5
        %v5931 = vor.u32 %v5927, %v5930
        %v5932 = vrot.slane %v5931, 4
        %v5934 = vshll.u32 %v5773, 16
        %v5936 = vrot.slane %v5934, 5
        %v5937 = vsel %vm305, %v5932, %v5936
        %v5938 = vshrl.u32 %v5773, 16
        %v5940 = vrot.slane %v5938, 4
        %v5941 = vor.u32 %v5940, %v5936
        %v5942 = vrot.slane %v5941, 4
        %v5944 = vshll.u32 %v5816, 16
        %v5946 = vrot.slane %v5944, 5
        %v5947 = vsel %vm305, %v5942, %v5946
        %v5949 = vshrl.u32 %v5774, 16
        %v5951 = vrot.slane %v5949, 4
        %v5952 = vshll.u32 %v5774, 16
        %v5954 = vrot.slane %v5952, 5
        %v5955 = vor.u32 %v5951, %v5954
        %v5956 = vrot.slane %v5955, 4
        %v5958 = vshll.u32 %v5775, 16
        %v5960 = vrot.slane %v5958, 5
        %v5961 = vsel %vm305, %v5956, %v5960
        %v5962 = vshrl.u32 %v5775, 16
        %v5964 = vrot.slane %v5962, 4
        %v5965 = vor.u32 %v5964, %v5960
        %v5966 = vrot.slane %v5965, 4
        %v5968 = vshll.u32 %v5817, 16
        %v5970 = vrot.slane %v5968, 5
        %v5971 = vsel %vm305, %v5966, %v5970
        %v5973 = vshrl.u32 %v5776, 16
        %v5975 = vrot.slane %v5973, 4
        %v5976 = vshll.u32 %v5776, 16
        %v5978 = vrot.slane %v5976, 5
        %v5979 = vor.u32 %v5975, %v5978
        %v5980 = vrot.slane %v5979, 4
        %v5982 = vshll.u32 %v5777, 16
        %v5984 = vrot.slane %v5982, 5
        %v5985 = vsel %vm305, %v5980, %v5984
        %v5986 = vshrl.u32 %v5777, 16
        %v5988 = vrot.slane %v5986, 4
        %v5989 = vor.u32 %v5988, %v5984
        %v5990 = vrot.slane %v5989, 4
        %v5992 = vshll.u32 %v5818, 16
        %v5994 = vrot.slane %v5992, 5
        %v5995 = vsel %vm305, %v5990, %v5994
        %v5997 = vshrl.u32 %v5778, 16
        %v5999 = vrot.slane %v5997, 4
        %v6000 = vshll.u32 %v5778, 16
        %v6002 = vrot.slane %v6000, 5
        %v6003 = vor.u32 %v5999, %v6002
        %v6004 = vrot.slane %v6003, 4
        %v6006 = vshll.u32 %v5779, 16
        %v6008 = vrot.slane %v6006, 5
        %v6009 = vsel %vm305, %v6004, %v6008
        %v6010 = vshrl.u32 %v5779, 16
        %v6012 = vrot.slane %v6010, 4
        %v6013 = vor.u32 %v6012, %v6008
        %v6014 = vrot.slane %v6013, 4
        %v6016 = vshll.u32 %v5819, 16
        %v6018 = vrot.slane %v6016, 5
        %v6019 = vsel %vm305, %v6014, %v6018
        %v6021 = vshrl.u32 %v5780, 16
        %v6023 = vrot.slane %v6021, 4
        %v6024 = vshll.u32 %v5780, 16
        %v6026 = vrot.slane %v6024, 5
        %v6027 = vor.u32 %v6023, %v6026
        %v6028 = vrot.slane %v6027, 4
        %v6030 = vshll.u32 %v5781, 16
        %v6032 = vrot.slane %v6030, 5
        %v6033 = vsel %vm305, %v6028, %v6032
        %v6034 = vshrl.u32 %v5781, 16
        %v6036 = vrot.slane %v6034, 4
        %v6037 = vor.u32 %v6036, %v6032
        %v6038 = vrot.slane %v6037, 4
        %v6040 = vshll.u32 %v5820, 16
        %v6042 = vrot.slane %v6040, 5
        %v6043 = vsel %vm305, %v6038, %v6042
        %v6045 = vshrl.u32 %v5782, 16
        %v6047 = vrot.slane %v6045, 4
        %v6048 = vshll.u32 %v5782, 16
        %v6050 = vrot.slane %v6048, 5
        %v6051 = vor.u32 %v6047, %v6050
        %v6052 = vrot.slane %v6051, 4
        %v6054 = vshll.u32 %v5783, 16
        %v6056 = vrot.slane %v6054, 5
        %v6057 = vsel %vm305, %v6052, %v6056
        %v6058 = vshrl.u32 %v5783, 16
        %v6060 = vrot.slane %v6058, 4
        %v6061 = vor.u32 %v6060, %v6056
        %v6062 = vrot.slane %v6061, 4
        %v6064 = vshll.u32 %v5821, 16
        %v6066 = vrot.slane %v6064, 5
        %v6067 = vsel %vm305, %v6062, %v6066
        %v6069 = vshrl.u32 %v5784, 16
        %v6071 = vrot.slane %v6069, 4
        %v6072 = vshll.u32 %v5784, 16
        %v6074 = vrot.slane %v6072, 5
        %v6075 = vor.u32 %v6071, %v6074
        %v6076 = vrot.slane %v6075, 4
        %v6078 = vshll.u32 %v5785, 16
        %v6080 = vrot.slane %v6078, 5
        %v6081 = vsel %vm305, %v6076, %v6080
        %v6082 = vshrl.u32 %v5785, 16
        %v6084 = vrot.slane %v6082, 4
        %v6085 = vor.u32 %v6084, %v6080
        %v6086 = vrot.slane %v6085, 4
        %v6088 = vshll.u32 %v5822, 16
        %v6090 = vrot.slane %v6088, 5
        %v6091 = vsel %vm305, %v6086, %v6090
        %v6093 = vshrl.u32 %v5786, 16
        %v6095 = vrot.slane %v6093, 4
        %v6096 = vshll.u32 %v5786, 16
        %v6098 = vrot.slane %v6096, 5
        %v6099 = vor.u32 %v6095, %v6098
        %v6100 = vrot.slane %v6099, 4
        %v6102 = vshll.u32 %v5787, 16
        %v6104 = vrot.slane %v6102, 5
        %v6105 = vsel %vm305, %v6100, %v6104
        %v6106 = vshrl.u32 %v5787, 16
        %v6108 = vrot.slane %v6106, 4
        %v6109 = vor.u32 %v6108, %v6104
        %v6110 = vrot.slane %v6109, 4
        %v6112 = vshll.u32 %v5823, 16
        %v6114 = vrot.slane %v6112, 5
        %v6115 = vsel %vm305, %v6110, %v6114
        %v6117 = vshrl.u32 %v5788, 16
        %v6119 = vrot.slane %v6117, 4
        %v6120 = vshll.u32 %v5788, 16
        %v6122 = vrot.slane %v6120, 5
        %v6123 = vor.u32 %v6119, %v6122
        %v6124 = vrot.slane %v6123, 4
        %v6126 = vshll.u32 %v5789, 16
        %v6128 = vrot.slane %v6126, 5
        %v6129 = vsel %vm305, %v6124, %v6128
        %v6130 = vshrl.u32 %v5789, 16
        %v6132 = vrot.slane %v6130, 4
        %v6133 = vor.u32 %v6132, %v6128
        %v6134 = vrot.slane %v6133, 4
        %v6136 = vshll.u32 %v5824, 16
        %v6138 = vrot.slane %v6136, 5
        %v6139 = vsel %vm305, %v6134, %v6138
        %v6141 = vshrl.u32 %v5790, 16
        %v6143 = vrot.slane %v6141, 4
        %v6144 = vshll.u32 %v5790, 16
        %v6146 = vrot.slane %v6144, 5
        %v6147 = vor.u32 %v6143, %v6146
        %v6148 = vrot.slane %v6147, 4
        %v6150 = vshll.u32 %v5791, 16
        %v6152 = vrot.slane %v6150, 5
        %v6153 = vsel %vm305, %v6148, %v6152
        %v6154 = vshrl.u32 %v5791, 16
        %v6156 = vrot.slane %v6154, 4
        %v6157 = vor.u32 %v6156, %v6152
        %v6158 = vrot.slane %v6157, 4
        %v6160 = vshll.u32 %v5825, 16
        %v6162 = vrot.slane %v6160, 5
        %v6163 = vsel %vm305, %v6158, %v6162
        %v6165 = vshrl.u32 %v5792, 16
        %v6167 = vrot.slane %v6165, 4
        %v6168 = vshll.u32 %v5792, 16
        %v6170 = vrot.slane %v6168, 5
        %v6171 = vor.u32 %v6167, %v6170
        %v6172 = vrot.slane %v6171, 4
        %v6174 = vshll.u32 %v5793, 16
        %v6176 = vrot.slane %v6174, 5
        %v6177 = vsel %vm305, %v6172, %v6176
        %v6178 = vshrl.u32 %v5793, 16
        %v6180 = vrot.slane %v6178, 4
        %v6181 = vor.u32 %v6180, %v6176
        %v6182 = vrot.slane %v6181, 4
        %v6184 = vshll.u32 %v5826, 16
        %v6186 = vrot.slane %v6184, 5
        %v6187 = vsel %vm305, %v6182, %v6186
        %v6189 = vshrl.u32 %v5794, 16
        %v6191 = vrot.slane %v6189, 4
        %v6192 = vshll.u32 %v5794, 16
        %v6194 = vrot.slane %v6192, 5
        %v6195 = vor.u32 %v6191, %v6194
        %v6196 = vrot.slane %v6195, 4
        %v6198 = vshll.u32 %v5795, 16
        %v6200 = vrot.slane %v6198, 5
        %v6201 = vsel %vm305, %v6196, %v6200
        %v6202 = vshrl.u32 %v5795, 16
        %v6204 = vrot.slane %v6202, 4
        %v6205 = vor.u32 %v6204, %v6200
        %v6206 = vrot.slane %v6205, 4
        %v6208 = vshll.u32 %v5827, 16
        %v6210 = vrot.slane %v6208, 5
        %v6211 = vsel %vm305, %v6206, %v6210
        %v6212 = vld [vmem:[#allocation3 + $0x40] sm:$0xf]
        %v6213 = vld [vmem:[#allocation3 + $0x44] sm:$0xf]
        %v6214 = vld [vmem:[#allocation3 + $0x48] sm:$0xf]
        %v6215 = vld [vmem:[#allocation3 + $0x4c] sm:$0xf]
        %v6216 = vld [vmem:[#allocation3 + $0x50] sm:$0xf]
        %v6217 = vld [vmem:[#allocation3 + $0x54] sm:$0xf]
        %v6218 = vld [vmem:[#allocation3 + $0x58] sm:$0xf]
        %v6219 = vld [vmem:[#allocation3 + $0x5c] sm:$0xf]
        %v6220 = vld [vmem:[#allocation3 + $0x60] sm:$0xf]
        %v6221 = vld [vmem:[#allocation3 + $0x64] sm:$0xf]
        %v6222 = vld [vmem:[#allocation3 + $0x68] sm:$0xf]
        %v6223 = vld [vmem:[#allocation3 + $0x6c] sm:$0xf]
        %v6224 = vld [vmem:[#allocation3 + $0x70] sm:$0xf]
        %v6225 = vld [vmem:[#allocation3 + $0x74] sm:$0xf]
        %v6226 = vld [vmem:[#allocation3 + $0x78] sm:$0xf]
        %v6227 = vld [vmem:[#allocation3 + $0x7c] sm:$0xf]
        %v6228 = vunpack.c.l.b16 %v5841
        %v6229 = vunpack.c.l.b16 %v5851
        %v6230 = vunpack.c.l.b16 %v5865
        %v6231 = vunpack.c.l.b16 %v5875
        %v6232 = vunpack.c.l.b16 %v5889
        %v6233 = vunpack.c.l.b16 %v5899
        %v6234 = vunpack.c.l.b16 %v5913
        %v6235 = vunpack.c.l.b16 %v5923
        %v6236 = vunpack.c.l.b16 %v5937
        %v6237 = vunpack.c.l.b16 %v5947
        %v6238 = vunpack.c.l.b16 %v5961
        %v6239 = vunpack.c.l.b16 %v5971
        %v6240 = vunpack.c.l.b16 %v5985
        %v6241 = vunpack.c.l.b16 %v5995
        %v6242 = vunpack.c.l.b16 %v6009
        %v6243 = vunpack.c.l.b16 %v6019
        %v6244 = vunpack.c.l.b16 %v6033
        %v6245 = vunpack.c.l.b16 %v6043
        %v6246 = vunpack.c.l.b16 %v6057
        %v6247 = vunpack.c.l.b16 %v6067
        %v6248 = vunpack.c.l.b16 %v6081
        %v6249 = vunpack.c.l.b16 %v6091
        %v6250 = vunpack.c.l.b16 %v6105
        %v6251 = vunpack.c.l.b16 %v6115
        %v6252 = vunpack.c.l.b16 %v6129
        %v6253 = vunpack.c.l.b16 %v6139
        %v6254 = vunpack.c.l.b16 %v6153
        %v6255 = vunpack.c.l.b16 %v6163
        %v6256 = vunpack.c.l.b16 %v6177
        %v6257 = vunpack.c.l.b16 %v6187
        %v6258 = vunpack.c.l.b16 %v6201
        %v6259 = vunpack.c.l.b16 %v6211
        %v6260 = vpack.c.b16 %v6229, %v6228
        %v6261 = vpack.c.b16 %v6231, %v6230
        %v6262 = vpack.c.b16 %v6233, %v6232
        %v6263 = vpack.c.b16 %v6235, %v6234
        %v6264 = vpack.c.b16 %v6237, %v6236
        %v6265 = vpack.c.b16 %v6239, %v6238
        %v6266 = vpack.c.b16 %v6241, %v6240
        %v6267 = vpack.c.b16 %v6243, %v6242
        %v6268 = vpack.c.b16 %v6245, %v6244
        %v6269 = vpack.c.b16 %v6247, %v6246
        %v6270 = vpack.c.b16 %v6249, %v6248
        %v6271 = vpack.c.b16 %v6251, %v6250
        %v6272 = vpack.c.b16 %v6253, %v6252
        %v6273 = vpack.c.b16 %v6255, %v6254
        %v6274 = vpack.c.b16 %v6257, %v6256
        %v6275 = vpack.c.b16 %v6259, %v6258
        %v6308 = vunpack.c.l.b16 %v6212
        %v6309 = vunpack.c.l.b16 %v6213
        %v6310 = vunpack.c.l.b16 %v6214
        %v6311 = vunpack.c.l.b16 %v6215
        %v6312 = vunpack.c.l.b16 %v6216
        %v6313 = vunpack.c.l.b16 %v6217
        %v6314 = vunpack.c.l.b16 %v6218
        %v6315 = vunpack.c.l.b16 %v6219
        %v6316 = vunpack.c.l.b16 %v6220
        %v6317 = vunpack.c.l.b16 %v6221
        %v6318 = vunpack.c.l.b16 %v6222
        %v6319 = vunpack.c.l.b16 %v6223
        %v6320 = vunpack.c.l.b16 %v6224
        %v6321 = vunpack.c.l.b16 %v6225
        %v6322 = vunpack.c.l.b16 %v6226
        %v6323 = vunpack.c.l.b16 %v6227
        %v6324 = vpack.c.b16 %v6309, %v6308
        %v6325 = vpack.c.b16 %v6311, %v6310
        %v6326 = vpack.c.b16 %v6313, %v6312
        %v6327 = vpack.c.b16 %v6315, %v6314
        %v6328 = vpack.c.b16 %v6317, %v6316
        %v6329 = vpack.c.b16 %v6319, %v6318
        %v6330 = vpack.c.b16 %v6321, %v6320
        %v6331 = vpack.c.b16 %v6323, %v6322
        %6340 = vmatprep.subr.bf16.mxu0 0
        %6341 = vmatpush1.bf16.msra.mxu0 %v6331
        %6342 = vmatprep.subr.bf16.mxu0 0
        %6343 = vmatpush1.bf16.msra.mxu0 %v6330
        %6344 = vmatprep.subr.bf16.mxu0 0
        %6345 = vmatpush1.bf16.msra.mxu0 %v6329
        %6346 = vmatprep.subr.bf16.mxu0 0
        %6347 = vmatpush1.bf16.msra.mxu0 %v6328
        %6348 = vmatprep.subr.bf16.mxu0 0
        %6349 = vmatpush1.bf16.msra.mxu0 %v6327
        %6350 = vmatprep.subr.bf16.mxu0 0
        %6351 = vmatpush1.bf16.msra.mxu0 %v6326
        %6352 = vmatprep.subr.bf16.mxu0 0
        %6353 = vmatpush1.bf16.msra.mxu0 %v6325
        %6354 = vmatprep.subr.bf16.mxu0 0
        %6355 = vmatpush1.bf16.msra.mxu0 %v6324
        %6356 = vmatprep.subr.bf16.mxu0 0
        %6357 = vmatpush2.bf16.msra.mxu0 0
        %6358 = vmatprep.subr.bf16.mxu0 0
        %6359 = vmatpush2.bf16.msra.mxu0 0
        %6360 = vmatprep.subr.bf16.mxu0 0
        %6361 = vmatpush2.bf16.msra.mxu0 0
        %6362 = vmatprep.subr.bf16.mxu0 0
        %6363 = vmatpush2.bf16.msra.mxu0 0
        %6364 = vmatprep.subr.bf16.mxu0 0
        %6365 = vmatpush2.bf16.msra.mxu0 0
        %6366 = vmatprep.subr.bf16.mxu0 0
        %6367 = vmatpush2.bf16.msra.mxu0 0
        %6368 = vmatprep.subr.bf16.mxu0 0
        %6369 = vmatpush2.bf16.msra.mxu0 0
        %6370 = vmatprep.subr.bf16.mxu0 0
        %6371 = vmatpush2.bf16.msra.mxu0 0
        %6372 = vmatprep.mubr.bf16.mxu0 0
        %6373 = vmatmul.mubr.bf16.gmra.mxu0 %v6260
        %v6374 = vpop.f32.mrf.mxu0
        %v6375 = vadd.f32 0.0, %v6374
        %v6376 = vpop.f32.mrf.mxu0
        %v6377 = vpop.f32.mrf.mxu0
        %v6378 = vadd.f32 0.0, %v6377
        %v6379 = vpop.f32.mrf.mxu0
        %6380 = vmatprep.mubr.bf16.mxu0 0
        %6381 = vmatmul.mubr.bf16.gmra.mxu0 %v6261
        %v6382 = vpop.f32.mrf.mxu0
        %v6383 = vadd.f32 0.0, %v6382
        %v6384 = vpop.f32.mrf.mxu0
        %v6385 = vpop.f32.mrf.mxu0
        %v6386 = vadd.f32 0.0, %v6385
        %v6387 = vpop.f32.mrf.mxu0
        %6388 = vmatprep.mubr.bf16.mxu0 0
        %6389 = vmatmul.mubr.bf16.gmra.mxu0 %v6262
        %v6390 = vpop.f32.mrf.mxu0
        %v6391 = vadd.f32 0.0, %v6390
        %v6392 = vpop.f32.mrf.mxu0
        %v6393 = vpop.f32.mrf.mxu0
        %v6394 = vadd.f32 0.0, %v6393
        %v6395 = vpop.f32.mrf.mxu0
        %6396 = vmatprep.mubr.bf16.mxu0 0
        %6397 = vmatmul.mubr.bf16.gmra.mxu0 %v6263
        %v6398 = vpop.f32.mrf.mxu0
        %v6399 = vadd.f32 0.0, %v6398
        %v6400 = vpop.f32.mrf.mxu0
        %v6401 = vpop.f32.mrf.mxu0
        %v6402 = vadd.f32 0.0, %v6401
        %v6403 = vpop.f32.mrf.mxu0
        %6404 = vmatprep.mubr.bf16.mxu0 0
        %6405 = vmatmul.mubr.bf16.gmra.mxu0 %v6264
        %v6406 = vpop.f32.mrf.mxu0
        %v6407 = vadd.f32 0.0, %v6406
        %v6408 = vpop.f32.mrf.mxu0
        %v6409 = vpop.f32.mrf.mxu0
        %v6410 = vadd.f32 0.0, %v6409
        %v6411 = vpop.f32.mrf.mxu0
        %6412 = vmatprep.mubr.bf16.mxu0 0
        %6413 = vmatmul.mubr.bf16.gmra.mxu0 %v6265
        %v6414 = vpop.f32.mrf.mxu0
        %v6415 = vadd.f32 0.0, %v6414
        %v6416 = vpop.f32.mrf.mxu0
        %v6417 = vpop.f32.mrf.mxu0
        %v6418 = vadd.f32 0.0, %v6417
        %v6419 = vpop.f32.mrf.mxu0
        %6420 = vmatprep.mubr.bf16.mxu0 0
        %6421 = vmatmul.mubr.bf16.gmra.mxu0 %v6266
        %v6422 = vpop.f32.mrf.mxu0
        %v6423 = vadd.f32 0.0, %v6422
        %v6424 = vpop.f32.mrf.mxu0
        %v6425 = vpop.f32.mrf.mxu0
        %v6426 = vadd.f32 0.0, %v6425
        %v6427 = vpop.f32.mrf.mxu0
        %6428 = vmatprep.mubr.bf16.mxu0 0
        %6429 = vmatmul.mubr.bf16.gmra.mxu0 %v6267
        %v6430 = vpop.f32.mrf.mxu0
        %v6431 = vadd.f32 0.0, %v6430
        %v6432 = vpop.f32.mrf.mxu0
        %v6433 = vpop.f32.mrf.mxu0
        %v6434 = vadd.f32 0.0, %v6433
        %v6435 = vpop.f32.mrf.mxu0
        %6436 = vmatprep.mubr.bf16.mxu0 0
        %6437 = vmatmul.mubr.bf16.gmra.mxu0 %v6268
        %v6438 = vpop.f32.mrf.mxu0
        %v6439 = vadd.f32 0.0, %v6438
        %v6440 = vpop.f32.mrf.mxu0
        %v6441 = vpop.f32.mrf.mxu0
        %v6442 = vadd.f32 0.0, %v6441
        %v6443 = vpop.f32.mrf.mxu0
        %6444 = vmatprep.mubr.bf16.mxu0 0
        %6445 = vmatmul.mubr.bf16.gmra.mxu0 %v6269
        %v6446 = vpop.f32.mrf.mxu0
        %v6447 = vadd.f32 0.0, %v6446
        %v6448 = vpop.f32.mrf.mxu0
        %v6449 = vpop.f32.mrf.mxu0
        %v6450 = vadd.f32 0.0, %v6449
        %v6451 = vpop.f32.mrf.mxu0
        %6452 = vmatprep.mubr.bf16.mxu0 0
        %6453 = vmatmul.mubr.bf16.gmra.mxu0 %v6270
        %v6454 = vpop.f32.mrf.mxu0
        %v6455 = vadd.f32 0.0, %v6454
        %v6456 = vpop.f32.mrf.mxu0
        %v6457 = vpop.f32.mrf.mxu0
        %v6458 = vadd.f32 0.0, %v6457
        %v6459 = vpop.f32.mrf.mxu0
        %6460 = vmatprep.mubr.bf16.mxu0 0
        %6461 = vmatmul.mubr.bf16.gmra.mxu0 %v6271
        %v6462 = vpop.f32.mrf.mxu0
        %v6463 = vadd.f32 0.0, %v6462
        %v6464 = vpop.f32.mrf.mxu0
        %v6465 = vpop.f32.mrf.mxu0
        %v6466 = vadd.f32 0.0, %v6465
        %v6467 = vpop.f32.mrf.mxu0
        %6468 = vmatprep.mubr.bf16.mxu0 0
        %6469 = vmatmul.mubr.bf16.gmra.mxu0 %v6272
        %v6470 = vpop.f32.mrf.mxu0
        %v6471 = vadd.f32 0.0, %v6470
        %v6472 = vpop.f32.mrf.mxu0
        %v6473 = vpop.f32.mrf.mxu0
        %v6474 = vadd.f32 0.0, %v6473
        %v6475 = vpop.f32.mrf.mxu0
        %6476 = vmatprep.mubr.bf16.mxu0 0
        %6477 = vmatmul.mubr.bf16.gmra.mxu0 %v6273
        %v6478 = vpop.f32.mrf.mxu0
        %v6479 = vadd.f32 0.0, %v6478
        %v6480 = vpop.f32.mrf.mxu0
        %v6481 = vpop.f32.mrf.mxu0
        %v6482 = vadd.f32 0.0, %v6481
        %v6483 = vpop.f32.mrf.mxu0
        %6484 = vmatprep.mubr.bf16.mxu0 0
        %6485 = vmatmul.mubr.bf16.gmra.mxu0 %v6274
        %v6486 = vpop.f32.mrf.mxu0
        %v6487 = vadd.f32 0.0, %v6486
        %v6488 = vpop.f32.mrf.mxu0
        %v6489 = vpop.f32.mrf.mxu0
        %v6490 = vadd.f32 0.0, %v6489
        %v6491 = vpop.f32.mrf.mxu0
        %6492 = vmatprep.mubr.bf16.mxu0 0
        %6493 = vmatmul.mubr.bf16.gmra.mxu0 %v6275
        %v6494 = vpop.f32.mrf.mxu0
        %v6495 = vadd.f32 0.0, %v6494
        %v6496 = vpop.f32.mrf.mxu0
        %v6497 = vpop.f32.mrf.mxu0
        %v6498 = vadd.f32 0.0, %v6497
        %v6499 = vpop.f32.mrf.mxu0
        %6500 = vdwg.mxu0
        %v6533 = vunpack.c.l.b16 %v5764
        %v6534 = vunpack.c.l.b16 %v5765
        %v6535 = vunpack.c.l.b16 %v5766
        %v6536 = vunpack.c.l.b16 %v5767
        %v6537 = vunpack.c.l.b16 %v5768
        %v6538 = vunpack.c.l.b16 %v5769
        %v6539 = vunpack.c.l.b16 %v5770
        %v6540 = vunpack.c.l.b16 %v5771
        %v6541 = vunpack.c.l.b16 %v5772
        %v6542 = vunpack.c.l.b16 %v5773
        %v6543 = vunpack.c.l.b16 %v5774
        %v6544 = vunpack.c.l.b16 %v5775
        %v6545 = vunpack.c.l.b16 %v5776
        %v6546 = vunpack.c.l.b16 %v5777
        %v6547 = vunpack.c.l.b16 %v5778
        %v6548 = vunpack.c.l.b16 %v5779
        %v6549 = vunpack.c.l.b16 %v5780
        %v6550 = vunpack.c.l.b16 %v5781
        %v6551 = vunpack.c.l.b16 %v5782
        %v6552 = vunpack.c.l.b16 %v5783
        %v6553 = vunpack.c.l.b16 %v5784
        %v6554 = vunpack.c.l.b16 %v5785
        %v6555 = vunpack.c.l.b16 %v5786
        %v6556 = vunpack.c.l.b16 %v5787
        %v6557 = vunpack.c.l.b16 %v5788
        %v6558 = vunpack.c.l.b16 %v5789
        %v6559 = vunpack.c.l.b16 %v5790
        %v6560 = vunpack.c.l.b16 %v5791
        %v6561 = vunpack.c.l.b16 %v5792
        %v6562 = vunpack.c.l.b16 %v5793
        %v6563 = vunpack.c.l.b16 %v5794
        %v6564 = vunpack.c.l.b16 %v5795
        %v6565 = vpack.c.b16 %v6534, %v6533
        %v6566 = vpack.c.b16 %v6536, %v6535
        %v6567 = vpack.c.b16 %v6538, %v6537
        %v6568 = vpack.c.b16 %v6540, %v6539
        %v6569 = vpack.c.b16 %v6542, %v6541
        %v6570 = vpack.c.b16 %v6544, %v6543
        %v6571 = vpack.c.b16 %v6546, %v6545
        %v6572 = vpack.c.b16 %v6548, %v6547
        %v6573 = vpack.c.b16 %v6550, %v6549
        %v6574 = vpack.c.b16 %v6552, %v6551
        %v6575 = vpack.c.b16 %v6554, %v6553
        %v6576 = vpack.c.b16 %v6556, %v6555
        %v6577 = vpack.c.b16 %v6558, %v6557
        %v6578 = vpack.c.b16 %v6560, %v6559
        %v6579 = vpack.c.b16 %v6562, %v6561
        %v6580 = vpack.c.b16 %v6564, %v6563
        %v6613 = vunpack.c.l.b16 %v5796
        %v6614 = vunpack.c.l.b16 %v5797
        %v6615 = vunpack.c.l.b16 %v5798
        %v6616 = vunpack.c.l.b16 %v5799
        %v6617 = vunpack.c.l.b16 %v5800
        %v6618 = vunpack.c.l.b16 %v5801
        %v6619 = vunpack.c.l.b16 %v5802
        %v6620 = vunpack.c.l.b16 %v5803
        %v6621 = vunpack.c.l.b16 %v5804
        %v6622 = vunpack.c.l.b16 %v5805
        %v6623 = vunpack.c.l.b16 %v5806
        %v6624 = vunpack.c.l.b16 %v5807
        %v6625 = vunpack.c.l.b16 %v5808
        %v6626 = vunpack.c.l.b16 %v5809
        %v6627 = vunpack.c.l.b16 %v5810
        %v6628 = vunpack.c.l.b16 %v5811
        %v6629 = vpack.c.b16 %v6614, %v6613
        %v6630 = vpack.c.b16 %v6616, %v6615
        %v6631 = vpack.c.b16 %v6618, %v6617
        %v6632 = vpack.c.b16 %v6620, %v6619
        %v6633 = vpack.c.b16 %v6622, %v6621
        %v6634 = vpack.c.b16 %v6624, %v6623
        %v6635 = vpack.c.b16 %v6626, %v6625
        %v6636 = vpack.c.b16 %v6628, %v6627
        %6645 = vmatprep.subr.bf16.mxu0 0
        %6646 = vmatpush1.bf16.msra.mxu0 %v6636
        %6647 = vmatprep.subr.bf16.mxu0 0
        %6648 = vmatpush1.bf16.msra.mxu0 %v6635
        %6649 = vmatprep.subr.bf16.mxu0 0
        %6650 = vmatpush1.bf16.msra.mxu0 %v6634
        %6651 = vmatprep.subr.bf16.mxu0 0
        %6652 = vmatpush1.bf16.msra.mxu0 %v6633
        %6653 = vmatprep.subr.bf16.mxu0 0
        %6654 = vmatpush1.bf16.msra.mxu0 %v6632
        %6655 = vmatprep.subr.bf16.mxu0 0
        %6656 = vmatpush1.bf16.msra.mxu0 %v6631
        %6657 = vmatprep.subr.bf16.mxu0 0
        %6658 = vmatpush1.bf16.msra.mxu0 %v6630
        %6659 = vmatprep.subr.bf16.mxu0 0
        %6660 = vmatpush1.bf16.msra.mxu0 %v6629
        %6661 = vmatprep.subr.bf16.mxu0 0
        %6662 = vmatpush2.bf16.msra.mxu0 0
        %6663 = vmatprep.subr.bf16.mxu0 0
        %6664 = vmatpush2.bf16.msra.mxu0 0
        %6665 = vmatprep.subr.bf16.mxu0 0
        %6666 = vmatpush2.bf16.msra.mxu0 0
        %6667 = vmatprep.subr.bf16.mxu0 0
        %6668 = vmatpush2.bf16.msra.mxu0 0
        %6669 = vmatprep.subr.bf16.mxu0 0
        %6670 = vmatpush2.bf16.msra.mxu0 0
        %6671 = vmatprep.subr.bf16.mxu0 0
        %6672 = vmatpush2.bf16.msra.mxu0 0
        %6673 = vmatprep.subr.bf16.mxu0 0
        %6674 = vmatpush2.bf16.msra.mxu0 0
        %6675 = vmatprep.subr.bf16.mxu0 0
        %6676 = vmatpush2.bf16.msra.mxu0 0
        %6677 = vmatprep.mubr.bf16.mxu0 0
        %6678 = vmatmul.mubr.bf16.gmra.mxu0 %v6565
        %v6679 = vpop.f32.mrf.mxu0
        %v6680 = vadd.f32 %v6375, %v6679
        %v6681 = vpop.f32.mrf.mxu0
        %v6682 = vpop.f32.mrf.mxu0
        %v6683 = vadd.f32 %v6378, %v6682
        %v6684 = vpop.f32.mrf.mxu0
        %6685 = vmatprep.mubr.bf16.mxu0 0
        %6686 = vmatmul.mubr.bf16.gmra.mxu0 %v6566
        %v6687 = vpop.f32.mrf.mxu0
        %v6688 = vadd.f32 %v6383, %v6687
        %v6689 = vpop.f32.mrf.mxu0
        %v6690 = vpop.f32.mrf.mxu0
        %v6691 = vadd.f32 %v6386, %v6690
        %v6692 = vpop.f32.mrf.mxu0
        %6693 = vmatprep.mubr.bf16.mxu0 0
        %6694 = vmatmul.mubr.bf16.gmra.mxu0 %v6567
        %v6695 = vpop.f32.mrf.mxu0
        %v6696 = vadd.f32 %v6391, %v6695
        %v6697 = vpop.f32.mrf.mxu0
        %v6698 = vpop.f32.mrf.mxu0
        %v6699 = vadd.f32 %v6394, %v6698
        %v6700 = vpop.f32.mrf.mxu0
        %6701 = vmatprep.mubr.bf16.mxu0 0
        %6702 = vmatmul.mubr.bf16.gmra.mxu0 %v6568
        %v6703 = vpop.f32.mrf.mxu0
        %v6704 = vadd.f32 %v6399, %v6703
        %v6705 = vpop.f32.mrf.mxu0
        %v6706 = vpop.f32.mrf.mxu0
        %v6707 = vadd.f32 %v6402, %v6706
        %v6708 = vpop.f32.mrf.mxu0
        %6709 = vmatprep.mubr.bf16.mxu0 0
        %6710 = vmatmul.mubr.bf16.gmra.mxu0 %v6569
        %v6711 = vpop.f32.mrf.mxu0
        %v6712 = vadd.f32 %v6407, %v6711
        %v6713 = vpop.f32.mrf.mxu0
        %v6714 = vpop.f32.mrf.mxu0
        %v6715 = vadd.f32 %v6410, %v6714
        %v6716 = vpop.f32.mrf.mxu0
        %6717 = vmatprep.mubr.bf16.mxu0 0
        %6718 = vmatmul.mubr.bf16.gmra.mxu0 %v6570
        %v6719 = vpop.f32.mrf.mxu0
        %v6720 = vadd.f32 %v6415, %v6719
        %v6721 = vpop.f32.mrf.mxu0
        %v6722 = vpop.f32.mrf.mxu0
        %v6723 = vadd.f32 %v6418, %v6722
        %v6724 = vpop.f32.mrf.mxu0
        %6725 = vmatprep.mubr.bf16.mxu0 0
        %6726 = vmatmul.mubr.bf16.gmra.mxu0 %v6571
        %v6727 = vpop.f32.mrf.mxu0
        %v6728 = vadd.f32 %v6423, %v6727
        %v6729 = vpop.f32.mrf.mxu0
        %v6730 = vpop.f32.mrf.mxu0
        %v6731 = vadd.f32 %v6426, %v6730
        %v6732 = vpop.f32.mrf.mxu0
        %6733 = vmatprep.mubr.bf16.mxu0 0
        %6734 = vmatmul.mubr.bf16.gmra.mxu0 %v6572
        %v6735 = vpop.f32.mrf.mxu0
        %v6736 = vadd.f32 %v6431, %v6735
        %v6737 = vpop.f32.mrf.mxu0
        %v6738 = vpop.f32.mrf.mxu0
        %v6739 = vadd.f32 %v6434, %v6738
        %v6740 = vpop.f32.mrf.mxu0
        %6741 = vmatprep.mubr.bf16.mxu0 0
        %6742 = vmatmul.mubr.bf16.gmra.mxu0 %v6573
        %v6743 = vpop.f32.mrf.mxu0
        %v6744 = vadd.f32 %v6439, %v6743
        %v6745 = vpop.f32.mrf.mxu0
        %v6746 = vpop.f32.mrf.mxu0
        %v6747 = vadd.f32 %v6442, %v6746
        %v6748 = vpop.f32.mrf.mxu0
        %6749 = vmatprep.mubr.bf16.mxu0 0
        %6750 = vmatmul.mubr.bf16.gmra.mxu0 %v6574
        %v6751 = vpop.f32.mrf.mxu0
        %v6752 = vadd.f32 %v6447, %v6751
        %v6753 = vpop.f32.mrf.mxu0
        %v6754 = vpop.f32.mrf.mxu0
        %v6755 = vadd.f32 %v6450, %v6754
        %v6756 = vpop.f32.mrf.mxu0
        %6757 = vmatprep.mubr.bf16.mxu0 0
        %6758 = vmatmul.mubr.bf16.gmra.mxu0 %v6575
        %v6759 = vpop.f32.mrf.mxu0
        %v6760 = vadd.f32 %v6455, %v6759
        %v6761 = vpop.f32.mrf.mxu0
        %v6762 = vpop.f32.mrf.mxu0
        %v6763 = vadd.f32 %v6458, %v6762
        %v6764 = vpop.f32.mrf.mxu0
        %6765 = vmatprep.mubr.bf16.mxu0 0
        %6766 = vmatmul.mubr.bf16.gmra.mxu0 %v6576
        %v6767 = vpop.f32.mrf.mxu0
        %v6768 = vadd.f32 %v6463, %v6767
        %v6769 = vpop.f32.mrf.mxu0
        %v6770 = vpop.f32.mrf.mxu0
        %v6771 = vadd.f32 %v6466, %v6770
        %v6772 = vpop.f32.mrf.mxu0
        %6773 = vmatprep.mubr.bf16.mxu0 0
        %6774 = vmatmul.mubr.bf16.gmra.mxu0 %v6577
        %v6775 = vpop.f32.mrf.mxu0
        %v6776 = vadd.f32 %v6471, %v6775
        %v6777 = vpop.f32.mrf.mxu0
        %v6778 = vpop.f32.mrf.mxu0
        %v6779 = vadd.f32 %v6474, %v6778
        %v6780 = vpop.f32.mrf.mxu0
        %6781 = vmatprep.mubr.bf16.mxu0 0
        %6782 = vmatmul.mubr.bf16.gmra.mxu0 %v6578
        %v6783 = vpop.f32.mrf.mxu0
        %v6784 = vadd.f32 %v6479, %v6783
        %v6785 = vpop.f32.mrf.mxu0
        %v6786 = vpop.f32.mrf.mxu0
        %v6787 = vadd.f32 %v6482, %v6786
        %v6788 = vpop.f32.mrf.mxu0
        %6789 = vmatprep.mubr.bf16.mxu0 0
        %6790 = vmatmul.mubr.bf16.gmra.mxu0 %v6579
        %v6791 = vpop.f32.mrf.mxu0
        %v6792 = vadd.f32 %v6487, %v6791
        %v6793 = vpop.f32.mrf.mxu0
        %v6794 = vpop.f32.mrf.mxu0
        %v6795 = vadd.f32 %v6490, %v6794
        %v6796 = vpop.f32.mrf.mxu0
        %6797 = vmatprep.mubr.bf16.mxu0 0
        %6798 = vmatmul.mubr.bf16.gmra.mxu0 %v6580
        %v6799 = vpop.f32.mrf.mxu0
        %v6800 = vadd.f32 %v6495, %v6799
        %v6801 = vpop.f32.mrf.mxu0
        %v6802 = vpop.f32.mrf.mxu0
        %v6803 = vadd.f32 %v6498, %v6802
        %v6804 = vpop.f32.mrf.mxu0
        %6805 = vdwg.mxu0
        %v6806 = vld [vmem:[#allocation2] sm:$0xe]
        %v6807 = vld [vmem:[#allocation2 + $0xc] sm:$0xe]
        %v6808 = vld [vmem:[#allocation2 + $0x18] sm:$0xe]
        %v6809 = vld [vmem:[#allocation2 + $0x24] sm:$0xe]
        %v6810 = vld [vmem:[#allocation2 + $0x30] sm:$0xe]
        %v6811 = vld [vmem:[#allocation2 + $0x3c] sm:$0xe]
        %v6812 = vld [vmem:[#allocation2 + $0x48] sm:$0xe]
        %v6813 = vld [vmem:[#allocation2 + $0x54] sm:$0xe]
        %v6814 = vld [vmem:[#allocation2 + $0x60] sm:$0xe]
        %v6815 = vld [vmem:[#allocation2 + $0x6c] sm:$0xe]
        %v6816 = vld [vmem:[#allocation2 + $0x78] sm:$0xe]
        %v6817 = vld [vmem:[#allocation2 + $0x84] sm:$0xe]
        %v6818 = vld [vmem:[#allocation2 + $0x90] sm:$0xe]
        %v6819 = vld [vmem:[#allocation2 + $0x9c] sm:$0xe]
        %v6820 = vld [vmem:[#allocation2 + $0xa8] sm:$0xe]
        %v6821 = vld [vmem:[#allocation2 + $0xb4] sm:$0xe]
        %v6854 = vrot.slane %v6806, 5
        %v6855 = vrot.slane %v6854, 4
        %v6856 = vrot.slane %v5765, 5
        %v6857 = vsel %vm1334, %v6855, %v6856
        %v6858 = vrot.slane %v6856, 4
        %v6859 = vrot.slane %v5812, 5
        %v6860 = vsel %vm1334, %v6858, %v6859
        %v6861 = vrot.slane %v6807, 5
        %v6862 = vrot.slane %v6861, 4
        %v6863 = vrot.slane %v5767, 5
        %v6864 = vsel %vm1334, %v6862, %v6863
        %v6865 = vrot.slane %v6863, 4
        %v6866 = vrot.slane %v5813, 5
        %v6867 = vsel %vm1334, %v6865, %v6866
        %v6868 = vrot.slane %v6808, 5
        %v6869 = vrot.slane %v6868, 4
        %v6870 = vrot.slane %v5769, 5
        %v6871 = vsel %vm1334, %v6869, %v6870
        %v6872 = vrot.slane %v6870, 4
        %v6873 = vrot.slane %v5814, 5
        %v6874 = vsel %vm1334, %v6872, %v6873
        %v6875 = vrot.slane %v6809, 5
        %v6876 = vrot.slane %v6875, 4
        %v6877 = vrot.slane %v5771, 5
        %v6878 = vsel %vm1334, %v6876, %v6877
        %v6879 = vrot.slane %v6877, 4
        %v6880 = vrot.slane %v5815, 5
        %v6881 = vsel %vm1334, %v6879, %v6880
        %v6882 = vrot.slane %v6810, 5
        %v6883 = vrot.slane %v6882, 4
        %v6884 = vrot.slane %v5773, 5
        %v6885 = vsel %vm1334, %v6883, %v6884
        %v6886 = vrot.slane %v6884, 4
        %v6887 = vrot.slane %v5816, 5
        %v6888 = vsel %vm1334, %v6886, %v6887
        %v6889 = vrot.slane %v6811, 5
        %v6890 = vrot.slane %v6889, 4
        %v6891 = vrot.slane %v5775, 5
        %v6892 = vsel %vm1334, %v6890, %v6891
        %v6893 = vrot.slane %v6891, 4
        %v6894 = vrot.slane %v5817, 5
        %v6895 = vsel %vm1334, %v6893, %v6894
        %v6896 = vrot.slane %v6812, 5
        %v6897 = vrot.slane %v6896, 4
        %v6898 = vrot.slane %v5777, 5
        %v6899 = vsel %vm1334, %v6897, %v6898
        %v6900 = vrot.slane %v6898, 4
        %v6901 = vrot.slane %v5818, 5
        %v6902 = vsel %vm1334, %v6900, %v6901
        %v6903 = vrot.slane %v6813, 5
        %v6904 = vrot.slane %v6903, 4
        %v6905 = vrot.slane %v5779, 5
        %v6906 = vsel %vm1334, %v6904, %v6905
        %v6907 = vrot.slane %v6905, 4
        %v6908 = vrot.slane %v5819, 5
        %v6909 = vsel %vm1334, %v6907, %v6908
        %v6910 = vrot.slane %v6814, 5
        %v6911 = vrot.slane %v6910, 4
        %v6912 = vrot.slane %v5781, 5
        %v6913 = vsel %vm1334, %v6911, %v6912
        %v6914 = vrot.slane %v6912, 4
        %v6915 = vrot.slane %v5820, 5
        %v6916 = vsel %vm1334, %v6914, %v6915
        %v6917 = vrot.slane %v6815, 5
        %v6918 = vrot.slane %v6917, 4
        %v6919 = vrot.slane %v5783, 5
        %v6920 = vsel %vm1334, %v6918, %v6919
        %v6921 = vrot.slane %v6919, 4
        %v6922 = vrot.slane %v5821, 5
        %v6923 = vsel %vm1334, %v6921, %v6922
        %v6924 = vrot.slane %v6816, 5
        %v6925 = vrot.slane %v6924, 4
        %v6926 = vrot.slane %v5785, 5
        %v6927 = vsel %vm1334, %v6925, %v6926
        %v6928 = vrot.slane %v6926, 4
        %v6929 = vrot.slane %v5822, 5
        %v6930 = vsel %vm1334, %v6928, %v6929
        %v6931 = vrot.slane %v6817, 5
        %v6932 = vrot.slane %v6931, 4
        %v6933 = vrot.slane %v5787, 5
        %v6934 = vsel %vm1334, %v6932, %v6933
        %v6935 = vrot.slane %v6933, 4
        %v6936 = vrot.slane %v5823, 5
        %v6937 = vsel %vm1334, %v6935, %v6936
        %v6938 = vrot.slane %v6818, 5
        %v6939 = vrot.slane %v6938, 4
        %v6940 = vrot.slane %v5789, 5
        %v6941 = vsel %vm1334, %v6939, %v6940
        %v6942 = vrot.slane %v6940, 4
        %v6943 = vrot.slane %v5824, 5
        %v6944 = vsel %vm1334, %v6942, %v6943
        %v6945 = vrot.slane %v6819, 5
        %v6946 = vrot.slane %v6945, 4
        %v6947 = vrot.slane %v5791, 5
        %v6948 = vsel %vm1334, %v6946, %v6947
        %v6949 = vrot.slane %v6947, 4
        %v6950 = vrot.slane %v5825, 5
        %v6951 = vsel %vm1334, %v6949, %v6950
        %v6952 = vrot.slane %v6820, 5
        %v6953 = vrot.slane %v6952, 4
        %v6954 = vrot.slane %v5793, 5
        %v6955 = vsel %vm1334, %v6953, %v6954
        %v6956 = vrot.slane %v6954, 4
        %v6957 = vrot.slane %v5826, 5
        %v6958 = vsel %vm1334, %v6956, %v6957
        %v6959 = vrot.slane %v6821, 5
        %v6960 = vrot.slane %v6959, 4
        %v6961 = vrot.slane %v5795, 5
        %v6962 = vsel %vm1334, %v6960, %v6961
        %v6963 = vrot.slane %v6961, 4
        %v6964 = vrot.slane %v5827, 5
        %v6965 = vsel %vm1334, %v6963, %v6964
        %v6966 = vld [vmem:[#allocation3 + $0x80] sm:$0xf]
        %v6967 = vld [vmem:[#allocation3 + $0x84] sm:$0xf]
        %v6968 = vld [vmem:[#allocation3 + $0x88] sm:$0xf]
        %v6969 = vld [vmem:[#allocation3 + $0x8c] sm:$0xf]
        %v6970 = vld [vmem:[#allocation3 + $0x90] sm:$0xf]
        %v6971 = vld [vmem:[#allocation3 + $0x94] sm:$0xf]
        %v6972 = vld [vmem:[#allocation3 + $0x98] sm:$0xf]
        %v6973 = vld [vmem:[#allocation3 + $0x9c] sm:$0xf]
        %v6974 = vld [vmem:[#allocation3 + $0xa0] sm:$0xf]
        %v6975 = vld [vmem:[#allocation3 + $0xa4] sm:$0xf]
        %v6976 = vld [vmem:[#allocation3 + $0xa8] sm:$0xf]
        %v6977 = vld [vmem:[#allocation3 + $0xac] sm:$0xf]
        %v6978 = vld [vmem:[#allocation3 + $0xb0] sm:$0xf]
        %v6979 = vld [vmem:[#allocation3 + $0xb4] sm:$0xf]
        %v6980 = vld [vmem:[#allocation3 + $0xb8] sm:$0xf]
        %v6981 = vld [vmem:[#allocation3 + $0xbc] sm:$0xf]
        %v6982 = vunpack.c.l.b16 %v6857
        %v6983 = vunpack.c.l.b16 %v6860
        %v6984 = vunpack.c.l.b16 %v6864
        %v6985 = vunpack.c.l.b16 %v6867
        %v6986 = vunpack.c.l.b16 %v6871
        %v6987 = vunpack.c.l.b16 %v6874
        %v6988 = vunpack.c.l.b16 %v6878
        %v6989 = vunpack.c.l.b16 %v6881
        %v6990 = vunpack.c.l.b16 %v6885
        %v6991 = vunpack.c.l.b16 %v6888
        %v6992 = vunpack.c.l.b16 %v6892
        %v6993 = vunpack.c.l.b16 %v6895
        %v6994 = vunpack.c.l.b16 %v6899
        %v6995 = vunpack.c.l.b16 %v6902
        %v6996 = vunpack.c.l.b16 %v6906
        %v6997 = vunpack.c.l.b16 %v6909
        %v6998 = vunpack.c.l.b16 %v6913
        %v6999 = vunpack.c.l.b16 %v6916
        %v7000 = vunpack.c.l.b16 %v6920
        %v7001 = vunpack.c.l.b16 %v6923
        %v7002 = vunpack.c.l.b16 %v6927
        %v7003 = vunpack.c.l.b16 %v6930
        %v7004 = vunpack.c.l.b16 %v6934
        %v7005 = vunpack.c.l.b16 %v6937
        %v7006 = vunpack.c.l.b16 %v6941
        %v7007 = vunpack.c.l.b16 %v6944
        %v7008 = vunpack.c.l.b16 %v6948
        %v7009 = vunpack.c.l.b16 %v6951
        %v7010 = vunpack.c.l.b16 %v6955
        %v7011 = vunpack.c.l.b16 %v6958
        %v7012 = vunpack.c.l.b16 %v6962
        %v7013 = vunpack.c.l.b16 %v6965
        %v7014 = vpack.c.b16 %v6983, %v6982
        %v7015 = vpack.c.b16 %v6985, %v6984
        %v7016 = vpack.c.b16 %v6987, %v6986
        %v7017 = vpack.c.b16 %v6989, %v6988
        %v7018 = vpack.c.b16 %v6991, %v6990
        %v7019 = vpack.c.b16 %v6993, %v6992
        %v7020 = vpack.c.b16 %v6995, %v6994
        %v7021 = vpack.c.b16 %v6997, %v6996
        %v7022 = vpack.c.b16 %v6999, %v6998
        %v7023 = vpack.c.b16 %v7001, %v7000
        %v7024 = vpack.c.b16 %v7003, %v7002
        %v7025 = vpack.c.b16 %v7005, %v7004
        %v7026 = vpack.c.b16 %v7007, %v7006
        %v7027 = vpack.c.b16 %v7009, %v7008
        %v7028 = vpack.c.b16 %v7011, %v7010
        %v7029 = vpack.c.b16 %v7013, %v7012
        %v7062 = vunpack.c.l.b16 %v6966
        %v7063 = vunpack.c.l.b16 %v6967
        %v7064 = vunpack.c.l.b16 %v6968
        %v7065 = vunpack.c.l.b16 %v6969
        %v7066 = vunpack.c.l.b16 %v6970
        %v7067 = vunpack.c.l.b16 %v6971
        %v7068 = vunpack.c.l.b16 %v6972
        %v7069 = vunpack.c.l.b16 %v6973
        %v7070 = vunpack.c.l.b16 %v6974
        %v7071 = vunpack.c.l.b16 %v6975
        %v7072 = vunpack.c.l.b16 %v6976
        %v7073 = vunpack.c.l.b16 %v6977
        %v7074 = vunpack.c.l.b16 %v6978
        %v7075 = vunpack.c.l.b16 %v6979
        %v7076 = vunpack.c.l.b16 %v6980
        %v7077 = vunpack.c.l.b16 %v6981
        %v7078 = vpack.c.b16 %v7063, %v7062
        %v7079 = vpack.c.b16 %v7065, %v7064
        %v7080 = vpack.c.b16 %v7067, %v7066
        %v7081 = vpack.c.b16 %v7069, %v7068
        %v7082 = vpack.c.b16 %v7071, %v7070
        %v7083 = vpack.c.b16 %v7073, %v7072
        %v7084 = vpack.c.b16 %v7075, %v7074
        %v7085 = vpack.c.b16 %v7077, %v7076
        %7094 = vmatprep.subr.bf16.mxu0 0
        %7095 = vmatpush1.bf16.msra.mxu0 %v7085
        %7096 = vmatprep.subr.bf16.mxu0 0
        %7097 = vmatpush1.bf16.msra.mxu0 %v7084
        %7098 = vmatprep.subr.bf16.mxu0 0
        %7099 = vmatpush1.bf16.msra.mxu0 %v7083
        %7100 = vmatprep.subr.bf16.mxu0 0
        %7101 = vmatpush1.bf16.msra.mxu0 %v7082
        %7102 = vmatprep.subr.bf16.mxu0 0
        %7103 = vmatpush1.bf16.msra.mxu0 %v7081
        %7104 = vmatprep.subr.bf16.mxu0 0
        %7105 = vmatpush1.bf16.msra.mxu0 %v7080
        %7106 = vmatprep.subr.bf16.mxu0 0
        %7107 = vmatpush1.bf16.msra.mxu0 %v7079
        %7108 = vmatprep.subr.bf16.mxu0 0
        %7109 = vmatpush1.bf16.msra.mxu0 %v7078
        %7110 = vmatprep.subr.bf16.mxu0 0
        %7111 = vmatpush2.bf16.msra.mxu0 0
        %7112 = vmatprep.subr.bf16.mxu0 0
        %7113 = vmatpush2.bf16.msra.mxu0 0
        %7114 = vmatprep.subr.bf16.mxu0 0
        %7115 = vmatpush2.bf16.msra.mxu0 0
        %7116 = vmatprep.subr.bf16.mxu0 0
        %7117 = vmatpush2.bf16.msra.mxu0 0
        %7118 = vmatprep.subr.bf16.mxu0 0
        %7119 = vmatpush2.bf16.msra.mxu0 0
        %7120 = vmatprep.subr.bf16.mxu0 0
        %7121 = vmatpush2.bf16.msra.mxu0 0
        %7122 = vmatprep.subr.bf16.mxu0 0
        %7123 = vmatpush2.bf16.msra.mxu0 0
        %7124 = vmatprep.subr.bf16.mxu0 0
        %7125 = vmatpush2.bf16.msra.mxu0 0
        %7126 = vmatprep.mubr.bf16.mxu0 0
        %7127 = vmatmul.mubr.bf16.gmra.mxu0 %v7014
        %v7128 = vpop.f32.mrf.mxu0
        %v7129 = vadd.f32 0.0, %v7128
        %v7130 = vpop.f32.mrf.mxu0
        %v7131 = vpop.f32.mrf.mxu0
        %v7132 = vadd.f32 0.0, %v7131
        %v7133 = vpop.f32.mrf.mxu0
        %7134 = vmatprep.mubr.bf16.mxu0 0
        %7135 = vmatmul.mubr.bf16.gmra.mxu0 %v7015
        %v7136 = vpop.f32.mrf.mxu0
        %v7137 = vadd.f32 0.0, %v7136
        %v7138 = vpop.f32.mrf.mxu0
        %v7139 = vpop.f32.mrf.mxu0
        %v7140 = vadd.f32 0.0, %v7139
        %v7141 = vpop.f32.mrf.mxu0
        %7142 = vmatprep.mubr.bf16.mxu0 0
        %7143 = vmatmul.mubr.bf16.gmra.mxu0 %v7016
        %v7144 = vpop.f32.mrf.mxu0
        %v7145 = vadd.f32 0.0, %v7144
        %v7146 = vpop.f32.mrf.mxu0
        %v7147 = vpop.f32.mrf.mxu0
        %v7148 = vadd.f32 0.0, %v7147
        %v7149 = vpop.f32.mrf.mxu0
        %7150 = vmatprep.mubr.bf16.mxu0 0
        %7151 = vmatmul.mubr.bf16.gmra.mxu0 %v7017
        %v7152 = vpop.f32.mrf.mxu0
        %v7153 = vadd.f32 0.0, %v7152
        %v7154 = vpop.f32.mrf.mxu0
        %v7155 = vpop.f32.mrf.mxu0
        %v7156 = vadd.f32 0.0, %v7155
        %v7157 = vpop.f32.mrf.mxu0
        %7158 = vmatprep.mubr.bf16.mxu0 0
        %7159 = vmatmul.mubr.bf16.gmra.mxu0 %v7018
        %v7160 = vpop.f32.mrf.mxu0
        %v7161 = vadd.f32 0.0, %v7160
        %v7162 = vpop.f32.mrf.mxu0
        %v7163 = vpop.f32.mrf.mxu0
        %v7164 = vadd.f32 0.0, %v7163
        %v7165 = vpop.f32.mrf.mxu0
        %7166 = vmatprep.mubr.bf16.mxu0 0
        %7167 = vmatmul.mubr.bf16.gmra.mxu0 %v7019
        %v7168 = vpop.f32.mrf.mxu0
        %v7169 = vadd.f32 0.0, %v7168
        %v7170 = vpop.f32.mrf.mxu0
        %v7171 = vpop.f32.mrf.mxu0
        %v7172 = vadd.f32 0.0, %v7171
        %v7173 = vpop.f32.mrf.mxu0
        %7174 = vmatprep.mubr.bf16.mxu0 0
        %7175 = vmatmul.mubr.bf16.gmra.mxu0 %v7020
        %v7176 = vpop.f32.mrf.mxu0
        %v7177 = vadd.f32 0.0, %v7176
        %v7178 = vpop.f32.mrf.mxu0
        %v7179 = vpop.f32.mrf.mxu0
        %v7180 = vadd.f32 0.0, %v7179
        %v7181 = vpop.f32.mrf.mxu0
        %7182 = vmatprep.mubr.bf16.mxu0 0
        %7183 = vmatmul.mubr.bf16.gmra.mxu0 %v7021
        %v7184 = vpop.f32.mrf.mxu0
        %v7185 = vadd.f32 0.0, %v7184
        %v7186 = vpop.f32.mrf.mxu0
        %v7187 = vpop.f32.mrf.mxu0
        %v7188 = vadd.f32 0.0, %v7187
        %v7189 = vpop.f32.mrf.mxu0
        %7190 = vmatprep.mubr.bf16.mxu0 0
        %7191 = vmatmul.mubr.bf16.gmra.mxu0 %v7022
        %v7192 = vpop.f32.mrf.mxu0
        %v7193 = vadd.f32 0.0, %v7192
        %v7194 = vpop.f32.mrf.mxu0
        %v7195 = vpop.f32.mrf.mxu0
        %v7196 = vadd.f32 0.0, %v7195
        %v7197 = vpop.f32.mrf.mxu0
        %7198 = vmatprep.mubr.bf16.mxu0 0
        %7199 = vmatmul.mubr.bf16.gmra.mxu0 %v7023
        %v7200 = vpop.f32.mrf.mxu0
        %v7201 = vadd.f32 0.0, %v7200
        %v7202 = vpop.f32.mrf.mxu0
        %v7203 = vpop.f32.mrf.mxu0
        %v7204 = vadd.f32 0.0, %v7203
        %v7205 = vpop.f32.mrf.mxu0
        %7206 = vmatprep.mubr.bf16.mxu0 0
        %7207 = vmatmul.mubr.bf16.gmra.mxu0 %v7024
        %v7208 = vpop.f32.mrf.mxu0
        %v7209 = vadd.f32 0.0, %v7208
        %v7210 = vpop.f32.mrf.mxu0
        %v7211 = vpop.f32.mrf.mxu0
        %v7212 = vadd.f32 0.0, %v7211
        %v7213 = vpop.f32.mrf.mxu0
        %7214 = vmatprep.mubr.bf16.mxu0 0
        %7215 = vmatmul.mubr.bf16.gmra.mxu0 %v7025
        %v7216 = vpop.f32.mrf.mxu0
        %v7217 = vadd.f32 0.0, %v7216
        %v7218 = vpop.f32.mrf.mxu0
        %v7219 = vpop.f32.mrf.mxu0
        %v7220 = vadd.f32 0.0, %v7219
        %v7221 = vpop.f32.mrf.mxu0
        %7222 = vmatprep.mubr.bf16.mxu0 0
        %7223 = vmatmul.mubr.bf16.gmra.mxu0 %v7026
        %v7224 = vpop.f32.mrf.mxu0
        %v7225 = vadd.f32 0.0, %v7224
        %v7226 = vpop.f32.mrf.mxu0
        %v7227 = vpop.f32.mrf.mxu0
        %v7228 = vadd.f32 0.0, %v7227
        %v7229 = vpop.f32.mrf.mxu0
        %7230 = vmatprep.mubr.bf16.mxu0 0
        %7231 = vmatmul.mubr.bf16.gmra.mxu0 %v7027
        %v7232 = vpop.f32.mrf.mxu0
        %v7233 = vadd.f32 0.0, %v7232
        %v7234 = vpop.f32.mrf.mxu0
        %v7235 = vpop.f32.mrf.mxu0
        %v7236 = vadd.f32 0.0, %v7235
        %v7237 = vpop.f32.mrf.mxu0
        %7238 = vmatprep.mubr.bf16.mxu0 0
        %7239 = vmatmul.mubr.bf16.gmra.mxu0 %v7028
        %v7240 = vpop.f32.mrf.mxu0
        %v7241 = vadd.f32 0.0, %v7240
        %v7242 = vpop.f32.mrf.mxu0
        %v7243 = vpop.f32.mrf.mxu0
        %v7244 = vadd.f32 0.0, %v7243
        %v7245 = vpop.f32.mrf.mxu0
        %7246 = vmatprep.mubr.bf16.mxu0 0
        %7247 = vmatmul.mubr.bf16.gmra.mxu0 %v7029
        %v7248 = vpop.f32.mrf.mxu0
        %v7249 = vadd.f32 0.0, %v7248
        %v7250 = vpop.f32.mrf.mxu0
        %v7251 = vpop.f32.mrf.mxu0
        %v7252 = vadd.f32 0.0, %v7251
        %v7253 = vpop.f32.mrf.mxu0
        %7254 = vdwg.mxu0
        %v7255 = vadd.f32 %v6680, %v7129
        %v7256 = vadd.f32 %v6683, %v7132
        %v7257 = vadd.f32 %v6688, %v7137
        %v7258 = vadd.f32 %v6691, %v7140
        %v7259 = vadd.f32 %v6696, %v7145
        %v7260 = vadd.f32 %v6699, %v7148
        %v7261 = vadd.f32 %v6704, %v7153
        %v7262 = vadd.f32 %v6707, %v7156
        %v7263 = vadd.f32 %v6712, %v7161
        %v7264 = vadd.f32 %v6715, %v7164
        %v7265 = vadd.f32 %v6720, %v7169
        %v7266 = vadd.f32 %v6723, %v7172
        %v7267 = vadd.f32 %v6728, %v7177
        %v7268 = vadd.f32 %v6731, %v7180
        %v7269 = vadd.f32 %v6736, %v7185
        %v7270 = vadd.f32 %v6739, %v7188
        %v7271 = vadd.f32 %v6744, %v7193
        %v7272 = vadd.f32 %v6747, %v7196
        %v7273 = vadd.f32 %v6752, %v7201
        %v7274 = vadd.f32 %v6755, %v7204
        %v7275 = vadd.f32 %v6760, %v7209
        %v7276 = vadd.f32 %v6763, %v7212
        %v7277 = vadd.f32 %v6768, %v7217
        %v7278 = vadd.f32 %v6771, %v7220
        %v7279 = vadd.f32 %v6776, %v7225
        %v7280 = vadd.f32 %v6779, %v7228
        %v7281 = vadd.f32 %v6784, %v7233
        %v7282 = vadd.f32 %v6787, %v7236
        %v7283 = vadd.f32 %v6792, %v7241
        %v7284 = vadd.f32 %v6795, %v7244
        %v7285 = vadd.f32 %v6800, %v7249
        %v7286 = vadd.f32 %v6803, %v7252
        %v7287 = vld [vmem:[%s5649] sm:$0xf]
        %v7288 = vld [vmem:[%s5649 + $0x4] sm:$0xf]
        %v7289 = vld [vmem:[%s5649 + $0xc] sm:$0xf]
        %v7290 = vld [vmem:[%s5649 + $0x10] sm:$0xf]
        %v7291 = vld [vmem:[%s5649 + $0x18] sm:$0xf]
        %v7292 = vld [vmem:[%s5649 + $0x1c] sm:$0xf]
        %v7293 = vld [vmem:[%s5649 + $0x24] sm:$0xf]
        %v7294 = vld [vmem:[%s5649 + $0x28] sm:$0xf]
        %v7295 = vld [vmem:[%s5649 + $0x30] sm:$0xf]
        %v7296 = vld [vmem:[%s5649 + $0x34] sm:$0xf]
        %v7297 = vld [vmem:[%s5649 + $0x3c] sm:$0xf]
        %v7298 = vld [vmem:[%s5649 + $0x40] sm:$0xf]
        %v7299 = vld [vmem:[%s5649 + $0x48] sm:$0xf]
        %v7300 = vld [vmem:[%s5649 + $0x4c] sm:$0xf]
        %v7301 = vld [vmem:[%s5649 + $0x54] sm:$0xf]
        %v7302 = vld [vmem:[%s5649 + $0x58] sm:$0xf]
        %v7303 = vld [vmem:[%s5649 + $0x60] sm:$0xf]
        %v7304 = vld [vmem:[%s5649 + $0x64] sm:$0xf]
        %v7305 = vld [vmem:[%s5649 + $0x6c] sm:$0xf]
        %v7306 = vld [vmem:[%s5649 + $0x70] sm:$0xf]
        %v7307 = vld [vmem:[%s5649 + $0x78] sm:$0xf]
        %v7308 = vld [vmem:[%s5649 + $0x7c] sm:$0xf]
        %v7309 = vld [vmem:[%s5649 + $0x84] sm:$0xf]
        %v7310 = vld [vmem:[%s5649 + $0x88] sm:$0xf]
        %v7311 = vld [vmem:[%s5649 + $0x90] sm:$0xf]
        %v7312 = vld [vmem:[%s5649 + $0x94] sm:$0xf]
        %v7313 = vld [vmem:[%s5649 + $0x9c] sm:$0xf]
        %v7314 = vld [vmem:[%s5649 + $0xa0] sm:$0xf]
        %v7315 = vld [vmem:[%s5649 + $0xa8] sm:$0xf]
        %v7316 = vld [vmem:[%s5649 + $0xac] sm:$0xf]
        %v7317 = vld [vmem:[%s5649 + $0xb4] sm:$0xf]
        %v7318 = vld [vmem:[%s5649 + $0xb8] sm:$0xf]
        %v7319 = vld [vmem:[#allocation3 + $0xc0] sm:$0xf]
        %v7320 = vld [vmem:[#allocation3 + $0xc4] sm:$0xf]
        %v7321 = vld [vmem:[#allocation3 + $0xc8] sm:$0xf]
        %v7322 = vld [vmem:[#allocation3 + $0xcc] sm:$0xf]
        %v7323 = vld [vmem:[#allocation3 + $0xd0] sm:$0xf]
        %v7324 = vld [vmem:[#allocation3 + $0xd4] sm:$0xf]
        %v7325 = vld [vmem:[#allocation3 + $0xd8] sm:$0xf]
        %v7326 = vld [vmem:[#allocation3 + $0xdc] sm:$0xf]
        %v7327 = vld [vmem:[#allocation3 + $0xe0] sm:$0xf]
        %v7328 = vld [vmem:[#allocation3 + $0xe4] sm:$0xf]
        %v7329 = vld [vmem:[#allocation3 + $0xe8] sm:$0xf]
        %v7330 = vld [vmem:[#allocation3 + $0xec] sm:$0xf]
        %v7331 = vld [vmem:[#allocation3 + $0xf0] sm:$0xf]
        %v7332 = vld [vmem:[#allocation3 + $0xf4] sm:$0xf]
        %v7333 = vld [vmem:[#allocation3 + $0xf8] sm:$0xf]
        %v7334 = vld [vmem:[#allocation3 + $0xfc] sm:$0xf]
        %v7367 = vunpack.c.l.b16 %v7287
        %v7368 = vunpack.c.l.b16 %v7288
        %v7369 = vunpack.c.l.b16 %v7289
        %v7370 = vunpack.c.l.b16 %v7290
        %v7371 = vunpack.c.l.b16 %v7291
        %v7372 = vunpack.c.l.b16 %v7292
        %v7373 = vunpack.c.l.b16 %v7293
        %v7374 = vunpack.c.l.b16 %v7294
        %v7375 = vunpack.c.l.b16 %v7295
        %v7376 = vunpack.c.l.b16 %v7296
        %v7377 = vunpack.c.l.b16 %v7297
        %v7378 = vunpack.c.l.b16 %v7298
        %v7379 = vunpack.c.l.b16 %v7299
        %v7380 = vunpack.c.l.b16 %v7300
        %v7381 = vunpack.c.l.b16 %v7301
        %v7382 = vunpack.c.l.b16 %v7302
        %v7383 = vunpack.c.l.b16 %v7303
        %v7384 = vunpack.c.l.b16 %v7304
        %v7385 = vunpack.c.l.b16 %v7305
        %v7386 = vunpack.c.l.b16 %v7306
        %v7387 = vunpack.c.l.b16 %v7307
        %v7388 = vunpack.c.l.b16 %v7308
        %v7389 = vunpack.c.l.b16 %v7309
        %v7390 = vunpack.c.l.b16 %v7310
        %v7391 = vunpack.c.l.b16 %v7311
        %v7392 = vunpack.c.l.b16 %v7312
        %v7393 = vunpack.c.l.b16 %v7313
        %v7394 = vunpack.c.l.b16 %v7314
        %v7395 = vunpack.c.l.b16 %v7315
        %v7396 = vunpack.c.l.b16 %v7316
        %v7397 = vunpack.c.l.b16 %v7317
        %v7398 = vunpack.c.l.b16 %v7318
        %v7399 = vpack.c.b16 %v7368, %v7367
        %v7400 = vpack.c.b16 %v7370, %v7369
        %v7401 = vpack.c.b16 %v7372, %v7371
        %v7402 = vpack.c.b16 %v7374, %v7373
        %v7403 = vpack.c.b16 %v7376, %v7375
        %v7404 = vpack.c.b16 %v7378, %v7377
        %v7405 = vpack.c.b16 %v7380, %v7379
        %v7406 = vpack.c.b16 %v7382, %v7381
        %v7407 = vpack.c.b16 %v7384, %v7383
        %v7408 = vpack.c.b16 %v7386, %v7385
        %v7409 = vpack.c.b16 %v7388, %v7387
        %v7410 = vpack.c.b16 %v7390, %v7389
        %v7411 = vpack.c.b16 %v7392, %v7391
        %v7412 = vpack.c.b16 %v7394, %v7393
        %v7413 = vpack.c.b16 %v7396, %v7395
        %v7414 = vpack.c.b16 %v7398, %v7397
        %v7447 = vunpack.c.l.b16 %v7319
        %v7448 = vunpack.c.l.b16 %v7320
        %v7449 = vunpack.c.l.b16 %v7321
        %v7450 = vunpack.c.l.b16 %v7322
        %v7451 = vunpack.c.l.b16 %v7323
        %v7452 = vunpack.c.l.b16 %v7324
        %v7453 = vunpack.c.l.b16 %v7325
        %v7454 = vunpack.c.l.b16 %v7326
        %v7455 = vunpack.c.l.b16 %v7327
        %v7456 = vunpack.c.l.b16 %v7328
        %v7457 = vunpack.c.l.b16 %v7329
        %v7458 = vunpack.c.l.b16 %v7330
        %v7459 = vunpack.c.l.b16 %v7331
        %v7460 = vunpack.c.l.b16 %v7332
        %v7461 = vunpack.c.l.b16 %v7333
        %v7462 = vunpack.c.l.b16 %v7334
        %v7463 = vpack.c.b16 %v7448, %v7447
        %v7464 = vpack.c.b16 %v7450, %v7449
        %v7465 = vpack.c.b16 %v7452, %v7451
        %v7466 = vpack.c.b16 %v7454, %v7453
        %v7467 = vpack.c.b16 %v7456, %v7455
        %v7468 = vpack.c.b16 %v7458, %v7457
        %v7469 = vpack.c.b16 %v7460, %v7459
        %v7470 = vpack.c.b16 %v7462, %v7461
        %7479 = vmatprep.subr.bf16.mxu0 0
        %7480 = vmatpush1.bf16.msra.mxu0 %v7470
        %7481 = vmatprep.subr.bf16.mxu0 0
        %7482 = vmatpush1.bf16.msra.mxu0 %v7469
        %7483 = vmatprep.subr.bf16.mxu0 0
        %7484 = vmatpush1.bf16.msra.mxu0 %v7468
        %7485 = vmatprep.subr.bf16.mxu0 0
        %7486 = vmatpush1.bf16.msra.mxu0 %v7467
        %7487 = vmatprep.subr.bf16.mxu0 0
        %7488 = vmatpush1.bf16.msra.mxu0 %v7466
        %7489 = vmatprep.subr.bf16.mxu0 0
        %7490 = vmatpush1.bf16.msra.mxu0 %v7465
        %7491 = vmatprep.subr.bf16.mxu0 0
        %7492 = vmatpush1.bf16.msra.mxu0 %v7464
        %7493 = vmatprep.subr.bf16.mxu0 0
        %7494 = vmatpush1.bf16.msra.mxu0 %v7463
        %7495 = vmatprep.subr.bf16.mxu0 0
        %7496 = vmatpush2.bf16.msra.mxu0 0
        %7497 = vmatprep.subr.bf16.mxu0 0
        %7498 = vmatpush2.bf16.msra.mxu0 0
        %7499 = vmatprep.subr.bf16.mxu0 0
        %7500 = vmatpush2.bf16.msra.mxu0 0
        %7501 = vmatprep.subr.bf16.mxu0 0
        %7502 = vmatpush2.bf16.msra.mxu0 0
        %7503 = vmatprep.subr.bf16.mxu0 0
        %7504 = vmatpush2.bf16.msra.mxu0 0
        %7505 = vmatprep.subr.bf16.mxu0 0
        %7506 = vmatpush2.bf16.msra.mxu0 0
        %7507 = vmatprep.subr.bf16.mxu0 0
        %7508 = vmatpush2.bf16.msra.mxu0 0
        %7509 = vmatprep.subr.bf16.mxu0 0
        %7510 = vmatpush2.bf16.msra.mxu0 0
        %7511 = vmatprep.mubr.bf16.mxu0 0
        %7512 = vmatmul.mubr.bf16.gmra.mxu0 %v7399
        %v7513 = vpop.f32.mrf.mxu0
        %v7514 = vadd.f32 0.0, %v7513
        %v7515 = vpop.f32.mrf.mxu0
        %v7516 = vpop.f32.mrf.mxu0
        %v7517 = vadd.f32 0.0, %v7516
        %v7518 = vpop.f32.mrf.mxu0
        %7519 = vmatprep.mubr.bf16.mxu0 0
        %7520 = vmatmul.mubr.bf16.gmra.mxu0 %v7400
        %v7521 = vpop.f32.mrf.mxu0
        %v7522 = vadd.f32 0.0, %v7521
        %v7523 = vpop.f32.mrf.mxu0
        %v7524 = vpop.f32.mrf.mxu0
        %v7525 = vadd.f32 0.0, %v7524
        %v7526 = vpop.f32.mrf.mxu0
        %7527 = vmatprep.mubr.bf16.mxu0 0
        %7528 = vmatmul.mubr.bf16.gmra.mxu0 %v7401
        %v7529 = vpop.f32.mrf.mxu0
        %v7530 = vadd.f32 0.0, %v7529
        %v7531 = vpop.f32.mrf.mxu0
        %v7532 = vpop.f32.mrf.mxu0
        %v7533 = vadd.f32 0.0, %v7532
        %v7534 = vpop.f32.mrf.mxu0
        %7535 = vmatprep.mubr.bf16.mxu0 0
        %7536 = vmatmul.mubr.bf16.gmra.mxu0 %v7402
        %v7537 = vpop.f32.mrf.mxu0
        %v7538 = vadd.f32 0.0, %v7537
        %v7539 = vpop.f32.mrf.mxu0
        %v7540 = vpop.f32.mrf.mxu0
        %v7541 = vadd.f32 0.0, %v7540
        %v7542 = vpop.f32.mrf.mxu0
        %7543 = vmatprep.mubr.bf16.mxu0 0
        %7544 = vmatmul.mubr.bf16.gmra.mxu0 %v7403
        %v7545 = vpop.f32.mrf.mxu0
        %v7546 = vadd.f32 0.0, %v7545
        %v7547 = vpop.f32.mrf.mxu0
        %v7548 = vpop.f32.mrf.mxu0
        %v7549 = vadd.f32 0.0, %v7548
        %v7550 = vpop.f32.mrf.mxu0
        %7551 = vmatprep.mubr.bf16.mxu0 0
        %7552 = vmatmul.mubr.bf16.gmra.mxu0 %v7404
        %v7553 = vpop.f32.mrf.mxu0
        %v7554 = vadd.f32 0.0, %v7553
        %v7555 = vpop.f32.mrf.mxu0
        %v7556 = vpop.f32.mrf.mxu0
        %v7557 = vadd.f32 0.0, %v7556
        %v7558 = vpop.f32.mrf.mxu0
        %7559 = vmatprep.mubr.bf16.mxu0 0
        %7560 = vmatmul.mubr.bf16.gmra.mxu0 %v7405
        %v7561 = vpop.f32.mrf.mxu0
        %v7562 = vadd.f32 0.0, %v7561
        %v7563 = vpop.f32.mrf.mxu0
        %v7564 = vpop.f32.mrf.mxu0
        %v7565 = vadd.f32 0.0, %v7564
        %v7566 = vpop.f32.mrf.mxu0
        %7567 = vmatprep.mubr.bf16.mxu0 0
        %7568 = vmatmul.mubr.bf16.gmra.mxu0 %v7406
        %v7569 = vpop.f32.mrf.mxu0
        %v7570 = vadd.f32 0.0, %v7569
        %v7571 = vpop.f32.mrf.mxu0
        %v7572 = vpop.f32.mrf.mxu0
        %v7573 = vadd.f32 0.0, %v7572
        %v7574 = vpop.f32.mrf.mxu0
        %7575 = vmatprep.mubr.bf16.mxu0 0
        %7576 = vmatmul.mubr.bf16.gmra.mxu0 %v7407
        %v7577 = vpop.f32.mrf.mxu0
        %v7578 = vadd.f32 0.0, %v7577
        %v7579 = vpop.f32.mrf.mxu0
        %v7580 = vpop.f32.mrf.mxu0
        %v7581 = vadd.f32 0.0, %v7580
        %v7582 = vpop.f32.mrf.mxu0
        %7583 = vmatprep.mubr.bf16.mxu0 0
        %7584 = vmatmul.mubr.bf16.gmra.mxu0 %v7408
        %v7585 = vpop.f32.mrf.mxu0
        %v7586 = vadd.f32 0.0, %v7585
        %v7587 = vpop.f32.mrf.mxu0
        %v7588 = vpop.f32.mrf.mxu0
        %v7589 = vadd.f32 0.0, %v7588
        %v7590 = vpop.f32.mrf.mxu0
        %7591 = vmatprep.mubr.bf16.mxu0 0
        %7592 = vmatmul.mubr.bf16.gmra.mxu0 %v7409
        %v7593 = vpop.f32.mrf.mxu0
        %v7594 = vadd.f32 0.0, %v7593
        %v7595 = vpop.f32.mrf.mxu0
        %v7596 = vpop.f32.mrf.mxu0
        %v7597 = vadd.f32 0.0, %v7596
        %v7598 = vpop.f32.mrf.mxu0
        %7599 = vmatprep.mubr.bf16.mxu0 0
        %7600 = vmatmul.mubr.bf16.gmra.mxu0 %v7410
        %v7601 = vpop.f32.mrf.mxu0
        %v7602 = vadd.f32 0.0, %v7601
        %v7603 = vpop.f32.mrf.mxu0
        %v7604 = vpop.f32.mrf.mxu0
        %v7605 = vadd.f32 0.0, %v7604
        %v7606 = vpop.f32.mrf.mxu0
        %7607 = vmatprep.mubr.bf16.mxu0 0
        %7608 = vmatmul.mubr.bf16.gmra.mxu0 %v7411
        %v7609 = vpop.f32.mrf.mxu0
        %v7610 = vadd.f32 0.0, %v7609
        %v7611 = vpop.f32.mrf.mxu0
        %v7612 = vpop.f32.mrf.mxu0
        %v7613 = vadd.f32 0.0, %v7612
        %v7614 = vpop.f32.mrf.mxu0
        %7615 = vmatprep.mubr.bf16.mxu0 0
        %7616 = vmatmul.mubr.bf16.gmra.mxu0 %v7412
        %v7617 = vpop.f32.mrf.mxu0
        %v7618 = vadd.f32 0.0, %v7617
        %v7619 = vpop.f32.mrf.mxu0
        %v7620 = vpop.f32.mrf.mxu0
        %v7621 = vadd.f32 0.0, %v7620
        %v7622 = vpop.f32.mrf.mxu0
        %7623 = vmatprep.mubr.bf16.mxu0 0
        %7624 = vmatmul.mubr.bf16.gmra.mxu0 %v7413
        %v7625 = vpop.f32.mrf.mxu0
        %v7626 = vadd.f32 0.0, %v7625
        %v7627 = vpop.f32.mrf.mxu0
        %v7628 = vpop.f32.mrf.mxu0
        %v7629 = vadd.f32 0.0, %v7628
        %v7630 = vpop.f32.mrf.mxu0
        %7631 = vmatprep.mubr.bf16.mxu0 0
        %7632 = vmatmul.mubr.bf16.gmra.mxu0 %v7414
        %v7633 = vpop.f32.mrf.mxu0
        %v7634 = vadd.f32 0.0, %v7633
        %v7635 = vpop.f32.mrf.mxu0
        %v7636 = vpop.f32.mrf.mxu0
        %v7637 = vadd.f32 0.0, %v7636
        %v7638 = vpop.f32.mrf.mxu0
        %7639 = vdwg.mxu0
        %v7640 = vadd.f32 %v7255, %v7514
        %v7641 = vadd.f32 %v7256, %v7517
        %v7642 = vadd.f32 %v7257, %v7522
        %v7643 = vadd.f32 %v7258, %v7525
        %v7644 = vadd.f32 %v7259, %v7530
        %v7645 = vadd.f32 %v7260, %v7533
        %v7646 = vadd.f32 %v7261, %v7538
        %v7647 = vadd.f32 %v7262, %v7541
        %v7648 = vadd.f32 %v7263, %v7546
        %v7649 = vadd.f32 %v7264, %v7549
        %v7650 = vadd.f32 %v7265, %v7554
        %v7651 = vadd.f32 %v7266, %v7557
        %v7652 = vadd.f32 %v7267, %v7562
        %v7653 = vadd.f32 %v7268, %v7565
        %v7654 = vadd.f32 %v7269, %v7570
        %v7655 = vadd.f32 %v7270, %v7573
        %v7656 = vadd.f32 %v7271, %v7578
        %v7657 = vadd.f32 %v7272, %v7581
        %v7658 = vadd.f32 %v7273, %v7586
        %v7659 = vadd.f32 %v7274, %v7589
        %v7660 = vadd.f32 %v7275, %v7594
        %v7661 = vadd.f32 %v7276, %v7597
        %v7662 = vadd.f32 %v7277, %v7602
        %v7663 = vadd.f32 %v7278, %v7605
        %v7664 = vadd.f32 %v7279, %v7610
        %v7665 = vadd.f32 %v7280, %v7613
        %v7666 = vadd.f32 %v7281, %v7618
        %v7667 = vadd.f32 %v7282, %v7621
        %v7668 = vadd.f32 %v7283, %v7626
        %v7669 = vadd.f32 %v7284, %v7629
        %v7670 = vadd.f32 %v7285, %v7634
        %v7671 = vadd.f32 %v7286, %v7637
        %v7672 = vld [vmem:[%s5649] sm:$0xf]
        %v7673 = vld [vmem:[%s5649 + $0x4] sm:$0xf]
        %v7674 = vld [vmem:[%s5649 + $0x8] sm:$0x1]
        %v7675 = vld [vmem:[%s5649 + $0xc] sm:$0xf]
        %v7676 = vld [vmem:[%s5649 + $0x10] sm:$0xf]
        %v7677 = vld [vmem:[%s5649 + $0x14] sm:$0x1]
        %v7678 = vld [vmem:[%s5649 + $0x18] sm:$0xf]
        %v7679 = vld [vmem:[%s5649 + $0x1c] sm:$0xf]
        %v7680 = vld [vmem:[%s5649 + $0x20] sm:$0x1]
        %v7681 = vld [vmem:[%s5649 + $0x24] sm:$0xf]
        %v7682 = vld [vmem:[%s5649 + $0x28] sm:$0xf]
        %v7683 = vld [vmem:[%s5649 + $0x2c] sm:$0x1]
        %v7684 = vld [vmem:[%s5649 + $0x30] sm:$0xf]
        %v7685 = vld [vmem:[%s5649 + $0x34] sm:$0xf]
        %v7686 = vld [vmem:[%s5649 + $0x38] sm:$0x1]
        %v7687 = vld [vmem:[%s5649 + $0x3c] sm:$0xf]
        %v7688 = vld [vmem:[%s5649 + $0x40] sm:$0xf]
        %v7689 = vld [vmem:[%s5649 + $0x44] sm:$0x1]
        %v7690 = vld [vmem:[%s5649 + $0x48] sm:$0xf]
        %v7691 = vld [vmem:[%s5649 + $0x4c] sm:$0xf]
        %v7692 = vld [vmem:[%s5649 + $0x50] sm:$0x1]
        %v7693 = vld [vmem:[%s5649 + $0x54] sm:$0xf]
        %v7694 = vld [vmem:[%s5649 + $0x58] sm:$0xf]
        %v7695 = vld [vmem:[%s5649 + $0x5c] sm:$0x1]
        %v7696 = vld [vmem:[%s5649 + $0x60] sm:$0xf]
        %v7697 = vld [vmem:[%s5649 + $0x64] sm:$0xf]
        %v7698 = vld [vmem:[%s5649 + $0x68] sm:$0x1]
        %v7699 = vld [vmem:[%s5649 + $0x6c] sm:$0xf]
        %v7700 = vld [vmem:[%s5649 + $0x70] sm:$0xf]
        %v7701 = vld [vmem:[%s5649 + $0x74] sm:$0x1]
        %v7702 = vld [vmem:[%s5649 + $0x78] sm:$0xf]
        %v7703 = vld [vmem:[%s5649 + $0x7c] sm:$0xf]
        %v7704 = vld [vmem:[%s5649 + $0x80] sm:$0x1]
        %v7705 = vld [vmem:[%s5649 + $0x84] sm:$0xf]
        %v7706 = vld [vmem:[%s5649 + $0x88] sm:$0xf]
        %v7707 = vld [vmem:[%s5649 + $0x8c] sm:$0x1]
        %v7708 = vld [vmem:[%s5649 + $0x90] sm:$0xf]
        %v7709 = vld [vmem:[%s5649 + $0x94] sm:$0xf]
        %v7710 = vld [vmem:[%s5649 + $0x98] sm:$0x1]
        %v7711 = vld [vmem:[%s5649 + $0x9c] sm:$0xf]
        %v7712 = vld [vmem:[%s5649 + $0xa0] sm:$0xf]
        %v7713 = vld [vmem:[%s5649 + $0xa4] sm:$0x1]
        %v7714 = vld [vmem:[%s5649 + $0xa8] sm:$0xf]
        %v7715 = vld [vmem:[%s5649 + $0xac] sm:$0xf]
        %v7716 = vld [vmem:[%s5649 + $0xb0] sm:$0x1]
        %v7717 = vld [vmem:[%s5649 + $0xb4] sm:$0xf]
        %v7718 = vld [vmem:[%s5649 + $0xb8] sm:$0xf]
        %v7719 = vld [vmem:[%s5649 + $0xbc] sm:$0x1]
        %v7721 = vshrl.u32 %v7672, 16
        %v7723 = vrot.slane %v7721, 4
        %v7724 = vshll.u32 %v7672, 16
        %v7726 = vrot.slane %v7724, 5
        %v7727 = vor.u32 %v7723, %v7726
        %v7728 = vrot.slane %v7727, 4
        %v7730 = vshll.u32 %v7673, 16
        %v7732 = vrot.slane %v7730, 5
        %v7733 = vsel %vm305, %v7728, %v7732
        %v7734 = vshrl.u32 %v7673, 16
        %v7736 = vrot.slane %v7734, 4
        %v7737 = vor.u32 %v7736, %v7732
        %v7738 = vrot.slane %v7737, 4
        %v7740 = vshll.u32 %v7674, 16
        %v7742 = vrot.slane %v7740, 5
        %v7743 = vsel %vm305, %v7738, %v7742
        %v7745 = vshrl.u32 %v7675, 16
        %v7747 = vrot.slane %v7745, 4
        %v7748 = vshll.u32 %v7675, 16
        %v7750 = vrot.slane %v7748, 5
        %v7751 = vor.u32 %v7747, %v7750
        %v7752 = vrot.slane %v7751, 4
        %v7754 = vshll.u32 %v7676, 16
        %v7756 = vrot.slane %v7754, 5
        %v7757 = vsel %vm305, %v7752, %v7756
        %v7758 = vshrl.u32 %v7676, 16
        %v7760 = vrot.slane %v7758, 4
        %v7761 = vor.u32 %v7760, %v7756
        %v7762 = vrot.slane %v7761, 4
        %v7764 = vshll.u32 %v7677, 16
        %v7766 = vrot.slane %v7764, 5
        %v7767 = vsel %vm305, %v7762, %v7766
        %v7769 = vshrl.u32 %v7678, 16
        %v7771 = vrot.slane %v7769, 4
        %v7772 = vshll.u32 %v7678, 16
        %v7774 = vrot.slane %v7772, 5
        %v7775 = vor.u32 %v7771, %v7774
        %v7776 = vrot.slane %v7775, 4
        %v7778 = vshll.u32 %v7679, 16
        %v7780 = vrot.slane %v7778, 5
        %v7781 = vsel %vm305, %v7776, %v7780
        %v7782 = vshrl.u32 %v7679, 16
        %v7784 = vrot.slane %v7782, 4
        %v7785 = vor.u32 %v7784, %v7780
        %v7786 = vrot.slane %v7785, 4
        %v7788 = vshll.u32 %v7680, 16
        %v7790 = vrot.slane %v7788, 5
        %v7791 = vsel %vm305, %v7786, %v7790
        %v7793 = vshrl.u32 %v7681, 16
        %v7795 = vrot.slane %v7793, 4
        %v7796 = vshll.u32 %v7681, 16
        %v7798 = vrot.slane %v7796, 5
        %v7799 = vor.u32 %v7795, %v7798
        %v7800 = vrot.slane %v7799, 4
        %v7802 = vshll.u32 %v7682, 16
        %v7804 = vrot.slane %v7802, 5
        %v7805 = vsel %vm305, %v7800, %v7804
        %v7806 = vshrl.u32 %v7682, 16
        %v7808 = vrot.slane %v7806, 4
        %v7809 = vor.u32 %v7808, %v7804
        %v7810 = vrot.slane %v7809, 4
        %v7812 = vshll.u32 %v7683, 16
        %v7814 = vrot.slane %v7812, 5
        %v7815 = vsel %vm305, %v7810, %v7814
        %v7817 = vshrl.u32 %v7684, 16
        %v7819 = vrot.slane %v7817, 4
        %v7820 = vshll.u32 %v7684, 16
        %v7822 = vrot.slane %v7820, 5
        %v7823 = vor.u32 %v7819, %v7822
        %v7824 = vrot.slane %v7823, 4
        %v7826 = vshll.u32 %v7685, 16
        %v7828 = vrot.slane %v7826, 5
        %v7829 = vsel %vm305, %v7824, %v7828
        %v7830 = vshrl.u32 %v7685, 16
        %v7832 = vrot.slane %v7830, 4
        %v7833 = vor.u32 %v7832, %v7828
        %v7834 = vrot.slane %v7833, 4
        %v7836 = vshll.u32 %v7686, 16
        %v7838 = vrot.slane %v7836, 5
        %v7839 = vsel %vm305, %v7834, %v7838
        %v7841 = vshrl.u32 %v7687, 16
        %v7843 = vrot.slane %v7841, 4
        %v7844 = vshll.u32 %v7687, 16
        %v7846 = vrot.slane %v7844, 5
        %v7847 = vor.u32 %v7843, %v7846
        %v7848 = vrot.slane %v7847, 4
        %v7850 = vshll.u32 %v7688, 16
        %v7852 = vrot.slane %v7850, 5
        %v7853 = vsel %vm305, %v7848, %v7852
        %v7854 = vshrl.u32 %v7688, 16
        %v7856 = vrot.slane %v7854, 4
        %v7857 = vor.u32 %v7856, %v7852
        %v7858 = vrot.slane %v7857, 4
        %v7860 = vshll.u32 %v7689, 16
        %v7862 = vrot.slane %v7860, 5
        %v7863 = vsel %vm305, %v7858, %v7862
        %v7865 = vshrl.u32 %v7690, 16
        %v7867 = vrot.slane %v7865, 4
        %v7868 = vshll.u32 %v7690, 16
        %v7870 = vrot.slane %v7868, 5
        %v7871 = vor.u32 %v7867, %v7870
        %v7872 = vrot.slane %v7871, 4
        %v7874 = vshll.u32 %v7691, 16
        %v7876 = vrot.slane %v7874, 5
        %v7877 = vsel %vm305, %v7872, %v7876
        %v7878 = vshrl.u32 %v7691, 16
        %v7880 = vrot.slane %v7878, 4
        %v7881 = vor.u32 %v7880, %v7876
        %v7882 = vrot.slane %v7881, 4
        %v7884 = vshll.u32 %v7692, 16
        %v7886 = vrot.slane %v7884, 5
        %v7887 = vsel %vm305, %v7882, %v7886
        %v7889 = vshrl.u32 %v7693, 16
        %v7891 = vrot.slane %v7889, 4
        %v7892 = vshll.u32 %v7693, 16
        %v7894 = vrot.slane %v7892, 5
        %v7895 = vor.u32 %v7891, %v7894
        %v7896 = vrot.slane %v7895, 4
        %v7898 = vshll.u32 %v7694, 16
        %v7900 = vrot.slane %v7898, 5
        %v7901 = vsel %vm305, %v7896, %v7900
        %v7902 = vshrl.u32 %v7694, 16
        %v7904 = vrot.slane %v7902, 4
        %v7905 = vor.u32 %v7904, %v7900
        %v7906 = vrot.slane %v7905, 4
        %v7908 = vshll.u32 %v7695, 16
        %v7910 = vrot.slane %v7908, 5
        %v7911 = vsel %vm305, %v7906, %v7910
        %v7913 = vshrl.u32 %v7696, 16
        %v7915 = vrot.slane %v7913, 4
        %v7916 = vshll.u32 %v7696, 16
        %v7918 = vrot.slane %v7916, 5
        %v7919 = vor.u32 %v7915, %v7918
        %v7920 = vrot.slane %v7919, 4
        %v7922 = vshll.u32 %v7697, 16
        %v7924 = vrot.slane %v7922, 5
        %v7925 = vsel %vm305, %v7920, %v7924
        %v7926 = vshrl.u32 %v7697, 16
        %v7928 = vrot.slane %v7926, 4
        %v7929 = vor.u32 %v7928, %v7924
        %v7930 = vrot.slane %v7929, 4
        %v7932 = vshll.u32 %v7698, 16
        %v7934 = vrot.slane %v7932, 5
        %v7935 = vsel %vm305, %v7930, %v7934
        %v7937 = vshrl.u32 %v7699, 16
        %v7939 = vrot.slane %v7937, 4
        %v7940 = vshll.u32 %v7699, 16
        %v7942 = vrot.slane %v7940, 5
        %v7943 = vor.u32 %v7939, %v7942
        %v7944 = vrot.slane %v7943, 4
        %v7946 = vshll.u32 %v7700, 16
        %v7948 = vrot.slane %v7946, 5
        %v7949 = vsel %vm305, %v7944, %v7948
        %v7950 = vshrl.u32 %v7700, 16
        %v7952 = vrot.slane %v7950, 4
        %v7953 = vor.u32 %v7952, %v7948
        %v7954 = vrot.slane %v7953, 4
        %v7956 = vshll.u32 %v7701, 16
        %v7958 = vrot.slane %v7956, 5
        %v7959 = vsel %vm305, %v7954, %v7958
        %v7961 = vshrl.u32 %v7702, 16
        %v7963 = vrot.slane %v7961, 4
        %v7964 = vshll.u32 %v7702, 16
        %v7966 = vrot.slane %v7964, 5
        %v7967 = vor.u32 %v7963, %v7966
        %v7968 = vrot.slane %v7967, 4
        %v7970 = vshll.u32 %v7703, 16
        %v7972 = vrot.slane %v7970, 5
        %v7973 = vsel %vm305, %v7968, %v7972
        %v7974 = vshrl.u32 %v7703, 16
        %v7976 = vrot.slane %v7974, 4
        %v7977 = vor.u32 %v7976, %v7972
        %v7978 = vrot.slane %v7977, 4
        %v7980 = vshll.u32 %v7704, 16
        %v7982 = vrot.slane %v7980, 5
        %v7983 = vsel %vm305, %v7978, %v7982
        %v7985 = vshrl.u32 %v7705, 16
        %v7987 = vrot.slane %v7985, 4
        %v7988 = vshll.u32 %v7705, 16
        %v7990 = vrot.slane %v7988, 5
        %v7991 = vor.u32 %v7987, %v7990
        %v7992 = vrot.slane %v7991, 4
        %v7994 = vshll.u32 %v7706, 16
        %v7996 = vrot.slane %v7994, 5
        %v7997 = vsel %vm305, %v7992, %v7996
        %v7998 = vshrl.u32 %v7706, 16
        %v8000 = vrot.slane %v7998, 4
        %v8001 = vor.u32 %v8000, %v7996
        %v8002 = vrot.slane %v8001, 4
        %v8004 = vshll.u32 %v7707, 16
        %v8006 = vrot.slane %v8004, 5
        %v8007 = vsel %vm305, %v8002, %v8006
        %v8009 = vshrl.u32 %v7708, 16
        %v8011 = vrot.slane %v8009, 4
        %v8012 = vshll.u32 %v7708, 16
        %v8014 = vrot.slane %v8012, 5
        %v8015 = vor.u32 %v8011, %v8014
        %v8016 = vrot.slane %v8015, 4
        %v8018 = vshll.u32 %v7709, 16
        %v8020 = vrot.slane %v8018, 5
        %v8021 = vsel %vm305, %v8016, %v8020
        %v8022 = vshrl.u32 %v7709, 16
        %v8024 = vrot.slane %v8022, 4
        %v8025 = vor.u32 %v8024, %v8020
        %v8026 = vrot.slane %v8025, 4
        %v8028 = vshll.u32 %v7710, 16
        %v8030 = vrot.slane %v8028, 5
        %v8031 = vsel %vm305, %v8026, %v8030
        %v8033 = vshrl.u32 %v7711, 16
        %v8035 = vrot.slane %v8033, 4
        %v8036 = vshll.u32 %v7711, 16
        %v8038 = vrot.slane %v8036, 5
        %v8039 = vor.u32 %v8035, %v8038
        %v8040 = vrot.slane %v8039, 4
        %v8042 = vshll.u32 %v7712, 16
        %v8044 = vrot.slane %v8042, 5
        %v8045 = vsel %vm305, %v8040, %v8044
        %v8046 = vshrl.u32 %v7712, 16
        %v8048 = vrot.slane %v8046, 4
        %v8049 = vor.u32 %v8048, %v8044
        %v8050 = vrot.slane %v8049, 4
        %v8052 = vshll.u32 %v7713, 16
        %v8054 = vrot.slane %v8052, 5
        %v8055 = vsel %vm305, %v8050, %v8054
        %v8057 = vshrl.u32 %v7714, 16
        %v8059 = vrot.slane %v8057, 4
        %v8060 = vshll.u32 %v7714, 16
        %v8062 = vrot.slane %v8060, 5
        %v8063 = vor.u32 %v8059, %v8062
        %v8064 = vrot.slane %v8063, 4
        %v8066 = vshll.u32 %v7715, 16
        %v8068 = vrot.slane %v8066, 5
        %v8069 = vsel %vm305, %v8064, %v8068
        %v8070 = vshrl.u32 %v7715, 16
        %v8072 = vrot.slane %v8070, 4
        %v8073 = vor.u32 %v8072, %v8068
        %v8074 = vrot.slane %v8073, 4
        %v8076 = vshll.u32 %v7716, 16
        %v8078 = vrot.slane %v8076, 5
        %v8079 = vsel %vm305, %v8074, %v8078
        %v8081 = vshrl.u32 %v7717, 16
        %v8083 = vrot.slane %v8081, 4
        %v8084 = vshll.u32 %v7717, 16
        %v8086 = vrot.slane %v8084, 5
        %v8087 = vor.u32 %v8083, %v8086
        %v8088 = vrot.slane %v8087, 4
        %v8090 = vshll.u32 %v7718, 16
        %v8092 = vrot.slane %v8090, 5
        %v8093 = vsel %vm305, %v8088, %v8092
        %v8094 = vshrl.u32 %v7718, 16
        %v8096 = vrot.slane %v8094, 4
        %v8097 = vor.u32 %v8096, %v8092
        %v8098 = vrot.slane %v8097, 4
        %v8100 = vshll.u32 %v7719, 16
        %v8102 = vrot.slane %v8100, 5
        %v8103 = vsel %vm305, %v8098, %v8102
        %v8104 = vld [vmem:[#allocation3 + $0x100] sm:$0xf]
        %v8105 = vld [vmem:[#allocation3 + $0x104] sm:$0xf]
        %v8106 = vld [vmem:[#allocation3 + $0x108] sm:$0xf]
        %v8107 = vld [vmem:[#allocation3 + $0x10c] sm:$0xf]
        %v8108 = vld [vmem:[#allocation3 + $0x110] sm:$0xf]
        %v8109 = vld [vmem:[#allocation3 + $0x114] sm:$0xf]
        %v8110 = vld [vmem:[#allocation3 + $0x118] sm:$0xf]
        %v8111 = vld [vmem:[#allocation3 + $0x11c] sm:$0xf]
        %v8112 = vld [vmem:[#allocation3 + $0x120] sm:$0xf]
        %v8113 = vld [vmem:[#allocation3 + $0x124] sm:$0xf]
        %v8114 = vld [vmem:[#allocation3 + $0x128] sm:$0xf]
        %v8115 = vld [vmem:[#allocation3 + $0x12c] sm:$0xf]
        %v8116 = vld [vmem:[#allocation3 + $0x130] sm:$0xf]
        %v8117 = vld [vmem:[#allocation3 + $0x134] sm:$0xf]
        %v8118 = vld [vmem:[#allocation3 + $0x138] sm:$0xf]
        %v8119 = vld [vmem:[#allocation3 + $0x13c] sm:$0xf]
        %v8120 = vunpack.c.l.b16 %v7733
        %v8121 = vunpack.c.l.b16 %v7743
        %v8122 = vunpack.c.l.b16 %v7757
        %v8123 = vunpack.c.l.b16 %v7767
        %v8124 = vunpack.c.l.b16 %v7781
        %v8125 = vunpack.c.l.b16 %v7791
        %v8126 = vunpack.c.l.b16 %v7805
        %v8127 = vunpack.c.l.b16 %v7815
        %v8128 = vunpack.c.l.b16 %v7829
        %v8129 = vunpack.c.l.b16 %v7839
        %v8130 = vunpack.c.l.b16 %v7853
        %v8131 = vunpack.c.l.b16 %v7863
        %v8132 = vunpack.c.l.b16 %v7877
        %v8133 = vunpack.c.l.b16 %v7887
        %v8134 = vunpack.c.l.b16 %v7901
        %v8135 = vunpack.c.l.b16 %v7911
        %v8136 = vunpack.c.l.b16 %v7925
        %v8137 = vunpack.c.l.b16 %v7935
        %v8138 = vunpack.c.l.b16 %v7949
        %v8139 = vunpack.c.l.b16 %v7959
        %v8140 = vunpack.c.l.b16 %v7973
        %v8141 = vunpack.c.l.b16 %v7983
        %v8142 = vunpack.c.l.b16 %v7997
        %v8143 = vunpack.c.l.b16 %v8007
        %v8144 = vunpack.c.l.b16 %v8021
        %v8145 = vunpack.c.l.b16 %v8031
        %v8146 = vunpack.c.l.b16 %v8045
        %v8147 = vunpack.c.l.b16 %v8055
        %v8148 = vunpack.c.l.b16 %v8069
        %v8149 = vunpack.c.l.b16 %v8079
        %v8150 = vunpack.c.l.b16 %v8093
        %v8151 = vunpack.c.l.b16 %v8103
        %v8152 = vpack.c.b16 %v8121, %v8120
        %v8153 = vpack.c.b16 %v8123, %v8122
        %v8154 = vpack.c.b16 %v8125, %v8124
        %v8155 = vpack.c.b16 %v8127, %v8126
        %v8156 = vpack.c.b16 %v8129, %v8128
        %v8157 = vpack.c.b16 %v8131, %v8130
        %v8158 = vpack.c.b16 %v8133, %v8132
        %v8159 = vpack.c.b16 %v8135, %v8134
        %v8160 = vpack.c.b16 %v8137, %v8136
        %v8161 = vpack.c.b16 %v8139, %v8138
        %v8162 = vpack.c.b16 %v8141, %v8140
        %v8163 = vpack.c.b16 %v8143, %v8142
        %v8164 = vpack.c.b16 %v8145, %v8144
        %v8165 = vpack.c.b16 %v8147, %v8146
        %v8166 = vpack.c.b16 %v8149, %v8148
        %v8167 = vpack.c.b16 %v8151, %v8150
        %v8200 = vunpack.c.l.b16 %v8104
        %v8201 = vunpack.c.l.b16 %v8105
        %v8202 = vunpack.c.l.b16 %v8106
        %v8203 = vunpack.c.l.b16 %v8107
        %v8204 = vunpack.c.l.b16 %v8108
        %v8205 = vunpack.c.l.b16 %v8109
        %v8206 = vunpack.c.l.b16 %v8110
        %v8207 = vunpack.c.l.b16 %v8111
        %v8208 = vunpack.c.l.b16 %v8112
        %v8209 = vunpack.c.l.b16 %v8113
        %v8210 = vunpack.c.l.b16 %v8114
        %v8211 = vunpack.c.l.b16 %v8115
        %v8212 = vunpack.c.l.b16 %v8116
        %v8213 = vunpack.c.l.b16 %v8117
        %v8214 = vunpack.c.l.b16 %v8118
        %v8215 = vunpack.c.l.b16 %v8119
        %v8216 = vpack.c.b16 %v8201, %v8200
        %v8217 = vpack.c.b16 %v8203, %v8202
        %v8218 = vpack.c.b16 %v8205, %v8204
        %v8219 = vpack.c.b16 %v8207, %v8206
        %v8220 = vpack.c.b16 %v8209, %v8208
        %v8221 = vpack.c.b16 %v8211, %v8210
        %v8222 = vpack.c.b16 %v8213, %v8212
        %v8223 = vpack.c.b16 %v8215, %v8214
        %8232 = vmatprep.subr.bf16.mxu0 0
        %8233 = vmatpush1.bf16.msra.mxu0 %v8223
        %8234 = vmatprep.subr.bf16.mxu0 0
        %8235 = vmatpush1.bf16.msra.mxu0 %v8222
        %8236 = vmatprep.subr.bf16.mxu0 0
        %8237 = vmatpush1.bf16.msra.mxu0 %v8221
        %8238 = vmatprep.subr.bf16.mxu0 0
        %8239 = vmatpush1.bf16.msra.mxu0 %v8220
        %8240 = vmatprep.subr.bf16.mxu0 0
        %8241 = vmatpush1.bf16.msra.mxu0 %v8219
        %8242 = vmatprep.subr.bf16.mxu0 0
        %8243 = vmatpush1.bf16.msra.mxu0 %v8218
        %8244 = vmatprep.subr.bf16.mxu0 0
        %8245 = vmatpush1.bf16.msra.mxu0 %v8217
        %8246 = vmatprep.subr.bf16.mxu0 0
        %8247 = vmatpush1.bf16.msra.mxu0 %v8216
        %8248 = vmatprep.subr.bf16.mxu0 0
        %8249 = vmatpush2.bf16.msra.mxu0 0
        %8250 = vmatprep.subr.bf16.mxu0 0
        %8251 = vmatpush2.bf16.msra.mxu0 0
        %8252 = vmatprep.subr.bf16.mxu0 0
        %8253 = vmatpush2.bf16.msra.mxu0 0
        %8254 = vmatprep.subr.bf16.mxu0 0
        %8255 = vmatpush2.bf16.msra.mxu0 0
        %8256 = vmatprep.subr.bf16.mxu0 0
        %8257 = vmatpush2.bf16.msra.mxu0 0
        %8258 = vmatprep.subr.bf16.mxu0 0
        %8259 = vmatpush2.bf16.msra.mxu0 0
        %8260 = vmatprep.subr.bf16.mxu0 0
        %8261 = vmatpush2.bf16.msra.mxu0 0
        %8262 = vmatprep.subr.bf16.mxu0 0
        %8263 = vmatpush2.bf16.msra.mxu0 0
        %8264 = vmatprep.mubr.bf16.mxu0 0
        %8265 = vmatmul.mubr.bf16.gmra.mxu0 %v8152
        %v8266 = vpop.f32.mrf.mxu0
        %v8267 = vadd.f32 0.0, %v8266
        %v8268 = vpop.f32.mrf.mxu0
        %v8269 = vpop.f32.mrf.mxu0
        %v8270 = vadd.f32 0.0, %v8269
        %v8271 = vpop.f32.mrf.mxu0
        %8272 = vmatprep.mubr.bf16.mxu0 0
        %8273 = vmatmul.mubr.bf16.gmra.mxu0 %v8153
        %v8274 = vpop.f32.mrf.mxu0
        %v8275 = vadd.f32 0.0, %v8274
        %v8276 = vpop.f32.mrf.mxu0
        %v8277 = vpop.f32.mrf.mxu0
        %v8278 = vadd.f32 0.0, %v8277
        %v8279 = vpop.f32.mrf.mxu0
        %8280 = vmatprep.mubr.bf16.mxu0 0
        %8281 = vmatmul.mubr.bf16.gmra.mxu0 %v8154
        %v8282 = vpop.f32.mrf.mxu0
        %v8283 = vadd.f32 0.0, %v8282
        %v8284 = vpop.f32.mrf.mxu0
        %v8285 = vpop.f32.mrf.mxu0
        %v8286 = vadd.f32 0.0, %v8285
        %v8287 = vpop.f32.mrf.mxu0
        %8288 = vmatprep.mubr.bf16.mxu0 0
        %8289 = vmatmul.mubr.bf16.gmra.mxu0 %v8155
        %v8290 = vpop.f32.mrf.mxu0
        %v8291 = vadd.f32 0.0, %v8290
        %v8292 = vpop.f32.mrf.mxu0
        %v8293 = vpop.f32.mrf.mxu0
        %v8294 = vadd.f32 0.0, %v8293
        %v8295 = vpop.f32.mrf.mxu0
        %8296 = vmatprep.mubr.bf16.mxu0 0
        %8297 = vmatmul.mubr.bf16.gmra.mxu0 %v8156
        %v8298 = vpop.f32.mrf.mxu0
        %v8299 = vadd.f32 0.0, %v8298
        %v8300 = vpop.f32.mrf.mxu0
        %v8301 = vpop.f32.mrf.mxu0
        %v8302 = vadd.f32 0.0, %v8301
        %v8303 = vpop.f32.mrf.mxu0
        %8304 = vmatprep.mubr.bf16.mxu0 0
        %8305 = vmatmul.mubr.bf16.gmra.mxu0 %v8157
        %v8306 = vpop.f32.mrf.mxu0
        %v8307 = vadd.f32 0.0, %v8306
        %v8308 = vpop.f32.mrf.mxu0
        %v8309 = vpop.f32.mrf.mxu0
        %v8310 = vadd.f32 0.0, %v8309
        %v8311 = vpop.f32.mrf.mxu0
        %8312 = vmatprep.mubr.bf16.mxu0 0
        %8313 = vmatmul.mubr.bf16.gmra.mxu0 %v8158
        %v8314 = vpop.f32.mrf.mxu0
        %v8315 = vadd.f32 0.0, %v8314
        %v8316 = vpop.f32.mrf.mxu0
        %v8317 = vpop.f32.mrf.mxu0
        %v8318 = vadd.f32 0.0, %v8317
        %v8319 = vpop.f32.mrf.mxu0
        %8320 = vmatprep.mubr.bf16.mxu0 0
        %8321 = vmatmul.mubr.bf16.gmra.mxu0 %v8159
        %v8322 = vpop.f32.mrf.mxu0
        %v8323 = vadd.f32 0.0, %v8322
        %v8324 = vpop.f32.mrf.mxu0
        %v8325 = vpop.f32.mrf.mxu0
        %v8326 = vadd.f32 0.0, %v8325
        %v8327 = vpop.f32.mrf.mxu0
        %8328 = vmatprep.mubr.bf16.mxu0 0
        %8329 = vmatmul.mubr.bf16.gmra.mxu0 %v8160
        %v8330 = vpop.f32.mrf.mxu0
        %v8331 = vadd.f32 0.0, %v8330
        %v8332 = vpop.f32.mrf.mxu0
        %v8333 = vpop.f32.mrf.mxu0
        %v8334 = vadd.f32 0.0, %v8333
        %v8335 = vpop.f32.mrf.mxu0
        %8336 = vmatprep.mubr.bf16.mxu0 0
        %8337 = vmatmul.mubr.bf16.gmra.mxu0 %v8161
        %v8338 = vpop.f32.mrf.mxu0
        %v8339 = vadd.f32 0.0, %v8338
        %v8340 = vpop.f32.mrf.mxu0
        %v8341 = vpop.f32.mrf.mxu0
        %v8342 = vadd.f32 0.0, %v8341
        %v8343 = vpop.f32.mrf.mxu0
        %8344 = vmatprep.mubr.bf16.mxu0 0
        %8345 = vmatmul.mubr.bf16.gmra.mxu0 %v8162
        %v8346 = vpop.f32.mrf.mxu0
        %v8347 = vadd.f32 0.0, %v8346
        %v8348 = vpop.f32.mrf.mxu0
        %v8349 = vpop.f32.mrf.mxu0
        %v8350 = vadd.f32 0.0, %v8349
        %v8351 = vpop.f32.mrf.mxu0
        %8352 = vmatprep.mubr.bf16.mxu0 0
        %8353 = vmatmul.mubr.bf16.gmra.mxu0 %v8163
        %v8354 = vpop.f32.mrf.mxu0
        %v8355 = vadd.f32 0.0, %v8354
        %v8356 = vpop.f32.mrf.mxu0
        %v8357 = vpop.f32.mrf.mxu0
        %v8358 = vadd.f32 0.0, %v8357
        %v8359 = vpop.f32.mrf.mxu0
        %8360 = vmatprep.mubr.bf16.mxu0 0
        %8361 = vmatmul.mubr.bf16.gmra.mxu0 %v8164
        %v8362 = vpop.f32.mrf.mxu0
        %v8363 = vadd.f32 0.0, %v8362
        %v8364 = vpop.f32.mrf.mxu0
        %v8365 = vpop.f32.mrf.mxu0
        %v8366 = vadd.f32 0.0, %v8365
        %v8367 = vpop.f32.mrf.mxu0
        %8368 = vmatprep.mubr.bf16.mxu0 0
        %8369 = vmatmul.mubr.bf16.gmra.mxu0 %v8165
        %v8370 = vpop.f32.mrf.mxu0
        %v8371 = vadd.f32 0.0, %v8370
        %v8372 = vpop.f32.mrf.mxu0
        %v8373 = vpop.f32.mrf.mxu0
        %v8374 = vadd.f32 0.0, %v8373
        %v8375 = vpop.f32.mrf.mxu0
        %8376 = vmatprep.mubr.bf16.mxu0 0
        %8377 = vmatmul.mubr.bf16.gmra.mxu0 %v8166
        %v8378 = vpop.f32.mrf.mxu0
        %v8379 = vadd.f32 0.0, %v8378
        %v8380 = vpop.f32.mrf.mxu0
        %v8381 = vpop.f32.mrf.mxu0
        %v8382 = vadd.f32 0.0, %v8381
        %v8383 = vpop.f32.mrf.mxu0
        %8384 = vmatprep.mubr.bf16.mxu0 0
        %8385 = vmatmul.mubr.bf16.gmra.mxu0 %v8167
        %v8386 = vpop.f32.mrf.mxu0
        %v8387 = vadd.f32 0.0, %v8386
        %v8388 = vpop.f32.mrf.mxu0
        %v8389 = vpop.f32.mrf.mxu0
        %v8390 = vadd.f32 0.0, %v8389
        %v8391 = vpop.f32.mrf.mxu0
        %8392 = vdwg.mxu0
        %v8393 = vadd.f32 %v7640, %v8267
        %v8394 = vadd.f32 %v7641, %v8270
        %v8395 = vadd.f32 %v7642, %v8275
        %v8396 = vadd.f32 %v7643, %v8278
        %v8397 = vadd.f32 %v7644, %v8283
        %v8398 = vadd.f32 %v7645, %v8286
        %v8399 = vadd.f32 %v7646, %v8291
        %v8400 = vadd.f32 %v7647, %v8294
        %v8401 = vadd.f32 %v7648, %v8299
        %v8402 = vadd.f32 %v7649, %v8302
        %v8403 = vadd.f32 %v7650, %v8307
        %v8404 = vadd.f32 %v7651, %v8310
        %v8405 = vadd.f32 %v7652, %v8315
        %v8406 = vadd.f32 %v7653, %v8318
        %v8407 = vadd.f32 %v7654, %v8323
        %v8408 = vadd.f32 %v7655, %v8326
        %v8409 = vadd.f32 %v7656, %v8331
        %v8410 = vadd.f32 %v7657, %v8334
        %v8411 = vadd.f32 %v7658, %v8339
        %v8412 = vadd.f32 %v7659, %v8342
        %v8413 = vadd.f32 %v7660, %v8347
        %v8414 = vadd.f32 %v7661, %v8350
        %v8415 = vadd.f32 %v7662, %v8355
        %v8416 = vadd.f32 %v7663, %v8358
        %v8417 = vadd.f32 %v7664, %v8363
        %v8418 = vadd.f32 %v7665, %v8366
        %v8419 = vadd.f32 %v7666, %v8371
        %v8420 = vadd.f32 %v7667, %v8374
        %v8421 = vadd.f32 %v7668, %v8379
        %v8422 = vadd.f32 %v7669, %v8382
        %v8423 = vadd.f32 %v7670, %v8387
        %v8424 = vadd.f32 %v7671, %v8390
        %v8425 = vld [vmem:[%s5649] sm:$0xe]
        %v8426 = vld [vmem:[%s5649 + $0xc] sm:$0xe]
        %v8427 = vld [vmem:[%s5649 + $0x18] sm:$0xe]
        %v8428 = vld [vmem:[%s5649 + $0x24] sm:$0xe]
        %v8429 = vld [vmem:[%s5649 + $0x30] sm:$0xe]
        %v8430 = vld [vmem:[%s5649 + $0x3c] sm:$0xe]
        %v8431 = vld [vmem:[%s5649 + $0x48] sm:$0xe]
        %v8432 = vld [vmem:[%s5649 + $0x54] sm:$0xe]
        %v8433 = vld [vmem:[%s5649 + $0x60] sm:$0xe]
        %v8434 = vld [vmem:[%s5649 + $0x6c] sm:$0xe]
        %v8435 = vld [vmem:[%s5649 + $0x78] sm:$0xe]
        %v8436 = vld [vmem:[%s5649 + $0x84] sm:$0xe]
        %v8437 = vld [vmem:[%s5649 + $0x90] sm:$0xe]
        %v8438 = vld [vmem:[%s5649 + $0x9c] sm:$0xe]
        %v8439 = vld [vmem:[%s5649 + $0xa8] sm:$0xe]
        %v8440 = vld [vmem:[%s5649 + $0xb4] sm:$0xe]
        %v8489 = vrot.slane %v8425, 5
        %v8490 = vrot.slane %v8489, 4
        %v8491 = vrot.slane %v7673, 5
        %v8492 = vsel %vm1334, %v8490, %v8491
        %v8493 = vrot.slane %v8491, 4
        %v8494 = vrot.slane %v7674, 5
        %v8495 = vsel %vm1334, %v8493, %v8494
        %v8496 = vrot.slane %v8426, 5
        %v8497 = vrot.slane %v8496, 4
        %v8498 = vrot.slane %v7676, 5
        %v8499 = vsel %vm1334, %v8497, %v8498
        %v8500 = vrot.slane %v8498, 4
        %v8501 = vrot.slane %v7677, 5
        %v8502 = vsel %vm1334, %v8500, %v8501
        %v8503 = vrot.slane %v8427, 5
        %v8504 = vrot.slane %v8503, 4
        %v8505 = vrot.slane %v7679, 5
        %v8506 = vsel %vm1334, %v8504, %v8505
        %v8507 = vrot.slane %v8505, 4
        %v8508 = vrot.slane %v7680, 5
        %v8509 = vsel %vm1334, %v8507, %v8508
        %v8510 = vrot.slane %v8428, 5
        %v8511 = vrot.slane %v8510, 4
        %v8512 = vrot.slane %v7682, 5
        %v8513 = vsel %vm1334, %v8511, %v8512
        %v8514 = vrot.slane %v8512, 4
        %v8515 = vrot.slane %v7683, 5
        %v8516 = vsel %vm1334, %v8514, %v8515
        %v8517 = vrot.slane %v8429, 5
        %v8518 = vrot.slane %v8517, 4
        %v8519 = vrot.slane %v7685, 5
        %v8520 = vsel %vm1334, %v8518, %v8519
        %v8521 = vrot.slane %v8519, 4
        %v8522 = vrot.slane %v7686, 5
        %v8523 = vsel %vm1334, %v8521, %v8522
        %v8524 = vrot.slane %v8430, 5
        %v8525 = vrot.slane %v8524, 4
        %v8526 = vrot.slane %v7688, 5
        %v8527 = vsel %vm1334, %v8525, %v8526
        %v8528 = vrot.slane %v8526, 4
        %v8529 = vrot.slane %v7689, 5
        %v8530 = vsel %vm1334, %v8528, %v8529
        %v8531 = vrot.slane %v8431, 5
        %v8532 = vrot.slane %v8531, 4
        %v8533 = vrot.slane %v7691, 5
        %v8534 = vsel %vm1334, %v8532, %v8533
        %v8535 = vrot.slane %v8533, 4
        %v8536 = vrot.slane %v7692, 5
        %v8537 = vsel %vm1334, %v8535, %v8536
        %v8538 = vrot.slane %v8432, 5
        %v8539 = vrot.slane %v8538, 4
        %v8540 = vrot.slane %v7694, 5
        %v8541 = vsel %vm1334, %v8539, %v8540
        %v8542 = vrot.slane %v8540, 4
        %v8543 = vrot.slane %v7695, 5
        %v8544 = vsel %vm1334, %v8542, %v8543
        %v8545 = vrot.slane %v8433, 5
        %v8546 = vrot.slane %v8545, 4
        %v8547 = vrot.slane %v7697, 5
        %v8548 = vsel %vm1334, %v8546, %v8547
        %v8549 = vrot.slane %v8547, 4
        %v8550 = vrot.slane %v7698, 5
        %v8551 = vsel %vm1334, %v8549, %v8550
        %v8552 = vrot.slane %v8434, 5
        %v8553 = vrot.slane %v8552, 4
        %v8554 = vrot.slane %v7700, 5
        %v8555 = vsel %vm1334, %v8553, %v8554
        %v8556 = vrot.slane %v8554, 4
        %v8557 = vrot.slane %v7701, 5
        %v8558 = vsel %vm1334, %v8556, %v8557
        %v8559 = vrot.slane %v8435, 5
        %v8560 = vrot.slane %v8559, 4
        %v8561 = vrot.slane %v7703, 5
        %v8562 = vsel %vm1334, %v8560, %v8561
        %v8563 = vrot.slane %v8561, 4
        %v8564 = vrot.slane %v7704, 5
        %v8565 = vsel %vm1334, %v8563, %v8564
        %v8566 = vrot.slane %v8436, 5
        %v8567 = vrot.slane %v8566, 4
        %v8568 = vrot.slane %v7706, 5
        %v8569 = vsel %vm1334, %v8567, %v8568
        %v8570 = vrot.slane %v8568, 4
        %v8571 = vrot.slane %v7707, 5
        %v8572 = vsel %vm1334, %v8570, %v8571
        %v8573 = vrot.slane %v8437, 5
        %v8574 = vrot.slane %v8573, 4
        %v8575 = vrot.slane %v7709, 5
        %v8576 = vsel %vm1334, %v8574, %v8575
        %v8577 = vrot.slane %v8575, 4
        %v8578 = vrot.slane %v7710, 5
        %v8579 = vsel %vm1334, %v8577, %v8578
        %v8580 = vrot.slane %v8438, 5
        %v8581 = vrot.slane %v8580, 4
        %v8582 = vrot.slane %v7712, 5
        %v8583 = vsel %vm1334, %v8581, %v8582
        %v8584 = vrot.slane %v8582, 4
        %v8585 = vrot.slane %v7713, 5
        %v8586 = vsel %vm1334, %v8584, %v8585
        %v8587 = vrot.slane %v8439, 5
        %v8588 = vrot.slane %v8587, 4
        %v8589 = vrot.slane %v7715, 5
        %v8590 = vsel %vm1334, %v8588, %v8589
        %v8591 = vrot.slane %v8589, 4
        %v8592 = vrot.slane %v7716, 5
        %v8593 = vsel %vm1334, %v8591, %v8592
        %v8594 = vrot.slane %v8440, 5
        %v8595 = vrot.slane %v8594, 4
        %v8596 = vrot.slane %v7718, 5
        %v8597 = vsel %vm1334, %v8595, %v8596
        %v8598 = vrot.slane %v8596, 4
        %v8599 = vrot.slane %v7719, 5
        %v8600 = vsel %vm1334, %v8598, %v8599
        %v8601 = vld [vmem:[#allocation3 + $0x140] sm:$0xf]
        %v8602 = vld [vmem:[#allocation3 + $0x144] sm:$0xf]
        %v8603 = vld [vmem:[#allocation3 + $0x148] sm:$0xf]
        %v8604 = vld [vmem:[#allocation3 + $0x14c] sm:$0xf]
        %v8605 = vld [vmem:[#allocation3 + $0x150] sm:$0xf]
        %v8606 = vld [vmem:[#allocation3 + $0x154] sm:$0xf]
        %v8607 = vld [vmem:[#allocation3 + $0x158] sm:$0xf]
        %v8608 = vld [vmem:[#allocation3 + $0x15c] sm:$0xf]
        %v8609 = vld [vmem:[#allocation3 + $0x160] sm:$0xf]
        %v8610 = vld [vmem:[#allocation3 + $0x164] sm:$0xf]
        %v8611 = vld [vmem:[#allocation3 + $0x168] sm:$0xf]
        %v8612 = vld [vmem:[#allocation3 + $0x16c] sm:$0xf]
        %v8613 = vld [vmem:[#allocation3 + $0x170] sm:$0xf]
        %v8614 = vld [vmem:[#allocation3 + $0x174] sm:$0xf]
        %v8615 = vld [vmem:[#allocation3 + $0x178] sm:$0xf]
        %v8616 = vld [vmem:[#allocation3 + $0x17c] sm:$0xf]
        %v8617 = vunpack.c.l.b16 %v8492
        %v8618 = vunpack.c.l.b16 %v8495
        %v8619 = vunpack.c.l.b16 %v8499
        %v8620 = vunpack.c.l.b16 %v8502
        %v8621 = vunpack.c.l.b16 %v8506
        %v8622 = vunpack.c.l.b16 %v8509
        %v8623 = vunpack.c.l.b16 %v8513
        %v8624 = vunpack.c.l.b16 %v8516
        %v8625 = vunpack.c.l.b16 %v8520
        %v8626 = vunpack.c.l.b16 %v8523
        %v8627 = vunpack.c.l.b16 %v8527
        %v8628 = vunpack.c.l.b16 %v8530
        %v8629 = vunpack.c.l.b16 %v8534
        %v8630 = vunpack.c.l.b16 %v8537
        %v8631 = vunpack.c.l.b16 %v8541
        %v8632 = vunpack.c.l.b16 %v8544
        %v8633 = vunpack.c.l.b16 %v8548
        %v8634 = vunpack.c.l.b16 %v8551
        %v8635 = vunpack.c.l.b16 %v8555
        %v8636 = vunpack.c.l.b16 %v8558
        %v8637 = vunpack.c.l.b16 %v8562
        %v8638 = vunpack.c.l.b16 %v8565
        %v8639 = vunpack.c.l.b16 %v8569
        %v8640 = vunpack.c.l.b16 %v8572
        %v8641 = vunpack.c.l.b16 %v8576
        %v8642 = vunpack.c.l.b16 %v8579
        %v8643 = vunpack.c.l.b16 %v8583
        %v8644 = vunpack.c.l.b16 %v8586
        %v8645 = vunpack.c.l.b16 %v8590
        %v8646 = vunpack.c.l.b16 %v8593
        %v8647 = vunpack.c.l.b16 %v8597
        %v8648 = vunpack.c.l.b16 %v8600
        %v8649 = vpack.c.b16 %v8618, %v8617
        %v8650 = vpack.c.b16 %v8620, %v8619
        %v8651 = vpack.c.b16 %v8622, %v8621
        %v8652 = vpack.c.b16 %v8624, %v8623
        %v8653 = vpack.c.b16 %v8626, %v8625
        %v8654 = vpack.c.b16 %v8628, %v8627
        %v8655 = vpack.c.b16 %v8630, %v8629
        %v8656 = vpack.c.b16 %v8632, %v8631
        %v8657 = vpack.c.b16 %v8634, %v8633
        %v8658 = vpack.c.b16 %v8636, %v8635
        %v8659 = vpack.c.b16 %v8638, %v8637
        %v8660 = vpack.c.b16 %v8640, %v8639
        %v8661 = vpack.c.b16 %v8642, %v8641
        %v8662 = vpack.c.b16 %v8644, %v8643
        %v8663 = vpack.c.b16 %v8646, %v8645
        %v8664 = vpack.c.b16 %v8648, %v8647
        %v8697 = vunpack.c.l.b16 %v8601
        %v8698 = vunpack.c.l.b16 %v8602
        %v8699 = vunpack.c.l.b16 %v8603
        %v8700 = vunpack.c.l.b16 %v8604
        %v8701 = vunpack.c.l.b16 %v8605
        %v8702 = vunpack.c.l.b16 %v8606
        %v8703 = vunpack.c.l.b16 %v8607
        %v8704 = vunpack.c.l.b16 %v8608
        %v8705 = vunpack.c.l.b16 %v8609
        %v8706 = vunpack.c.l.b16 %v8610
        %v8707 = vunpack.c.l.b16 %v8611
        %v8708 = vunpack.c.l.b16 %v8612
        %v8709 = vunpack.c.l.b16 %v8613
        %v8710 = vunpack.c.l.b16 %v8614
        %v8711 = vunpack.c.l.b16 %v8615
        %v8712 = vunpack.c.l.b16 %v8616
        %v8713 = vpack.c.b16 %v8698, %v8697
        %v8714 = vpack.c.b16 %v8700, %v8699
        %v8715 = vpack.c.b16 %v8702, %v8701
        %v8716 = vpack.c.b16 %v8704, %v8703
        %v8717 = vpack.c.b16 %v8706, %v8705
        %v8718 = vpack.c.b16 %v8708, %v8707
        %v8719 = vpack.c.b16 %v8710, %v8709
        %v8720 = vpack.c.b16 %v8712, %v8711
        %8729 = vmatprep.subr.bf16.mxu0 0
        %8730 = vmatpush1.bf16.msra.mxu0 %v8720
        %8731 = vmatprep.subr.bf16.mxu0 0
        %8732 = vmatpush1.bf16.msra.mxu0 %v8719
        %8733 = vmatprep.subr.bf16.mxu0 0
        %8734 = vmatpush1.bf16.msra.mxu0 %v8718
        %8735 = vmatprep.subr.bf16.mxu0 0
        %8736 = vmatpush1.bf16.msra.mxu0 %v8717
        %8737 = vmatprep.subr.bf16.mxu0 0
        %8738 = vmatpush1.bf16.msra.mxu0 %v8716
        %8739 = vmatprep.subr.bf16.mxu0 0
        %8740 = vmatpush1.bf16.msra.mxu0 %v8715
        %8741 = vmatprep.subr.bf16.mxu0 0
        %8742 = vmatpush1.bf16.msra.mxu0 %v8714
        %8743 = vmatprep.subr.bf16.mxu0 0
        %8744 = vmatpush1.bf16.msra.mxu0 %v8713
        %8745 = vmatprep.subr.bf16.mxu0 0
        %8746 = vmatpush2.bf16.msra.mxu0 0
        %8747 = vmatprep.subr.bf16.mxu0 0
        %8748 = vmatpush2.bf16.msra.mxu0 0
        %8749 = vmatprep.subr.bf16.mxu0 0
        %8750 = vmatpush2.bf16.msra.mxu0 0
        %8751 = vmatprep.subr.bf16.mxu0 0
        %8752 = vmatpush2.bf16.msra.mxu0 0
        %8753 = vmatprep.subr.bf16.mxu0 0
        %8754 = vmatpush2.bf16.msra.mxu0 0
        %8755 = vmatprep.subr.bf16.mxu0 0
        %8756 = vmatpush2.bf16.msra.mxu0 0
        %8757 = vmatprep.subr.bf16.mxu0 0
        %8758 = vmatpush2.bf16.msra.mxu0 0
        %8759 = vmatprep.subr.bf16.mxu0 0
        %8760 = vmatpush2.bf16.msra.mxu0 0
        %8761 = vmatprep.mubr.bf16.mxu0 0
        %8762 = vmatmul.mubr.bf16.gmra.mxu0 %v8649
        %v8763 = vpop.f32.mrf.mxu0
        %v8764 = vadd.f32 0.0, %v8763
        %v8765 = vpop.f32.mrf.mxu0
        %v8766 = vpop.f32.mrf.mxu0
        %v8767 = vadd.f32 0.0, %v8766
        %v8768 = vpop.f32.mrf.mxu0
        %8769 = vmatprep.mubr.bf16.mxu0 0
        %8770 = vmatmul.mubr.bf16.gmra.mxu0 %v8650
        %v8771 = vpop.f32.mrf.mxu0
        %v8772 = vadd.f32 0.0, %v8771
        %v8773 = vpop.f32.mrf.mxu0
        %v8774 = vpop.f32.mrf.mxu0
        %v8775 = vadd.f32 0.0, %v8774
        %v8776 = vpop.f32.mrf.mxu0
        %8777 = vmatprep.mubr.bf16.mxu0 0
        %8778 = vmatmul.mubr.bf16.gmra.mxu0 %v8651
        %v8779 = vpop.f32.mrf.mxu0
        %v8780 = vadd.f32 0.0, %v8779
        %v8781 = vpop.f32.mrf.mxu0
        %v8782 = vpop.f32.mrf.mxu0
        %v8783 = vadd.f32 0.0, %v8782
        %v8784 = vpop.f32.mrf.mxu0
        %8785 = vmatprep.mubr.bf16.mxu0 0
        %8786 = vmatmul.mubr.bf16.gmra.mxu0 %v8652
        %v8787 = vpop.f32.mrf.mxu0
        %v8788 = vadd.f32 0.0, %v8787
        %v8789 = vpop.f32.mrf.mxu0
        %v8790 = vpop.f32.mrf.mxu0
        %v8791 = vadd.f32 0.0, %v8790
        %v8792 = vpop.f32.mrf.mxu0
        %8793 = vmatprep.mubr.bf16.mxu0 0
        %8794 = vmatmul.mubr.bf16.gmra.mxu0 %v8653
        %v8795 = vpop.f32.mrf.mxu0
        %v8796 = vadd.f32 0.0, %v8795
        %v8797 = vpop.f32.mrf.mxu0
        %v8798 = vpop.f32.mrf.mxu0
        %v8799 = vadd.f32 0.0, %v8798
        %v8800 = vpop.f32.mrf.mxu0
        %8801 = vmatprep.mubr.bf16.mxu0 0
        %8802 = vmatmul.mubr.bf16.gmra.mxu0 %v8654
        %v8803 = vpop.f32.mrf.mxu0
        %v8804 = vadd.f32 0.0, %v8803
        %v8805 = vpop.f32.mrf.mxu0
        %v8806 = vpop.f32.mrf.mxu0
        %v8807 = vadd.f32 0.0, %v8806
        %v8808 = vpop.f32.mrf.mxu0
        %8809 = vmatprep.mubr.bf16.mxu0 0
        %8810 = vmatmul.mubr.bf16.gmra.mxu0 %v8655
        %v8811 = vpop.f32.mrf.mxu0
        %v8812 = vadd.f32 0.0, %v8811
        %v8813 = vpop.f32.mrf.mxu0
        %v8814 = vpop.f32.mrf.mxu0
        %v8815 = vadd.f32 0.0, %v8814
        %v8816 = vpop.f32.mrf.mxu0
        %8817 = vmatprep.mubr.bf16.mxu0 0
        %8818 = vmatmul.mubr.bf16.gmra.mxu0 %v8656
        %v8819 = vpop.f32.mrf.mxu0
        %v8820 = vadd.f32 0.0, %v8819
        %v8821 = vpop.f32.mrf.mxu0
        %v8822 = vpop.f32.mrf.mxu0
        %v8823 = vadd.f32 0.0, %v8822
        %v8824 = vpop.f32.mrf.mxu0
        %8825 = vmatprep.mubr.bf16.mxu0 0
        %8826 = vmatmul.mubr.bf16.gmra.mxu0 %v8657
        %v8827 = vpop.f32.mrf.mxu0
        %v8828 = vadd.f32 0.0, %v8827
        %v8829 = vpop.f32.mrf.mxu0
        %v8830 = vpop.f32.mrf.mxu0
        %v8831 = vadd.f32 0.0, %v8830
        %v8832 = vpop.f32.mrf.mxu0
        %8833 = vmatprep.mubr.bf16.mxu0 0
        %8834 = vmatmul.mubr.bf16.gmra.mxu0 %v8658
        %v8835 = vpop.f32.mrf.mxu0
        %v8836 = vadd.f32 0.0, %v8835
        %v8837 = vpop.f32.mrf.mxu0
        %v8838 = vpop.f32.mrf.mxu0
        %v8839 = vadd.f32 0.0, %v8838
        %v8840 = vpop.f32.mrf.mxu0
        %8841 = vmatprep.mubr.bf16.mxu0 0
        %8842 = vmatmul.mubr.bf16.gmra.mxu0 %v8659
        %v8843 = vpop.f32.mrf.mxu0
        %v8844 = vadd.f32 0.0, %v8843
        %v8845 = vpop.f32.mrf.mxu0
        %v8846 = vpop.f32.mrf.mxu0
        %v8847 = vadd.f32 0.0, %v8846
        %v8848 = vpop.f32.mrf.mxu0
        %8849 = vmatprep.mubr.bf16.mxu0 0
        %8850 = vmatmul.mubr.bf16.gmra.mxu0 %v8660
        %v8851 = vpop.f32.mrf.mxu0
        %v8852 = vadd.f32 0.0, %v8851
        %v8853 = vpop.f32.mrf.mxu0
        %v8854 = vpop.f32.mrf.mxu0
        %v8855 = vadd.f32 0.0, %v8854
        %v8856 = vpop.f32.mrf.mxu0
        %8857 = vmatprep.mubr.bf16.mxu0 0
        %8858 = vmatmul.mubr.bf16.gmra.mxu0 %v8661
        %v8859 = vpop.f32.mrf.mxu0
        %v8860 = vadd.f32 0.0, %v8859
        %v8861 = vpop.f32.mrf.mxu0
        %v8862 = vpop.f32.mrf.mxu0
        %v8863 = vadd.f32 0.0, %v8862
        %v8864 = vpop.f32.mrf.mxu0
        %8865 = vmatprep.mubr.bf16.mxu0 0
        %8866 = vmatmul.mubr.bf16.gmra.mxu0 %v8662
        %v8867 = vpop.f32.mrf.mxu0
        %v8868 = vadd.f32 0.0, %v8867
        %v8869 = vpop.f32.mrf.mxu0
        %v8870 = vpop.f32.mrf.mxu0
        %v8871 = vadd.f32 0.0, %v8870
        %v8872 = vpop.f32.mrf.mxu0
        %8873 = vmatprep.mubr.bf16.mxu0 0
        %8874 = vmatmul.mubr.bf16.gmra.mxu0 %v8663
        %v8875 = vpop.f32.mrf.mxu0
        %v8876 = vadd.f32 0.0, %v8875
        %v8877 = vpop.f32.mrf.mxu0
        %v8878 = vpop.f32.mrf.mxu0
        %v8879 = vadd.f32 0.0, %v8878
        %v8880 = vpop.f32.mrf.mxu0
        %8881 = vmatprep.mubr.bf16.mxu0 0
        %8882 = vmatmul.mubr.bf16.gmra.mxu0 %v8664
        %v8883 = vpop.f32.mrf.mxu0
        %v8884 = vadd.f32 0.0, %v8883
        %v8885 = vpop.f32.mrf.mxu0
        %v8886 = vpop.f32.mrf.mxu0
        %v8887 = vadd.f32 0.0, %v8886
        %v8888 = vpop.f32.mrf.mxu0
        %8889 = vdwg.mxu0
        %v8890 = vadd.f32 %v8393, %v8764
        %v8891 = vadd.f32 %v8394, %v8767
        %v8892 = vadd.f32 %v8395, %v8772
        %v8893 = vadd.f32 %v8396, %v8775
        %v8894 = vadd.f32 %v8397, %v8780
        %v8895 = vadd.f32 %v8398, %v8783
        %v8896 = vadd.f32 %v8399, %v8788
        %v8897 = vadd.f32 %v8400, %v8791
        %v8898 = vadd.f32 %v8401, %v8796
        %v8899 = vadd.f32 %v8402, %v8799
        %v8900 = vadd.f32 %v8403, %v8804
        %v8901 = vadd.f32 %v8404, %v8807
        %v8902 = vadd.f32 %v8405, %v8812
        %v8903 = vadd.f32 %v8406, %v8815
        %v8904 = vadd.f32 %v8407, %v8820
        %v8905 = vadd.f32 %v8408, %v8823
        %v8906 = vadd.f32 %v8409, %v8828
        %v8907 = vadd.f32 %v8410, %v8831
        %v8908 = vadd.f32 %v8411, %v8836
        %v8909 = vadd.f32 %v8412, %v8839
        %v8910 = vadd.f32 %v8413, %v8844
        %v8911 = vadd.f32 %v8414, %v8847
        %v8912 = vadd.f32 %v8415, %v8852
        %v8913 = vadd.f32 %v8416, %v8855
        %v8914 = vadd.f32 %v8417, %v8860
        %v8915 = vadd.f32 %v8418, %v8863
        %v8916 = vadd.f32 %v8419, %v8868
        %v8917 = vadd.f32 %v8420, %v8871
        %v8918 = vadd.f32 %v8421, %v8876
        %v8919 = vadd.f32 %v8422, %v8879
        %v8920 = vadd.f32 %v8423, %v8884
        %v8921 = vadd.f32 %v8424, %v8887
        %s8922 = scalar_lea.vmem [#allocation2], 24
        %v8923 = vld [vmem:[%s8922] sm:$0xf]
        %v8924 = vld [vmem:[%s8922 + $0x4] sm:$0xf]
        %v8925 = vld [vmem:[%s8922 + $0xc] sm:$0xf]
        %v8926 = vld [vmem:[%s8922 + $0x10] sm:$0xf]
        %v8927 = vld [vmem:[%s8922 + $0x18] sm:$0xf]
        %v8928 = vld [vmem:[%s8922 + $0x1c] sm:$0xf]
        %v8929 = vld [vmem:[%s8922 + $0x24] sm:$0xf]
        %v8930 = vld [vmem:[%s8922 + $0x28] sm:$0xf]
        %v8931 = vld [vmem:[%s8922 + $0x30] sm:$0xf]
        %v8932 = vld [vmem:[%s8922 + $0x34] sm:$0xf]
        %v8933 = vld [vmem:[%s8922 + $0x3c] sm:$0xf]
        %v8934 = vld [vmem:[%s8922 + $0x40] sm:$0xf]
        %v8935 = vld [vmem:[%s8922 + $0x48] sm:$0xf]
        %v8936 = vld [vmem:[%s8922 + $0x4c] sm:$0xf]
        %v8937 = vld [vmem:[%s8922 + $0x54] sm:$0xf]
        %v8938 = vld [vmem:[%s8922 + $0x58] sm:$0xf]
        %v8939 = vld [vmem:[%s8922 + $0x60] sm:$0xf]
        %v8940 = vld [vmem:[%s8922 + $0x64] sm:$0xf]
        %v8941 = vld [vmem:[%s8922 + $0x6c] sm:$0xf]
        %v8942 = vld [vmem:[%s8922 + $0x70] sm:$0xf]
        %v8943 = vld [vmem:[%s8922 + $0x78] sm:$0xf]
        %v8944 = vld [vmem:[%s8922 + $0x7c] sm:$0xf]
        %v8945 = vld [vmem:[%s8922 + $0x84] sm:$0xf]
        %v8946 = vld [vmem:[%s8922 + $0x88] sm:$0xf]
        %v8947 = vld [vmem:[%s8922 + $0x90] sm:$0xf]
        %v8948 = vld [vmem:[%s8922 + $0x94] sm:$0xf]
        %v8949 = vld [vmem:[%s8922 + $0x9c] sm:$0xf]
        %v8950 = vld [vmem:[%s8922 + $0xa0] sm:$0xf]
        %v8951 = vld [vmem:[%s8922 + $0xa8] sm:$0xf]
        %v8952 = vld [vmem:[%s8922 + $0xac] sm:$0xf]
        %v8953 = vld [vmem:[%s8922 + $0xb4] sm:$0xf]
        %v8954 = vld [vmem:[%s8922 + $0xb8] sm:$0xf]
        %v8955 = vld [vmem:[#allocation3 + $0x180] sm:$0xf]
        %v8956 = vld [vmem:[#allocation3 + $0x184] sm:$0xf]
        %v8957 = vld [vmem:[#allocation3 + $0x188] sm:$0xf]
        %v8958 = vld [vmem:[#allocation3 + $0x18c] sm:$0xf]
        %v8959 = vld [vmem:[#allocation3 + $0x190] sm:$0xf]
        %v8960 = vld [vmem:[#allocation3 + $0x194] sm:$0xf]
        %v8961 = vld [vmem:[#allocation3 + $0x198] sm:$0xf]
        %v8962 = vld [vmem:[#allocation3 + $0x19c] sm:$0xf]
        %v8963 = vld [vmem:[#allocation3 + $0x1a0] sm:$0xf]
        %v8964 = vld [vmem:[#allocation3 + $0x1a4] sm:$0xf]
        %v8965 = vld [vmem:[#allocation3 + $0x1a8] sm:$0xf]
        %v8966 = vld [vmem:[#allocation3 + $0x1ac] sm:$0xf]
        %v8967 = vld [vmem:[#allocation3 + $0x1b0] sm:$0xf]
        %v8968 = vld [vmem:[#allocation3 + $0x1b4] sm:$0xf]
        %v8969 = vld [vmem:[#allocation3 + $0x1b8] sm:$0xf]
        %v8970 = vld [vmem:[#allocation3 + $0x1bc] sm:$0xf]
        %v9003 = vunpack.c.l.b16 %v8923
        %v9004 = vunpack.c.l.b16 %v8924
        %v9005 = vunpack.c.l.b16 %v8925
        %v9006 = vunpack.c.l.b16 %v8926
        %v9007 = vunpack.c.l.b16 %v8927
        %v9008 = vunpack.c.l.b16 %v8928
        %v9009 = vunpack.c.l.b16 %v8929
        %v9010 = vunpack.c.l.b16 %v8930
        %v9011 = vunpack.c.l.b16 %v8931
        %v9012 = vunpack.c.l.b16 %v8932
        %v9013 = vunpack.c.l.b16 %v8933
        %v9014 = vunpack.c.l.b16 %v8934
        %v9015 = vunpack.c.l.b16 %v8935
        %v9016 = vunpack.c.l.b16 %v8936
        %v9017 = vunpack.c.l.b16 %v8937
        %v9018 = vunpack.c.l.b16 %v8938
        %v9019 = vunpack.c.l.b16 %v8939
        %v9020 = vunpack.c.l.b16 %v8940
        %v9021 = vunpack.c.l.b16 %v8941
        %v9022 = vunpack.c.l.b16 %v8942
        %v9023 = vunpack.c.l.b16 %v8943
        %v9024 = vunpack.c.l.b16 %v8944
        %v9025 = vunpack.c.l.b16 %v8945
        %v9026 = vunpack.c.l.b16 %v8946
        %v9027 = vunpack.c.l.b16 %v8947
        %v9028 = vunpack.c.l.b16 %v8948
        %v9029 = vunpack.c.l.b16 %v8949
        %v9030 = vunpack.c.l.b16 %v8950
        %v9031 = vunpack.c.l.b16 %v8951
        %v9032 = vunpack.c.l.b16 %v8952
        %v9033 = vunpack.c.l.b16 %v8953
        %v9034 = vunpack.c.l.b16 %v8954
        %v9035 = vpack.c.b16 %v9004, %v9003
        %v9036 = vpack.c.b16 %v9006, %v9005
        %v9037 = vpack.c.b16 %v9008, %v9007
        %v9038 = vpack.c.b16 %v9010, %v9009
        %v9039 = vpack.c.b16 %v9012, %v9011
        %v9040 = vpack.c.b16 %v9014, %v9013
        %v9041 = vpack.c.b16 %v9016, %v9015
        %v9042 = vpack.c.b16 %v9018, %v9017
        %v9043 = vpack.c.b16 %v9020, %v9019
        %v9044 = vpack.c.b16 %v9022, %v9021
        %v9045 = vpack.c.b16 %v9024, %v9023
        %v9046 = vpack.c.b16 %v9026, %v9025
        %v9047 = vpack.c.b16 %v9028, %v9027
        %v9048 = vpack.c.b16 %v9030, %v9029
        %v9049 = vpack.c.b16 %v9032, %v9031
        %v9050 = vpack.c.b16 %v9034, %v9033
        %v9083 = vunpack.c.l.b16 %v8955
        %v9084 = vunpack.c.l.b16 %v8956
        %v9085 = vunpack.c.l.b16 %v8957
        %v9086 = vunpack.c.l.b16 %v8958
        %v9087 = vunpack.c.l.b16 %v8959
        %v9088 = vunpack.c.l.b16 %v8960
        %v9089 = vunpack.c.l.b16 %v8961
        %v9090 = vunpack.c.l.b16 %v8962
        %v9091 = vunpack.c.l.b16 %v8963
        %v9092 = vunpack.c.l.b16 %v8964
        %v9093 = vunpack.c.l.b16 %v8965
        %v9094 = vunpack.c.l.b16 %v8966
        %v9095 = vunpack.c.l.b16 %v8967
        %v9096 = vunpack.c.l.b16 %v8968
        %v9097 = vunpack.c.l.b16 %v8969
        %v9098 = vunpack.c.l.b16 %v8970
        %v9099 = vpack.c.b16 %v9084, %v9083
        %v9100 = vpack.c.b16 %v9086, %v9085
        %v9101 = vpack.c.b16 %v9088, %v9087
        %v9102 = vpack.c.b16 %v9090, %v9089
        %v9103 = vpack.c.b16 %v9092, %v9091
        %v9104 = vpack.c.b16 %v9094, %v9093
        %v9105 = vpack.c.b16 %v9096, %v9095
        %v9106 = vpack.c.b16 %v9098, %v9097
        %9115 = vmatprep.subr.bf16.mxu0 0
        %9116 = vmatpush1.bf16.msra.mxu0 %v9106
        %9117 = vmatprep.subr.bf16.mxu0 0
        %9118 = vmatpush1.bf16.msra.mxu0 %v9105
        %9119 = vmatprep.subr.bf16.mxu0 0
        %9120 = vmatpush1.bf16.msra.mxu0 %v9104
        %9121 = vmatprep.subr.bf16.mxu0 0
        %9122 = vmatpush1.bf16.msra.mxu0 %v9103
        %9123 = vmatprep.subr.bf16.mxu0 0
        %9124 = vmatpush1.bf16.msra.mxu0 %v9102
        %9125 = vmatprep.subr.bf16.mxu0 0
        %9126 = vmatpush1.bf16.msra.mxu0 %v9101
        %9127 = vmatprep.subr.bf16.mxu0 0
        %9128 = vmatpush1.bf16.msra.mxu0 %v9100
        %9129 = vmatprep.subr.bf16.mxu0 0
        %9130 = vmatpush1.bf16.msra.mxu0 %v9099
        %9131 = vmatprep.subr.bf16.mxu0 0
        %9132 = vmatpush2.bf16.msra.mxu0 0
        %9133 = vmatprep.subr.bf16.mxu0 0
        %9134 = vmatpush2.bf16.msra.mxu0 0
        %9135 = vmatprep.subr.bf16.mxu0 0
        %9136 = vmatpush2.bf16.msra.mxu0 0
        %9137 = vmatprep.subr.bf16.mxu0 0
        %9138 = vmatpush2.bf16.msra.mxu0 0
        %9139 = vmatprep.subr.bf16.mxu0 0
        %9140 = vmatpush2.bf16.msra.mxu0 0
        %9141 = vmatprep.subr.bf16.mxu0 0
        %9142 = vmatpush2.bf16.msra.mxu0 0
        %9143 = vmatprep.subr.bf16.mxu0 0
        %9144 = vmatpush2.bf16.msra.mxu0 0
        %9145 = vmatprep.subr.bf16.mxu0 0
        %9146 = vmatpush2.bf16.msra.mxu0 0
        %9147 = vmatprep.mubr.bf16.mxu0 0
        %9148 = vmatmul.mubr.bf16.gmra.mxu0 %v9035
        %v9149 = vpop.f32.mrf.mxu0
        %v9150 = vadd.f32 0.0, %v9149
        %v9151 = vpop.f32.mrf.mxu0
        %v9152 = vpop.f32.mrf.mxu0
        %v9153 = vadd.f32 0.0, %v9152
        %v9154 = vpop.f32.mrf.mxu0
        %9155 = vmatprep.mubr.bf16.mxu0 0
        %9156 = vmatmul.mubr.bf16.gmra.mxu0 %v9036
        %v9157 = vpop.f32.mrf.mxu0
        %v9158 = vadd.f32 0.0, %v9157
        %v9159 = vpop.f32.mrf.mxu0
        %v9160 = vpop.f32.mrf.mxu0
        %v9161 = vadd.f32 0.0, %v9160
        %v9162 = vpop.f32.mrf.mxu0
        %9163 = vmatprep.mubr.bf16.mxu0 0
        %9164 = vmatmul.mubr.bf16.gmra.mxu0 %v9037
        %v9165 = vpop.f32.mrf.mxu0
        %v9166 = vadd.f32 0.0, %v9165
        %v9167 = vpop.f32.mrf.mxu0
        %v9168 = vpop.f32.mrf.mxu0
        %v9169 = vadd.f32 0.0, %v9168
        %v9170 = vpop.f32.mrf.mxu0
        %9171 = vmatprep.mubr.bf16.mxu0 0
        %9172 = vmatmul.mubr.bf16.gmra.mxu0 %v9038
        %v9173 = vpop.f32.mrf.mxu0
        %v9174 = vadd.f32 0.0, %v9173
        %v9175 = vpop.f32.mrf.mxu0
        %v9176 = vpop.f32.mrf.mxu0
        %v9177 = vadd.f32 0.0, %v9176
        %v9178 = vpop.f32.mrf.mxu0
        %9179 = vmatprep.mubr.bf16.mxu0 0
        %9180 = vmatmul.mubr.bf16.gmra.mxu0 %v9039
        %v9181 = vpop.f32.mrf.mxu0
        %v9182 = vadd.f32 0.0, %v9181
        %v9183 = vpop.f32.mrf.mxu0
        %v9184 = vpop.f32.mrf.mxu0
        %v9185 = vadd.f32 0.0, %v9184
        %v9186 = vpop.f32.mrf.mxu0
        %9187 = vmatprep.mubr.bf16.mxu0 0
        %9188 = vmatmul.mubr.bf16.gmra.mxu0 %v9040
        %v9189 = vpop.f32.mrf.mxu0
        %v9190 = vadd.f32 0.0, %v9189
        %v9191 = vpop.f32.mrf.mxu0
        %v9192 = vpop.f32.mrf.mxu0
        %v9193 = vadd.f32 0.0, %v9192
        %v9194 = vpop.f32.mrf.mxu0
        %9195 = vmatprep.mubr.bf16.mxu0 0
        %9196 = vmatmul.mubr.bf16.gmra.mxu0 %v9041
        %v9197 = vpop.f32.mrf.mxu0
        %v9198 = vadd.f32 0.0, %v9197
        %v9199 = vpop.f32.mrf.mxu0
        %v9200 = vpop.f32.mrf.mxu0
        %v9201 = vadd.f32 0.0, %v9200
        %v9202 = vpop.f32.mrf.mxu0
        %9203 = vmatprep.mubr.bf16.mxu0 0
        %9204 = vmatmul.mubr.bf16.gmra.mxu0 %v9042
        %v9205 = vpop.f32.mrf.mxu0
        %v9206 = vadd.f32 0.0, %v9205
        %v9207 = vpop.f32.mrf.mxu0
        %v9208 = vpop.f32.mrf.mxu0
        %v9209 = vadd.f32 0.0, %v9208
        %v9210 = vpop.f32.mrf.mxu0
        %9211 = vmatprep.mubr.bf16.mxu0 0
        %9212 = vmatmul.mubr.bf16.gmra.mxu0 %v9043
        %v9213 = vpop.f32.mrf.mxu0
        %v9214 = vadd.f32 0.0, %v9213
        %v9215 = vpop.f32.mrf.mxu0
        %v9216 = vpop.f32.mrf.mxu0
        %v9217 = vadd.f32 0.0, %v9216
        %v9218 = vpop.f32.mrf.mxu0
        %9219 = vmatprep.mubr.bf16.mxu0 0
        %9220 = vmatmul.mubr.bf16.gmra.mxu0 %v9044
        %v9221 = vpop.f32.mrf.mxu0
        %v9222 = vadd.f32 0.0, %v9221
        %v9223 = vpop.f32.mrf.mxu0
        %v9224 = vpop.f32.mrf.mxu0
        %v9225 = vadd.f32 0.0, %v9224
        %v9226 = vpop.f32.mrf.mxu0
        %9227 = vmatprep.mubr.bf16.mxu0 0
        %9228 = vmatmul.mubr.bf16.gmra.mxu0 %v9045
        %v9229 = vpop.f32.mrf.mxu0
        %v9230 = vadd.f32 0.0, %v9229
        %v9231 = vpop.f32.mrf.mxu0
        %v9232 = vpop.f32.mrf.mxu0
        %v9233 = vadd.f32 0.0, %v9232
        %v9234 = vpop.f32.mrf.mxu0
        %9235 = vmatprep.mubr.bf16.mxu0 0
        %9236 = vmatmul.mubr.bf16.gmra.mxu0 %v9046
        %v9237 = vpop.f32.mrf.mxu0
        %v9238 = vadd.f32 0.0, %v9237
        %v9239 = vpop.f32.mrf.mxu0
        %v9240 = vpop.f32.mrf.mxu0
        %v9241 = vadd.f32 0.0, %v9240
        %v9242 = vpop.f32.mrf.mxu0
        %9243 = vmatprep.mubr.bf16.mxu0 0
        %9244 = vmatmul.mubr.bf16.gmra.mxu0 %v9047
        %v9245 = vpop.f32.mrf.mxu0
        %v9246 = vadd.f32 0.0, %v9245
        %v9247 = vpop.f32.mrf.mxu0
        %v9248 = vpop.f32.mrf.mxu0
        %v9249 = vadd.f32 0.0, %v9248
        %v9250 = vpop.f32.mrf.mxu0
        %9251 = vmatprep.mubr.bf16.mxu0 0
        %9252 = vmatmul.mubr.bf16.gmra.mxu0 %v9048
        %v9253 = vpop.f32.mrf.mxu0
        %v9254 = vadd.f32 0.0, %v9253
        %v9255 = vpop.f32.mrf.mxu0
        %v9256 = vpop.f32.mrf.mxu0
        %v9257 = vadd.f32 0.0, %v9256
        %v9258 = vpop.f32.mrf.mxu0
        %9259 = vmatprep.mubr.bf16.mxu0 0
        %9260 = vmatmul.mubr.bf16.gmra.mxu0 %v9049
        %v9261 = vpop.f32.mrf.mxu0
        %v9262 = vadd.f32 0.0, %v9261
        %v9263 = vpop.f32.mrf.mxu0
        %v9264 = vpop.f32.mrf.mxu0
        %v9265 = vadd.f32 0.0, %v9264
        %v9266 = vpop.f32.mrf.mxu0
        %9267 = vmatprep.mubr.bf16.mxu0 0
        %9268 = vmatmul.mubr.bf16.gmra.mxu0 %v9050
        %v9269 = vpop.f32.mrf.mxu0
        %v9270 = vadd.f32 0.0, %v9269
        %v9271 = vpop.f32.mrf.mxu0
        %v9272 = vpop.f32.mrf.mxu0
        %v9273 = vadd.f32 0.0, %v9272
        %v9274 = vpop.f32.mrf.mxu0
        %9275 = vdwg.mxu0
        %v9276 = vadd.f32 %v8890, %v9150
        %v9277 = vadd.f32 %v8891, %v9153
        %v9278 = vadd.f32 %v8892, %v9158
        %v9279 = vadd.f32 %v8893, %v9161
        %v9280 = vadd.f32 %v8894, %v9166
        %v9281 = vadd.f32 %v8895, %v9169
        %v9282 = vadd.f32 %v8896, %v9174
        %v9283 = vadd.f32 %v8897, %v9177
        %v9284 = vadd.f32 %v8898, %v9182
        %v9285 = vadd.f32 %v8899, %v9185
        %v9286 = vadd.f32 %v8900, %v9190
        %v9287 = vadd.f32 %v8901, %v9193
        %v9288 = vadd.f32 %v8902, %v9198
        %v9289 = vadd.f32 %v8903, %v9201
        %v9290 = vadd.f32 %v8904, %v9206
        %v9291 = vadd.f32 %v8905, %v9209
        %v9292 = vadd.f32 %v8906, %v9214
        %v9293 = vadd.f32 %v8907, %v9217
        %v9294 = vadd.f32 %v8908, %v9222
        %v9295 = vadd.f32 %v8909, %v9225
        %v9296 = vadd.f32 %v8910, %v9230
        %v9297 = vadd.f32 %v8911, %v9233
        %v9298 = vadd.f32 %v8912, %v9238
        %v9299 = vadd.f32 %v8913, %v9241
        %v9300 = vadd.f32 %v8914, %v9246
        %v9301 = vadd.f32 %v8915, %v9249
        %v9302 = vadd.f32 %v8916, %v9254
        %v9303 = vadd.f32 %v8917, %v9257
        %v9304 = vadd.f32 %v8918, %v9262
        %v9305 = vadd.f32 %v8919, %v9265
        %v9306 = vadd.f32 %v8920, %v9270
        %v9307 = vadd.f32 %v8921, %v9273
        %v9308 = vld [vmem:[%s8922] sm:$0xf]
        %v9309 = vld [vmem:[%s8922 + $0x4] sm:$0xf]
        %v9310 = vld [vmem:[%s8922 + $0x8] sm:$0x1]
        %v9311 = vld [vmem:[%s8922 + $0xc] sm:$0xf]
        %v9312 = vld [vmem:[%s8922 + $0x10] sm:$0xf]
        %v9313 = vld [vmem:[%s8922 + $0x14] sm:$0x1]
        %v9314 = vld [vmem:[%s8922 + $0x18] sm:$0xf]
        %v9315 = vld [vmem:[%s8922 + $0x1c] sm:$0xf]
        %v9316 = vld [vmem:[%s8922 + $0x20] sm:$0x1]
        %v9317 = vld [vmem:[%s8922 + $0x24] sm:$0xf]
        %v9318 = vld [vmem:[%s8922 + $0x28] sm:$0xf]
        %v9319 = vld [vmem:[%s8922 + $0x2c] sm:$0x1]
        %v9320 = vld [vmem:[%s8922 + $0x30] sm:$0xf]
        %v9321 = vld [vmem:[%s8922 + $0x34] sm:$0xf]
        %v9322 = vld [vmem:[%s8922 + $0x38] sm:$0x1]
        %v9323 = vld [vmem:[%s8922 + $0x3c] sm:$0xf]
        %v9324 = vld [vmem:[%s8922 + $0x40] sm:$0xf]
        %v9325 = vld [vmem:[%s8922 + $0x44] sm:$0x1]
        %v9326 = vld [vmem:[%s8922 + $0x48] sm:$0xf]
        %v9327 = vld [vmem:[%s8922 + $0x4c] sm:$0xf]
        %v9328 = vld [vmem:[%s8922 + $0x50] sm:$0x1]
        %v9329 = vld [vmem:[%s8922 + $0x54] sm:$0xf]
        %v9330 = vld [vmem:[%s8922 + $0x58] sm:$0xf]
        %v9331 = vld [vmem:[%s8922 + $0x5c] sm:$0x1]
        %v9332 = vld [vmem:[%s8922 + $0x60] sm:$0xf]
        %v9333 = vld [vmem:[%s8922 + $0x64] sm:$0xf]
        %v9334 = vld [vmem:[%s8922 + $0x68] sm:$0x1]
        %v9335 = vld [vmem:[%s8922 + $0x6c] sm:$0xf]
        %v9336 = vld [vmem:[%s8922 + $0x70] sm:$0xf]
        %v9337 = vld [vmem:[%s8922 + $0x74] sm:$0x1]
        %v9338 = vld [vmem:[%s8922 + $0x78] sm:$0xf]
        %v9339 = vld [vmem:[%s8922 + $0x7c] sm:$0xf]
        %v9340 = vld [vmem:[%s8922 + $0x80] sm:$0x1]
        %v9341 = vld [vmem:[%s8922 + $0x84] sm:$0xf]
        %v9342 = vld [vmem:[%s8922 + $0x88] sm:$0xf]
        %v9343 = vld [vmem:[%s8922 + $0x8c] sm:$0x1]
        %v9344 = vld [vmem:[%s8922 + $0x90] sm:$0xf]
        %v9345 = vld [vmem:[%s8922 + $0x94] sm:$0xf]
        %v9346 = vld [vmem:[%s8922 + $0x98] sm:$0x1]
        %v9347 = vld [vmem:[%s8922 + $0x9c] sm:$0xf]
        %v9348 = vld [vmem:[%s8922 + $0xa0] sm:$0xf]
        %v9349 = vld [vmem:[%s8922 + $0xa4] sm:$0x1]
        %v9350 = vld [vmem:[%s8922 + $0xa8] sm:$0xf]
        %v9351 = vld [vmem:[%s8922 + $0xac] sm:$0xf]
        %v9352 = vld [vmem:[%s8922 + $0xb0] sm:$0x1]
        %v9353 = vld [vmem:[%s8922 + $0xb4] sm:$0xf]
        %v9354 = vld [vmem:[%s8922 + $0xb8] sm:$0xf]
        %v9355 = vld [vmem:[%s8922 + $0xbc] sm:$0x1]
        %v9357 = vshrl.u32 %v9308, 16
        %v9359 = vrot.slane %v9357, 4
        %v9360 = vshll.u32 %v9308, 16
        %v9362 = vrot.slane %v9360, 5
        %v9363 = vor.u32 %v9359, %v9362
        %v9364 = vrot.slane %v9363, 4
        %v9366 = vshll.u32 %v9309, 16
        %v9368 = vrot.slane %v9366, 5
        %v9369 = vsel %vm305, %v9364, %v9368
        %v9370 = vshrl.u32 %v9309, 16
        %v9372 = vrot.slane %v9370, 4
        %v9373 = vor.u32 %v9372, %v9368
        %v9374 = vrot.slane %v9373, 4
        %v9376 = vshll.u32 %v9310, 16
        %v9378 = vrot.slane %v9376, 5
        %v9379 = vsel %vm305, %v9374, %v9378
        %v9381 = vshrl.u32 %v9311, 16
        %v9383 = vrot.slane %v9381, 4
        %v9384 = vshll.u32 %v9311, 16
        %v9386 = vrot.slane %v9384, 5
        %v9387 = vor.u32 %v9383, %v9386
        %v9388 = vrot.slane %v9387, 4
        %v9390 = vshll.u32 %v9312, 16
        %v9392 = vrot.slane %v9390, 5
        %v9393 = vsel %vm305, %v9388, %v9392
        %v9394 = vshrl.u32 %v9312, 16
        %v9396 = vrot.slane %v9394, 4
        %v9397 = vor.u32 %v9396, %v9392
        %v9398 = vrot.slane %v9397, 4
        %v9400 = vshll.u32 %v9313, 16
        %v9402 = vrot.slane %v9400, 5
        %v9403 = vsel %vm305, %v9398, %v9402
        %v9405 = vshrl.u32 %v9314, 16
        %v9407 = vrot.slane %v9405, 4
        %v9408 = vshll.u32 %v9314, 16
        %v9410 = vrot.slane %v9408, 5
        %v9411 = vor.u32 %v9407, %v9410
        %v9412 = vrot.slane %v9411, 4
        %v9414 = vshll.u32 %v9315, 16
        %v9416 = vrot.slane %v9414, 5
        %v9417 = vsel %vm305, %v9412, %v9416
        %v9418 = vshrl.u32 %v9315, 16
        %v9420 = vrot.slane %v9418, 4
        %v9421 = vor.u32 %v9420, %v9416
        %v9422 = vrot.slane %v9421, 4
        %v9424 = vshll.u32 %v9316, 16
        %v9426 = vrot.slane %v9424, 5
        %v9427 = vsel %vm305, %v9422, %v9426
        %v9429 = vshrl.u32 %v9317, 16
        %v9431 = vrot.slane %v9429, 4
        %v9432 = vshll.u32 %v9317, 16
        %v9434 = vrot.slane %v9432, 5
        %v9435 = vor.u32 %v9431, %v9434
        %v9436 = vrot.slane %v9435, 4
        %v9438 = vshll.u32 %v9318, 16
        %v9440 = vrot.slane %v9438, 5
        %v9441 = vsel %vm305, %v9436, %v9440
        %v9442 = vshrl.u32 %v9318, 16
        %v9444 = vrot.slane %v9442, 4
        %v9445 = vor.u32 %v9444, %v9440
        %v9446 = vrot.slane %v9445, 4
        %v9448 = vshll.u32 %v9319, 16
        %v9450 = vrot.slane %v9448, 5
        %v9451 = vsel %vm305, %v9446, %v9450
        %v9453 = vshrl.u32 %v9320, 16
        %v9455 = vrot.slane %v9453, 4
        %v9456 = vshll.u32 %v9320, 16
        %v9458 = vrot.slane %v9456, 5
        %v9459 = vor.u32 %v9455, %v9458
        %v9460 = vrot.slane %v9459, 4
        %v9462 = vshll.u32 %v9321, 16
        %v9464 = vrot.slane %v9462, 5
        %v9465 = vsel %vm305, %v9460, %v9464
        %v9466 = vshrl.u32 %v9321, 16
        %v9468 = vrot.slane %v9466, 4
        %v9469 = vor.u32 %v9468, %v9464
        %v9470 = vrot.slane %v9469, 4
        %v9472 = vshll.u32 %v9322, 16
        %v9474 = vrot.slane %v9472, 5
        %v9475 = vsel %vm305, %v9470, %v9474
        %v9477 = vshrl.u32 %v9323, 16
        %v9479 = vrot.slane %v9477, 4
        %v9480 = vshll.u32 %v9323, 16
        %v9482 = vrot.slane %v9480, 5
        %v9483 = vor.u32 %v9479, %v9482
        %v9484 = vrot.slane %v9483, 4
        %v9486 = vshll.u32 %v9324, 16
        %v9488 = vrot.slane %v9486, 5
        %v9489 = vsel %vm305, %v9484, %v9488
        %v9490 = vshrl.u32 %v9324, 16
        %v9492 = vrot.slane %v9490, 4
        %v9493 = vor.u32 %v9492, %v9488
        %v9494 = vrot.slane %v9493, 4
        %v9496 = vshll.u32 %v9325, 16
        %v9498 = vrot.slane %v9496, 5
        %v9499 = vsel %vm305, %v9494, %v9498
        %v9501 = vshrl.u32 %v9326, 16
        %v9503 = vrot.slane %v9501, 4
        %v9504 = vshll.u32 %v9326, 16
        %v9506 = vrot.slane %v9504, 5
        %v9507 = vor.u32 %v9503, %v9506
        %v9508 = vrot.slane %v9507, 4
        %v9510 = vshll.u32 %v9327, 16
        %v9512 = vrot.slane %v9510, 5
        %v9513 = vsel %vm305, %v9508, %v9512
        %v9514 = vshrl.u32 %v9327, 16
        %v9516 = vrot.slane %v9514, 4
        %v9517 = vor.u32 %v9516, %v9512
        %v9518 = vrot.slane %v9517, 4
        %v9520 = vshll.u32 %v9328, 16
        %v9522 = vrot.slane %v9520, 5
        %v9523 = vsel %vm305, %v9518, %v9522
        %v9525 = vshrl.u32 %v9329, 16
        %v9527 = vrot.slane %v9525, 4
        %v9528 = vshll.u32 %v9329, 16
        %v9530 = vrot.slane %v9528, 5
        %v9531 = vor.u32 %v9527, %v9530
        %v9532 = vrot.slane %v9531, 4
        %v9534 = vshll.u32 %v9330, 16
        %v9536 = vrot.slane %v9534, 5
        %v9537 = vsel %vm305, %v9532, %v9536
        %v9538 = vshrl.u32 %v9330, 16
        %v9540 = vrot.slane %v9538, 4
        %v9541 = vor.u32 %v9540, %v9536
        %v9542 = vrot.slane %v9541, 4
        %v9544 = vshll.u32 %v9331, 16
        %v9546 = vrot.slane %v9544, 5
        %v9547 = vsel %vm305, %v9542, %v9546
        %v9549 = vshrl.u32 %v9332, 16
        %v9551 = vrot.slane %v9549, 4
        %v9552 = vshll.u32 %v9332, 16
        %v9554 = vrot.slane %v9552, 5
        %v9555 = vor.u32 %v9551, %v9554
        %v9556 = vrot.slane %v9555, 4
        %v9558 = vshll.u32 %v9333, 16
        %v9560 = vrot.slane %v9558, 5
        %v9561 = vsel %vm305, %v9556, %v9560
        %v9562 = vshrl.u32 %v9333, 16
        %v9564 = vrot.slane %v9562, 4
        %v9565 = vor.u32 %v9564, %v9560
        %v9566 = vrot.slane %v9565, 4
        %v9568 = vshll.u32 %v9334, 16
        %v9570 = vrot.slane %v9568, 5
        %v9571 = vsel %vm305, %v9566, %v9570
        %v9573 = vshrl.u32 %v9335, 16
        %v9575 = vrot.slane %v9573, 4
        %v9576 = vshll.u32 %v9335, 16
        %v9578 = vrot.slane %v9576, 5
        %v9579 = vor.u32 %v9575, %v9578
        %v9580 = vrot.slane %v9579, 4
        %v9582 = vshll.u32 %v9336, 16
        %v9584 = vrot.slane %v9582, 5
        %v9585 = vsel %vm305, %v9580, %v9584
        %v9586 = vshrl.u32 %v9336, 16
        %v9588 = vrot.slane %v9586, 4
        %v9589 = vor.u32 %v9588, %v9584
        %v9590 = vrot.slane %v9589, 4
        %v9592 = vshll.u32 %v9337, 16
        %v9594 = vrot.slane %v9592, 5
        %v9595 = vsel %vm305, %v9590, %v9594
        %v9597 = vshrl.u32 %v9338, 16
        %v9599 = vrot.slane %v9597, 4
        %v9600 = vshll.u32 %v9338, 16
        %v9602 = vrot.slane %v9600, 5
        %v9603 = vor.u32 %v9599, %v9602
        %v9604 = vrot.slane %v9603, 4
        %v9606 = vshll.u32 %v9339, 16
        %v9608 = vrot.slane %v9606, 5
        %v9609 = vsel %vm305, %v9604, %v9608
        %v9610 = vshrl.u32 %v9339, 16
        %v9612 = vrot.slane %v9610, 4
        %v9613 = vor.u32 %v9612, %v9608
        %v9614 = vrot.slane %v9613, 4
        %v9616 = vshll.u32 %v9340, 16
        %v9618 = vrot.slane %v9616, 5
        %v9619 = vsel %vm305, %v9614, %v9618
        %v9621 = vshrl.u32 %v9341, 16
        %v9623 = vrot.slane %v9621, 4
        %v9624 = vshll.u32 %v9341, 16
        %v9626 = vrot.slane %v9624, 5
        %v9627 = vor.u32 %v9623, %v9626
        %v9628 = vrot.slane %v9627, 4
        %v9630 = vshll.u32 %v9342, 16
        %v9632 = vrot.slane %v9630, 5
        %v9633 = vsel %vm305, %v9628, %v9632
        %v9634 = vshrl.u32 %v9342, 16
        %v9636 = vrot.slane %v9634, 4
        %v9637 = vor.u32 %v9636, %v9632
        %v9638 = vrot.slane %v9637, 4
        %v9640 = vshll.u32 %v9343, 16
        %v9642 = vrot.slane %v9640, 5
        %v9643 = vsel %vm305, %v9638, %v9642
        %v9645 = vshrl.u32 %v9344, 16
        %v9647 = vrot.slane %v9645, 4
        %v9648 = vshll.u32 %v9344, 16
        %v9650 = vrot.slane %v9648, 5
        %v9651 = vor.u32 %v9647, %v9650
        %v9652 = vrot.slane %v9651, 4
        %v9654 = vshll.u32 %v9345, 16
        %v9656 = vrot.slane %v9654, 5
        %v9657 = vsel %vm305, %v9652, %v9656
        %v9658 = vshrl.u32 %v9345, 16
        %v9660 = vrot.slane %v9658, 4
        %v9661 = vor.u32 %v9660, %v9656
        %v9662 = vrot.slane %v9661, 4
        %v9664 = vshll.u32 %v9346, 16
        %v9666 = vrot.slane %v9664, 5
        %v9667 = vsel %vm305, %v9662, %v9666
        %v9669 = vshrl.u32 %v9347, 16
        %v9671 = vrot.slane %v9669, 4
        %v9672 = vshll.u32 %v9347, 16
        %v9674 = vrot.slane %v9672, 5
        %v9675 = vor.u32 %v9671, %v9674
        %v9676 = vrot.slane %v9675, 4
        %v9678 = vshll.u32 %v9348, 16
        %v9680 = vrot.slane %v9678, 5
        %v9681 = vsel %vm305, %v9676, %v9680
        %v9682 = vshrl.u32 %v9348, 16
        %v9684 = vrot.slane %v9682, 4
        %v9685 = vor.u32 %v9684, %v9680
        %v9686 = vrot.slane %v9685, 4
        %v9688 = vshll.u32 %v9349, 16
        %v9690 = vrot.slane %v9688, 5
        %v9691 = vsel %vm305, %v9686, %v9690
        %v9693 = vshrl.u32 %v9350, 16
        %v9695 = vrot.slane %v9693, 4
        %v9696 = vshll.u32 %v9350, 16
        %v9698 = vrot.slane %v9696, 5
        %v9699 = vor.u32 %v9695, %v9698
        %v9700 = vrot.slane %v9699, 4
        %v9702 = vshll.u32 %v9351, 16
        %v9704 = vrot.slane %v9702, 5
        %v9705 = vsel %vm305, %v9700, %v9704
        %v9706 = vshrl.u32 %v9351, 16
        %v9708 = vrot.slane %v9706, 4
        %v9709 = vor.u32 %v9708, %v9704
        %v9710 = vrot.slane %v9709, 4
        %v9712 = vshll.u32 %v9352, 16
        %v9714 = vrot.slane %v9712, 5
        %v9715 = vsel %vm305, %v9710, %v9714
        %v9717 = vshrl.u32 %v9353, 16
        %v9719 = vrot.slane %v9717, 4
        %v9720 = vshll.u32 %v9353, 16
        %v9722 = vrot.slane %v9720, 5
        %v9723 = vor.u32 %v9719, %v9722
        %v9724 = vrot.slane %v9723, 4
        %v9726 = vshll.u32 %v9354, 16
        %v9728 = vrot.slane %v9726, 5
        %v9729 = vsel %vm305, %v9724, %v9728
        %v9730 = vshrl.u32 %v9354, 16
        %v9732 = vrot.slane %v9730, 4
        %v9733 = vor.u32 %v9732, %v9728
        %v9734 = vrot.slane %v9733, 4
        %v9736 = vshll.u32 %v9355, 16
        %v9738 = vrot.slane %v9736, 5
        %v9739 = vsel %vm305, %v9734, %v9738
        %v9740 = vld [vmem:[#allocation3 + $0x1c0] sm:$0xf]
        %v9741 = vld [vmem:[#allocation3 + $0x1c4] sm:$0xf]
        %v9742 = vld [vmem:[#allocation3 + $0x1c8] sm:$0xf]
        %v9743 = vld [vmem:[#allocation3 + $0x1cc] sm:$0xf]
        %v9744 = vld [vmem:[#allocation3 + $0x1d0] sm:$0xf]
        %v9745 = vld [vmem:[#allocation3 + $0x1d4] sm:$0xf]
        %v9746 = vld [vmem:[#allocation3 + $0x1d8] sm:$0xf]
        %v9747 = vld [vmem:[#allocation3 + $0x1dc] sm:$0xf]
        %v9748 = vld [vmem:[#allocation3 + $0x1e0] sm:$0xf]
        %v9749 = vld [vmem:[#allocation3 + $0x1e4] sm:$0xf]
        %v9750 = vld [vmem:[#allocation3 + $0x1e8] sm:$0xf]
        %v9751 = vld [vmem:[#allocation3 + $0x1ec] sm:$0xf]
        %v9752 = vld [vmem:[#allocation3 + $0x1f0] sm:$0xf]
        %v9753 = vld [vmem:[#allocation3 + $0x1f4] sm:$0xf]
        %v9754 = vld [vmem:[#allocation3 + $0x1f8] sm:$0xf]
        %v9755 = vld [vmem:[#allocation3 + $0x1fc] sm:$0xf]
        %v9756 = vunpack.c.l.b16 %v9369
        %v9757 = vunpack.c.l.b16 %v9379
        %v9758 = vunpack.c.l.b16 %v9393
        %v9759 = vunpack.c.l.b16 %v9403
        %v9760 = vunpack.c.l.b16 %v9417
        %v9761 = vunpack.c.l.b16 %v9427
        %v9762 = vunpack.c.l.b16 %v9441
        %v9763 = vunpack.c.l.b16 %v9451
        %v9764 = vunpack.c.l.b16 %v9465
        %v9765 = vunpack.c.l.b16 %v9475
        %v9766 = vunpack.c.l.b16 %v9489
        %v9767 = vunpack.c.l.b16 %v9499
        %v9768 = vunpack.c.l.b16 %v9513
        %v9769 = vunpack.c.l.b16 %v9523
        %v9770 = vunpack.c.l.b16 %v9537
        %v9771 = vunpack.c.l.b16 %v9547
        %v9772 = vunpack.c.l.b16 %v9561
        %v9773 = vunpack.c.l.b16 %v9571
        %v9774 = vunpack.c.l.b16 %v9585
        %v9775 = vunpack.c.l.b16 %v9595
        %v9776 = vunpack.c.l.b16 %v9609
        %v9777 = vunpack.c.l.b16 %v9619
        %v9778 = vunpack.c.l.b16 %v9633
        %v9779 = vunpack.c.l.b16 %v9643
        %v9780 = vunpack.c.l.b16 %v9657
        %v9781 = vunpack.c.l.b16 %v9667
        %v9782 = vunpack.c.l.b16 %v9681
        %v9783 = vunpack.c.l.b16 %v9691
        %v9784 = vunpack.c.l.b16 %v9705
        %v9785 = vunpack.c.l.b16 %v9715
        %v9786 = vunpack.c.l.b16 %v9729
        %v9787 = vunpack.c.l.b16 %v9739
        %v9788 = vpack.c.b16 %v9757, %v9756
        %v9789 = vpack.c.b16 %v9759, %v9758
        %v9790 = vpack.c.b16 %v9761, %v9760
        %v9791 = vpack.c.b16 %v9763, %v9762
        %v9792 = vpack.c.b16 %v9765, %v9764
        %v9793 = vpack.c.b16 %v9767, %v9766
        %v9794 = vpack.c.b16 %v9769, %v9768
        %v9795 = vpack.c.b16 %v9771, %v9770
        %v9796 = vpack.c.b16 %v9773, %v9772
        %v9797 = vpack.c.b16 %v9775, %v9774
        %v9798 = vpack.c.b16 %v9777, %v9776
        %v9799 = vpack.c.b16 %v9779, %v9778
        %v9800 = vpack.c.b16 %v9781, %v9780
        %v9801 = vpack.c.b16 %v9783, %v9782
        %v9802 = vpack.c.b16 %v9785, %v9784
        %v9803 = vpack.c.b16 %v9787, %v9786
        %v9836 = vunpack.c.l.b16 %v9740
        %v9837 = vunpack.c.l.b16 %v9741
        %v9838 = vunpack.c.l.b16 %v9742
        %v9839 = vunpack.c.l.b16 %v9743
        %v9840 = vunpack.c.l.b16 %v9744
        %v9841 = vunpack.c.l.b16 %v9745
        %v9842 = vunpack.c.l.b16 %v9746
        %v9843 = vunpack.c.l.b16 %v9747
        %v9844 = vunpack.c.l.b16 %v9748
        %v9845 = vunpack.c.l.b16 %v9749
        %v9846 = vunpack.c.l.b16 %v9750
        %v9847 = vunpack.c.l.b16 %v9751
        %v9848 = vunpack.c.l.b16 %v9752
        %v9849 = vunpack.c.l.b16 %v9753
        %v9850 = vunpack.c.l.b16 %v9754
        %v9851 = vunpack.c.l.b16 %v9755
        %v9852 = vpack.c.b16 %v9837, %v9836
        %v9853 = vpack.c.b16 %v9839, %v9838
        %v9854 = vpack.c.b16 %v9841, %v9840
        %v9855 = vpack.c.b16 %v9843, %v9842
        %v9856 = vpack.c.b16 %v9845, %v9844
        %v9857 = vpack.c.b16 %v9847, %v9846
        %v9858 = vpack.c.b16 %v9849, %v9848
        %v9859 = vpack.c.b16 %v9851, %v9850
        %9868 = vmatprep.subr.bf16.mxu0 0
        %9869 = vmatpush1.bf16.msra.mxu0 %v9859
        %9870 = vmatprep.subr.bf16.mxu0 0
        %9871 = vmatpush1.bf16.msra.mxu0 %v9858
        %9872 = vmatprep.subr.bf16.mxu0 0
        %9873 = vmatpush1.bf16.msra.mxu0 %v9857
        %9874 = vmatprep.subr.bf16.mxu0 0
        %9875 = vmatpush1.bf16.msra.mxu0 %v9856
        %9876 = vmatprep.subr.bf16.mxu0 0
        %9877 = vmatpush1.bf16.msra.mxu0 %v9855
        %9878 = vmatprep.subr.bf16.mxu0 0
        %9879 = vmatpush1.bf16.msra.mxu0 %v9854
        %9880 = vmatprep.subr.bf16.mxu0 0
        %9881 = vmatpush1.bf16.msra.mxu0 %v9853
        %9882 = vmatprep.subr.bf16.mxu0 0
        %9883 = vmatpush1.bf16.msra.mxu0 %v9852
        %9884 = vmatprep.subr.bf16.mxu0 0
        %9885 = vmatpush2.bf16.msra.mxu0 0
        %9886 = vmatprep.subr.bf16.mxu0 0
        %9887 = vmatpush2.bf16.msra.mxu0 0
        %9888 = vmatprep.subr.bf16.mxu0 0
        %9889 = vmatpush2.bf16.msra.mxu0 0
        %9890 = vmatprep.subr.bf16.mxu0 0
        %9891 = vmatpush2.bf16.msra.mxu0 0
        %9892 = vmatprep.subr.bf16.mxu0 0
        %9893 = vmatpush2.bf16.msra.mxu0 0
        %9894 = vmatprep.subr.bf16.mxu0 0
        %9895 = vmatpush2.bf16.msra.mxu0 0
        %9896 = vmatprep.subr.bf16.mxu0 0
        %9897 = vmatpush2.bf16.msra.mxu0 0
        %9898 = vmatprep.subr.bf16.mxu0 0
        %9899 = vmatpush2.bf16.msra.mxu0 0
        %9900 = vmatprep.mubr.bf16.mxu0 0
        %9901 = vmatmul.mubr.bf16.gmra.mxu0 %v9788
        %v9902 = vpop.f32.mrf.mxu0
        %v9903 = vadd.f32 0.0, %v9902
        %v9904 = vpop.f32.mrf.mxu0
        %v9905 = vpop.f32.mrf.mxu0
        %v9906 = vadd.f32 0.0, %v9905
        %v9907 = vpop.f32.mrf.mxu0
        %9908 = vmatprep.mubr.bf16.mxu0 0
        %9909 = vmatmul.mubr.bf16.gmra.mxu0 %v9789
        %v9910 = vpop.f32.mrf.mxu0
        %v9911 = vadd.f32 0.0, %v9910
        %v9912 = vpop.f32.mrf.mxu0
        %v9913 = vpop.f32.mrf.mxu0
        %v9914 = vadd.f32 0.0, %v9913
        %v9915 = vpop.f32.mrf.mxu0
        %9916 = vmatprep.mubr.bf16.mxu0 0
        %9917 = vmatmul.mubr.bf16.gmra.mxu0 %v9790
        %v9918 = vpop.f32.mrf.mxu0
        %v9919 = vadd.f32 0.0, %v9918
        %v9920 = vpop.f32.mrf.mxu0
        %v9921 = vpop.f32.mrf.mxu0
        %v9922 = vadd.f32 0.0, %v9921
        %v9923 = vpop.f32.mrf.mxu0
        %9924 = vmatprep.mubr.bf16.mxu0 0
        %9925 = vmatmul.mubr.bf16.gmra.mxu0 %v9791
        %v9926 = vpop.f32.mrf.mxu0
        %v9927 = vadd.f32 0.0, %v9926
        %v9928 = vpop.f32.mrf.mxu0
        %v9929 = vpop.f32.mrf.mxu0
        %v9930 = vadd.f32 0.0, %v9929
        %v9931 = vpop.f32.mrf.mxu0
        %9932 = vmatprep.mubr.bf16.mxu0 0
        %9933 = vmatmul.mubr.bf16.gmra.mxu0 %v9792
        %v9934 = vpop.f32.mrf.mxu0
        %v9935 = vadd.f32 0.0, %v9934
        %v9936 = vpop.f32.mrf.mxu0
        %v9937 = vpop.f32.mrf.mxu0
        %v9938 = vadd.f32 0.0, %v9937
        %v9939 = vpop.f32.mrf.mxu0
        %9940 = vmatprep.mubr.bf16.mxu0 0
        %9941 = vmatmul.mubr.bf16.gmra.mxu0 %v9793
        %v9942 = vpop.f32.mrf.mxu0
        %v9943 = vadd.f32 0.0, %v9942
        %v9944 = vpop.f32.mrf.mxu0
        %v9945 = vpop.f32.mrf.mxu0
        %v9946 = vadd.f32 0.0, %v9945
        %v9947 = vpop.f32.mrf.mxu0
        %9948 = vmatprep.mubr.bf16.mxu0 0
        %9949 = vmatmul.mubr.bf16.gmra.mxu0 %v9794
        %v9950 = vpop.f32.mrf.mxu0
        %v9951 = vadd.f32 0.0, %v9950
        %v9952 = vpop.f32.mrf.mxu0
        %v9953 = vpop.f32.mrf.mxu0
        %v9954 = vadd.f32 0.0, %v9953
        %v9955 = vpop.f32.mrf.mxu0
        %9956 = vmatprep.mubr.bf16.mxu0 0
        %9957 = vmatmul.mubr.bf16.gmra.mxu0 %v9795
        %v9958 = vpop.f32.mrf.mxu0
        %v9959 = vadd.f32 0.0, %v9958
        %v9960 = vpop.f32.mrf.mxu0
        %v9961 = vpop.f32.mrf.mxu0
        %v9962 = vadd.f32 0.0, %v9961
        %v9963 = vpop.f32.mrf.mxu0
        %9964 = vmatprep.mubr.bf16.mxu0 0
        %9965 = vmatmul.mubr.bf16.gmra.mxu0 %v9796
        %v9966 = vpop.f32.mrf.mxu0
        %v9967 = vadd.f32 0.0, %v9966
        %v9968 = vpop.f32.mrf.mxu0
        %v9969 = vpop.f32.mrf.mxu0
        %v9970 = vadd.f32 0.0, %v9969
        %v9971 = vpop.f32.mrf.mxu0
        %9972 = vmatprep.mubr.bf16.mxu0 0
        %9973 = vmatmul.mubr.bf16.gmra.mxu0 %v9797
        %v9974 = vpop.f32.mrf.mxu0
        %v9975 = vadd.f32 0.0, %v9974
        %v9976 = vpop.f32.mrf.mxu0
        %v9977 = vpop.f32.mrf.mxu0
        %v9978 = vadd.f32 0.0, %v9977
        %v9979 = vpop.f32.mrf.mxu0
        %9980 = vmatprep.mubr.bf16.mxu0 0
        %9981 = vmatmul.mubr.bf16.gmra.mxu0 %v9798
        %v9982 = vpop.f32.mrf.mxu0
        %v9983 = vadd.f32 0.0, %v9982
        %v9984 = vpop.f32.mrf.mxu0
        %v9985 = vpop.f32.mrf.mxu0
        %v9986 = vadd.f32 0.0, %v9985
        %v9987 = vpop.f32.mrf.mxu0
        %9988 = vmatprep.mubr.bf16.mxu0 0
        %9989 = vmatmul.mubr.bf16.gmra.mxu0 %v9799
        %v9990 = vpop.f32.mrf.mxu0
        %v9991 = vadd.f32 0.0, %v9990
        %v9992 = vpop.f32.mrf.mxu0
        %v9993 = vpop.f32.mrf.mxu0
        %v9994 = vadd.f32 0.0, %v9993
        %v9995 = vpop.f32.mrf.mxu0
        %9996 = vmatprep.mubr.bf16.mxu0 0
        %9997 = vmatmul.mubr.bf16.gmra.mxu0 %v9800
        %v9998 = vpop.f32.mrf.mxu0
        %v9999 = vadd.f32 0.0, %v9998
        %v10000 = vpop.f32.mrf.mxu0
        %v10001 = vpop.f32.mrf.mxu0
        %v10002 = vadd.f32 0.0, %v10001
        %v10003 = vpop.f32.mrf.mxu0
        %10004 = vmatprep.mubr.bf16.mxu0 0
        %10005 = vmatmul.mubr.bf16.gmra.mxu0 %v9801
        %v10006 = vpop.f32.mrf.mxu0
        %v10007 = vadd.f32 0.0, %v10006
        %v10008 = vpop.f32.mrf.mxu0
        %v10009 = vpop.f32.mrf.mxu0
        %v10010 = vadd.f32 0.0, %v10009
        %v10011 = vpop.f32.mrf.mxu0
        %10012 = vmatprep.mubr.bf16.mxu0 0
        %10013 = vmatmul.mubr.bf16.gmra.mxu0 %v9802
        %v10014 = vpop.f32.mrf.mxu0
        %v10015 = vadd.f32 0.0, %v10014
        %v10016 = vpop.f32.mrf.mxu0
        %v10017 = vpop.f32.mrf.mxu0
        %v10018 = vadd.f32 0.0, %v10017
        %v10019 = vpop.f32.mrf.mxu0
        %10020 = vmatprep.mubr.bf16.mxu0 0
        %10021 = vmatmul.mubr.bf16.gmra.mxu0 %v9803
        %v10022 = vpop.f32.mrf.mxu0
        %v10023 = vadd.f32 0.0, %v10022
        %v10024 = vpop.f32.mrf.mxu0
        %v10025 = vpop.f32.mrf.mxu0
        %v10026 = vadd.f32 0.0, %v10025
        %v10027 = vpop.f32.mrf.mxu0
        %10028 = vdwg.mxu0
        %v10029 = vadd.f32 %v9276, %v9903
        %v10030 = vadd.f32 %v9277, %v9906
        %v10031 = vadd.f32 %v9278, %v9911
        %v10032 = vadd.f32 %v9279, %v9914
        %v10033 = vadd.f32 %v9280, %v9919
        %v10034 = vadd.f32 %v9281, %v9922
        %v10035 = vadd.f32 %v9282, %v9927
        %v10036 = vadd.f32 %v9283, %v9930
        %v10037 = vadd.f32 %v9284, %v9935
        %v10038 = vadd.f32 %v9285, %v9938
        %v10039 = vadd.f32 %v9286, %v9943
        %v10040 = vadd.f32 %v9287, %v9946
        %v10041 = vadd.f32 %v9288, %v9951
        %v10042 = vadd.f32 %v9289, %v9954
        %v10043 = vadd.f32 %v9290, %v9959
        %v10044 = vadd.f32 %v9291, %v9962
        %v10045 = vadd.f32 %v9292, %v9967
        %v10046 = vadd.f32 %v9293, %v9970
        %v10047 = vadd.f32 %v9294, %v9975
        %v10048 = vadd.f32 %v9295, %v9978
        %v10049 = vadd.f32 %v9296, %v9983
        %v10050 = vadd.f32 %v9297, %v9986
        %v10051 = vadd.f32 %v9298, %v9991
        %v10052 = vadd.f32 %v9299, %v9994
        %v10053 = vadd.f32 %v9300, %v9999
        %v10054 = vadd.f32 %v9301, %v10002
        %v10055 = vadd.f32 %v9302, %v10007
        %v10056 = vadd.f32 %v9303, %v10010
        %v10057 = vadd.f32 %v9304, %v10015
        %v10058 = vadd.f32 %v9305, %v10018
        %v10059 = vadd.f32 %v9306, %v10023
        %v10060 = vadd.f32 %v9307, %v10026
        %v10061 = vld [vmem:[%s8922] sm:$0xe]
        %v10062 = vld [vmem:[%s8922 + $0xc] sm:$0xe]
        %v10063 = vld [vmem:[%s8922 + $0x18] sm:$0xe]
        %v10064 = vld [vmem:[%s8922 + $0x24] sm:$0xe]
        %v10065 = vld [vmem:[%s8922 + $0x30] sm:$0xe]
        %v10066 = vld [vmem:[%s8922 + $0x3c] sm:$0xe]
        %v10067 = vld [vmem:[%s8922 + $0x48] sm:$0xe]
        %v10068 = vld [vmem:[%s8922 + $0x54] sm:$0xe]
        %v10069 = vld [vmem:[%s8922 + $0x60] sm:$0xe]
        %v10070 = vld [vmem:[%s8922 + $0x6c] sm:$0xe]
        %v10071 = vld [vmem:[%s8922 + $0x78] sm:$0xe]
        %v10072 = vld [vmem:[%s8922 + $0x84] sm:$0xe]
        %v10073 = vld [vmem:[%s8922 + $0x90] sm:$0xe]
        %v10074 = vld [vmem:[%s8922 + $0x9c] sm:$0xe]
        %v10075 = vld [vmem:[%s8922 + $0xa8] sm:$0xe]
        %v10076 = vld [vmem:[%s8922 + $0xb4] sm:$0xe]
        %v10125 = vrot.slane %v10061, 5
        %v10126 = vrot.slane %v10125, 4
        %v10127 = vrot.slane %v9309, 5
        %v10128 = vsel %vm1334, %v10126, %v10127
        %v10129 = vrot.slane %v10127, 4
        %v10130 = vrot.slane %v9310, 5
        %v10131 = vsel %vm1334, %v10129, %v10130
        %v10132 = vrot.slane %v10062, 5
        %v10133 = vrot.slane %v10132, 4
        %v10134 = vrot.slane %v9312, 5
        %v10135 = vsel %vm1334, %v10133, %v10134
        %v10136 = vrot.slane %v10134, 4
        %v10137 = vrot.slane %v9313, 5
        %v10138 = vsel %vm1334, %v10136, %v10137
        %v10139 = vrot.slane %v10063, 5
        %v10140 = vrot.slane %v10139, 4
        %v10141 = vrot.slane %v9315, 5
        %v10142 = vsel %vm1334, %v10140, %v10141
        %v10143 = vrot.slane %v10141, 4
        %v10144 = vrot.slane %v9316, 5
        %v10145 = vsel %vm1334, %v10143, %v10144
        %v10146 = vrot.slane %v10064, 5
        %v10147 = vrot.slane %v10146, 4
        %v10148 = vrot.slane %v9318, 5
        %v10149 = vsel %vm1334, %v10147, %v10148
        %v10150 = vrot.slane %v10148, 4
        %v10151 = vrot.slane %v9319, 5
        %v10152 = vsel %vm1334, %v10150, %v10151
        %v10153 = vrot.slane %v10065, 5
        %v10154 = vrot.slane %v10153, 4
        %v10155 = vrot.slane %v9321, 5
        %v10156 = vsel %vm1334, %v10154, %v10155
        %v10157 = vrot.slane %v10155, 4
        %v10158 = vrot.slane %v9322, 5
        %v10159 = vsel %vm1334, %v10157, %v10158
        %v10160 = vrot.slane %v10066, 5
        %v10161 = vrot.slane %v10160, 4
        %v10162 = vrot.slane %v9324, 5
        %v10163 = vsel %vm1334, %v10161, %v10162
        %v10164 = vrot.slane %v10162, 4
        %v10165 = vrot.slane %v9325, 5
        %v10166 = vsel %vm1334, %v10164, %v10165
        %v10167 = vrot.slane %v10067, 5
        %v10168 = vrot.slane %v10167, 4
        %v10169 = vrot.slane %v9327, 5
        %v10170 = vsel %vm1334, %v10168, %v10169
        %v10171 = vrot.slane %v10169, 4
        %v10172 = vrot.slane %v9328, 5
        %v10173 = vsel %vm1334, %v10171, %v10172
        %v10174 = vrot.slane %v10068, 5
        %v10175 = vrot.slane %v10174, 4
        %v10176 = vrot.slane %v9330, 5
        %v10177 = vsel %vm1334, %v10175, %v10176
        %v10178 = vrot.slane %v10176, 4
        %v10179 = vrot.slane %v9331, 5
        %v10180 = vsel %vm1334, %v10178, %v10179
        %v10181 = vrot.slane %v10069, 5
        %v10182 = vrot.slane %v10181, 4
        %v10183 = vrot.slane %v9333, 5
        %v10184 = vsel %vm1334, %v10182, %v10183
        %v10185 = vrot.slane %v10183, 4
        %v10186 = vrot.slane %v9334, 5
        %v10187 = vsel %vm1334, %v10185, %v10186
        %v10188 = vrot.slane %v10070, 5
        %v10189 = vrot.slane %v10188, 4
        %v10190 = vrot.slane %v9336, 5
        %v10191 = vsel %vm1334, %v10189, %v10190
        %v10192 = vrot.slane %v10190, 4
        %v10193 = vrot.slane %v9337, 5
        %v10194 = vsel %vm1334, %v10192, %v10193
        %v10195 = vrot.slane %v10071, 5
        %v10196 = vrot.slane %v10195, 4
        %v10197 = vrot.slane %v9339, 5
        %v10198 = vsel %vm1334, %v10196, %v10197
        %v10199 = vrot.slane %v10197, 4
        %v10200 = vrot.slane %v9340, 5
        %v10201 = vsel %vm1334, %v10199, %v10200
        %v10202 = vrot.slane %v10072, 5
        %v10203 = vrot.slane %v10202, 4
        %v10204 = vrot.slane %v9342, 5
        %v10205 = vsel %vm1334, %v10203, %v10204
        %v10206 = vrot.slane %v10204, 4
        %v10207 = vrot.slane %v9343, 5
        %v10208 = vsel %vm1334, %v10206, %v10207
        %v10209 = vrot.slane %v10073, 5
        %v10210 = vrot.slane %v10209, 4
        %v10211 = vrot.slane %v9345, 5
        %v10212 = vsel %vm1334, %v10210, %v10211
        %v10213 = vrot.slane %v10211, 4
        %v10214 = vrot.slane %v9346, 5
        %v10215 = vsel %vm1334, %v10213, %v10214
        %v10216 = vrot.slane %v10074, 5
        %v10217 = vrot.slane %v10216, 4
        %v10218 = vrot.slane %v9348, 5
        %v10219 = vsel %vm1334, %v10217, %v10218
        %v10220 = vrot.slane %v10218, 4
        %v10221 = vrot.slane %v9349, 5
        %v10222 = vsel %vm1334, %v10220, %v10221
        %v10223 = vrot.slane %v10075, 5
        %v10224 = vrot.slane %v10223, 4
        %v10225 = vrot.slane %v9351, 5
        %v10226 = vsel %vm1334, %v10224, %v10225
        %v10227 = vrot.slane %v10225, 4
        %v10228 = vrot.slane %v9352, 5
        %v10229 = vsel %vm1334, %v10227, %v10228
        %v10230 = vrot.slane %v10076, 5
        %v10231 = vrot.slane %v10230, 4
        %v10232 = vrot.slane %v9354, 5
        %v10233 = vsel %vm1334, %v10231, %v10232
        %v10234 = vrot.slane %v10232, 4
        %v10235 = vrot.slane %v9355, 5
        %v10236 = vsel %vm1334, %v10234, %v10235
        %v10237 = vld [vmem:[#allocation3 + $0x200] sm:$0xf]
        %v10238 = vld [vmem:[#allocation3 + $0x204] sm:$0xf]
        %v10239 = vld [vmem:[#allocation3 + $0x208] sm:$0xf]
        %v10240 = vld [vmem:[#allocation3 + $0x20c] sm:$0xf]
        %v10241 = vld [vmem:[#allocation3 + $0x210] sm:$0xf]
        %v10242 = vld [vmem:[#allocation3 + $0x214] sm:$0xf]
        %v10243 = vld [vmem:[#allocation3 + $0x218] sm:$0xf]
        %v10244 = vld [vmem:[#allocation3 + $0x21c] sm:$0xf]
        %v10245 = vld [vmem:[#allocation3 + $0x220] sm:$0xf]
        %v10246 = vld [vmem:[#allocation3 + $0x224] sm:$0xf]
        %v10247 = vld [vmem:[#allocation3 + $0x228] sm:$0xf]
        %v10248 = vld [vmem:[#allocation3 + $0x22c] sm:$0xf]
        %v10249 = vld [vmem:[#allocation3 + $0x230] sm:$0xf]
        %v10250 = vld [vmem:[#allocation3 + $0x234] sm:$0xf]
        %v10251 = vld [vmem:[#allocation3 + $0x238] sm:$0xf]
        %v10252 = vld [vmem:[#allocation3 + $0x23c] sm:$0xf]
        %v10253 = vunpack.c.l.b16 %v10128
        %v10254 = vunpack.c.l.b16 %v10131
        %v10255 = vunpack.c.l.b16 %v10135
        %v10256 = vunpack.c.l.b16 %v10138
        %v10257 = vunpack.c.l.b16 %v10142
        %v10258 = vunpack.c.l.b16 %v10145
        %v10259 = vunpack.c.l.b16 %v10149
        %v10260 = vunpack.c.l.b16 %v10152
        %v10261 = vunpack.c.l.b16 %v10156
        %v10262 = vunpack.c.l.b16 %v10159
        %v10263 = vunpack.c.l.b16 %v10163
        %v10264 = vunpack.c.l.b16 %v10166
        %v10265 = vunpack.c.l.b16 %v10170
        %v10266 = vunpack.c.l.b16 %v10173
        %v10267 = vunpack.c.l.b16 %v10177
        %v10268 = vunpack.c.l.b16 %v10180
        %v10269 = vunpack.c.l.b16 %v10184
        %v10270 = vunpack.c.l.b16 %v10187
        %v10271 = vunpack.c.l.b16 %v10191
        %v10272 = vunpack.c.l.b16 %v10194
        %v10273 = vunpack.c.l.b16 %v10198
        %v10274 = vunpack.c.l.b16 %v10201
        %v10275 = vunpack.c.l.b16 %v10205
        %v10276 = vunpack.c.l.b16 %v10208
        %v10277 = vunpack.c.l.b16 %v10212
        %v10278 = vunpack.c.l.b16 %v10215
        %v10279 = vunpack.c.l.b16 %v10219
        %v10280 = vunpack.c.l.b16 %v10222
        %v10281 = vunpack.c.l.b16 %v10226
        %v10282 = vunpack.c.l.b16 %v10229
        %v10283 = vunpack.c.l.b16 %v10233
        %v10284 = vunpack.c.l.b16 %v10236
        %v10285 = vpack.c.b16 %v10254, %v10253
        %v10286 = vpack.c.b16 %v10256, %v10255
        %v10287 = vpack.c.b16 %v10258, %v10257
        %v10288 = vpack.c.b16 %v10260, %v10259
        %v10289 = vpack.c.b16 %v10262, %v10261
        %v10290 = vpack.c.b16 %v10264, %v10263
        %v10291 = vpack.c.b16 %v10266, %v10265
        %v10292 = vpack.c.b16 %v10268, %v10267
        %v10293 = vpack.c.b16 %v10270, %v10269
        %v10294 = vpack.c.b16 %v10272, %v10271
        %v10295 = vpack.c.b16 %v10274, %v10273
        %v10296 = vpack.c.b16 %v10276, %v10275
        %v10297 = vpack.c.b16 %v10278, %v10277
        %v10298 = vpack.c.b16 %v10280, %v10279
        %v10299 = vpack.c.b16 %v10282, %v10281
        %v10300 = vpack.c.b16 %v10284, %v10283
        %v10333 = vunpack.c.l.b16 %v10237
        %v10334 = vunpack.c.l.b16 %v10238
        %v10335 = vunpack.c.l.b16 %v10239
        %v10336 = vunpack.c.l.b16 %v10240
        %v10337 = vunpack.c.l.b16 %v10241
        %v10338 = vunpack.c.l.b16 %v10242
        %v10339 = vunpack.c.l.b16 %v10243
        %v10340 = vunpack.c.l.b16 %v10244
        %v10341 = vunpack.c.l.b16 %v10245
        %v10342 = vunpack.c.l.b16 %v10246
        %v10343 = vunpack.c.l.b16 %v10247
        %v10344 = vunpack.c.l.b16 %v10248
        %v10345 = vunpack.c.l.b16 %v10249
        %v10346 = vunpack.c.l.b16 %v10250
        %v10347 = vunpack.c.l.b16 %v10251
        %v10348 = vunpack.c.l.b16 %v10252
        %v10349 = vpack.c.b16 %v10334, %v10333
        %v10350 = vpack.c.b16 %v10336, %v10335
        %v10351 = vpack.c.b16 %v10338, %v10337
        %v10352 = vpack.c.b16 %v10340, %v10339
        %v10353 = vpack.c.b16 %v10342, %v10341
        %v10354 = vpack.c.b16 %v10344, %v10343
        %v10355 = vpack.c.b16 %v10346, %v10345
        %v10356 = vpack.c.b16 %v10348, %v10347
        %10365 = vmatprep.subr.bf16.mxu0 0
        %10366 = vmatpush1.bf16.msra.mxu0 %v10356
        %10367 = vmatprep.subr.bf16.mxu0 0
        %10368 = vmatpush1.bf16.msra.mxu0 %v10355
        %10369 = vmatprep.subr.bf16.mxu0 0
        %10370 = vmatpush1.bf16.msra.mxu0 %v10354
        %10371 = vmatprep.subr.bf16.mxu0 0
        %10372 = vmatpush1.bf16.msra.mxu0 %v10353
        %10373 = vmatprep.subr.bf16.mxu0 0
        %10374 = vmatpush1.bf16.msra.mxu0 %v10352
        %10375 = vmatprep.subr.bf16.mxu0 0
        %10376 = vmatpush1.bf16.msra.mxu0 %v10351
        %10377 = vmatprep.subr.bf16.mxu0 0
        %10378 = vmatpush1.bf16.msra.mxu0 %v10350
        %10379 = vmatprep.subr.bf16.mxu0 0
        %10380 = vmatpush1.bf16.msra.mxu0 %v10349
        %10381 = vmatprep.subr.bf16.mxu0 0
        %10382 = vmatpush2.bf16.msra.mxu0 0
        %10383 = vmatprep.subr.bf16.mxu0 0
        %10384 = vmatpush2.bf16.msra.mxu0 0
        %10385 = vmatprep.subr.bf16.mxu0 0
        %10386 = vmatpush2.bf16.msra.mxu0 0
        %10387 = vmatprep.subr.bf16.mxu0 0
        %10388 = vmatpush2.bf16.msra.mxu0 0
        %10389 = vmatprep.subr.bf16.mxu0 0
        %10390 = vmatpush2.bf16.msra.mxu0 0
        %10391 = vmatprep.subr.bf16.mxu0 0
        %10392 = vmatpush2.bf16.msra.mxu0 0
        %10393 = vmatprep.subr.bf16.mxu0 0
        %10394 = vmatpush2.bf16.msra.mxu0 0
        %10395 = vmatprep.subr.bf16.mxu0 0
        %10396 = vmatpush2.bf16.msra.mxu0 0
        %10397 = vmatprep.mubr.bf16.mxu0 0
        %10398 = vmatmul.mubr.bf16.gmra.mxu0 %v10285
        %v10399 = vpop.f32.mrf.mxu0
        %v10400 = vadd.f32 0.0, %v10399
        %v10401 = vpop.f32.mrf.mxu0
        %v10402 = vpop.f32.mrf.mxu0
        %v10403 = vadd.f32 0.0, %v10402
        %v10404 = vpop.f32.mrf.mxu0
        %10405 = vmatprep.mubr.bf16.mxu0 0
        %10406 = vmatmul.mubr.bf16.gmra.mxu0 %v10286
        %v10407 = vpop.f32.mrf.mxu0
        %v10408 = vadd.f32 0.0, %v10407
        %v10409 = vpop.f32.mrf.mxu0
        %v10410 = vpop.f32.mrf.mxu0
        %v10411 = vadd.f32 0.0, %v10410
        %v10412 = vpop.f32.mrf.mxu0
        %10413 = vmatprep.mubr.bf16.mxu0 0
        %10414 = vmatmul.mubr.bf16.gmra.mxu0 %v10287
        %v10415 = vpop.f32.mrf.mxu0
        %v10416 = vadd.f32 0.0, %v10415
        %v10417 = vpop.f32.mrf.mxu0
        %v10418 = vpop.f32.mrf.mxu0
        %v10419 = vadd.f32 0.0, %v10418
        %v10420 = vpop.f32.mrf.mxu0
        %10421 = vmatprep.mubr.bf16.mxu0 0
        %10422 = vmatmul.mubr.bf16.gmra.mxu0 %v10288
        %v10423 = vpop.f32.mrf.mxu0
        %v10424 = vadd.f32 0.0, %v10423
        %v10425 = vpop.f32.mrf.mxu0
        %v10426 = vpop.f32.mrf.mxu0
        %v10427 = vadd.f32 0.0, %v10426
        %v10428 = vpop.f32.mrf.mxu0
        %10429 = vmatprep.mubr.bf16.mxu0 0
        %10430 = vmatmul.mubr.bf16.gmra.mxu0 %v10289
        %v10431 = vpop.f32.mrf.mxu0
        %v10432 = vadd.f32 0.0, %v10431
        %v10433 = vpop.f32.mrf.mxu0
        %v10434 = vpop.f32.mrf.mxu0
        %v10435 = vadd.f32 0.0, %v10434
        %v10436 = vpop.f32.mrf.mxu0
        %10437 = vmatprep.mubr.bf16.mxu0 0
        %10438 = vmatmul.mubr.bf16.gmra.mxu0 %v10290
        %v10439 = vpop.f32.mrf.mxu0
        %v10440 = vadd.f32 0.0, %v10439
        %v10441 = vpop.f32.mrf.mxu0
        %v10442 = vpop.f32.mrf.mxu0
        %v10443 = vadd.f32 0.0, %v10442
        %v10444 = vpop.f32.mrf.mxu0
        %10445 = vmatprep.mubr.bf16.mxu0 0
        %10446 = vmatmul.mubr.bf16.gmra.mxu0 %v10291
        %v10447 = vpop.f32.mrf.mxu0
        %v10448 = vadd.f32 0.0, %v10447
        %v10449 = vpop.f32.mrf.mxu0
        %v10450 = vpop.f32.mrf.mxu0
        %v10451 = vadd.f32 0.0, %v10450
        %v10452 = vpop.f32.mrf.mxu0
        %10453 = vmatprep.mubr.bf16.mxu0 0
        %10454 = vmatmul.mubr.bf16.gmra.mxu0 %v10292
        %v10455 = vpop.f32.mrf.mxu0
        %v10456 = vadd.f32 0.0, %v10455
        %v10457 = vpop.f32.mrf.mxu0
        %v10458 = vpop.f32.mrf.mxu0
        %v10459 = vadd.f32 0.0, %v10458
        %v10460 = vpop.f32.mrf.mxu0
        %10461 = vmatprep.mubr.bf16.mxu0 0
        %10462 = vmatmul.mubr.bf16.gmra.mxu0 %v10293
        %v10463 = vpop.f32.mrf.mxu0
        %v10464 = vadd.f32 0.0, %v10463
        %v10465 = vpop.f32.mrf.mxu0
        %v10466 = vpop.f32.mrf.mxu0
        %v10467 = vadd.f32 0.0, %v10466
        %v10468 = vpop.f32.mrf.mxu0
        %10469 = vmatprep.mubr.bf16.mxu0 0
        %10470 = vmatmul.mubr.bf16.gmra.mxu0 %v10294
        %v10471 = vpop.f32.mrf.mxu0
        %v10472 = vadd.f32 0.0, %v10471
        %v10473 = vpop.f32.mrf.mxu0
        %v10474 = vpop.f32.mrf.mxu0
        %v10475 = vadd.f32 0.0, %v10474
        %v10476 = vpop.f32.mrf.mxu0
        %10477 = vmatprep.mubr.bf16.mxu0 0
        %10478 = vmatmul.mubr.bf16.gmra.mxu0 %v10295
        %v10479 = vpop.f32.mrf.mxu0
        %v10480 = vadd.f32 0.0, %v10479
        %v10481 = vpop.f32.mrf.mxu0
        %v10482 = vpop.f32.mrf.mxu0
        %v10483 = vadd.f32 0.0, %v10482
        %v10484 = vpop.f32.mrf.mxu0
        %10485 = vmatprep.mubr.bf16.mxu0 0
        %10486 = vmatmul.mubr.bf16.gmra.mxu0 %v10296
        %v10487 = vpop.f32.mrf.mxu0
        %v10488 = vadd.f32 0.0, %v10487
        %v10489 = vpop.f32.mrf.mxu0
        %v10490 = vpop.f32.mrf.mxu0
        %v10491 = vadd.f32 0.0, %v10490
        %v10492 = vpop.f32.mrf.mxu0
        %10493 = vmatprep.mubr.bf16.mxu0 0
        %10494 = vmatmul.mubr.bf16.gmra.mxu0 %v10297
        %v10495 = vpop.f32.mrf.mxu0
        %v10496 = vadd.f32 0.0, %v10495
        %v10497 = vpop.f32.mrf.mxu0
        %v10498 = vpop.f32.mrf.mxu0
        %v10499 = vadd.f32 0.0, %v10498
        %v10500 = vpop.f32.mrf.mxu0
        %10501 = vmatprep.mubr.bf16.mxu0 0
        %10502 = vmatmul.mubr.bf16.gmra.mxu0 %v10298
        %v10503 = vpop.f32.mrf.mxu0
        %v10504 = vadd.f32 0.0, %v10503
        %v10505 = vpop.f32.mrf.mxu0
        %v10506 = vpop.f32.mrf.mxu0
        %v10507 = vadd.f32 0.0, %v10506
        %v10508 = vpop.f32.mrf.mxu0
        %10509 = vmatprep.mubr.bf16.mxu0 0
        %10510 = vmatmul.mubr.bf16.gmra.mxu0 %v10299
        %v10511 = vpop.f32.mrf.mxu0
        %v10512 = vadd.f32 0.0, %v10511
        %v10513 = vpop.f32.mrf.mxu0
        %v10514 = vpop.f32.mrf.mxu0
        %v10515 = vadd.f32 0.0, %v10514
        %v10516 = vpop.f32.mrf.mxu0
        %10517 = vmatprep.mubr.bf16.mxu0 0
        %10518 = vmatmul.mubr.bf16.gmra.mxu0 %v10300
        %v10519 = vpop.f32.mrf.mxu0
        %v10520 = vadd.f32 0.0, %v10519
        %v10521 = vpop.f32.mrf.mxu0
        %v10522 = vpop.f32.mrf.mxu0
        %v10523 = vadd.f32 0.0, %v10522
        %v10524 = vpop.f32.mrf.mxu0
        %10525 = vdwg.mxu0
        %v10526 = vadd.f32 %v10029, %v10400
        %v10527 = vadd.f32 %v10030, %v10403
        %v10528 = vadd.f32 %v10031, %v10408
        %v10529 = vadd.f32 %v10032, %v10411
        %v10530 = vadd.f32 %v10033, %v10416
        %v10531 = vadd.f32 %v10034, %v10419
        %v10532 = vadd.f32 %v10035, %v10424
        %v10533 = vadd.f32 %v10036, %v10427
        %v10534 = vadd.f32 %v10037, %v10432
        %v10535 = vadd.f32 %v10038, %v10435
        %v10536 = vadd.f32 %v10039, %v10440
        %v10537 = vadd.f32 %v10040, %v10443
        %v10538 = vadd.f32 %v10041, %v10448
        %v10539 = vadd.f32 %v10042, %v10451
        %v10540 = vadd.f32 %v10043, %v10456
        %v10541 = vadd.f32 %v10044, %v10459
        %v10542 = vadd.f32 %v10045, %v10464
        %v10543 = vadd.f32 %v10046, %v10467
        %v10544 = vadd.f32 %v10047, %v10472
        %v10545 = vadd.f32 %v10048, %v10475
        %v10546 = vadd.f32 %v10049, %v10480
        %v10547 = vadd.f32 %v10050, %v10483
        %v10548 = vadd.f32 %v10051, %v10488
        %v10549 = vadd.f32 %v10052, %v10491
        %v10550 = vadd.f32 %v10053, %v10496
        %v10551 = vadd.f32 %v10054, %v10499
        %v10552 = vadd.f32 %v10055, %v10504
        %v10553 = vadd.f32 %v10056, %v10507
        %v10554 = vadd.f32 %v10057, %v10512
        %v10555 = vadd.f32 %v10058, %v10515
        %v10556 = vadd.f32 %v10059, %v10520
        %v10557 = vadd.f32 %v10060, %v10523
        %v10558 = vld [vmem:[%s4] sm:$0x1]
        %v10560 = vlaneseq
        %v10561 = vshrl.u32 %v10560, 7
        %v10562 = vsub.s32 0, %v10561
        %v10563 = vrot.slane %v10558, %v10562
        %v10565 = vadd.f32 %v10526, %v10563
        %v10566 = vadd.f32 %v10527, %v10563
        %v10567 = vadd.f32 %v10528, %v10563
        %v10568 = vadd.f32 %v10529, %v10563
        %v10569 = vadd.f32 %v10530, %v10563
        %v10570 = vadd.f32 %v10531, %v10563
        %v10571 = vadd.f32 %v10532, %v10563
        %v10572 = vadd.f32 %v10533, %v10563
        %v10573 = vadd.f32 %v10534, %v10563
        %v10574 = vadd.f32 %v10535, %v10563
        %v10575 = vadd.f32 %v10536, %v10563
        %v10576 = vadd.f32 %v10537, %v10563
        %v10577 = vadd.f32 %v10538, %v10563
        %v10578 = vadd.f32 %v10539, %v10563
        %v10579 = vadd.f32 %v10540, %v10563
        %v10580 = vadd.f32 %v10541, %v10563
        %v10581 = vadd.f32 %v10542, %v10563
        %v10582 = vadd.f32 %v10543, %v10563
        %v10583 = vadd.f32 %v10544, %v10563
        %v10584 = vadd.f32 %v10545, %v10563
        %v10585 = vadd.f32 %v10546, %v10563
        %v10586 = vadd.f32 %v10547, %v10563
        %v10587 = vadd.f32 %v10548, %v10563
        %v10588 = vadd.f32 %v10549, %v10563
        %v10589 = vadd.f32 %v10550, %v10563
        %v10590 = vadd.f32 %v10551, %v10563
        %v10591 = vadd.f32 %v10552, %v10563
        %v10592 = vadd.f32 %v10553, %v10563
        %v10593 = vadd.f32 %v10554, %v10563
        %v10594 = vadd.f32 %v10555, %v10563
        %v10595 = vadd.f32 %v10556, %v10563
        %v10596 = vadd.f32 %v10557, %v10563
        %v10597 = vld [vmem:[%s1768] sm:$0xf]
        %v10598 = vld [vmem:[%s1768 + $0x4] sm:$0xf]
        %v10599 = vld [vmem:[%s1768 + $0x8] sm:$0x1]
        %v10600 = vld [vmem:[%s1768 + $0xc] sm:$0xf]
        %v10601 = vld [vmem:[%s1768 + $0x10] sm:$0xf]
        %v10602 = vld [vmem:[%s1768 + $0x14] sm:$0x1]
        %v10603 = vld [vmem:[%s1768 + $0x18] sm:$0xf]
        %v10604 = vld [vmem:[%s1768 + $0x1c] sm:$0xf]
        %v10605 = vld [vmem:[%s1768 + $0x20] sm:$0x1]
        %v10606 = vld [vmem:[%s1768 + $0x24] sm:$0xf]
        %v10607 = vld [vmem:[%s1768 + $0x28] sm:$0xf]
        %v10608 = vld [vmem:[%s1768 + $0x2c] sm:$0x1]
        %v10609 = vld [vmem:[%s1768 + $0x30] sm:$0xf]
        %v10610 = vld [vmem:[%s1768 + $0x34] sm:$0xf]
        %v10611 = vld [vmem:[%s1768 + $0x38] sm:$0x1]
        %v10612 = vld [vmem:[%s1768 + $0x3c] sm:$0xf]
        %v10613 = vld [vmem:[%s1768 + $0x40] sm:$0xf]
        %v10614 = vld [vmem:[%s1768 + $0x44] sm:$0x1]
        %v10615 = vld [vmem:[%s1768 + $0x48] sm:$0xf]
        %v10616 = vld [vmem:[%s1768 + $0x4c] sm:$0xf]
        %v10617 = vld [vmem:[%s1768 + $0x50] sm:$0x1]
        %v10618 = vld [vmem:[%s1768 + $0x54] sm:$0xf]
        %v10619 = vld [vmem:[%s1768 + $0x58] sm:$0xf]
        %v10620 = vld [vmem:[%s1768 + $0x5c] sm:$0x1]
        %v10621 = vld [vmem:[%s1768 + $0x60] sm:$0xf]
        %v10622 = vld [vmem:[%s1768 + $0x64] sm:$0xf]
        %v10623 = vld [vmem:[%s1768 + $0x68] sm:$0x1]
        %v10624 = vld [vmem:[%s1768 + $0x6c] sm:$0xf]
        %v10625 = vld [vmem:[%s1768 + $0x70] sm:$0xf]
        %v10626 = vld [vmem:[%s1768 + $0x74] sm:$0x1]
        %v10627 = vld [vmem:[%s1768 + $0x78] sm:$0xf]
        %v10628 = vld [vmem:[%s1768 + $0x7c] sm:$0xf]
        %v10629 = vld [vmem:[%s1768 + $0x80] sm:$0x1]
        %v10630 = vld [vmem:[%s1768 + $0x84] sm:$0xf]
        %v10631 = vld [vmem:[%s1768 + $0x88] sm:$0xf]
        %v10632 = vld [vmem:[%s1768 + $0x8c] sm:$0x1]
        %v10633 = vld [vmem:[%s1768 + $0x90] sm:$0xf]
        %v10634 = vld [vmem:[%s1768 + $0x94] sm:$0xf]
        %v10635 = vld [vmem:[%s1768 + $0x98] sm:$0x1]
        %v10636 = vld [vmem:[%s1768 + $0x9c] sm:$0xf]
        %v10637 = vld [vmem:[%s1768 + $0xa0] sm:$0xf]
        %v10638 = vld [vmem:[%s1768 + $0xa4] sm:$0x1]
        %v10639 = vld [vmem:[%s1768 + $0xa8] sm:$0xf]
        %v10640 = vld [vmem:[%s1768 + $0xac] sm:$0xf]
        %v10641 = vld [vmem:[%s1768 + $0xb0] sm:$0x1]
        %v10642 = vld [vmem:[%s1768 + $0xb4] sm:$0xf]
        %v10643 = vld [vmem:[%s1768 + $0xb8] sm:$0xf]
        %v10644 = vld [vmem:[%s1768 + $0xbc] sm:$0x1]
        %v10646 = vshrl.u32 %v10597, 16
        %v10648 = vrot.slane %v10646, 4
        %v10649 = vshll.u32 %v10597, 16
        %v10651 = vrot.slane %v10649, 5
        %v10652 = vor.u32 %v10648, %v10651
        %v10653 = vrot.slane %v10652, 4
        %v10655 = vshll.u32 %v10598, 16
        %v10657 = vrot.slane %v10655, 5
        %v10658 = vsel %vm305, %v10653, %v10657
        %v10659 = vshrl.u32 %v10598, 16
        %v10661 = vrot.slane %v10659, 4
        %v10662 = vor.u32 %v10661, %v10657
        %v10663 = vrot.slane %v10662, 4
        %v10665 = vshll.u32 %v10599, 16
        %v10667 = vrot.slane %v10665, 5
        %v10668 = vsel %vm305, %v10663, %v10667
        %v10670 = vshrl.u32 %v10600, 16
        %v10672 = vrot.slane %v10670, 4
        %v10673 = vshll.u32 %v10600, 16
        %v10675 = vrot.slane %v10673, 5
        %v10676 = vor.u32 %v10672, %v10675
        %v10677 = vrot.slane %v10676, 4
        %v10679 = vshll.u32 %v10601, 16
        %v10681 = vrot.slane %v10679, 5
        %v10682 = vsel %vm305, %v10677, %v10681
        %v10683 = vshrl.u32 %v10601, 16
        %v10685 = vrot.slane %v10683, 4
        %v10686 = vor.u32 %v10685, %v10681
        %v10687 = vrot.slane %v10686, 4
        %v10689 = vshll.u32 %v10602, 16
        %v10691 = vrot.slane %v10689, 5
        %v10692 = vsel %vm305, %v10687, %v10691
        %v10694 = vshrl.u32 %v10603, 16
        %v10696 = vrot.slane %v10694, 4
        %v10697 = vshll.u32 %v10603, 16
        %v10699 = vrot.slane %v10697, 5
        %v10700 = vor.u32 %v10696, %v10699
        %v10701 = vrot.slane %v10700, 4
        %v10703 = vshll.u32 %v10604, 16
        %v10705 = vrot.slane %v10703, 5
        %v10706 = vsel %vm305, %v10701, %v10705
        %v10707 = vshrl.u32 %v10604, 16
        %v10709 = vrot.slane %v10707, 4
        %v10710 = vor.u32 %v10709, %v10705
        %v10711 = vrot.slane %v10710, 4
        %v10713 = vshll.u32 %v10605, 16
        %v10715 = vrot.slane %v10713, 5
        %v10716 = vsel %vm305, %v10711, %v10715
        %v10718 = vshrl.u32 %v10606, 16
        %v10720 = vrot.slane %v10718, 4
        %v10721 = vshll.u32 %v10606, 16
        %v10723 = vrot.slane %v10721, 5
        %v10724 = vor.u32 %v10720, %v10723
        %v10725 = vrot.slane %v10724, 4
        %v10727 = vshll.u32 %v10607, 16
        %v10729 = vrot.slane %v10727, 5
        %v10730 = vsel %vm305, %v10725, %v10729
        %v10731 = vshrl.u32 %v10607, 16
        %v10733 = vrot.slane %v10731, 4
        %v10734 = vor.u32 %v10733, %v10729
        %v10735 = vrot.slane %v10734, 4
        %v10737 = vshll.u32 %v10608, 16
        %v10739 = vrot.slane %v10737, 5
        %v10740 = vsel %vm305, %v10735, %v10739
        %v10742 = vshrl.u32 %v10609, 16
        %v10744 = vrot.slane %v10742, 4
        %v10745 = vshll.u32 %v10609, 16
        %v10747 = vrot.slane %v10745, 5
        %v10748 = vor.u32 %v10744, %v10747
        %v10749 = vrot.slane %v10748, 4
        %v10751 = vshll.u32 %v10610, 16
        %v10753 = vrot.slane %v10751, 5
        %v10754 = vsel %vm305, %v10749, %v10753
        %v10755 = vshrl.u32 %v10610, 16
        %v10757 = vrot.slane %v10755, 4
        %v10758 = vor.u32 %v10757, %v10753
        %v10759 = vrot.slane %v10758, 4
        %v10761 = vshll.u32 %v10611, 16
        %v10763 = vrot.slane %v10761, 5
        %v10764 = vsel %vm305, %v10759, %v10763
        %v10766 = vshrl.u32 %v10612, 16
        %v10768 = vrot.slane %v10766, 4
        %v10769 = vshll.u32 %v10612, 16
        %v10771 = vrot.slane %v10769, 5
        %v10772 = vor.u32 %v10768, %v10771
        %v10773 = vrot.slane %v10772, 4
        %v10775 = vshll.u32 %v10613, 16
        %v10777 = vrot.slane %v10775, 5
        %v10778 = vsel %vm305, %v10773, %v10777
        %v10779 = vshrl.u32 %v10613, 16
        %v10781 = vrot.slane %v10779, 4
        %v10782 = vor.u32 %v10781, %v10777
        %v10783 = vrot.slane %v10782, 4
        %v10785 = vshll.u32 %v10614, 16
        %v10787 = vrot.slane %v10785, 5
        %v10788 = vsel %vm305, %v10783, %v10787
        %v10790 = vshrl.u32 %v10615, 16
        %v10792 = vrot.slane %v10790, 4
        %v10793 = vshll.u32 %v10615, 16
        %v10795 = vrot.slane %v10793, 5
        %v10796 = vor.u32 %v10792, %v10795
        %v10797 = vrot.slane %v10796, 4
        %v10799 = vshll.u32 %v10616, 16
        %v10801 = vrot.slane %v10799, 5
        %v10802 = vsel %vm305, %v10797, %v10801
        %v10803 = vshrl.u32 %v10616, 16
        %v10805 = vrot.slane %v10803, 4
        %v10806 = vor.u32 %v10805, %v10801
        %v10807 = vrot.slane %v10806, 4
        %v10809 = vshll.u32 %v10617, 16
        %v10811 = vrot.slane %v10809, 5
        %v10812 = vsel %vm305, %v10807, %v10811
        %v10814 = vshrl.u32 %v10618, 16
        %v10816 = vrot.slane %v10814, 4
        %v10817 = vshll.u32 %v10618, 16
        %v10819 = vrot.slane %v10817, 5
        %v10820 = vor.u32 %v10816, %v10819
        %v10821 = vrot.slane %v10820, 4
        %v10823 = vshll.u32 %v10619, 16
        %v10825 = vrot.slane %v10823, 5
        %v10826 = vsel %vm305, %v10821, %v10825
        %v10827 = vshrl.u32 %v10619, 16
        %v10829 = vrot.slane %v10827, 4
        %v10830 = vor.u32 %v10829, %v10825
        %v10831 = vrot.slane %v10830, 4
        %v10833 = vshll.u32 %v10620, 16
        %v10835 = vrot.slane %v10833, 5
        %v10836 = vsel %vm305, %v10831, %v10835
        %v10838 = vshrl.u32 %v10621, 16
        %v10840 = vrot.slane %v10838, 4
        %v10841 = vshll.u32 %v10621, 16
        %v10843 = vrot.slane %v10841, 5
        %v10844 = vor.u32 %v10840, %v10843
        %v10845 = vrot.slane %v10844, 4
        %v10847 = vshll.u32 %v10622, 16
        %v10849 = vrot.slane %v10847, 5
        %v10850 = vsel %vm305, %v10845, %v10849
        %v10851 = vshrl.u32 %v10622, 16
        %v10853 = vrot.slane %v10851, 4
        %v10854 = vor.u32 %v10853, %v10849
        %v10855 = vrot.slane %v10854, 4
        %v10857 = vshll.u32 %v10623, 16
        %v10859 = vrot.slane %v10857, 5
        %v10860 = vsel %vm305, %v10855, %v10859
        %v10862 = vshrl.u32 %v10624, 16
        %v10864 = vrot.slane %v10862, 4
        %v10865 = vshll.u32 %v10624, 16
        %v10867 = vrot.slane %v10865, 5
        %v10868 = vor.u32 %v10864, %v10867
        %v10869 = vrot.slane %v10868, 4
        %v10871 = vshll.u32 %v10625, 16
        %v10873 = vrot.slane %v10871, 5
        %v10874 = vsel %vm305, %v10869, %v10873
        %v10875 = vshrl.u32 %v10625, 16
        %v10877 = vrot.slane %v10875, 4
        %v10878 = vor.u32 %v10877, %v10873
        %v10879 = vrot.slane %v10878, 4
        %v10881 = vshll.u32 %v10626, 16
        %v10883 = vrot.slane %v10881, 5
        %v10884 = vsel %vm305, %v10879, %v10883
        %v10886 = vshrl.u32 %v10627, 16
        %v10888 = vrot.slane %v10886, 4
        %v10889 = vshll.u32 %v10627, 16
        %v10891 = vrot.slane %v10889, 5
        %v10892 = vor.u32 %v10888, %v10891
        %v10893 = vrot.slane %v10892, 4
        %v10895 = vshll.u32 %v10628, 16
        %v10897 = vrot.slane %v10895, 5
        %v10898 = vsel %vm305, %v10893, %v10897
        %v10899 = vshrl.u32 %v10628, 16
        %v10901 = vrot.slane %v10899, 4
        %v10902 = vor.u32 %v10901, %v10897
        %v10903 = vrot.slane %v10902, 4
        %v10905 = vshll.u32 %v10629, 16
        %v10907 = vrot.slane %v10905, 5
        %v10908 = vsel %vm305, %v10903, %v10907
        %v10910 = vshrl.u32 %v10630, 16
        %v10912 = vrot.slane %v10910, 4
        %v10913 = vshll.u32 %v10630, 16
        %v10915 = vrot.slane %v10913, 5
        %v10916 = vor.u32 %v10912, %v10915
        %v10917 = vrot.slane %v10916, 4
        %v10919 = vshll.u32 %v10631, 16
        %v10921 = vrot.slane %v10919, 5
        %v10922 = vsel %vm305, %v10917, %v10921
        %v10923 = vshrl.u32 %v10631, 16
        %v10925 = vrot.slane %v10923, 4
        %v10926 = vor.u32 %v10925, %v10921
        %v10927 = vrot.slane %v10926, 4
        %v10929 = vshll.u32 %v10632, 16
        %v10931 = vrot.slane %v10929, 5
        %v10932 = vsel %vm305, %v10927, %v10931
        %v10934 = vshrl.u32 %v10633, 16
        %v10936 = vrot.slane %v10934, 4
        %v10937 = vshll.u32 %v10633, 16
        %v10939 = vrot.slane %v10937, 5
        %v10940 = vor.u32 %v10936, %v10939
        %v10941 = vrot.slane %v10940, 4
        %v10943 = vshll.u32 %v10634, 16
        %v10945 = vrot.slane %v10943, 5
        %v10946 = vsel %vm305, %v10941, %v10945
        %v10947 = vshrl.u32 %v10634, 16
        %v10949 = vrot.slane %v10947, 4
        %v10950 = vor.u32 %v10949, %v10945
        %v10951 = vrot.slane %v10950, 4
        %v10953 = vshll.u32 %v10635, 16
        %v10955 = vrot.slane %v10953, 5
        %v10956 = vsel %vm305, %v10951, %v10955
        %v10958 = vshrl.u32 %v10636, 16
        %v10960 = vrot.slane %v10958, 4
        %v10961 = vshll.u32 %v10636, 16
        %v10963 = vrot.slane %v10961, 5
        %v10964 = vor.u32 %v10960, %v10963
        %v10965 = vrot.slane %v10964, 4
        %v10967 = vshll.u32 %v10637, 16
        %v10969 = vrot.slane %v10967, 5
        %v10970 = vsel %vm305, %v10965, %v10969
        %v10971 = vshrl.u32 %v10637, 16
        %v10973 = vrot.slane %v10971, 4
        %v10974 = vor.u32 %v10973, %v10969
        %v10975 = vrot.slane %v10974, 4
        %v10977 = vshll.u32 %v10638, 16
        %v10979 = vrot.slane %v10977, 5
        %v10980 = vsel %vm305, %v10975, %v10979
        %v10982 = vshrl.u32 %v10639, 16
        %v10984 = vrot.slane %v10982, 4
        %v10985 = vshll.u32 %v10639, 16
        %v10987 = vrot.slane %v10985, 5
        %v10988 = vor.u32 %v10984, %v10987
        %v10989 = vrot.slane %v10988, 4
        %v10991 = vshll.u32 %v10640, 16
        %v10993 = vrot.slane %v10991, 5
        %v10994 = vsel %vm305, %v10989, %v10993
        %v10995 = vshrl.u32 %v10640, 16
        %v10997 = vrot.slane %v10995, 4
        %v10998 = vor.u32 %v10997, %v10993
        %v10999 = vrot.slane %v10998, 4
        %v11001 = vshll.u32 %v10641, 16
        %v11003 = vrot.slane %v11001, 5
        %v11004 = vsel %vm305, %v10999, %v11003
        %v11006 = vshrl.u32 %v10642, 16
        %v11008 = vrot.slane %v11006, 4
        %v11009 = vshll.u32 %v10642, 16
        %v11011 = vrot.slane %v11009, 5
        %v11012 = vor.u32 %v11008, %v11011
        %v11013 = vrot.slane %v11012, 4
        %v11015 = vshll.u32 %v10643, 16
        %v11017 = vrot.slane %v11015, 5
        %v11018 = vsel %vm305, %v11013, %v11017
        %v11019 = vshrl.u32 %v10643, 16
        %v11021 = vrot.slane %v11019, 4
        %v11022 = vor.u32 %v11021, %v11017
        %v11023 = vrot.slane %v11022, 4
        %v11025 = vshll.u32 %v10644, 16
        %v11027 = vrot.slane %v11025, 5
        %v11028 = vsel %vm305, %v11023, %v11027
        %v11061 = vunpack.c.l.bf16 %v10658
        %v11062 = vunpack.c.l.bf16 %v10668
        %v11063 = vunpack.c.l.bf16 %v10682
        %v11064 = vunpack.c.l.bf16 %v10692
        %v11065 = vunpack.c.l.bf16 %v10706
        %v11066 = vunpack.c.l.bf16 %v10716
        %v11067 = vunpack.c.l.bf16 %v10730
        %v11068 = vunpack.c.l.bf16 %v10740
        %v11069 = vunpack.c.l.bf16 %v10754
        %v11070 = vunpack.c.l.bf16 %v10764
        %v11071 = vunpack.c.l.bf16 %v10778
        %v11072 = vunpack.c.l.bf16 %v10788
        %v11073 = vunpack.c.l.bf16 %v10802
        %v11074 = vunpack.c.l.bf16 %v10812
        %v11075 = vunpack.c.l.bf16 %v10826
        %v11076 = vunpack.c.l.bf16 %v10836
        %v11077 = vunpack.c.l.bf16 %v10850
        %v11078 = vunpack.c.l.bf16 %v10860
        %v11079 = vunpack.c.l.bf16 %v10874
        %v11080 = vunpack.c.l.bf16 %v10884
        %v11081 = vunpack.c.l.bf16 %v10898
        %v11082 = vunpack.c.l.bf16 %v10908
        %v11083 = vunpack.c.l.bf16 %v10922
        %v11084 = vunpack.c.l.bf16 %v10932
        %v11085 = vunpack.c.l.bf16 %v10946
        %v11086 = vunpack.c.l.bf16 %v10956
        %v11087 = vunpack.c.l.bf16 %v10970
        %v11088 = vunpack.c.l.bf16 %v10980
        %v11089 = vunpack.c.l.bf16 %v10994
        %v11090 = vunpack.c.l.bf16 %v11004
        %v11091 = vunpack.c.l.bf16 %v11018
        %v11092 = vunpack.c.l.bf16 %v11028
        %v11093 = vadd.f32 %v10565, %v11061
        %v11094 = vadd.f32 %v10566, %v11062
        %v11095 = vadd.f32 %v10567, %v11063
        %v11096 = vadd.f32 %v10568, %v11064
        %v11097 = vadd.f32 %v10569, %v11065
        %v11098 = vadd.f32 %v10570, %v11066
        %v11099 = vadd.f32 %v10571, %v11067
        %v11100 = vadd.f32 %v10572, %v11068
        %v11101 = vadd.f32 %v10573, %v11069
        %v11102 = vadd.f32 %v10574, %v11070
        %v11103 = vadd.f32 %v10575, %v11071
        %v11104 = vadd.f32 %v10576, %v11072
        %v11105 = vadd.f32 %v10577, %v11073
        %v11106 = vadd.f32 %v10578, %v11074
        %v11107 = vadd.f32 %v10579, %v11075
        %v11108 = vadd.f32 %v10580, %v11076
        %v11109 = vadd.f32 %v10581, %v11077
        %v11110 = vadd.f32 %v10582, %v11078
        %v11111 = vadd.f32 %v10583, %v11079
        %v11112 = vadd.f32 %v10584, %v11080
        %v11113 = vadd.f32 %v10585, %v11081
        %v11114 = vadd.f32 %v10586, %v11082
        %v11115 = vadd.f32 %v10587, %v11083
        %v11116 = vadd.f32 %v10588, %v11084
        %v11117 = vadd.f32 %v10589, %v11085
        %v11118 = vadd.f32 %v10590, %v11086
        %v11119 = vadd.f32 %v10591, %v11087
        %v11120 = vadd.f32 %v10592, %v11088
        %v11121 = vadd.f32 %v10593, %v11089
        %v11122 = vadd.f32 %v10594, %v11090
        %v11123 = vadd.f32 %v10595, %v11091
        %v11124 = vadd.f32 %v10596, %v11092
        %v11125 = vmax.f32 %v11093, 0.0
        %v11126 = vmax.f32 %v11094, 0.0
        %v11127 = vmax.f32 %v11095, 0.0
        %v11128 = vmax.f32 %v11096, 0.0
        %v11129 = vmax.f32 %v11097, 0.0
        %v11130 = vmax.f32 %v11098, 0.0
        %v11131 = vmax.f32 %v11099, 0.0
        %v11132 = vmax.f32 %v11100, 0.0
        %v11133 = vmax.f32 %v11101, 0.0
        %v11134 = vmax.f32 %v11102, 0.0
        %v11135 = vmax.f32 %v11103, 0.0
        %v11136 = vmax.f32 %v11104, 0.0
        %v11137 = vmax.f32 %v11105, 0.0
        %v11138 = vmax.f32 %v11106, 0.0
        %v11139 = vmax.f32 %v11107, 0.0
        %v11140 = vmax.f32 %v11108, 0.0
        %v11141 = vmax.f32 %v11109, 0.0
        %v11142 = vmax.f32 %v11110, 0.0
        %v11143 = vmax.f32 %v11111, 0.0
        %v11144 = vmax.f32 %v11112, 0.0
        %v11145 = vmax.f32 %v11113, 0.0
        %v11146 = vmax.f32 %v11114, 0.0
        %v11147 = vmax.f32 %v11115, 0.0
        %v11148 = vmax.f32 %v11116, 0.0
        %v11149 = vmax.f32 %v11117, 0.0
        %v11150 = vmax.f32 %v11118, 0.0
        %v11151 = vmax.f32 %v11119, 0.0
        %v11152 = vmax.f32 %v11120, 0.0
        %v11153 = vmax.f32 %v11121, 0.0
        %v11154 = vmax.f32 %v11122, 0.0
        %v11155 = vmax.f32 %v11123, 0.0
        %v11156 = vmax.f32 %v11124, 0.0
        %11157 = vst [vmem:[%s232] sm:$0xff] %v11125
        %11158 = vst [vmem:[%s232 + $0x8] sm:$0xff] %v11126
        %11159 = vst [vmem:[%s232 + $0x10] sm:$0xff] %v11127
        %11160 = vst [vmem:[%s232 + $0x18] sm:$0xff] %v11128
        %11161 = vst [vmem:[%s232 + $0x20] sm:$0xff] %v11129
        %11162 = vst [vmem:[%s232 + $0x28] sm:$0xff] %v11130
        %11163 = vst [vmem:[%s232 + $0x30] sm:$0xff] %v11131
        %11164 = vst [vmem:[%s232 + $0x38] sm:$0xff] %v11132
        %11165 = vst [vmem:[%s232 + $0x40] sm:$0xff] %v11133
        %11166 = vst [vmem:[%s232 + $0x48] sm:$0xff] %v11134
        %11167 = vst [vmem:[%s232 + $0x50] sm:$0xff] %v11135
        %11168 = vst [vmem:[%s232 + $0x58] sm:$0xff] %v11136
        %11169 = vst [vmem:[%s232 + $0x60] sm:$0xff] %v11137
        %11170 = vst [vmem:[%s232 + $0x68] sm:$0xff] %v11138
        %11171 = vst [vmem:[%s232 + $0x70] sm:$0xff] %v11139
        %11172 = vst [vmem:[%s232 + $0x78] sm:$0xff] %v11140
        %11173 = vst [vmem:[%s232 + $0x80] sm:$0xff] %v11141
        %11174 = vst [vmem:[%s232 + $0x88] sm:$0xff] %v11142
        %11175 = vst [vmem:[%s232 + $0x90] sm:$0xff] %v11143
        %11176 = vst [vmem:[%s232 + $0x98] sm:$0xff] %v11144
        %11177 = vst [vmem:[%s232 + $0xa0] sm:$0xff] %v11145
        %11178 = vst [vmem:[%s232 + $0xa8] sm:$0xff] %v11146
        %11179 = vst [vmem:[%s232 + $0xb0] sm:$0xff] %v11147
        %11180 = vst [vmem:[%s232 + $0xb8] sm:$0xff] %v11148
        %11181 = vst [vmem:[%s232 + $0xc0] sm:$0xff] %v11149
        %11182 = vst [vmem:[%s232 + $0xc8] sm:$0xff] %v11150
        %11183 = vst [vmem:[%s232 + $0xd0] sm:$0xff] %v11151
        %11184 = vst [vmem:[%s232 + $0xd8] sm:$0xff] %v11152
        %11185 = vst [vmem:[%s232 + $0xe0] sm:$0xff] %v11153
        %11186 = vst [vmem:[%s232 + $0xe8] sm:$0xff] %v11154
        %11187 = vst [vmem:[%s232 + $0xf0] sm:$0xff] %v11155
        %11188 = vst [vmem:[%s232 + $0xf8] sm:$0xff] %v11156
        %s11189 = sand.u32 %s138, 1
        %s11190 = scalar_lea.sflag [#allocation5], %s11189
        %s11191 = sand.u32 %s138, 1
        %s11192 = smul.addr %s11191, 256
        %s11193 = scalar_lea.vmem [#allocation6], %s11192
        // Predicated region
        $region45: #{tpu_custom_call.1} parent=39 // pred_check
          %p11194 = pneg %p148
        $region46: #{tpu_custom_call.1} parent=39 // pred_check_branch
          %11196 = sbr.rel (%p11194) target = $region48
        $region47: #{tpu_custom_call.1} parent=39 // pred_region
          %s11198 = ssub.s32 4096, 4096
          %11199 = vsyncadd %s11190, %s11198
          %s11200 = smul.addr %s20, 32
          %s11201 = smul.addr %s11200, 128
          %s11202 = scalar_lea.hbm %s5, %s11201
          %s11203 = sshll.u32 %s11193, 4
          %s11204 = int_to_ptr.vmem [resolvable:$true] %s11203
          %11209 = dma.vmem_to_hbm [thread:$0]  %s11204, 4096, %s11202, %s11190, 128, 128, 8
        $region48: #{tpu_custom_call.1} parent=39 // pred_fallthru
          _
      $region40: #{tpu_custom_call.1} parent=5 // pred_fallthru
        _
      %p11210 = scmp.le.s32.totalorder 2, %s15
      // Predicated region
      $region49: #{tpu_custom_call.1} parent=5 // pred_check
        %p11211 = pneg %p11210
      $region50: #{tpu_custom_call.1} parent=5 // pred_check_branch
        %11213 = sbr.rel (%p11211) target = $region52
      $region51: #{tpu_custom_call.1} parent=5 // pred_region
        %s11214 = ssub.s32 %s15, 2
        // Predicated region
        $region53: #{tpu_custom_call.1} parent=51 // pred_check
          %p11215 = pneg %p154
        $region54: #{tpu_custom_call.1} parent=51 // pred_check_branch
          %11217 = sbr.rel (%p11215) target = $region56
        $region55: #{tpu_custom_call.1} parent=51 // pred_region
          %s11218 = sand.u32 %s139, 1
          %s11219 = scalar_lea.sflag [#allocation5], %s11218
          %s11220 = sand.u32 %s139, 1
          %s11221 = smul.addr %s11220, 256
          %s11222 = scalar_lea.vmem [#allocation6], %s11221
          %11223 = dma.done %s11219, 4096
        $region56: #{tpu_custom_call.1} parent=51 // pred_fallthru
          _
      $region52: #{tpu_custom_call.1} parent=5 // pred_fallthru
        _
    $region6: #{tpu_custom_call.1} parent=1 // loop_footer
      %s19 = sadd.s32 1, %s15
    $region7: #{tpu_custom_call.1} parent=1 // loop_footer_branch
      %14 = sbr.rel target = $region3
    $region8: #{tpu_custom_call.1} parent=1 // loop_exit
      _
    %11224 = vsyncpa [#allocation4], 1
    %s11225 = scalar_lea.sflag [#allocation4], 1
    %11226 = vsyncpa %s11225, 1
    %11227 = vsyncpa [#allocation5], 1
    %s11228 = scalar_lea.sflag [#allocation5], 1
    %11229 = vsyncpa %s11228, 1

</llo_original>
